<compile_context>
chip_gen: v7x
topology: tpu7x:2x2x1
jax: 0.10.0
libtpu: 0.0.40
codegen_flags: <defaults>
</compile_context>

<pallas_src>
import functools

import jax
import jax.numpy as jnp
import numpy as np
from jax import lax
from jax.experimental import pallas as pl
from jax.experimental.pallas import tpu as pltpu

# ---------------------------------------------------------------------------
# Problem sizes (small, consistent with the module's forward)
# ---------------------------------------------------------------------------
B = 2          # batch
N = 16         # number of input tokens
FD = 32        # feature_dim
D = 32         # slot dim (== kvq_dim, n_heads = 1)
KVQ = D
NS = 8         # number of slots
ITERS = 3
EPS = 1e-8     # slot-attention eps
LN_EPS = 1e-5  # torch.nn.LayerNorm default eps
SCALE = float(KVQ) ** -0.5

assert FD == D, "vector-param packing below assumes feature_dim == dim"

_HI = lax.Precision.HIGHEST


def _dot(a, b):
    return jnp.dot(a, b, preferred_element_type=jnp.float32, precision=_HI)


def _dot_t(a, b):
    # a @ b.T without materializing the transpose.
    return lax.dot_general(
        a, b, (((1,), (1,)), ((), ())),
        preferred_element_type=jnp.float32, precision=_HI)


# ---------------------------------------------------------------------------
# Pallas kernel: the full SlotAttention forward (all batches, all iterations)
# in a single grid step.
# ---------------------------------------------------------------------------
def slot_attention_kernel(
    inputs_ref,    # (B, N, FD)
    slots_ref,     # (B, NS, D)
    vec_ref,       # (8, D): ln_in_g, ln_in_b, ln_s_g, ln_s_b, b_r, b_z, b_in, b_hn
    wkv_ref,       # (FD, 2*KVQ) = [Wk^T | Wv^T]
    wq_ref,        # (D, KVQ)    = Wq^T
    wi_ref,        # (KVQ, 3*D)  = [W_ir^T | W_iz^T | W_in^T]
    wh_ref,        # (D, 3*D)    = [W_hr^T | W_hz^T | W_hn^T]
    slots_out_ref, # (B, NS, D)
    attn_out_ref,  # (B, NS, N)
):
    # Whole batch in one invocation (B is tiny) -> no reshapes needed.
    x = jnp.concatenate([inputs_ref[b] for b in range(B)], axis=0)     # (B*N, FD)
    slots = jnp.concatenate([slots_ref[b] for b in range(B)], axis=0)  # (B*NS, D)

    # Hoisted (1, D) parameter rows (loaded once, outside the iteration loop).
    ln_in_g = vec_ref[0:1, :]
    ln_in_b = vec_ref[1:2, :]
    ln_s_g = vec_ref[2:3, :]
    ln_s_b = vec_ref[3:4, :]
    b_r = vec_ref[4:5, :]      # b_ir + b_hr (pre-folded)
    b_z = vec_ref[5:6, :]      # b_iz + b_hz (pre-folded)
    b_in = vec_ref[6:7, :]
    b_hn = vec_ref[7:8, :]

    wq = wq_ref[...]
    wi = wi_ref[...]
    wh = wh_ref[...]

    def layernorm(z, g, b):
        mu = jnp.mean(z, axis=-1, keepdims=True)
        var = jnp.mean((z - mu) ** 2, axis=-1, keepdims=True)
        return (z - mu) * lax.rsqrt(var + LN_EPS) * g + b

    # norm_input + fused to_k/to_v projection (shared across iterations).
    xn = layernorm(x, ln_in_g, ln_in_b)                # (B*N, FD)
    kv = _dot(xn, wkv_ref[...])                        # (B*N, 2*KVQ)
    k_list = [kv[b * N:(b + 1) * N, 0:KVQ] for b in range(B)]        # (N, KVQ)
    v_list = [kv[b * N:(b + 1) * N, KVQ:2 * KVQ] for b in range(B)]  # (N, KVQ)

    attn_last = [None] * B

    for _ in range(ITERS):                      # statically unrolled
        slots_prev = slots
        sn = layernorm(slots, ln_s_g, ln_s_b)   # (B*NS, D)
        q = _dot(sn, wq) * SCALE                # (B*NS, KVQ)

        upd_list = []
        for b in range(B):
            q_b = q[b * NS:(b + 1) * NS, :]               # (NS, KVQ)
            dots = _dot_t(q_b, k_list[b])                 # (NS, N)
            # softmax over slots (axis 0), per input token
            m = jnp.max(dots, axis=0, keepdims=True)
            e = jnp.exp(dots - m)
            attn_b = e / jnp.sum(e, axis=0, keepdims=True)
            attn_last[b] = attn_b
            # re-weight over inputs (weighted mean)
            attn_w = attn_b / (jnp.sum(attn_b, axis=-1, keepdims=True) + EPS)
            upd_list.append(_dot(attn_w, v_list[b]))      # (NS, KVQ)
        updates = jnp.concatenate(upd_list, axis=0)       # (B*NS, KVQ)

        # Fused GRUCell(updates, slots_prev): two wide matmuls + lane slices.
        gi = _dot(updates, wi)                            # (B*NS, 3*D)
        gh = _dot(slots_prev, wh)                         # (B*NS, 3*D)
        r = jax.nn.sigmoid(gi[:, 0:D] + gh[:, 0:D] + b_r)
        z = jax.nn.sigmoid(gi[:, D:2 * D] + gh[:, D:2 * D] + b_z)
        n_gate = jnp.tanh(gi[:, 2 * D:3 * D] + b_in
                          + r * (gh[:, 2 * D:3 * D] + b_hn))
        slots = (1.0 - z) * n_gate + z * slots_prev
        # ff_mlp = Identity

    for b in range(B):
        slots_out_ref[b] = slots[b * NS:(b + 1) * NS, :]
        # attn_before_reweighting.mean(dim=heads) == attn_before for n_heads==1
        attn_out_ref[b] = attn_last[b]


# ---------------------------------------------------------------------------
# Wrapper
# ---------------------------------------------------------------------------
def slot_attention_pallas(inputs, slots, packed):
    vecs, wkv, wq, wi, wh = packed

    def full(shape):
        return pl.BlockSpec(shape, lambda i, _s=len(shape): (0,) * _s)

    in_specs = [
        full((B, N, FD)),        # inputs
        full((B, NS, D)),        # slots
        full((8, D)),            # packed LayerNorm / bias vectors
        full((FD, 2 * KVQ)),     # [Wk^T | Wv^T]
        full((D, KVQ)),          # Wq^T
        full((KVQ, 3 * D)),      # [W_ir^T | W_iz^T | W_in^T]
        full((D, 3 * D)),        # [W_hr^T | W_hz^T | W_hn^T]
    ]
    out_specs = [
        full((B, NS, D)),
        full((B, NS, N)),
    ]
    out_shape = (
        jax.ShapeDtypeStruct((B, NS, D), jnp.float32),
        jax.ShapeDtypeStruct((B, NS, N), jnp.float32),
    )
    fn = pl.pallas_call(
        slot_attention_kernel,
        out_shape=out_shape,
        grid_spec=pltpu.PrefetchScalarGridSpec(
            num_scalar_prefetch=0,
            grid=(1,),                       # single step: whole problem in one go
            in_specs=in_specs,
            out_specs=out_specs,
        ),
        compiler_params=pltpu.CompilerParams(
            dimension_semantics=("arbitrary",)),
    )
    return fn(inputs, slots, vecs, wkv, wq, wi, wh)


# ---------------------------------------------------------------------------
# Pure-JAX reference (mirrors the PyTorch module exactly, n_heads = 1),
# operating on the raw (PyTorch-layout) parameters.
# ---------------------------------------------------------------------------
def slot_attention_ref(inputs, slots, raw):
    def layernorm(z, g, b):
        mu = jnp.mean(z, axis=-1, keepdims=True)
        var = jnp.mean((z - mu) ** 2, axis=-1, keepdims=True)
        return (z - mu) * lax.rsqrt(var + LN_EPS) * g + b

    mm = functools.partial(jnp.matmul, precision=_HI)

    Wq, Wk, Wv = raw["Wq"], raw["Wk"], raw["Wv"]
    W_ih, W_hh = raw["W_ih"], raw["W_hh"]
    b_ih, b_hh = raw["b_ih"], raw["b_hh"]
    W_ir, W_iz, W_in_ = W_ih[0:D], W_ih[D:2 * D], W_ih[2 * D:3 * D]
    W_hr, W_hz, W_hn = W_hh[0:D], W_hh[D:2 * D], W_hh[2 * D:3 * D]
    b_ir, b_iz, b_in_ = b_ih[0:D], b_ih[D:2 * D], b_ih[2 * D:3 * D]
    b_hr, b_hz, b_hn = b_hh[0:D], b_hh[D:2 * D], b_hh[2 * D:3 * D]

    xn = layernorm(inputs, raw["ln_in_g"], raw["ln_in_b"])
    k = mm(xn, Wk.T)                       # (B, N, KVQ)
    v = mm(xn, Wv.T)
    attn_before = None
    for _ in range(ITERS):
        slots_prev = slots
        sn = layernorm(slots, raw["ln_s_g"], raw["ln_s_b"])
        q = mm(sn, Wq.T) * SCALE                                # (B, NS, KVQ)
        dots = jnp.einsum('bid,bjd->bij', q, k, precision=_HI)  # (B, NS, N)
        attn_before = jax.nn.softmax(dots, axis=1)
        attn_w = attn_before / (jnp.sum(attn_before, -1, keepdims=True) + EPS)
        updates = jnp.einsum('bjd,bij->bid', v, attn_w, precision=_HI)
        r = jax.nn.sigmoid(mm(updates, W_ir.T) + b_ir + mm(slots_prev, W_hr.T) + b_hr)
        z = jax.nn.sigmoid(mm(updates, W_iz.T) + b_iz + mm(slots_prev, W_hz.T) + b_hz)
        n_gate = jnp.tanh(mm(updates, W_in_.T) + b_in_
                          + r * (mm(slots_prev, W_hn.T) + b_hn))
        slots = (1.0 - z) * n_gate + z * slots_prev
    return slots, attn_before


# ---------------------------------------------------------------------------
# Deterministic parameter init + packing for the kernel
# ---------------------------------------------------------------------------
def make_raw_params():
    key = jax.random.PRNGKey(0)
    ks = jax.random.split(key, 12)
    f32 = jnp.float32
    raw = dict(
        # PyTorch-layout weights (out_features, in_features)
        Wq=0.1 * jax.random.normal(ks[0], (KVQ, D), f32),
        Wk=0.1 * jax.random.normal(ks[1], (KVQ, FD), f32),
        Wv=0.1 * jax.random.normal(ks[2], (KVQ, FD), f32),
        W_ih=0.1 * jax.random.normal(ks[3], (3 * D, KVQ), f32),   # [r; z; n]
        W_hh=0.1 * jax.random.normal(ks[4], (3 * D, D), f32),
        b_ih=0.1 * jax.random.normal(ks[5], (3 * D,), f32),
        b_hh=0.1 * jax.random.normal(ks[6], (3 * D,), f32),
        ln_in_g=1.0 + 0.1 * jax.random.normal(ks[7], (FD,), f32),
        ln_in_b=0.1 * jax.random.normal(ks[8], (FD,), f32),
        ln_s_g=1.0 + 0.1 * jax.random.normal(ks[9], (D,), f32),
        ln_s_b=0.1 * jax.random.normal(ks[10], (D,), f32),
    )
    return raw, ks[11]


def pack_params(raw):
    b_ih, b_hh = raw["b_ih"], raw["b_hh"]
    vecs = jnp.stack([
        raw["ln_in_g"], raw["ln_in_b"],
        raw["ln_s_g"], raw["ln_s_b"],
        b_ih[0:D] + b_hh[0:D],          # b_r  = b_ir + b_hr
        b_ih[D:2 * D] + b_hh[D:2 * D],  # b_z  = b_iz + b_hz
        b_ih[2 * D:3 * D],              # b_in
        b_hh[2 * D:3 * D],              # b_hn
    ], axis=0)                                            # (8, D)
    wkv = jnp.concatenate([raw["Wk"].T, raw["Wv"].T], axis=1)   # (FD, 2*KVQ)
    wq = raw["Wq"].T                                            # (D, KVQ)
    wi = raw["W_ih"].T                                          # (KVQ, 3*D)
    wh = raw["W_hh"].T                                          # (D, 3*D)
    return vecs, wkv, wq, wi, wh


if __name__ == "__main__":
    raw, kdata = make_raw_params()
    packed = pack_params(raw)
    k1, k2 = jax.random.split(kdata)
    inputs = jax.random.normal(k1, (B, N, FD), jnp.float32)
    slots0 = jax.random.normal(k2, (B, NS, D), jnp.float32)

    slots_out, attn_out = slot_attention_pallas(inputs, slots0, packed)
    jax.block_until_ready((slots_out, attn_out))

    slots_ref, attn_ref = slot_attention_ref(inputs, slots0, raw)
    np.testing.assert_allclose(np.asarray(slots_out), np.asarray(slots_ref),
                               atol=1e-4, rtol=1e-4)
    np.testing.assert_allclose(np.asarray(attn_out), np.asarray(attn_ref),
                               atol=1e-4, rtol=1e-4)
    print("KERNEL_OK")
</pallas_src>

<mosaic_0001>
module attributes {stable_mosaic.version = 11 : i64} {
  func.func @slot_attention_kernel(%arg0: i32, %arg1: memref<2x16x32xf32, #tpu.memory_space<vmem>>, %arg2: memref<2x8x32xf32, #tpu.memory_space<vmem>>, %arg3: memref<8x32xf32, #tpu.memory_space<vmem>>, %arg4: memref<32x64xf32, #tpu.memory_space<vmem>>, %arg5: memref<32x32xf32, #tpu.memory_space<vmem>>, %arg6: memref<32x96xf32, #tpu.memory_space<vmem>>, %arg7: memref<32x96xf32, #tpu.memory_space<vmem>>, %arg8: memref<2x8x32xf32, #tpu.memory_space<vmem>>, %arg9: memref<2x8x16xf32, #tpu.memory_space<vmem>>) attributes {dimension_semantics = [#tpu.dimension_semantics<arbitrary>], iteration_bounds = array<i64: 1>, scalar_prefetch = 0 : i64, scratch_operands = 0 : i64, tpu.core_type = #tpu.core_type<tc>, window_params = [{pipeline_mode = #tpu.pipeline_mode<synchronous>, transform_indices = @transform_0, window_bounds = array<i64: 2, 16, 32>}, {pipeline_mode = #tpu.pipeline_mode<synchronous>, transform_indices = @transform_1, window_bounds = array<i64: 2, 8, 32>}, {pipeline_mode = #tpu.pipeline_mode<synchronous>, transform_indices = @transform_2, window_bounds = array<i64: 8, 32>}, {pipeline_mode = #tpu.pipeline_mode<synchronous>, transform_indices = @transform_3, window_bounds = array<i64: 32, 64>}, {pipeline_mode = #tpu.pipeline_mode<synchronous>, transform_indices = @transform_4, window_bounds = array<i64: 32, 32>}, {pipeline_mode = #tpu.pipeline_mode<synchronous>, transform_indices = @transform_5, window_bounds = array<i64: 32, 96>}, {pipeline_mode = #tpu.pipeline_mode<synchronous>, transform_indices = @transform_6, window_bounds = array<i64: 32, 96>}, {pipeline_mode = #tpu.pipeline_mode<synchronous>, transform_indices = @transform_7, window_bounds = array<i64: 2, 8, 32>}, {pipeline_mode = #tpu.pipeline_mode<synchronous>, transform_indices = @transform_8, window_bounds = array<i64: 2, 8, 16>}]} {
    %c0 = arith.constant 0 : index
    %c0_0 = arith.constant 0 : index
    %c0_1 = arith.constant 0 : index
    %0 = vector.load %arg1[%c0, %c0_0, %c0_1] : memref<2x16x32xf32, #tpu.memory_space<vmem>>, vector<1x16x32xf32>
    %1 = vector.shape_cast %0 : vector<1x16x32xf32> to vector<16x32xf32>
    %c1 = arith.constant 1 : index
    %c0_2 = arith.constant 0 : index
    %c0_3 = arith.constant 0 : index
    %2 = vector.load %arg1[%c1, %c0_2, %c0_3] : memref<2x16x32xf32, #tpu.memory_space<vmem>>, vector<1x16x32xf32>
    %3 = vector.shape_cast %2 : vector<1x16x32xf32> to vector<16x32xf32>
    %4 = tpu.concatenate %1, %3 in 0 : vector<16x32xf32>, vector<16x32xf32> -> vector<32x32xf32>
    %c0_4 = arith.constant 0 : index
    %c0_5 = arith.constant 0 : index
    %c0_6 = arith.constant 0 : index
    %5 = vector.load %arg2[%c0_4, %c0_5, %c0_6] : memref<2x8x32xf32, #tpu.memory_space<vmem>>, vector<1x8x32xf32>
    %6 = vector.shape_cast %5 : vector<1x8x32xf32> to vector<8x32xf32>
    %c1_7 = arith.constant 1 : index
    %c0_8 = arith.constant 0 : index
    %c0_9 = arith.constant 0 : index
    %7 = vector.load %arg2[%c1_7, %c0_8, %c0_9] : memref<2x8x32xf32, #tpu.memory_space<vmem>>, vector<1x8x32xf32>
    %8 = vector.shape_cast %7 : vector<1x8x32xf32> to vector<8x32xf32>
    %9 = tpu.concatenate %6, %8 in 0 : vector<8x32xf32>, vector<8x32xf32> -> vector<16x32xf32>
    %c0_10 = arith.constant 0 : index
    %c0_11 = arith.constant 0 : index
    %10 = vector.load %arg3[%c0_10, %c0_11] : memref<8x32xf32, #tpu.memory_space<vmem>>, vector<1x32xf32>
    %c1_12 = arith.constant 1 : index
    %c0_13 = arith.constant 0 : index
    %11 = vector.load %arg3[%c1_12, %c0_13] : memref<8x32xf32, #tpu.memory_space<vmem>>, vector<1x32xf32>
    %c2 = arith.constant 2 : index
    %c0_14 = arith.constant 0 : index
    %12 = vector.load %arg3[%c2, %c0_14] : memref<8x32xf32, #tpu.memory_space<vmem>>, vector<1x32xf32>
    %c3 = arith.constant 3 : index
    %c0_15 = arith.constant 0 : index
    %13 = vector.load %arg3[%c3, %c0_15] : memref<8x32xf32, #tpu.memory_space<vmem>>, vector<1x32xf32>
    %c4 = arith.constant 4 : index
    %c0_16 = arith.constant 0 : index
    %14 = vector.load %arg3[%c4, %c0_16] : memref<8x32xf32, #tpu.memory_space<vmem>>, vector<1x32xf32>
    %c5 = arith.constant 5 : index
    %c0_17 = arith.constant 0 : index
    %15 = vector.load %arg3[%c5, %c0_17] : memref<8x32xf32, #tpu.memory_space<vmem>>, vector<1x32xf32>
    %c6 = arith.constant 6 : index
    %c0_18 = arith.constant 0 : index
    %16 = vector.load %arg3[%c6, %c0_18] : memref<8x32xf32, #tpu.memory_space<vmem>>, vector<1x32xf32>
    %c7 = arith.constant 7 : index
    %c0_19 = arith.constant 0 : index
    %17 = vector.load %arg3[%c7, %c0_19] : memref<8x32xf32, #tpu.memory_space<vmem>>, vector<1x32xf32>
    %c0_20 = arith.constant 0 : index
    %c0_21 = arith.constant 0 : index
    %18 = vector.load %arg5[%c0_20, %c0_21] : memref<32x32xf32, #tpu.memory_space<vmem>>, vector<32x32xf32>
    %c0_22 = arith.constant 0 : index
    %c0_23 = arith.constant 0 : index
    %19 = vector.load %arg6[%c0_22, %c0_23] : memref<32x96xf32, #tpu.memory_space<vmem>>, vector<32x96xf32>
    %c0_24 = arith.constant 0 : index
    %c0_25 = arith.constant 0 : index
    %20 = vector.load %arg7[%c0_24, %c0_25] : memref<32x96xf32, #tpu.memory_space<vmem>>, vector<32x96xf32>
    %cst = arith.constant dense<0.000000e+00> : vector<32xf32>
    %21 = vector.multi_reduction <add>, %4, %cst [1] : vector<32x32xf32> to vector<32xf32>
    %22 = vector.shape_cast %21 : vector<32xf32> to vector<32x1xf32>
    %cst_26 = arith.constant 3.200000e+01 : f32
    %23 = vector.broadcast %cst_26 : f32 to vector<32x1xf32>
    %24 = arith.divf %22, %23 : vector<32x1xf32>
    %25 = vector.broadcast %24 : vector<32x1xf32> to vector<32x32xf32>
    %26 = arith.subf %4, %25 : vector<32x32xf32>
    %27 = arith.mulf %26, %26 : vector<32x32xf32>
    %cst_27 = arith.constant dense<0.000000e+00> : vector<32xf32>
    %28 = vector.multi_reduction <add>, %27, %cst_27 [1] : vector<32x32xf32> to vector<32xf32>
    %29 = vector.shape_cast %28 : vector<32xf32> to vector<32x1xf32>
    %cst_28 = arith.constant 3.200000e+01 : f32
    %30 = vector.broadcast %cst_28 : f32 to vector<32x1xf32>
    %31 = arith.divf %29, %30 : vector<32x1xf32>
    %32 = vector.broadcast %24 : vector<32x1xf32> to vector<32x32xf32>
    %33 = arith.subf %4, %32 : vector<32x32xf32>
    %cst_29 = arith.constant 9.99999974E-6 : f32
    %34 = vector.broadcast %cst_29 : f32 to vector<32x1xf32>
    %35 = arith.addf %31, %34 : vector<32x1xf32>
    %36 = math.rsqrt %35 : vector<32x1xf32>
    %37 = vector.broadcast %36 : vector<32x1xf32> to vector<32x32xf32>
    %38 = arith.mulf %33, %37 : vector<32x32xf32>
    %39 = vector.broadcast %10 : vector<1x32xf32> to vector<32x32xf32>
    %40 = arith.mulf %38, %39 : vector<32x32xf32>
    %41 = vector.broadcast %11 : vector<1x32xf32> to vector<32x32xf32>
    %42 = arith.addf %40, %41 : vector<32x32xf32>
    %c0_30 = arith.constant 0 : index
    %c0_31 = arith.constant 0 : index
    %43 = vector.load %arg4[%c0_30, %c0_31] : memref<32x64xf32, #tpu.memory_space<vmem>>, vector<32x64xf32>
    %cst_32 = arith.constant dense<0.000000e+00> : vector<32x64xf32>
    %44 = tpu.matmul %42, %43, %cst_32 {dimension_numbers = #tpu.dot_dimension_numbers<[1], [0], [0], [1], [0, 0, 1, 1], [], []>, precision = #tpu.contract_precision<fp32>} : vector<32x32xf32>, vector<32x64xf32>, vector<32x64xf32> -> vector<32x64xf32>
    %45 = vector.extract_strided_slice %44 {offsets = [0, 0], sizes = [16, 32], strides = [1, 1]} : vector<32x64xf32> to vector<16x32xf32>
    %46 = vector.extract_strided_slice %44 {offsets = [16, 0], sizes = [16, 32], strides = [1, 1]} : vector<32x64xf32> to vector<16x32xf32>
    %47 = vector.extract_strided_slice %44 {offsets = [0, 32], sizes = [16, 32], strides = [1, 1]} : vector<32x64xf32> to vector<16x32xf32>
    %48 = vector.extract_strided_slice %44 {offsets = [16, 32], sizes = [16, 32], strides = [1, 1]} : vector<32x64xf32> to vector<16x32xf32>
    %cst_33 = arith.constant dense<0.000000e+00> : vector<16xf32>
    %49 = vector.multi_reduction <add>, %9, %cst_33 [1] : vector<16x32xf32> to vector<16xf32>
    %50 = vector.shape_cast %49 : vector<16xf32> to vector<16x1xf32>
    %cst_34 = arith.constant 3.200000e+01 : f32
    %51 = vector.broadcast %cst_34 : f32 to vector<16x1xf32>
    %52 = arith.divf %50, %51 : vector<16x1xf32>
    %53 = vector.broadcast %52 : vector<16x1xf32> to vector<16x32xf32>
    %54 = arith.subf %9, %53 : vector<16x32xf32>
    %55 = arith.mulf %54, %54 : vector<16x32xf32>
    %cst_35 = arith.constant dense<0.000000e+00> : vector<16xf32>
    %56 = vector.multi_reduction <add>, %55, %cst_35 [1] : vector<16x32xf32> to vector<16xf32>
    %57 = vector.shape_cast %56 : vector<16xf32> to vector<16x1xf32>
    %cst_36 = arith.constant 3.200000e+01 : f32
    %58 = vector.broadcast %cst_36 : f32 to vector<16x1xf32>
    %59 = arith.divf %57, %58 : vector<16x1xf32>
    %60 = vector.broadcast %52 : vector<16x1xf32> to vector<16x32xf32>
    %61 = arith.subf %9, %60 : vector<16x32xf32>
    %cst_37 = arith.constant 9.99999974E-6 : f32
    %62 = vector.broadcast %cst_37 : f32 to vector<16x1xf32>
    %63 = arith.addf %59, %62 : vector<16x1xf32>
    %64 = math.rsqrt %63 : vector<16x1xf32>
    %65 = vector.broadcast %64 : vector<16x1xf32> to vector<16x32xf32>
    %66 = arith.mulf %61, %65 : vector<16x32xf32>
    %67 = vector.broadcast %12 : vector<1x32xf32> to vector<16x32xf32>
    %68 = arith.mulf %66, %67 : vector<16x32xf32>
    %69 = vector.broadcast %13 : vector<1x32xf32> to vector<16x32xf32>
    %70 = arith.addf %68, %69 : vector<16x32xf32>
    %cst_38 = arith.constant dense<0.000000e+00> : vector<16x32xf32>
    %71 = tpu.matmul %70, %18, %cst_38 {dimension_numbers = #tpu.dot_dimension_numbers<[1], [0], [0], [1], [0, 0, 1, 1], [], []>, precision = #tpu.contract_precision<fp32>} : vector<16x32xf32>, vector<32x32xf32>, vector<16x32xf32> -> vector<16x32xf32>
    %cst_39 = arith.constant 0.176776692 : f32
    %72 = vector.broadcast %cst_39 : f32 to vector<16x32xf32>
    %73 = arith.mulf %71, %72 : vector<16x32xf32>
    %74 = vector.extract_strided_slice %73 {offsets = [0, 0], sizes = [8, 32], strides = [1, 1]} : vector<16x32xf32> to vector<8x32xf32>
    %cst_40 = arith.constant dense<0.000000e+00> : vector<8x16xf32>
    %75 = tpu.matmul %74, %45, %cst_40 {dimension_numbers = #tpu.dot_dimension_numbers<[1], [1], [0], [0], [0, 0, 1, 0], [], []>, precision = #tpu.contract_precision<fp32>} : vector<8x32xf32>, vector<16x32xf32>, vector<8x16xf32> -> vector<8x16xf32>
    %cst_41 = arith.constant dense<0xFF800000> : vector<16xf32>
    %76 = vector.multi_reduction <maximumf>, %75, %cst_41 [0] : vector<8x16xf32> to vector<16xf32>
    %77 = vector.shape_cast %76 : vector<16xf32> to vector<1x16xf32>
    %78 = vector.broadcast %77 : vector<1x16xf32> to vector<8x16xf32>
    %79 = arith.subf %75, %78 : vector<8x16xf32>
    %80 = math.exp %79 : vector<8x16xf32>
    %cst_42 = arith.constant dense<0.000000e+00> : vector<16xf32>
    %81 = vector.multi_reduction <add>, %80, %cst_42 [0] : vector<8x16xf32> to vector<16xf32>
    %82 = vector.shape_cast %81 : vector<16xf32> to vector<1x16xf32>
    %83 = vector.broadcast %82 : vector<1x16xf32> to vector<8x16xf32>
    %84 = arith.divf %80, %83 : vector<8x16xf32>
    %cst_43 = arith.constant dense<0.000000e+00> : vector<8xf32>
    %85 = vector.multi_reduction <add>, %84, %cst_43 [1] : vector<8x16xf32> to vector<8xf32>
    %86 = vector.shape_cast %85 : vector<8xf32> to vector<8x1xf32>
    %cst_44 = arith.constant 9.99999993E-9 : f32
    %87 = vector.broadcast %cst_44 : f32 to vector<8x1xf32>
    %88 = arith.addf %86, %87 : vector<8x1xf32>
    %89 = vector.broadcast %88 : vector<8x1xf32> to vector<8x16xf32>
    %90 = arith.divf %84, %89 : vector<8x16xf32>
    %cst_45 = arith.constant dense<0.000000e+00> : vector<8x32xf32>
    %91 = tpu.matmul %90, %47, %cst_45 {dimension_numbers = #tpu.dot_dimension_numbers<[1], [0], [0], [1], [0, 0, 1, 1], [], []>, precision = #tpu.contract_precision<fp32>} : vector<8x16xf32>, vector<16x32xf32>, vector<8x32xf32> -> vector<8x32xf32>
    %92 = vector.extract_strided_slice %73 {offsets = [8, 0], sizes = [8, 32], strides = [1, 1]} : vector<16x32xf32> to vector<8x32xf32>
    %cst_46 = arith.constant dense<0.000000e+00> : vector<8x16xf32>
    %93 = tpu.matmul %92, %46, %cst_46 {dimension_numbers = #tpu.dot_dimension_numbers<[1], [1], [0], [0], [0, 0, 1, 0], [], []>, precision = #tpu.contract_precision<fp32>} : vector<8x32xf32>, vector<16x32xf32>, vector<8x16xf32> -> vector<8x16xf32>
    %cst_47 = arith.constant dense<0xFF800000> : vector<16xf32>
    %94 = vector.multi_reduction <maximumf>, %93, %cst_47 [0] : vector<8x16xf32> to vector<16xf32>
    %95 = vector.shape_cast %94 : vector<16xf32> to vector<1x16xf32>
    %96 = vector.broadcast %95 : vector<1x16xf32> to vector<8x16xf32>
    %97 = arith.subf %93, %96 : vector<8x16xf32>
    %98 = math.exp %97 : vector<8x16xf32>
    %cst_48 = arith.constant dense<0.000000e+00> : vector<16xf32>
    %99 = vector.multi_reduction <add>, %98, %cst_48 [0] : vector<8x16xf32> to vector<16xf32>
    %100 = vector.shape_cast %99 : vector<16xf32> to vector<1x16xf32>
    %101 = vector.broadcast %100 : vector<1x16xf32> to vector<8x16xf32>
    %102 = arith.divf %98, %101 : vector<8x16xf32>
    %cst_49 = arith.constant dense<0.000000e+00> : vector<8xf32>
    %103 = vector.multi_reduction <add>, %102, %cst_49 [1] : vector<8x16xf32> to vector<8xf32>
    %104 = vector.shape_cast %103 : vector<8xf32> to vector<8x1xf32>
    %cst_50 = arith.constant 9.99999993E-9 : f32
    %105 = vector.broadcast %cst_50 : f32 to vector<8x1xf32>
    %106 = arith.addf %104, %105 : vector<8x1xf32>
    %107 = vector.broadcast %106 : vector<8x1xf32> to vector<8x16xf32>
    %108 = arith.divf %102, %107 : vector<8x16xf32>
    %cst_51 = arith.constant dense<0.000000e+00> : vector<8x32xf32>
    %109 = tpu.matmul %108, %48, %cst_51 {dimension_numbers = #tpu.dot_dimension_numbers<[1], [0], [0], [1], [0, 0, 1, 1], [], []>, precision = #tpu.contract_precision<fp32>} : vector<8x16xf32>, vector<16x32xf32>, vector<8x32xf32> -> vector<8x32xf32>
    %110 = tpu.concatenate %91, %109 in 0 : vector<8x32xf32>, vector<8x32xf32> -> vector<16x32xf32>
    %cst_52 = arith.constant dense<0.000000e+00> : vector<16x96xf32>
    %111 = tpu.matmul %110, %19, %cst_52 {dimension_numbers = #tpu.dot_dimension_numbers<[1], [0], [0], [1], [0, 0, 1, 1], [], []>, precision = #tpu.contract_precision<fp32>} : vector<16x32xf32>, vector<32x96xf32>, vector<16x96xf32> -> vector<16x96xf32>
    %cst_53 = arith.constant dense<0.000000e+00> : vector<16x96xf32>
    %112 = tpu.matmul %9, %20, %cst_53 {dimension_numbers = #tpu.dot_dimension_numbers<[1], [0], [0], [1], [0, 0, 1, 1], [], []>, precision = #tpu.contract_precision<fp32>} : vector<16x32xf32>, vector<32x96xf32>, vector<16x96xf32> -> vector<16x96xf32>
    %113 = vector.extract_strided_slice %111 {offsets = [0, 0], sizes = [16, 32], strides = [1, 1]} : vector<16x96xf32> to vector<16x32xf32>
    %114 = vector.extract_strided_slice %112 {offsets = [0, 0], sizes = [16, 32], strides = [1, 1]} : vector<16x96xf32> to vector<16x32xf32>
    %115 = arith.addf %113, %114 : vector<16x32xf32>
    %116 = vector.broadcast %14 : vector<1x32xf32> to vector<16x32xf32>
    %117 = arith.addf %115, %116 : vector<16x32xf32>
    %118 = arith.negf %117 : vector<16x32xf32>
    %119 = math.exp %118 : vector<16x32xf32>
    %cst_54 = arith.constant 1.000000e+00 : f32
    %120 = vector.broadcast %cst_54 : f32 to vector<16x32xf32>
    %121 = arith.addf %120, %119 : vector<16x32xf32>
    %122 = arith.divf %120, %121 : vector<16x32xf32>
    %123 = vector.extract_strided_slice %111 {offsets = [0, 32], sizes = [16, 32], strides = [1, 1]} : vector<16x96xf32> to vector<16x32xf32>
    %124 = vector.extract_strided_slice %112 {offsets = [0, 32], sizes = [16, 32], strides = [1, 1]} : vector<16x96xf32> to vector<16x32xf32>
    %125 = arith.addf %123, %124 : vector<16x32xf32>
    %126 = vector.broadcast %15 : vector<1x32xf32> to vector<16x32xf32>
    %127 = arith.addf %125, %126 : vector<16x32xf32>
    %128 = arith.negf %127 : vector<16x32xf32>
    %129 = math.exp %128 : vector<16x32xf32>
    %cst_55 = arith.constant 1.000000e+00 : f32
    %130 = vector.broadcast %cst_55 : f32 to vector<16x32xf32>
    %131 = arith.addf %130, %129 : vector<16x32xf32>
    %132 = arith.divf %130, %131 : vector<16x32xf32>
    %133 = vector.extract_strided_slice %111 {offsets = [0, 64], sizes = [16, 32], strides = [1, 1]} : vector<16x96xf32> to vector<16x32xf32>
    %134 = vector.broadcast %16 : vector<1x32xf32> to vector<16x32xf32>
    %135 = arith.addf %133, %134 : vector<16x32xf32>
    %136 = vector.extract_strided_slice %112 {offsets = [0, 64], sizes = [16, 32], strides = [1, 1]} : vector<16x96xf32> to vector<16x32xf32>
    %137 = vector.broadcast %17 : vector<1x32xf32> to vector<16x32xf32>
    %138 = arith.addf %136, %137 : vector<16x32xf32>
    %139 = arith.mulf %122, %138 : vector<16x32xf32>
    %140 = arith.addf %135, %139 : vector<16x32xf32>
    %141 = math.tanh %140 : vector<16x32xf32>
    %cst_56 = arith.constant 1.000000e+00 : f32
    %142 = vector.broadcast %cst_56 : f32 to vector<16x32xf32>
    %143 = arith.subf %142, %132 : vector<16x32xf32>
    %144 = arith.mulf %143, %141 : vector<16x32xf32>
    %145 = arith.mulf %132, %9 : vector<16x32xf32>
    %146 = arith.addf %144, %145 : vector<16x32xf32>
    %cst_57 = arith.constant dense<0.000000e+00> : vector<16xf32>
    %147 = vector.multi_reduction <add>, %146, %cst_57 [1] : vector<16x32xf32> to vector<16xf32>
    %148 = vector.shape_cast %147 : vector<16xf32> to vector<16x1xf32>
    %cst_58 = arith.constant 3.200000e+01 : f32
    %149 = vector.broadcast %cst_58 : f32 to vector<16x1xf32>
    %150 = arith.divf %148, %149 : vector<16x1xf32>
    %151 = vector.broadcast %150 : vector<16x1xf32> to vector<16x32xf32>
    %152 = arith.subf %146, %151 : vector<16x32xf32>
    %153 = arith.mulf %152, %152 : vector<16x32xf32>
    %cst_59 = arith.constant dense<0.000000e+00> : vector<16xf32>
    %154 = vector.multi_reduction <add>, %153, %cst_59 [1] : vector<16x32xf32> to vector<16xf32>
    %155 = vector.shape_cast %154 : vector<16xf32> to vector<16x1xf32>
    %cst_60 = arith.constant 3.200000e+01 : f32
    %156 = vector.broadcast %cst_60 : f32 to vector<16x1xf32>
    %157 = arith.divf %155, %156 : vector<16x1xf32>
    %158 = vector.broadcast %150 : vector<16x1xf32> to vector<16x32xf32>
    %159 = arith.subf %146, %158 : vector<16x32xf32>
    %cst_61 = arith.constant 9.99999974E-6 : f32
    %160 = vector.broadcast %cst_61 : f32 to vector<16x1xf32>
    %161 = arith.addf %157, %160 : vector<16x1xf32>
    %162 = math.rsqrt %161 : vector<16x1xf32>
    %163 = vector.broadcast %162 : vector<16x1xf32> to vector<16x32xf32>
    %164 = arith.mulf %159, %163 : vector<16x32xf32>
    %165 = vector.broadcast %12 : vector<1x32xf32> to vector<16x32xf32>
    %166 = arith.mulf %164, %165 : vector<16x32xf32>
    %167 = vector.broadcast %13 : vector<1x32xf32> to vector<16x32xf32>
    %168 = arith.addf %166, %167 : vector<16x32xf32>
    %cst_62 = arith.constant dense<0.000000e+00> : vector<16x32xf32>
    %169 = tpu.matmul %168, %18, %cst_62 {dimension_numbers = #tpu.dot_dimension_numbers<[1], [0], [0], [1], [0, 0, 1, 1], [], []>, precision = #tpu.contract_precision<fp32>} : vector<16x32xf32>, vector<32x32xf32>, vector<16x32xf32> -> vector<16x32xf32>
    %cst_63 = arith.constant 0.176776692 : f32
    %170 = vector.broadcast %cst_63 : f32 to vector<16x32xf32>
    %171 = arith.mulf %169, %170 : vector<16x32xf32>
    %172 = vector.extract_strided_slice %171 {offsets = [0, 0], sizes = [8, 32], strides = [1, 1]} : vector<16x32xf32> to vector<8x32xf32>
    %cst_64 = arith.constant dense<0.000000e+00> : vector<8x16xf32>
    %173 = tpu.matmul %172, %45, %cst_64 {dimension_numbers = #tpu.dot_dimension_numbers<[1], [1], [0], [0], [0, 0, 1, 0], [], []>, precision = #tpu.contract_precision<fp32>} : vector<8x32xf32>, vector<16x32xf32>, vector<8x16xf32> -> vector<8x16xf32>
    %cst_65 = arith.constant dense<0xFF800000> : vector<16xf32>
    %174 = vector.multi_reduction <maximumf>, %173, %cst_65 [0] : vector<8x16xf32> to vector<16xf32>
    %175 = vector.shape_cast %174 : vector<16xf32> to vector<1x16xf32>
    %176 = vector.broadcast %175 : vector<1x16xf32> to vector<8x16xf32>
    %177 = arith.subf %173, %176 : vector<8x16xf32>
    %178 = math.exp %177 : vector<8x16xf32>
    %cst_66 = arith.constant dense<0.000000e+00> : vector<16xf32>
    %179 = vector.multi_reduction <add>, %178, %cst_66 [0] : vector<8x16xf32> to vector<16xf32>
    %180 = vector.shape_cast %179 : vector<16xf32> to vector<1x16xf32>
    %181 = vector.broadcast %180 : vector<1x16xf32> to vector<8x16xf32>
    %182 = arith.divf %178, %181 : vector<8x16xf32>
    %cst_67 = arith.constant dense<0.000000e+00> : vector<8xf32>
    %183 = vector.multi_reduction <add>, %182, %cst_67 [1] : vector<8x16xf32> to vector<8xf32>
    %184 = vector.shape_cast %183 : vector<8xf32> to vector<8x1xf32>
    %cst_68 = arith.constant 9.99999993E-9 : f32
    %185 = vector.broadcast %cst_68 : f32 to vector<8x1xf32>
    %186 = arith.addf %184, %185 : vector<8x1xf32>
    %187 = vector.broadcast %186 : vector<8x1xf32> to vector<8x16xf32>
    %188 = arith.divf %182, %187 : vector<8x16xf32>
    %cst_69 = arith.constant dense<0.000000e+00> : vector<8x32xf32>
    %189 = tpu.matmul %188, %47, %cst_69 {dimension_numbers = #tpu.dot_dimension_numbers<[1], [0], [0], [1], [0, 0, 1, 1], [], []>, precision = #tpu.contract_precision<fp32>} : vector<8x16xf32>, vector<16x32xf32>, vector<8x32xf32> -> vector<8x32xf32>
    %190 = vector.extract_strided_slice %171 {offsets = [8, 0], sizes = [8, 32], strides = [1, 1]} : vector<16x32xf32> to vector<8x32xf32>
    %cst_70 = arith.constant dense<0.000000e+00> : vector<8x16xf32>
    %191 = tpu.matmul %190, %46, %cst_70 {dimension_numbers = #tpu.dot_dimension_numbers<[1], [1], [0], [0], [0, 0, 1, 0], [], []>, precision = #tpu.contract_precision<fp32>} : vector<8x32xf32>, vector<16x32xf32>, vector<8x16xf32> -> vector<8x16xf32>
    %cst_71 = arith.constant dense<0xFF800000> : vector<16xf32>
    %192 = vector.multi_reduction <maximumf>, %191, %cst_71 [0] : vector<8x16xf32> to vector<16xf32>
    %193 = vector.shape_cast %192 : vector<16xf32> to vector<1x16xf32>
    %194 = vector.broadcast %193 : vector<1x16xf32> to vector<8x16xf32>
    %195 = arith.subf %191, %194 : vector<8x16xf32>
    %196 = math.exp %195 : vector<8x16xf32>
    %cst_72 = arith.constant dense<0.000000e+00> : vector<16xf32>
    %197 = vector.multi_reduction <add>, %196, %cst_72 [0] : vector<8x16xf32> to vector<16xf32>
    %198 = vector.shape_cast %197 : vector<16xf32> to vector<1x16xf32>
    %199 = vector.broadcast %198 : vector<1x16xf32> to vector<8x16xf32>
    %200 = arith.divf %196, %199 : vector<8x16xf32>
    %cst_73 = arith.constant dense<0.000000e+00> : vector<8xf32>
    %201 = vector.multi_reduction <add>, %200, %cst_73 [1] : vector<8x16xf32> to vector<8xf32>
    %202 = vector.shape_cast %201 : vector<8xf32> to vector<8x1xf32>
    %cst_74 = arith.constant 9.99999993E-9 : f32
    %203 = vector.broadcast %cst_74 : f32 to vector<8x1xf32>
    %204 = arith.addf %202, %203 : vector<8x1xf32>
    %205 = vector.broadcast %204 : vector<8x1xf32> to vector<8x16xf32>
    %206 = arith.divf %200, %205 : vector<8x16xf32>
    %cst_75 = arith.constant dense<0.000000e+00> : vector<8x32xf32>
    %207 = tpu.matmul %206, %48, %cst_75 {dimension_numbers = #tpu.dot_dimension_numbers<[1], [0], [0], [1], [0, 0, 1, 1], [], []>, precision = #tpu.contract_precision<fp32>} : vector<8x16xf32>, vector<16x32xf32>, vector<8x32xf32> -> vector<8x32xf32>
    %208 = tpu.concatenate %189, %207 in 0 : vector<8x32xf32>, vector<8x32xf32> -> vector<16x32xf32>
    %cst_76 = arith.constant dense<0.000000e+00> : vector<16x96xf32>
    %209 = tpu.matmul %208, %19, %cst_76 {dimension_numbers = #tpu.dot_dimension_numbers<[1], [0], [0], [1], [0, 0, 1, 1], [], []>, precision = #tpu.contract_precision<fp32>} : vector<16x32xf32>, vector<32x96xf32>, vector<16x96xf32> -> vector<16x96xf32>
    %cst_77 = arith.constant dense<0.000000e+00> : vector<16x96xf32>
    %210 = tpu.matmul %146, %20, %cst_77 {dimension_numbers = #tpu.dot_dimension_numbers<[1], [0], [0], [1], [0, 0, 1, 1], [], []>, precision = #tpu.contract_precision<fp32>} : vector<16x32xf32>, vector<32x96xf32>, vector<16x96xf32> -> vector<16x96xf32>
    %211 = vector.extract_strided_slice %209 {offsets = [0, 0], sizes = [16, 32], strides = [1, 1]} : vector<16x96xf32> to vector<16x32xf32>
    %212 = vector.extract_strided_slice %210 {offsets = [0, 0], sizes = [16, 32], strides = [1, 1]} : vector<16x96xf32> to vector<16x32xf32>
    %213 = arith.addf %211, %212 : vector<16x32xf32>
    %214 = vector.broadcast %14 : vector<1x32xf32> to vector<16x32xf32>
    %215 = arith.addf %213, %214 : vector<16x32xf32>
    %216 = arith.negf %215 : vector<16x32xf32>
    %217 = math.exp %216 : vector<16x32xf32>
    %cst_78 = arith.constant 1.000000e+00 : f32
    %218 = vector.broadcast %cst_78 : f32 to vector<16x32xf32>
    %219 = arith.addf %218, %217 : vector<16x32xf32>
    %220 = arith.divf %218, %219 : vector<16x32xf32>
    %221 = vector.extract_strided_slice %209 {offsets = [0, 32], sizes = [16, 32], strides = [1, 1]} : vector<16x96xf32> to vector<16x32xf32>
    %222 = vector.extract_strided_slice %210 {offsets = [0, 32], sizes = [16, 32], strides = [1, 1]} : vector<16x96xf32> to vector<16x32xf32>
    %223 = arith.addf %221, %222 : vector<16x32xf32>
    %224 = vector.broadcast %15 : vector<1x32xf32> to vector<16x32xf32>
    %225 = arith.addf %223, %224 : vector<16x32xf32>
    %226 = arith.negf %225 : vector<16x32xf32>
    %227 = math.exp %226 : vector<16x32xf32>
    %cst_79 = arith.constant 1.000000e+00 : f32
    %228 = vector.broadcast %cst_79 : f32 to vector<16x32xf32>
    %229 = arith.addf %228, %227 : vector<16x32xf32>
    %230 = arith.divf %228, %229 : vector<16x32xf32>
    %231 = vector.extract_strided_slice %209 {offsets = [0, 64], sizes = [16, 32], strides = [1, 1]} : vector<16x96xf32> to vector<16x32xf32>
    %232 = vector.broadcast %16 : vector<1x32xf32> to vector<16x32xf32>
    %233 = arith.addf %231, %232 : vector<16x32xf32>
    %234 = vector.extract_strided_slice %210 {offsets = [0, 64], sizes = [16, 32], strides = [1, 1]} : vector<16x96xf32> to vector<16x32xf32>
    %235 = vector.broadcast %17 : vector<1x32xf32> to vector<16x32xf32>
    %236 = arith.addf %234, %235 : vector<16x32xf32>
    %237 = arith.mulf %220, %236 : vector<16x32xf32>
    %238 = arith.addf %233, %237 : vector<16x32xf32>
    %239 = math.tanh %238 : vector<16x32xf32>
    %cst_80 = arith.constant 1.000000e+00 : f32
    %240 = vector.broadcast %cst_80 : f32 to vector<16x32xf32>
    %241 = arith.subf %240, %230 : vector<16x32xf32>
    %242 = arith.mulf %241, %239 : vector<16x32xf32>
    %243 = arith.mulf %230, %146 : vector<16x32xf32>
    %244 = arith.addf %242, %243 : vector<16x32xf32>
    %cst_81 = arith.constant dense<0.000000e+00> : vector<16xf32>
    %245 = vector.multi_reduction <add>, %244, %cst_81 [1] : vector<16x32xf32> to vector<16xf32>
    %246 = vector.shape_cast %245 : vector<16xf32> to vector<16x1xf32>
    %cst_82 = arith.constant 3.200000e+01 : f32
    %247 = vector.broadcast %cst_82 : f32 to vector<16x1xf32>
    %248 = arith.divf %246, %247 : vector<16x1xf32>
    %249 = vector.broadcast %248 : vector<16x1xf32> to vector<16x32xf32>
    %250 = arith.subf %244, %249 : vector<16x32xf32>
    %251 = arith.mulf %250, %250 : vector<16x32xf32>
    %cst_83 = arith.constant dense<0.000000e+00> : vector<16xf32>
    %252 = vector.multi_reduction <add>, %251, %cst_83 [1] : vector<16x32xf32> to vector<16xf32>
    %253 = vector.shape_cast %252 : vector<16xf32> to vector<16x1xf32>
    %cst_84 = arith.constant 3.200000e+01 : f32
    %254 = vector.broadcast %cst_84 : f32 to vector<16x1xf32>
    %255 = arith.divf %253, %254 : vector<16x1xf32>
    %256 = vector.broadcast %248 : vector<16x1xf32> to vector<16x32xf32>
    %257 = arith.subf %244, %256 : vector<16x32xf32>
    %cst_85 = arith.constant 9.99999974E-6 : f32
    %258 = vector.broadcast %cst_85 : f32 to vector<16x1xf32>
    %259 = arith.addf %255, %258 : vector<16x1xf32>
    %260 = math.rsqrt %259 : vector<16x1xf32>
    %261 = vector.broadcast %260 : vector<16x1xf32> to vector<16x32xf32>
    %262 = arith.mulf %257, %261 : vector<16x32xf32>
    %263 = vector.broadcast %12 : vector<1x32xf32> to vector<16x32xf32>
    %264 = arith.mulf %262, %263 : vector<16x32xf32>
    %265 = vector.broadcast %13 : vector<1x32xf32> to vector<16x32xf32>
    %266 = arith.addf %264, %265 : vector<16x32xf32>
    %cst_86 = arith.constant dense<0.000000e+00> : vector<16x32xf32>
    %267 = tpu.matmul %266, %18, %cst_86 {dimension_numbers = #tpu.dot_dimension_numbers<[1], [0], [0], [1], [0, 0, 1, 1], [], []>, precision = #tpu.contract_precision<fp32>} : vector<16x32xf32>, vector<32x32xf32>, vector<16x32xf32> -> vector<16x32xf32>
    %cst_87 = arith.constant 0.176776692 : f32
    %268 = vector.broadcast %cst_87 : f32 to vector<16x32xf32>
    %269 = arith.mulf %267, %268 : vector<16x32xf32>
    %270 = vector.extract_strided_slice %269 {offsets = [0, 0], sizes = [8, 32], strides = [1, 1]} : vector<16x32xf32> to vector<8x32xf32>
    %cst_88 = arith.constant dense<0.000000e+00> : vector<8x16xf32>
    %271 = tpu.matmul %270, %45, %cst_88 {dimension_numbers = #tpu.dot_dimension_numbers<[1], [1], [0], [0], [0, 0, 1, 0], [], []>, precision = #tpu.contract_precision<fp32>} : vector<8x32xf32>, vector<16x32xf32>, vector<8x16xf32> -> vector<8x16xf32>
    %cst_89 = arith.constant dense<0xFF800000> : vector<16xf32>
    %272 = vector.multi_reduction <maximumf>, %271, %cst_89 [0] : vector<8x16xf32> to vector<16xf32>
    %273 = vector.shape_cast %272 : vector<16xf32> to vector<1x16xf32>
    %274 = vector.broadcast %273 : vector<1x16xf32> to vector<8x16xf32>
    %275 = arith.subf %271, %274 : vector<8x16xf32>
    %276 = math.exp %275 : vector<8x16xf32>
    %cst_90 = arith.constant dense<0.000000e+00> : vector<16xf32>
    %277 = vector.multi_reduction <add>, %276, %cst_90 [0] : vector<8x16xf32> to vector<16xf32>
    %278 = vector.shape_cast %277 : vector<16xf32> to vector<1x16xf32>
    %279 = vector.broadcast %278 : vector<1x16xf32> to vector<8x16xf32>
    %280 = arith.divf %276, %279 : vector<8x16xf32>
    %cst_91 = arith.constant dense<0.000000e+00> : vector<8xf32>
    %281 = vector.multi_reduction <add>, %280, %cst_91 [1] : vector<8x16xf32> to vector<8xf32>
    %282 = vector.shape_cast %281 : vector<8xf32> to vector<8x1xf32>
    %cst_92 = arith.constant 9.99999993E-9 : f32
    %283 = vector.broadcast %cst_92 : f32 to vector<8x1xf32>
    %284 = arith.addf %282, %283 : vector<8x1xf32>
    %285 = vector.broadcast %284 : vector<8x1xf32> to vector<8x16xf32>
    %286 = arith.divf %280, %285 : vector<8x16xf32>
    %cst_93 = arith.constant dense<0.000000e+00> : vector<8x32xf32>
    %287 = tpu.matmul %286, %47, %cst_93 {dimension_numbers = #tpu.dot_dimension_numbers<[1], [0], [0], [1], [0, 0, 1, 1], [], []>, precision = #tpu.contract_precision<fp32>} : vector<8x16xf32>, vector<16x32xf32>, vector<8x32xf32> -> vector<8x32xf32>
    %288 = vector.extract_strided_slice %269 {offsets = [8, 0], sizes = [8, 32], strides = [1, 1]} : vector<16x32xf32> to vector<8x32xf32>
    %cst_94 = arith.constant dense<0.000000e+00> : vector<8x16xf32>
    %289 = tpu.matmul %288, %46, %cst_94 {dimension_numbers = #tpu.dot_dimension_numbers<[1], [1], [0], [0], [0, 0, 1, 0], [], []>, precision = #tpu.contract_precision<fp32>} : vector<8x32xf32>, vector<16x32xf32>, vector<8x16xf32> -> vector<8x16xf32>
    %cst_95 = arith.constant dense<0xFF800000> : vector<16xf32>
    %290 = vector.multi_reduction <maximumf>, %289, %cst_95 [0] : vector<8x16xf32> to vector<16xf32>
    %291 = vector.shape_cast %290 : vector<16xf32> to vector<1x16xf32>
    %292 = vector.broadcast %291 : vector<1x16xf32> to vector<8x16xf32>
    %293 = arith.subf %289, %292 : vector<8x16xf32>
    %294 = math.exp %293 : vector<8x16xf32>
    %cst_96 = arith.constant dense<0.000000e+00> : vector<16xf32>
    %295 = vector.multi_reduction <add>, %294, %cst_96 [0] : vector<8x16xf32> to vector<16xf32>
    %296 = vector.shape_cast %295 : vector<16xf32> to vector<1x16xf32>
    %297 = vector.broadcast %296 : vector<1x16xf32> to vector<8x16xf32>
    %298 = arith.divf %294, %297 : vector<8x16xf32>
    %cst_97 = arith.constant dense<0.000000e+00> : vector<8xf32>
    %299 = vector.multi_reduction <add>, %298, %cst_97 [1] : vector<8x16xf32> to vector<8xf32>
    %300 = vector.shape_cast %299 : vector<8xf32> to vector<8x1xf32>
    %cst_98 = arith.constant 9.99999993E-9 : f32
    %301 = vector.broadcast %cst_98 : f32 to vector<8x1xf32>
    %302 = arith.addf %300, %301 : vector<8x1xf32>
    %303 = vector.broadcast %302 : vector<8x1xf32> to vector<8x16xf32>
    %304 = arith.divf %298, %303 : vector<8x16xf32>
    %cst_99 = arith.constant dense<0.000000e+00> : vector<8x32xf32>
    %305 = tpu.matmul %304, %48, %cst_99 {dimension_numbers = #tpu.dot_dimension_numbers<[1], [0], [0], [1], [0, 0, 1, 1], [], []>, precision = #tpu.contract_precision<fp32>} : vector<8x16xf32>, vector<16x32xf32>, vector<8x32xf32> -> vector<8x32xf32>
    %306 = tpu.concatenate %287, %305 in 0 : vector<8x32xf32>, vector<8x32xf32> -> vector<16x32xf32>
    %cst_100 = arith.constant dense<0.000000e+00> : vector<16x96xf32>
    %307 = tpu.matmul %306, %19, %cst_100 {dimension_numbers = #tpu.dot_dimension_numbers<[1], [0], [0], [1], [0, 0, 1, 1], [], []>, precision = #tpu.contract_precision<fp32>} : vector<16x32xf32>, vector<32x96xf32>, vector<16x96xf32> -> vector<16x96xf32>
    %cst_101 = arith.constant dense<0.000000e+00> : vector<16x96xf32>
    %308 = tpu.matmul %244, %20, %cst_101 {dimension_numbers = #tpu.dot_dimension_numbers<[1], [0], [0], [1], [0, 0, 1, 1], [], []>, precision = #tpu.contract_precision<fp32>} : vector<16x32xf32>, vector<32x96xf32>, vector<16x96xf32> -> vector<16x96xf32>
    %309 = vector.extract_strided_slice %307 {offsets = [0, 0], sizes = [16, 32], strides = [1, 1]} : vector<16x96xf32> to vector<16x32xf32>
    %310 = vector.extract_strided_slice %308 {offsets = [0, 0], sizes = [16, 32], strides = [1, 1]} : vector<16x96xf32> to vector<16x32xf32>
    %311 = arith.addf %309, %310 : vector<16x32xf32>
    %312 = vector.broadcast %14 : vector<1x32xf32> to vector<16x32xf32>
    %313 = arith.addf %311, %312 : vector<16x32xf32>
    %314 = arith.negf %313 : vector<16x32xf32>
    %315 = math.exp %314 : vector<16x32xf32>
    %cst_102 = arith.constant 1.000000e+00 : f32
    %316 = vector.broadcast %cst_102 : f32 to vector<16x32xf32>
    %317 = arith.addf %316, %315 : vector<16x32xf32>
    %318 = arith.divf %316, %317 : vector<16x32xf32>
    %319 = vector.extract_strided_slice %307 {offsets = [0, 32], sizes = [16, 32], strides = [1, 1]} : vector<16x96xf32> to vector<16x32xf32>
    %320 = vector.extract_strided_slice %308 {offsets = [0, 32], sizes = [16, 32], strides = [1, 1]} : vector<16x96xf32> to vector<16x32xf32>
    %321 = arith.addf %319, %320 : vector<16x32xf32>
    %322 = vector.broadcast %15 : vector<1x32xf32> to vector<16x32xf32>
    %323 = arith.addf %321, %322 : vector<16x32xf32>
    %324 = arith.negf %323 : vector<16x32xf32>
    %325 = math.exp %324 : vector<16x32xf32>
    %cst_103 = arith.constant 1.000000e+00 : f32
    %326 = vector.broadcast %cst_103 : f32 to vector<16x32xf32>
    %327 = arith.addf %326, %325 : vector<16x32xf32>
    %328 = arith.divf %326, %327 : vector<16x32xf32>
    %329 = vector.extract_strided_slice %307 {offsets = [0, 64], sizes = [16, 32], strides = [1, 1]} : vector<16x96xf32> to vector<16x32xf32>
    %330 = vector.broadcast %16 : vector<1x32xf32> to vector<16x32xf32>
    %331 = arith.addf %329, %330 : vector<16x32xf32>
    %332 = vector.extract_strided_slice %308 {offsets = [0, 64], sizes = [16, 32], strides = [1, 1]} : vector<16x96xf32> to vector<16x32xf32>
    %333 = vector.broadcast %17 : vector<1x32xf32> to vector<16x32xf32>
    %334 = arith.addf %332, %333 : vector<16x32xf32>
    %335 = arith.mulf %318, %334 : vector<16x32xf32>
    %336 = arith.addf %331, %335 : vector<16x32xf32>
    %337 = math.tanh %336 : vector<16x32xf32>
    %cst_104 = arith.constant 1.000000e+00 : f32
    %338 = vector.broadcast %cst_104 : f32 to vector<16x32xf32>
    %339 = arith.subf %338, %328 : vector<16x32xf32>
    %340 = arith.mulf %339, %337 : vector<16x32xf32>
    %341 = arith.mulf %328, %244 : vector<16x32xf32>
    %342 = arith.addf %340, %341 : vector<16x32xf32>
    %343 = vector.extract_strided_slice %342 {offsets = [0, 0], sizes = [8, 32], strides = [1, 1]} : vector<16x32xf32> to vector<8x32xf32>
    %c0_105 = arith.constant 0 : index
    %c0_106 = arith.constant 0 : index
    %c0_107 = arith.constant 0 : index
    %344 = vector.load %arg8[%c0_105, %c0_106, %c0_107] : memref<2x8x32xf32, #tpu.memory_space<vmem>>, vector<1x8x32xf32>
    %345 = vector.shape_cast %344 : vector<1x8x32xf32> to vector<8x32xf32>
    %346 = vector.shape_cast %343 : vector<8x32xf32> to vector<1x8x32xf32>
    tpu.vector_store %arg8[%c0_105, %c0_106, %c0_107], %346 {strides = array<i32>} : memref<2x8x32xf32, #tpu.memory_space<vmem>>, vector<1x8x32xf32>,
    %c0_108 = arith.constant 0 : index
    %c0_109 = arith.constant 0 : index
    %c0_110 = arith.constant 0 : index
    %347 = vector.load %arg9[%c0_108, %c0_109, %c0_110] : memref<2x8x16xf32, #tpu.memory_space<vmem>>, vector<1x8x16xf32>
    %348 = vector.shape_cast %347 : vector<1x8x16xf32> to vector<8x16xf32>
    %349 = vector.shape_cast %280 : vector<8x16xf32> to vector<1x8x16xf32>
    tpu.vector_store %arg9[%c0_108, %c0_109, %c0_110], %349 {strides = array<i32>} : memref<2x8x16xf32, #tpu.memory_space<vmem>>, vector<1x8x16xf32>,
    %350 = vector.extract_strided_slice %342 {offsets = [8, 0], sizes = [8, 32], strides = [1, 1]} : vector<16x32xf32> to vector<8x32xf32>
    %c1_111 = arith.constant 1 : index
    %c0_112 = arith.constant 0 : index
    %c0_113 = arith.constant 0 : index
    %351 = vector.load %arg8[%c1_111, %c0_112, %c0_113] : memref<2x8x32xf32, #tpu.memory_space<vmem>>, vector<1x8x32xf32>
    %352 = vector.shape_cast %351 : vector<1x8x32xf32> to vector<8x32xf32>
    %353 = vector.shape_cast %350 : vector<8x32xf32> to vector<1x8x32xf32>
    tpu.vector_store %arg8[%c1_111, %c0_112, %c0_113], %353 {strides = array<i32>} : memref<2x8x32xf32, #tpu.memory_space<vmem>>, vector<1x8x32xf32>,
    %c1_114 = arith.constant 1 : index
    %c0_115 = arith.constant 0 : index
    %c0_116 = arith.constant 0 : index
    %354 = vector.load %arg9[%c1_114, %c0_115, %c0_116] : memref<2x8x16xf32, #tpu.memory_space<vmem>>, vector<1x8x16xf32>
    %355 = vector.shape_cast %354 : vector<1x8x16xf32> to vector<8x16xf32>
    %356 = vector.shape_cast %298 : vector<8x16xf32> to vector<1x8x16xf32>
    tpu.vector_store %arg9[%c1_114, %c0_115, %c0_116], %356 {strides = array<i32>} : memref<2x8x16xf32, #tpu.memory_space<vmem>>, vector<1x8x16xf32>,
    return
  }
  func.func @transform_0(%arg0: i32) -> (i32, i32, i32) {
    %c0_i32 = arith.constant 0 : i32
    %c0_i32_0 = arith.constant 0 : i32
    %c0_i32_1 = arith.constant 0 : i32
    %c0_i32_2 = arith.constant 0 : i32
    return %c0_i32, %c0_i32_0, %c0_i32_1 : i32, i32, i32
  }
  func.func @transform_1(%arg0: i32) -> (i32, i32, i32) {
    %c0_i32 = arith.constant 0 : i32
    %c0_i32_0 = arith.constant 0 : i32
    %c0_i32_1 = arith.constant 0 : i32
    %c0_i32_2 = arith.constant 0 : i32
    return %c0_i32, %c0_i32_0, %c0_i32_1 : i32, i32, i32
  }
  func.func @transform_2(%arg0: i32) -> (i32, i32) {
    %c0_i32 = arith.constant 0 : i32
    %c0_i32_0 = arith.constant 0 : i32
    %c0_i32_1 = arith.constant 0 : i32
    return %c0_i32, %c0_i32_0 : i32, i32
  }
  func.func @transform_3(%arg0: i32) -> (i32, i32) {
    %c0_i32 = arith.constant 0 : i32
    %c0_i32_0 = arith.constant 0 : i32
    %c0_i32_1 = arith.constant 0 : i32
    return %c0_i32, %c0_i32_0 : i32, i32
  }
  func.func @transform_4(%arg0: i32) -> (i32, i32) {
    %c0_i32 = arith.constant 0 : i32
    %c0_i32_0 = arith.constant 0 : i32
    %c0_i32_1 = arith.constant 0 : i32
    return %c0_i32, %c0_i32_0 : i32, i32
  }
  func.func @transform_5(%arg0: i32) -> (i32, i32) {
    %c0_i32 = arith.constant 0 : i32
    %c0_i32_0 = arith.constant 0 : i32
    %c0_i32_1 = arith.constant 0 : i32
    return %c0_i32, %c0_i32_0 : i32, i32
  }
  func.func @transform_6(%arg0: i32) -> (i32, i32) {
    %c0_i32 = arith.constant 0 : i32
    %c0_i32_0 = arith.constant 0 : i32
    %c0_i32_1 = arith.constant 0 : i32
    return %c0_i32, %c0_i32_0 : i32, i32
  }
  func.func @transform_7(%arg0: i32) -> (i32, i32, i32) {
    %c0_i32 = arith.constant 0 : i32
    %c0_i32_0 = arith.constant 0 : i32
    %c0_i32_1 = arith.constant 0 : i32
    %c0_i32_2 = arith.constant 0 : i32
    return %c0_i32, %c0_i32_0, %c0_i32_1 : i32, i32, i32
  }
  func.func @transform_8(%arg0: i32) -> (i32, i32, i32) {
    %c0_i32 = arith.constant 0 : i32
    %c0_i32_0 = arith.constant 0 : i32
    %c0_i32_1 = arith.constant 0 : i32
    %c0_i32_2 = arith.constant 0 : i32
    return %c0_i32, %c0_i32_0, %c0_i32_1 : i32, i32, i32
  }
}

</mosaic_0001>

<llo_original>
// kernel: tpu_custom_call.1
$region0: #{tpu_custom_call.1}
  #allocation0 [shape = 'u32[]', space=smem, size = 0x4, offset = 0x4, fixed_abs, tag = 'smem constant byte address 0x4 - core index']
  #allocation1 [shape = 'u32[144,128]{1,0:T(1,128)}', space=vmem, size = 0x12000, scoped, tag = 'internal scratch']
  %s0 = inlined_call_operand.hbm [shape: f32[2,16,32], index: 0, kind: input, shape index: {}]
  %s1 = inlined_call_operand.hbm [shape: f32[2,8,32], index: 1, kind: input, shape index: {}]
  %s2 = inlined_call_operand.hbm [shape: f32[8,32], index: 2, kind: input, shape index: {}]
  %s3 = inlined_call_operand.hbm [shape: f32[32,64], index: 3, kind: input, shape index: {}]
  %s4 = inlined_call_operand.hbm [shape: f32[32,32], index: 4, kind: input, shape index: {}]
  %s5 = inlined_call_operand.hbm [shape: f32[32,96], index: 5, kind: input, shape index: {}]
  %s6 = inlined_call_operand.hbm [shape: f32[32,96], index: 6, kind: input, shape index: {}]
  %s7 = inlined_call_operand.hbm [shape: f32[2,8,32], index: 7, kind: output, shape index: {0}]
  %s8 = inlined_call_operand.hbm [shape: f32[2,8,16], index: 8, kind: output, shape index: {1}]
  %9 = xla_tuple %s7, %s8
  %s10 = sld [smem:[#allocation0]]
  $region74: #{tpu_custom_call.1} parent=0
    _
  %s12 = ssub.s32 1, %s10
  %s13 = scalar_select 0, %s12, %s10
  $region1: #{tpu_custom_call.1} parent=0
    #allocation2 [shape = 'u8[16384]{0}', space=vmem, size = 0x4000, scoped, tag = 'input window, operand 0, single buffered']
    #allocation3 [shape = 's32[1]{0}', space=sflag, size = 0x4, scoped, tag = 'scoped memory for tpu_custom_call.1']
    #allocation4 [shape = 's32[1]{0}', space=sflag, size = 0x4, scoped, tag = 'scoped memory for tpu_custom_call.1']
    #allocation5 [shape = 'u8[8192]{0}', space=vmem, size = 0x2000, scoped, tag = 'input window, operand 1, single buffered']
    #allocation6 [shape = 's32[1]{0}', space=sflag, size = 0x4, scoped, tag = 'scoped memory for tpu_custom_call.1']
    #allocation7 [shape = 'u8[4096]{0}', space=vmem, size = 0x1000, scoped, tag = 'input window, operand 2, single buffered']
    #allocation8 [shape = 'u8[16384]{0}', space=vmem, size = 0x4000, scoped, tag = 'input window, operand 3, single buffered']
    #allocation9 [shape = 's32[1]{0}', space=sflag, size = 0x4, scoped, tag = 'scoped memory for tpu_custom_call.1']
    #allocation10 [shape = 'u8[16384]{0}', space=vmem, size = 0x4000, scoped, tag = 'input window, operand 4, single buffered']
    #allocation11 [shape = 'u8[16384]{0}', space=vmem, size = 0x4000, scoped, tag = 'input window, operand 5, single buffered']
    #allocation12 [shape = 's32[1]{0}', space=sflag, size = 0x4, scoped, tag = 'scoped memory for tpu_custom_call.1']
    #allocation13 [shape = 'u8[16384]{0}', space=vmem, size = 0x4000, scoped, tag = 'input window, operand 6, single buffered']
    #allocation14 [shape = 'u8[8192]{0}', space=vmem, size = 0x2000, scoped, tag = 'output window, operand 0, single buffered']
    #allocation15 [shape = 'u8[8192]{0}', space=vmem, size = 0x2000, scoped, tag = 'output window, operand 1, single buffered']
    #allocation16 [shape = 's32[1]{0}', space=sflag, size = 0x4, scoped, tag = 'scoped memory for tpu_custom_call.1']
    %14 = vsyncpa [#allocation3], 0
    %15 = vsyncpa [#allocation6], 0
    %16 = vsyncpa [#allocation9], 0
    %17 = vsyncpa [#allocation12], 0
    %18 = vsyncpa [#allocation4], 0
    %19 = vsyncpa [#allocation16], 0
    // Predicated region
    $region2: #{tpu_custom_call.1} parent=1 // pred_check
      _
    $region3: #{tpu_custom_call.1} parent=1 // pred_check_branch
      %21 = sbr.rel (0) target = $region5
    $region4: #{tpu_custom_call.1} parent=1 // pred_region
      %s23 = ssub.s32 512, 512
      %24 = vsyncadd [#allocation3], %s23
      %s25 = sshll.u32 [#allocation2], 4
      %s26 = int_to_ptr.vmem [resolvable:$true] %s25
      %31 = dma.hbm_to_vmem [thread:$0]  %s0, 512, %s26, [#allocation3], 128, 128, 8
    $region5: #{tpu_custom_call.1} parent=1 // pred_fallthru
      _
    // Predicated region
    $region6: #{tpu_custom_call.1} parent=1 // pred_check
      _
    $region7: #{tpu_custom_call.1} parent=1 // pred_check_branch
      %33 = sbr.rel (0) target = $region9
    $region8: #{tpu_custom_call.1} parent=1 // pred_region
      %s35 = ssub.s32 256, 256
      %36 = vsyncadd [#allocation6], %s35
      %s37 = sshll.u32 [#allocation5], 4
      %s38 = int_to_ptr.vmem [resolvable:$true] %s37
      %43 = dma.hbm_to_vmem [thread:$0]  %s1, 256, %s38, [#allocation6], 128, 128, 8
    $region9: #{tpu_custom_call.1} parent=1 // pred_fallthru
      _
    // Predicated region
    $region10: #{tpu_custom_call.1} parent=1 // pred_check
      _
    $region11: #{tpu_custom_call.1} parent=1 // pred_check_branch
      %45 = sbr.rel (0) target = $region13
    $region12: #{tpu_custom_call.1} parent=1 // pred_region
      %s47 = ssub.s32 128, 128
      %48 = vsyncadd [#allocation6], %s47
      %s50 = sshll.u32 [#allocation7], 4
      %s51 = int_to_ptr.vmem [resolvable:$true] %s50
      %53 = dma.hbm_to_vmem [thread:$0]  %s2, 128, %s51, [#allocation6]
    $region13: #{tpu_custom_call.1} parent=1 // pred_fallthru
      _
    // Predicated region
    $region14: #{tpu_custom_call.1} parent=1 // pred_check
      _
    $region15: #{tpu_custom_call.1} parent=1 // pred_check_branch
      %55 = sbr.rel (0) target = $region17
    $region16: #{tpu_custom_call.1} parent=1 // pred_region
      %s57 = ssub.s32 512, 512
      %58 = vsyncadd [#allocation9], %s57
      %s59 = sshll.u32 [#allocation8], 4
      %s60 = int_to_ptr.vmem [resolvable:$true] %s59
      %65 = dma.hbm_to_vmem [thread:$0]  %s3, 512, %s60, [#allocation9], 128, 128, 8
    $region17: #{tpu_custom_call.1} parent=1 // pred_fallthru
      _
    // Predicated region
    $region18: #{tpu_custom_call.1} parent=1 // pred_check
      _
    $region19: #{tpu_custom_call.1} parent=1 // pred_check_branch
      %67 = sbr.rel (0) target = $region21
    $region20: #{tpu_custom_call.1} parent=1 // pred_region
      %s69 = ssub.s32 512, 512
      %70 = vsyncadd [#allocation9], %s69
      %s71 = sshll.u32 [#allocation10], 4
      %s72 = int_to_ptr.vmem [resolvable:$true] %s71
      %77 = dma.hbm_to_vmem [thread:$0]  %s4, 512, %s72, [#allocation9], 128, 128, 8
    $region21: #{tpu_custom_call.1} parent=1 // pred_fallthru
      _
    // Predicated region
    $region22: #{tpu_custom_call.1} parent=1 // pred_check
      _
    $region23: #{tpu_custom_call.1} parent=1 // pred_check_branch
      %79 = sbr.rel (0) target = $region25
    $region24: #{tpu_custom_call.1} parent=1 // pred_region
      %s81 = ssub.s32 512, 512
      %82 = vsyncadd [#allocation12], %s81
      %s83 = sshll.u32 [#allocation11], 4
      %s84 = int_to_ptr.vmem [resolvable:$true] %s83
      %89 = dma.hbm_to_vmem [thread:$0]  %s5, 512, %s84, [#allocation12], 128, 128, 8
    $region25: #{tpu_custom_call.1} parent=1 // pred_fallthru
      _
    // Predicated region
    $region26: #{tpu_custom_call.1} parent=1 // pred_check
      _
    $region27: #{tpu_custom_call.1} parent=1 // pred_check_branch
      %91 = sbr.rel (0) target = $region29
    $region28: #{tpu_custom_call.1} parent=1 // pred_region
      %s93 = ssub.s32 512, 512
      %94 = vsyncadd [#allocation12], %s93
      %s95 = sshll.u32 [#allocation13], 4
      %s96 = int_to_ptr.vmem [resolvable:$true] %s95
      %101 = dma.hbm_to_vmem [thread:$0]  %s6, 512, %s96, [#allocation12], 128, 128, 8
    $region29: #{tpu_custom_call.1} parent=1 // pred_fallthru
      _
    // Predicated region
    $region30: #{tpu_custom_call.1} parent=1 // pred_check
      _
    $region31: #{tpu_custom_call.1} parent=1 // pred_check_branch
      %103 = sbr.rel (0) target = $region33
    $region32: #{tpu_custom_call.1} parent=1 // pred_region
      %104 = dma.done [#allocation3], 512
    $region33: #{tpu_custom_call.1} parent=1 // pred_fallthru
      _
    // Predicated region
    $region34: #{tpu_custom_call.1} parent=1 // pred_check
      _
    $region35: #{tpu_custom_call.1} parent=1 // pred_check_branch
      %106 = sbr.rel (0) target = $region37
    $region36: #{tpu_custom_call.1} parent=1 // pred_region
      %107 = dma.done [#allocation6], 256
    $region37: #{tpu_custom_call.1} parent=1 // pred_fallthru
      _
    // Predicated region
    $region38: #{tpu_custom_call.1} parent=1 // pred_check
      _
    $region39: #{tpu_custom_call.1} parent=1 // pred_check_branch
      %109 = sbr.rel (0) target = $region41
    $region40: #{tpu_custom_call.1} parent=1 // pred_region
      %110 = dma.done [#allocation6], 128
    $region41: #{tpu_custom_call.1} parent=1 // pred_fallthru
      _
    // Predicated region
    $region42: #{tpu_custom_call.1} parent=1 // pred_check
      _
    $region43: #{tpu_custom_call.1} parent=1 // pred_check_branch
      %112 = sbr.rel (0) target = $region45
    $region44: #{tpu_custom_call.1} parent=1 // pred_region
      %113 = dma.done [#allocation9], 512
    $region45: #{tpu_custom_call.1} parent=1 // pred_fallthru
      _
    // Predicated region
    $region46: #{tpu_custom_call.1} parent=1 // pred_check
      _
    $region47: #{tpu_custom_call.1} parent=1 // pred_check_branch
      %115 = sbr.rel (0) target = $region49
    $region48: #{tpu_custom_call.1} parent=1 // pred_region
      %116 = dma.done [#allocation9], 512
    $region49: #{tpu_custom_call.1} parent=1 // pred_fallthru
      _
    // Predicated region
    $region50: #{tpu_custom_call.1} parent=1 // pred_check
      _
    $region51: #{tpu_custom_call.1} parent=1 // pred_check_branch
      %118 = sbr.rel (0) target = $region53
    $region52: #{tpu_custom_call.1} parent=1 // pred_region
      %119 = dma.done [#allocation12], 512
    $region53: #{tpu_custom_call.1} parent=1 // pred_fallthru
      _
    // Predicated region
    $region54: #{tpu_custom_call.1} parent=1 // pred_check
      _
    $region55: #{tpu_custom_call.1} parent=1 // pred_check_branch
      %121 = sbr.rel (0) target = $region57
    $region56: #{tpu_custom_call.1} parent=1 // pred_region
      %122 = dma.done [#allocation12], 512
    $region57: #{tpu_custom_call.1} parent=1 // pred_fallthru
      _
    %v123 = vld [vmem:[#allocation2] sm:$0xff]
    %v124 = vld [vmem:[#allocation2 + $0x8] sm:$0xff]
    %s125 = scalar_lea.vmem [#allocation2], 16
    %v126 = vld [vmem:[%s125] sm:$0xff]
    %v127 = vld [vmem:[%s125 + $0x8] sm:$0xff]
    %v128 = vld [vmem:[#allocation5] sm:$0xff]
    %s129 = scalar_lea.vmem [#allocation5], 8
    %v130 = vld [vmem:[%s129] sm:$0xff]
    %v131 = vld [vmem:[#allocation7] sm:$0x1]
    %v132 = vld [vmem:[#allocation7 + $0x1] sm:$0x1]
    %v133 = vld [vmem:[#allocation7 + $0x2] sm:$0x1]
    %v134 = vld [vmem:[#allocation7 + $0x3] sm:$0x1]
    %v135 = vld [vmem:[#allocation7 + $0x4] sm:$0x1]
    %v136 = vld [vmem:[#allocation7 + $0x5] sm:$0x1]
    %v137 = vld [vmem:[#allocation7 + $0x6] sm:$0x1]
    %v138 = vld [vmem:[#allocation7 + $0x7] sm:$0x1]
    %v139 = vld [vmem:[#allocation10] sm:$0xff]
    %v140 = vld [vmem:[#allocation10 + $0x8] sm:$0xff]
    %v141 = vld [vmem:[#allocation10 + $0x10] sm:$0xff]
    %v142 = vld [vmem:[#allocation10 + $0x18] sm:$0xff]
    %v143 = vld [vmem:[#allocation11] sm:$0xff]
    %v144 = vld [vmem:[#allocation11 + $0x8] sm:$0xff]
    %v145 = vld [vmem:[#allocation11 + $0x10] sm:$0xff]
    %v146 = vld [vmem:[#allocation11 + $0x18] sm:$0xff]
    %v147 = vld [vmem:[#allocation13] sm:$0xff]
    %v148 = vld [vmem:[#allocation13 + $0x8] sm:$0xff]
    %v149 = vld [vmem:[#allocation13 + $0x10] sm:$0xff]
    %v150 = vld [vmem:[#allocation13 + $0x18] sm:$0xff]
    %vm151 = vcmask 261120
    %v152 = vsel %vm151, %v123, 0.0
    %153 = vadd.xlane.f32.xlu0 %v152
    %v154 = vpop.xlane.xlu0 %153
    %v155 = vsel %vm151, %v124, 0.0
    %156 = vadd.xlane.f32.xlu0 %v155
    %v157 = vpop.xlane.xlu0 %156
    %v158 = vsel %vm151, %v126, 0.0
    %159 = vadd.xlane.f32.xlu0 %v158
    %v160 = vpop.xlane.xlu0 %159
    %v161 = vsel %vm151, %v127, 0.0
    %162 = vadd.xlane.f32.xlu0 %v161
    %v163 = vpop.xlane.xlu0 %162
    %v164 = vrcp.pop 32.0
    %v165 = vmul.f32 %v154, %v164
    %v166 = vmul.f32 %v157, %v164
    %v167 = vmul.f32 %v160, %v164
    %v168 = vmul.f32 %v163, %v164
    %v169 = vsub.f32 %v123, %v165
    %v170 = vsub.f32 %v124, %v166
    %v171 = vsub.f32 %v126, %v167
    %v172 = vsub.f32 %v127, %v168
    %v173 = vmul.f32 %v169, %v169
    %v174 = vmul.f32 %v170, %v170
    %v175 = vmul.f32 %v171, %v171
    %v176 = vmul.f32 %v172, %v172
    %v177 = vsel %vm151, %v173, 0.0
    %178 = vadd.xlane.f32.xlu0 %v177
    %v179 = vpop.xlane.xlu0 %178
    %v180 = vsel %vm151, %v174, 0.0
    %181 = vadd.xlane.f32.xlu0 %v180
    %v182 = vpop.xlane.xlu0 %181
    %v183 = vsel %vm151, %v175, 0.0
    %184 = vadd.xlane.f32.xlu0 %v183
    %v185 = vpop.xlane.xlu0 %184
    %v186 = vsel %vm151, %v176, 0.0
    %187 = vadd.xlane.f32.xlu0 %v186
    %v188 = vpop.xlane.xlu0 %187
    %v189 = vmul.f32 %v179, %v164
    %v190 = vmul.f32 %v182, %v164
    %v191 = vmul.f32 %v185, %v164
    %v192 = vmul.f32 %v188, %v164
    %v193 = vadd.f32 %v189, 1e-05
    %v194 = vadd.f32 %v190, 1e-05
    %v195 = vadd.f32 %v191, 1e-05
    %v196 = vadd.f32 %v192, 1e-05
    %v197 = vrsqrt.pop %v193
    %v198 = vrsqrt.pop %v194
    %v199 = vrsqrt.pop %v195
    %v200 = vrsqrt.pop %v196
    %v201 = vmul.f32 %v169, %v197
    %v202 = vmul.f32 %v170, %v198
    %v203 = vmul.f32 %v171, %v199
    %v204 = vmul.f32 %v172, %v200
    %v205 = vlaneseq
    %v206 = vshrl.u32 %v205, 7
    %v207 = vsub.s32 0, %v206
    %v208 = vrot.slane %v131, %v207
    %v209 = vmul.f32 %v201, %v208
    %v210 = vmul.f32 %v202, %v208
    %v211 = vmul.f32 %v203, %v208
    %v212 = vmul.f32 %v204, %v208
    %v213 = vlaneseq
    %v214 = vshrl.u32 %v213, 7
    %v215 = vsub.s32 0, %v214
    %v216 = vrot.slane %v132, %v215
    %v217 = vadd.f32 %v209, %v216
    %v218 = vadd.f32 %v210, %v216
    %v219 = vadd.f32 %v211, %v216
    %v220 = vadd.f32 %v212, %v216
    %v221 = vld [vmem:[#allocation8] sm:$0xff]
    %v222 = vld [vmem:[#allocation8 + $0x8] sm:$0xff]
    %v223 = vld [vmem:[#allocation8 + $0x10] sm:$0xff]
    %v224 = vld [vmem:[#allocation8 + $0x18] sm:$0xff]
    %v226 = vsel %vm151, %v217, 0
    %v229 = vsel %vm151, %v218, 0
    %v232 = vsel %vm151, %v219, 0
    %v235 = vsel %vm151, %v220, 0
    %237 = vmatprep.subr.mxu0 0.0
    %v238 = vand.u32 %v221, 4294901760
    %239 = vmatpush1.msra.mxu0 %v238
    %240 = vmatprep.subr.mxu0 0.0
    %v241 = vand.u32 %v222, 4294901760
    %242 = vmatpush1.msra.mxu0 %v241
    %243 = vmatprep.subr.mxu0 0.0
    %v244 = vand.u32 %v223, 4294901760
    %245 = vmatpush1.msra.mxu0 %v244
    %246 = vmatprep.subr.mxu0 0.0
    %v247 = vand.u32 %v224, 4294901760
    %248 = vmatpush1.msra.mxu0 %v247
    %249 = vmatprep.subr.mxu0 0.0
    %250 = vmatpush1.msra.mxu0 0.0
    %251 = vmatprep.subr.mxu0 0.0
    %252 = vmatpush1.msra.mxu0 0.0
    %253 = vmatprep.subr.mxu0 0.0
    %254 = vmatpush1.msra.mxu0 0.0
    %255 = vmatprep.subr.mxu0 0.0
    %256 = vmatpush1.msra.mxu0 0.0
    %257 = vmatprep.subr.mxu0 0.0
    %258 = vmatpush1.msra.mxu0 0.0
    %259 = vmatprep.subr.mxu0 0.0
    %260 = vmatpush1.msra.mxu0 0.0
    %261 = vmatprep.subr.mxu0 0.0
    %262 = vmatpush1.msra.mxu0 0.0
    %263 = vmatprep.subr.mxu0 0.0
    %264 = vmatpush1.msra.mxu0 0.0
    %265 = vmatprep.subr.mxu0 0.0
    %266 = vmatpush1.msra.mxu0 0.0
    %267 = vmatprep.subr.mxu0 0.0
    %268 = vmatpush1.msra.mxu0 0.0
    %269 = vmatprep.subr.mxu0 0.0
    %270 = vmatpush1.msra.mxu0 0.0
    %271 = vmatprep.subr.mxu0 0.0
    %272 = vmatpush1.msra.mxu0 0.0
    %273 = vmatprep.subr.mxu0 0.0
    %274 = vmatpush1.msra.mxu0 0.0
    %275 = vmatprep.subr.mxu0 0.0
    %276 = vmatpush1.msra.mxu0 0.0
    %277 = vmatprep.subr.mxu0 0.0
    %278 = vmatpush1.msra.mxu0 0.0
    %279 = vmatprep.subr.mxu0 0.0
    %280 = vmatpush1.msra.mxu0 0.0
    %281 = vmatprep.subr.mxu0 0.0
    %282 = vmatpush1.msra.mxu0 0.0
    %283 = vmatprep.subr.mxu0 0.0
    %284 = vmatpush1.msra.mxu0 0.0
    %285 = vmatprep.subr.mxu0 0.0
    %286 = vmatpush1.msra.mxu0 0.0
    %287 = vmatprep.subr.mxu0 0.0
    %288 = vmatpush1.msra.mxu0 0.0
    %289 = vmatprep.subr.mxu0 0.0
    %290 = vmatpush1.msra.mxu0 0.0
    %291 = vmatprep.subr.mxu0 0.0
    %292 = vmatpush1.msra.mxu0 0.0
    %293 = vmatprep.subr.mxu0 0.0
    %294 = vmatpush1.msra.mxu0 0.0
    %295 = vmatprep.subr.mxu0 0.0
    %296 = vmatpush1.msra.mxu0 0.0
    %297 = vmatprep.subr.mxu0 0.0
    %298 = vmatpush1.msra.mxu0 0.0
    %299 = vmatprep.subr.mxu0 0.0
    %300 = vmatpush1.msra.mxu0 0.0
    %301 = vmatprep.subr.mxu0 0.0
    %302 = vmatpush1.msra.mxu0 0.0
    %303 = vmatprep.subr.mxu0 0.0
    %304 = vmatpush1.msra.mxu0 0.0
    %305 = vmatprep.mubr.f32.mxu0 0.0
    %v306 = vand.u32 %v226, 4294901760
    %v307 = vsub.f32 %v226, %v306
    %v308 = vand.u32 %v307, 4294901760
    %v309 = vsub.f32 %v307, %v308
    %v310 = vand.u32 %v309, 4294901760
    %311 = vmatmul.mubr.f32.gmra.mrb[0].mxu0 %v310
    %v312 = vpop.f32.mrb[0].mxu0
    %v313 = vadd.f32 0.0, %v312
    %v314 = vpop.f32.mrb[0].mxu0
    %315 = vmatprep.mubr.f32.mxu0 0.0
    %v316 = vand.u32 %v229, 4294901760
    %v317 = vsub.f32 %v229, %v316
    %v318 = vand.u32 %v317, 4294901760
    %v319 = vsub.f32 %v317, %v318
    %v320 = vand.u32 %v319, 4294901760
    %321 = vmatmul.mubr.f32.gmra.mrb[0].mxu0 %v320
    %v322 = vpop.f32.mrb[0].mxu0
    %v323 = vadd.f32 0.0, %v322
    %v324 = vpop.f32.mrb[0].mxu0
    %325 = vmatprep.mubr.f32.mxu0 0.0
    %v326 = vand.u32 %v232, 4294901760
    %v327 = vsub.f32 %v232, %v326
    %v328 = vand.u32 %v327, 4294901760
    %v329 = vsub.f32 %v327, %v328
    %v330 = vand.u32 %v329, 4294901760
    %331 = vmatmul.mubr.f32.gmra.mrb[0].mxu0 %v330
    %v332 = vpop.f32.mrb[0].mxu0
    %v333 = vadd.f32 0.0, %v332
    %v334 = vpop.f32.mrb[0].mxu0
    %335 = vmatprep.mubr.f32.mxu0 0.0
    %v336 = vand.u32 %v235, 4294901760
    %v337 = vsub.f32 %v235, %v336
    %v338 = vand.u32 %v337, 4294901760
    %v339 = vsub.f32 %v337, %v338
    %v340 = vand.u32 %v339, 4294901760
    %341 = vmatmul.mubr.f32.gmra.mrb[0].mxu0 %v340
    %v342 = vpop.f32.mrb[0].mxu0
    %v343 = vadd.f32 0.0, %v342
    %v344 = vpop.f32.mrb[0].mxu0
    %345 = vdwg.mxu0
    %346 = vmatprep.subr.mxu0 0.0
    %v347 = vand.u32 %v221, 4294901760
    %v348 = vsub.f32 %v221, %v347
    %v349 = vand.u32 %v348, 4294901760
    %v350 = vsub.f32 %v348, %v349
    %v351 = vand.u32 %v350, 4294901760
    %352 = vmatpush1.msra.mxu0 %v351
    %353 = vmatprep.subr.mxu0 0.0
    %v354 = vand.u32 %v222, 4294901760
    %v355 = vsub.f32 %v222, %v354
    %v356 = vand.u32 %v355, 4294901760
    %v357 = vsub.f32 %v355, %v356
    %v358 = vand.u32 %v357, 4294901760
    %359 = vmatpush1.msra.mxu0 %v358
    %360 = vmatprep.subr.mxu0 0.0
    %v361 = vand.u32 %v223, 4294901760
    %v362 = vsub.f32 %v223, %v361
    %v363 = vand.u32 %v362, 4294901760
    %v364 = vsub.f32 %v362, %v363
    %v365 = vand.u32 %v364, 4294901760
    %366 = vmatpush1.msra.mxu0 %v365
    %367 = vmatprep.subr.mxu0 0.0
    %v368 = vand.u32 %v224, 4294901760
    %v369 = vsub.f32 %v224, %v368
    %v370 = vand.u32 %v369, 4294901760
    %v371 = vsub.f32 %v369, %v370
    %v372 = vand.u32 %v371, 4294901760
    %373 = vmatpush1.msra.mxu0 %v372
    %374 = vmatprep.subr.mxu0 0.0
    %375 = vmatpush1.msra.mxu0 0.0
    %376 = vmatprep.subr.mxu0 0.0
    %377 = vmatpush1.msra.mxu0 0.0
    %378 = vmatprep.subr.mxu0 0.0
    %379 = vmatpush1.msra.mxu0 0.0
    %380 = vmatprep.subr.mxu0 0.0
    %381 = vmatpush1.msra.mxu0 0.0
    %382 = vmatprep.subr.mxu0 0.0
    %383 = vmatpush1.msra.mxu0 0.0
    %384 = vmatprep.subr.mxu0 0.0
    %385 = vmatpush1.msra.mxu0 0.0
    %386 = vmatprep.subr.mxu0 0.0
    %387 = vmatpush1.msra.mxu0 0.0
    %388 = vmatprep.subr.mxu0 0.0
    %389 = vmatpush1.msra.mxu0 0.0
    %390 = vmatprep.subr.mxu0 0.0
    %391 = vmatpush1.msra.mxu0 0.0
    %392 = vmatprep.subr.mxu0 0.0
    %393 = vmatpush1.msra.mxu0 0.0
    %394 = vmatprep.subr.mxu0 0.0
    %395 = vmatpush1.msra.mxu0 0.0
    %396 = vmatprep.subr.mxu0 0.0
    %397 = vmatpush1.msra.mxu0 0.0
    %398 = vmatprep.subr.mxu0 0.0
    %399 = vmatpush1.msra.mxu0 0.0
    %400 = vmatprep.subr.mxu0 0.0
    %401 = vmatpush1.msra.mxu0 0.0
    %402 = vmatprep.subr.mxu0 0.0
    %403 = vmatpush1.msra.mxu0 0.0
    %404 = vmatprep.subr.mxu0 0.0
    %405 = vmatpush1.msra.mxu0 0.0
    %406 = vmatprep.subr.mxu0 0.0
    %407 = vmatpush1.msra.mxu0 0.0
    %408 = vmatprep.subr.mxu0 0.0
    %409 = vmatpush1.msra.mxu0 0.0
    %410 = vmatprep.subr.mxu0 0.0
    %411 = vmatpush1.msra.mxu0 0.0
    %412 = vmatprep.subr.mxu0 0.0
    %413 = vmatpush1.msra.mxu0 0.0
    %414 = vmatprep.subr.mxu0 0.0
    %415 = vmatpush1.msra.mxu0 0.0
    %416 = vmatprep.subr.mxu0 0.0
    %417 = vmatpush1.msra.mxu0 0.0
    %418 = vmatprep.subr.mxu0 0.0
    %419 = vmatpush1.msra.mxu0 0.0
    %420 = vmatprep.subr.mxu0 0.0
    %421 = vmatpush1.msra.mxu0 0.0
    %422 = vmatprep.subr.mxu0 0.0
    %423 = vmatpush1.msra.mxu0 0.0
    %424 = vmatprep.subr.mxu0 0.0
    %425 = vmatpush1.msra.mxu0 0.0
    %426 = vmatprep.subr.mxu0 0.0
    %427 = vmatpush1.msra.mxu0 0.0
    %428 = vmatprep.subr.mxu0 0.0
    %429 = vmatpush1.msra.mxu0 0.0
    %430 = vmatprep.mubr.f32.mxu0 0.0
    %v431 = vand.u32 %v226, 4294901760
    %432 = vmatmul.mubr.f32.gmra.mrb[0].mxu0 %v431
    %v433 = vpop.f32.mrb[0].mxu0
    %v434 = vadd.f32 %v313, %v433
    %v435 = vpop.f32.mrb[0].mxu0
    %436 = vmatprep.mubr.f32.mxu0 0.0
    %v437 = vand.u32 %v229, 4294901760
    %438 = vmatmul.mubr.f32.gmra.mrb[0].mxu0 %v437
    %v439 = vpop.f32.mrb[0].mxu0
    %v440 = vadd.f32 %v323, %v439
    %v441 = vpop.f32.mrb[0].mxu0
    %442 = vmatprep.mubr.f32.mxu0 0.0
    %v443 = vand.u32 %v232, 4294901760
    %444 = vmatmul.mubr.f32.gmra.mrb[0].mxu0 %v443
    %v445 = vpop.f32.mrb[0].mxu0
    %v446 = vadd.f32 %v333, %v445
    %v447 = vpop.f32.mrb[0].mxu0
    %448 = vmatprep.mubr.f32.mxu0 0.0
    %v449 = vand.u32 %v235, 4294901760
    %450 = vmatmul.mubr.f32.gmra.mrb[0].mxu0 %v449
    %v451 = vpop.f32.mrb[0].mxu0
    %v452 = vadd.f32 %v343, %v451
    %v453 = vpop.f32.mrb[0].mxu0
    %454 = vdwg.mxu0
    %455 = vmatprep.subr.mxu0 0.0
    %v456 = vand.u32 %v221, 4294901760
    %v457 = vsub.f32 %v221, %v456
    %458 = vmatpush1.msra.mxu0 %v457
    %459 = vmatprep.subr.mxu0 0.0
    %v460 = vand.u32 %v222, 4294901760
    %v461 = vsub.f32 %v222, %v460
    %462 = vmatpush1.msra.mxu0 %v461
    %463 = vmatprep.subr.mxu0 0.0
    %v464 = vand.u32 %v223, 4294901760
    %v465 = vsub.f32 %v223, %v464
    %466 = vmatpush1.msra.mxu0 %v465
    %467 = vmatprep.subr.mxu0 0.0
    %v468 = vand.u32 %v224, 4294901760
    %v469 = vsub.f32 %v224, %v468
    %470 = vmatpush1.msra.mxu0 %v469
    %471 = vmatprep.subr.mxu0 0.0
    %472 = vmatpush1.msra.mxu0 0.0
    %473 = vmatprep.subr.mxu0 0.0
    %474 = vmatpush1.msra.mxu0 0.0
    %475 = vmatprep.subr.mxu0 0.0
    %476 = vmatpush1.msra.mxu0 0.0
    %477 = vmatprep.subr.mxu0 0.0
    %478 = vmatpush1.msra.mxu0 0.0
    %479 = vmatprep.subr.mxu0 0.0
    %480 = vmatpush1.msra.mxu0 0.0
    %481 = vmatprep.subr.mxu0 0.0
    %482 = vmatpush1.msra.mxu0 0.0
    %483 = vmatprep.subr.mxu0 0.0
    %484 = vmatpush1.msra.mxu0 0.0
    %485 = vmatprep.subr.mxu0 0.0
    %486 = vmatpush1.msra.mxu0 0.0
    %487 = vmatprep.subr.mxu0 0.0
    %488 = vmatpush1.msra.mxu0 0.0
    %489 = vmatprep.subr.mxu0 0.0
    %490 = vmatpush1.msra.mxu0 0.0
    %491 = vmatprep.subr.mxu0 0.0
    %492 = vmatpush1.msra.mxu0 0.0
    %493 = vmatprep.subr.mxu0 0.0
    %494 = vmatpush1.msra.mxu0 0.0
    %495 = vmatprep.subr.mxu0 0.0
    %496 = vmatpush1.msra.mxu0 0.0
    %497 = vmatprep.subr.mxu0 0.0
    %498 = vmatpush1.msra.mxu0 0.0
    %499 = vmatprep.subr.mxu0 0.0
    %500 = vmatpush1.msra.mxu0 0.0
    %501 = vmatprep.subr.mxu0 0.0
    %502 = vmatpush1.msra.mxu0 0.0
    %503 = vmatprep.subr.mxu0 0.0
    %504 = vmatpush1.msra.mxu0 0.0
    %505 = vmatprep.subr.mxu0 0.0
    %506 = vmatpush1.msra.mxu0 0.0
    %507 = vmatprep.subr.mxu0 0.0
    %508 = vmatpush1.msra.mxu0 0.0
    %509 = vmatprep.subr.mxu0 0.0
    %510 = vmatpush1.msra.mxu0 0.0
    %511 = vmatprep.subr.mxu0 0.0
    %512 = vmatpush1.msra.mxu0 0.0
    %513 = vmatprep.subr.mxu0 0.0
    %514 = vmatpush1.msra.mxu0 0.0
    %515 = vmatprep.subr.mxu0 0.0
    %516 = vmatpush1.msra.mxu0 0.0
    %517 = vmatprep.subr.mxu0 0.0
    %518 = vmatpush1.msra.mxu0 0.0
    %519 = vmatprep.subr.mxu0 0.0
    %520 = vmatpush1.msra.mxu0 0.0
    %521 = vmatprep.subr.mxu0 0.0
    %522 = vmatpush1.msra.mxu0 0.0
    %523 = vmatprep.subr.mxu0 0.0
    %524 = vmatpush1.msra.mxu0 0.0
    %525 = vmatprep.subr.mxu0 0.0
    %526 = vmatpush1.msra.mxu0 0.0
    %527 = vmatprep.mubr.f32.mxu0 0.0
    %v528 = vand.u32 %v226, 4294901760
    %v529 = vsub.f32 %v226, %v528
    %530 = vmatmul.mubr.f32.gmra.mrb[0].mxu0 %v529
    %v531 = vpop.f32.mrb[0].mxu0
    %v532 = vadd.f32 %v434, %v531
    %v533 = vpop.f32.mrb[0].mxu0
    %534 = vmatprep.mubr.f32.mxu0 0.0
    %v535 = vand.u32 %v229, 4294901760
    %v536 = vsub.f32 %v229, %v535
    %537 = vmatmul.mubr.f32.gmra.mrb[0].mxu0 %v536
    %v538 = vpop.f32.mrb[0].mxu0
    %v539 = vadd.f32 %v440, %v538
    %v540 = vpop.f32.mrb[0].mxu0
    %541 = vmatprep.mubr.f32.mxu0 0.0
    %v542 = vand.u32 %v232, 4294901760
    %v543 = vsub.f32 %v232, %v542
    %544 = vmatmul.mubr.f32.gmra.mrb[0].mxu0 %v543
    %v545 = vpop.f32.mrb[0].mxu0
    %v546 = vadd.f32 %v446, %v545
    %v547 = vpop.f32.mrb[0].mxu0
    %548 = vmatprep.mubr.f32.mxu0 0.0
    %v549 = vand.u32 %v235, 4294901760
    %v550 = vsub.f32 %v235, %v549
    %551 = vmatmul.mubr.f32.gmra.mrb[0].mxu0 %v550
    %v552 = vpop.f32.mrb[0].mxu0
    %v553 = vadd.f32 %v452, %v552
    %v554 = vpop.f32.mrb[0].mxu0
    %555 = vdwg.mxu0
    %556 = vmatprep.subr.mxu0 0.0
    %v557 = vand.u32 %v221, 4294901760
    %558 = vmatpush1.msra.mxu0 %v557
    %559 = vmatprep.subr.mxu0 0.0
    %v560 = vand.u32 %v222, 4294901760
    %561 = vmatpush1.msra.mxu0 %v560
    %562 = vmatprep.subr.mxu0 0.0
    %v563 = vand.u32 %v223, 4294901760
    %564 = vmatpush1.msra.mxu0 %v563
    %565 = vmatprep.subr.mxu0 0.0
    %v566 = vand.u32 %v224, 4294901760
    %567 = vmatpush1.msra.mxu0 %v566
    %568 = vmatprep.subr.mxu0 0.0
    %569 = vmatpush1.msra.mxu0 0.0
    %570 = vmatprep.subr.mxu0 0.0
    %571 = vmatpush1.msra.mxu0 0.0
    %572 = vmatprep.subr.mxu0 0.0
    %573 = vmatpush1.msra.mxu0 0.0
    %574 = vmatprep.subr.mxu0 0.0
    %575 = vmatpush1.msra.mxu0 0.0
    %576 = vmatprep.subr.mxu0 0.0
    %577 = vmatpush1.msra.mxu0 0.0
    %578 = vmatprep.subr.mxu0 0.0
    %579 = vmatpush1.msra.mxu0 0.0
    %580 = vmatprep.subr.mxu0 0.0
    %581 = vmatpush1.msra.mxu0 0.0
    %582 = vmatprep.subr.mxu0 0.0
    %583 = vmatpush1.msra.mxu0 0.0
    %584 = vmatprep.subr.mxu0 0.0
    %585 = vmatpush1.msra.mxu0 0.0
    %586 = vmatprep.subr.mxu0 0.0
    %587 = vmatpush1.msra.mxu0 0.0
    %588 = vmatprep.subr.mxu0 0.0
    %589 = vmatpush1.msra.mxu0 0.0
    %590 = vmatprep.subr.mxu0 0.0
    %591 = vmatpush1.msra.mxu0 0.0
    %592 = vmatprep.subr.mxu0 0.0
    %593 = vmatpush1.msra.mxu0 0.0
    %594 = vmatprep.subr.mxu0 0.0
    %595 = vmatpush1.msra.mxu0 0.0
    %596 = vmatprep.subr.mxu0 0.0
    %597 = vmatpush1.msra.mxu0 0.0
    %598 = vmatprep.subr.mxu0 0.0
    %599 = vmatpush1.msra.mxu0 0.0
    %600 = vmatprep.subr.mxu0 0.0
    %601 = vmatpush1.msra.mxu0 0.0
    %602 = vmatprep.subr.mxu0 0.0
    %603 = vmatpush1.msra.mxu0 0.0
    %604 = vmatprep.subr.mxu0 0.0
    %605 = vmatpush1.msra.mxu0 0.0
    %606 = vmatprep.subr.mxu0 0.0
    %607 = vmatpush1.msra.mxu0 0.0
    %608 = vmatprep.subr.mxu0 0.0
    %609 = vmatpush1.msra.mxu0 0.0
    %610 = vmatprep.subr.mxu0 0.0
    %611 = vmatpush1.msra.mxu0 0.0
    %612 = vmatprep.subr.mxu0 0.0
    %613 = vmatpush1.msra.mxu0 0.0
    %614 = vmatprep.subr.mxu0 0.0
    %615 = vmatpush1.msra.mxu0 0.0
    %616 = vmatprep.subr.mxu0 0.0
    %617 = vmatpush1.msra.mxu0 0.0
    %618 = vmatprep.subr.mxu0 0.0
    %619 = vmatpush1.msra.mxu0 0.0
    %620 = vmatprep.subr.mxu0 0.0
    %621 = vmatpush1.msra.mxu0 0.0
    %622 = vmatprep.subr.mxu0 0.0
    %623 = vmatpush1.msra.mxu0 0.0
    %624 = vmatprep.mubr.f32.mxu0 0.0
    %v625 = vand.u32 %v226, 4294901760
    %v626 = vsub.f32 %v226, %v625
    %v627 = vand.u32 %v626, 4294901760
    %628 = vmatmul.mubr.f32.gmra.mrb[0].mxu0 %v627
    %v629 = vpop.f32.mrb[0].mxu0
    %v630 = vadd.f32 %v532, %v629
    %v631 = vpop.f32.mrb[0].mxu0
    %632 = vmatprep.mubr.f32.mxu0 0.0
    %v633 = vand.u32 %v229, 4294901760
    %v634 = vsub.f32 %v229, %v633
    %v635 = vand.u32 %v634, 4294901760
    %636 = vmatmul.mubr.f32.gmra.mrb[0].mxu0 %v635
    %v637 = vpop.f32.mrb[0].mxu0
    %v638 = vadd.f32 %v539, %v637
    %v639 = vpop.f32.mrb[0].mxu0
    %640 = vmatprep.mubr.f32.mxu0 0.0
    %v641 = vand.u32 %v232, 4294901760
    %v642 = vsub.f32 %v232, %v641
    %v643 = vand.u32 %v642, 4294901760
    %644 = vmatmul.mubr.f32.gmra.mrb[0].mxu0 %v643
    %v645 = vpop.f32.mrb[0].mxu0
    %v646 = vadd.f32 %v546, %v645
    %v647 = vpop.f32.mrb[0].mxu0
    %648 = vmatprep.mubr.f32.mxu0 0.0
    %v649 = vand.u32 %v235, 4294901760
    %v650 = vsub.f32 %v235, %v649
    %v651 = vand.u32 %v650, 4294901760
    %652 = vmatmul.mubr.f32.gmra.mrb[0].mxu0 %v651
    %v653 = vpop.f32.mrb[0].mxu0
    %v654 = vadd.f32 %v553, %v653
    %v655 = vpop.f32.mrb[0].mxu0
    %656 = vdwg.mxu0
    %657 = vmatprep.subr.mxu0 0.0
    %v658 = vand.u32 %v221, 4294901760
    %v659 = vsub.f32 %v221, %v658
    %v660 = vand.u32 %v659, 4294901760
    %661 = vmatpush1.msra.mxu0 %v660
    %662 = vmatprep.subr.mxu0 0.0
    %v663 = vand.u32 %v222, 4294901760
    %v664 = vsub.f32 %v222, %v663
    %v665 = vand.u32 %v664, 4294901760
    %666 = vmatpush1.msra.mxu0 %v665
    %667 = vmatprep.subr.mxu0 0.0
    %v668 = vand.u32 %v223, 4294901760
    %v669 = vsub.f32 %v223, %v668
    %v670 = vand.u32 %v669, 4294901760
    %671 = vmatpush1.msra.mxu0 %v670
    %672 = vmatprep.subr.mxu0 0.0
    %v673 = vand.u32 %v224, 4294901760
    %v674 = vsub.f32 %v224, %v673
    %v675 = vand.u32 %v674, 4294901760
    %676 = vmatpush1.msra.mxu0 %v675
    %677 = vmatprep.subr.mxu0 0.0
    %678 = vmatpush1.msra.mxu0 0.0
    %679 = vmatprep.subr.mxu0 0.0
    %680 = vmatpush1.msra.mxu0 0.0
    %681 = vmatprep.subr.mxu0 0.0
    %682 = vmatpush1.msra.mxu0 0.0
    %683 = vmatprep.subr.mxu0 0.0
    %684 = vmatpush1.msra.mxu0 0.0
    %685 = vmatprep.subr.mxu0 0.0
    %686 = vmatpush1.msra.mxu0 0.0
    %687 = vmatprep.subr.mxu0 0.0
    %688 = vmatpush1.msra.mxu0 0.0
    %689 = vmatprep.subr.mxu0 0.0
    %690 = vmatpush1.msra.mxu0 0.0
    %691 = vmatprep.subr.mxu0 0.0
    %692 = vmatpush1.msra.mxu0 0.0
    %693 = vmatprep.subr.mxu0 0.0
    %694 = vmatpush1.msra.mxu0 0.0
    %695 = vmatprep.subr.mxu0 0.0
    %696 = vmatpush1.msra.mxu0 0.0
    %697 = vmatprep.subr.mxu0 0.0
    %698 = vmatpush1.msra.mxu0 0.0
    %699 = vmatprep.subr.mxu0 0.0
    %700 = vmatpush1.msra.mxu0 0.0
    %701 = vmatprep.subr.mxu0 0.0
    %702 = vmatpush1.msra.mxu0 0.0
    %703 = vmatprep.subr.mxu0 0.0
    %704 = vmatpush1.msra.mxu0 0.0
    %705 = vmatprep.subr.mxu0 0.0
    %706 = vmatpush1.msra.mxu0 0.0
    %707 = vmatprep.subr.mxu0 0.0
    %708 = vmatpush1.msra.mxu0 0.0
    %709 = vmatprep.subr.mxu0 0.0
    %710 = vmatpush1.msra.mxu0 0.0
    %711 = vmatprep.subr.mxu0 0.0
    %712 = vmatpush1.msra.mxu0 0.0
    %713 = vmatprep.subr.mxu0 0.0
    %714 = vmatpush1.msra.mxu0 0.0
    %715 = vmatprep.subr.mxu0 0.0
    %716 = vmatpush1.msra.mxu0 0.0
    %717 = vmatprep.subr.mxu0 0.0
    %718 = vmatpush1.msra.mxu0 0.0
    %719 = vmatprep.subr.mxu0 0.0
    %720 = vmatpush1.msra.mxu0 0.0
    %721 = vmatprep.subr.mxu0 0.0
    %722 = vmatpush1.msra.mxu0 0.0
    %723 = vmatprep.subr.mxu0 0.0
    %724 = vmatpush1.msra.mxu0 0.0
    %725 = vmatprep.subr.mxu0 0.0
    %726 = vmatpush1.msra.mxu0 0.0
    %727 = vmatprep.subr.mxu0 0.0
    %728 = vmatpush1.msra.mxu0 0.0
    %729 = vmatprep.subr.mxu0 0.0
    %730 = vmatpush1.msra.mxu0 0.0
    %731 = vmatprep.subr.mxu0 0.0
    %732 = vmatpush1.msra.mxu0 0.0
    %733 = vmatprep.mubr.f32.mxu0 0.0
    %v734 = vand.u32 %v226, 4294901760
    %735 = vmatmul.mubr.f32.gmra.mrb[0].mxu0 %v734
    %v736 = vpop.f32.mrb[0].mxu0
    %v737 = vadd.f32 %v630, %v736
    %v738 = vpop.f32.mrb[0].mxu0
    %739 = vmatprep.mubr.f32.mxu0 0.0
    %v740 = vand.u32 %v229, 4294901760
    %741 = vmatmul.mubr.f32.gmra.mrb[0].mxu0 %v740
    %v742 = vpop.f32.mrb[0].mxu0
    %v743 = vadd.f32 %v638, %v742
    %v744 = vpop.f32.mrb[0].mxu0
    %745 = vmatprep.mubr.f32.mxu0 0.0
    %v746 = vand.u32 %v232, 4294901760
    %747 = vmatmul.mubr.f32.gmra.mrb[0].mxu0 %v746
    %v748 = vpop.f32.mrb[0].mxu0
    %v749 = vadd.f32 %v646, %v748
    %v750 = vpop.f32.mrb[0].mxu0
    %751 = vmatprep.mubr.f32.mxu0 0.0
    %v752 = vand.u32 %v235, 4294901760
    %753 = vmatmul.mubr.f32.gmra.mrb[0].mxu0 %v752
    %v754 = vpop.f32.mrb[0].mxu0
    %v755 = vadd.f32 %v654, %v754
    %v756 = vpop.f32.mrb[0].mxu0
    %757 = vdwg.mxu0
    %758 = vmatprep.subr.mxu0 0.0
    %v759 = vand.u32 %v221, 4294901760
    %760 = vmatpush1.msra.mxu0 %v759
    %761 = vmatprep.subr.mxu0 0.0
    %v762 = vand.u32 %v222, 4294901760
    %763 = vmatpush1.msra.mxu0 %v762
    %764 = vmatprep.subr.mxu0 0.0
    %v765 = vand.u32 %v223, 4294901760
    %766 = vmatpush1.msra.mxu0 %v765
    %767 = vmatprep.subr.mxu0 0.0
    %v768 = vand.u32 %v224, 4294901760
    %769 = vmatpush1.msra.mxu0 %v768
    %770 = vmatprep.subr.mxu0 0.0
    %771 = vmatpush1.msra.mxu0 0.0
    %772 = vmatprep.subr.mxu0 0.0
    %773 = vmatpush1.msra.mxu0 0.0
    %774 = vmatprep.subr.mxu0 0.0
    %775 = vmatpush1.msra.mxu0 0.0
    %776 = vmatprep.subr.mxu0 0.0
    %777 = vmatpush1.msra.mxu0 0.0
    %778 = vmatprep.subr.mxu0 0.0
    %779 = vmatpush1.msra.mxu0 0.0
    %780 = vmatprep.subr.mxu0 0.0
    %781 = vmatpush1.msra.mxu0 0.0
    %782 = vmatprep.subr.mxu0 0.0
    %783 = vmatpush1.msra.mxu0 0.0
    %784 = vmatprep.subr.mxu0 0.0
    %785 = vmatpush1.msra.mxu0 0.0
    %786 = vmatprep.subr.mxu0 0.0
    %787 = vmatpush1.msra.mxu0 0.0
    %788 = vmatprep.subr.mxu0 0.0
    %789 = vmatpush1.msra.mxu0 0.0
    %790 = vmatprep.subr.mxu0 0.0
    %791 = vmatpush1.msra.mxu0 0.0
    %792 = vmatprep.subr.mxu0 0.0
    %793 = vmatpush1.msra.mxu0 0.0
    %794 = vmatprep.subr.mxu0 0.0
    %795 = vmatpush1.msra.mxu0 0.0
    %796 = vmatprep.subr.mxu0 0.0
    %797 = vmatpush1.msra.mxu0 0.0
    %798 = vmatprep.subr.mxu0 0.0
    %799 = vmatpush1.msra.mxu0 0.0
    %800 = vmatprep.subr.mxu0 0.0
    %801 = vmatpush1.msra.mxu0 0.0
    %802 = vmatprep.subr.mxu0 0.0
    %803 = vmatpush1.msra.mxu0 0.0
    %804 = vmatprep.subr.mxu0 0.0
    %805 = vmatpush1.msra.mxu0 0.0
    %806 = vmatprep.subr.mxu0 0.0
    %807 = vmatpush1.msra.mxu0 0.0
    %808 = vmatprep.subr.mxu0 0.0
    %809 = vmatpush1.msra.mxu0 0.0
    %810 = vmatprep.subr.mxu0 0.0
    %811 = vmatpush1.msra.mxu0 0.0
    %812 = vmatprep.subr.mxu0 0.0
    %813 = vmatpush1.msra.mxu0 0.0
    %814 = vmatprep.subr.mxu0 0.0
    %815 = vmatpush1.msra.mxu0 0.0
    %816 = vmatprep.subr.mxu0 0.0
    %817 = vmatpush1.msra.mxu0 0.0
    %818 = vmatprep.subr.mxu0 0.0
    %819 = vmatpush1.msra.mxu0 0.0
    %820 = vmatprep.subr.mxu0 0.0
    %821 = vmatpush1.msra.mxu0 0.0
    %822 = vmatprep.subr.mxu0 0.0
    %823 = vmatpush1.msra.mxu0 0.0
    %824 = vmatprep.subr.mxu0 0.0
    %825 = vmatpush1.msra.mxu0 0.0
    %826 = vmatprep.mubr.f32.mxu0 0.0
    %v827 = vand.u32 %v226, 4294901760
    %828 = vmatmul.mubr.f32.gmra.mrb[0].mxu0 %v827
    %v829 = vpop.f32.mrb[0].mxu0
    %v830 = vadd.f32 %v737, %v829
    %v831 = vpop.f32.mrb[0].mxu0
    %832 = vmatprep.mubr.f32.mxu0 0.0
    %v833 = vand.u32 %v229, 4294901760
    %834 = vmatmul.mubr.f32.gmra.mrb[0].mxu0 %v833
    %v835 = vpop.f32.mrb[0].mxu0
    %v836 = vadd.f32 %v743, %v835
    %v837 = vpop.f32.mrb[0].mxu0
    %838 = vmatprep.mubr.f32.mxu0 0.0
    %v839 = vand.u32 %v232, 4294901760
    %840 = vmatmul.mubr.f32.gmra.mrb[0].mxu0 %v839
    %v841 = vpop.f32.mrb[0].mxu0
    %v842 = vadd.f32 %v749, %v841
    %v843 = vpop.f32.mrb[0].mxu0
    %844 = vmatprep.mubr.f32.mxu0 0.0
    %v845 = vand.u32 %v235, 4294901760
    %846 = vmatmul.mubr.f32.gmra.mrb[0].mxu0 %v845
    %v847 = vpop.f32.mrb[0].mxu0
    %v848 = vadd.f32 %v755, %v847
    %v849 = vpop.f32.mrb[0].mxu0
    %850 = vdwg.mxu0
    %v851 = vsel %vm151, %v128, 0.0
    %852 = vadd.xlane.f32.xlu0 %v851
    %v853 = vpop.xlane.xlu0 %852
    %v854 = vsel %vm151, %v130, 0.0
    %855 = vadd.xlane.f32.xlu0 %v854
    %v856 = vpop.xlane.xlu0 %855
    %v857 = vmul.f32 %v853, %v164
    %v858 = vmul.f32 %v856, %v164
    %v859 = vsub.f32 %v128, %v857
    %v860 = vsub.f32 %v130, %v858
    %v861 = vmul.f32 %v859, %v859
    %v862 = vmul.f32 %v860, %v860
    %v863 = vsel %vm151, %v861, 0.0
    %864 = vadd.xlane.f32.xlu0 %v863
    %v865 = vpop.xlane.xlu0 %864
    %v866 = vsel %vm151, %v862, 0.0
    %867 = vadd.xlane.f32.xlu0 %v866
    %v868 = vpop.xlane.xlu0 %867
    %v869 = vmul.f32 %v865, %v164
    %v870 = vmul.f32 %v868, %v164
    %v871 = vadd.f32 %v869, 1e-05
    %v872 = vadd.f32 %v870, 1e-05
    %v873 = vrsqrt.pop %v871
    %v874 = vrsqrt.pop %v872
    %v875 = vmul.f32 %v859, %v873
    %v876 = vmul.f32 %v860, %v874
    %v877 = vlaneseq
    %v878 = vshrl.u32 %v877, 7
    %v879 = vsub.s32 0, %v878
    %v880 = vrot.slane %v133, %v879
    %v881 = vmul.f32 %v875, %v880
    %v882 = vmul.f32 %v876, %v880
    %v883 = vlaneseq
    %v884 = vshrl.u32 %v883, 7
    %v885 = vsub.s32 0, %v884
    %v886 = vrot.slane %v134, %v885
    %v887 = vadd.f32 %v881, %v886
    %v888 = vadd.f32 %v882, %v886
    %v890 = vsel %vm151, %v887, 0
    %v893 = vsel %vm151, %v888, 0
    %895 = vmatprep.subr.mxu0 0.0
    %v896 = vand.u32 %v139, 4294901760
    %897 = vmatpush1.msra.mxu0 %v896
    %898 = vmatprep.subr.mxu0 0.0
    %v899 = vand.u32 %v140, 4294901760
    %900 = vmatpush1.msra.mxu0 %v899
    %901 = vmatprep.subr.mxu0 0.0
    %v902 = vand.u32 %v141, 4294901760
    %903 = vmatpush1.msra.mxu0 %v902
    %904 = vmatprep.subr.mxu0 0.0
    %v905 = vand.u32 %v142, 4294901760
    %906 = vmatpush1.msra.mxu0 %v905
    %907 = vmatprep.subr.mxu0 0.0
    %908 = vmatpush1.msra.mxu0 0.0
    %909 = vmatprep.subr.mxu0 0.0
    %910 = vmatpush1.msra.mxu0 0.0
    %911 = vmatprep.subr.mxu0 0.0
    %912 = vmatpush1.msra.mxu0 0.0
    %913 = vmatprep.subr.mxu0 0.0
    %914 = vmatpush1.msra.mxu0 0.0
    %915 = vmatprep.subr.mxu0 0.0
    %916 = vmatpush1.msra.mxu0 0.0
    %917 = vmatprep.subr.mxu0 0.0
    %918 = vmatpush1.msra.mxu0 0.0
    %919 = vmatprep.subr.mxu0 0.0
    %920 = vmatpush1.msra.mxu0 0.0
    %921 = vmatprep.subr.mxu0 0.0
    %922 = vmatpush1.msra.mxu0 0.0
    %923 = vmatprep.subr.mxu0 0.0
    %924 = vmatpush1.msra.mxu0 0.0
    %925 = vmatprep.subr.mxu0 0.0
    %926 = vmatpush1.msra.mxu0 0.0
    %927 = vmatprep.subr.mxu0 0.0
    %928 = vmatpush1.msra.mxu0 0.0
    %929 = vmatprep.subr.mxu0 0.0
    %930 = vmatpush1.msra.mxu0 0.0
    %931 = vmatprep.subr.mxu0 0.0
    %932 = vmatpush1.msra.mxu0 0.0
    %933 = vmatprep.subr.mxu0 0.0
    %934 = vmatpush1.msra.mxu0 0.0
    %935 = vmatprep.subr.mxu0 0.0
    %936 = vmatpush1.msra.mxu0 0.0
    %937 = vmatprep.subr.mxu0 0.0
    %938 = vmatpush1.msra.mxu0 0.0
    %939 = vmatprep.subr.mxu0 0.0
    %940 = vmatpush1.msra.mxu0 0.0
    %941 = vmatprep.subr.mxu0 0.0
    %942 = vmatpush1.msra.mxu0 0.0
    %943 = vmatprep.subr.mxu0 0.0
    %944 = vmatpush1.msra.mxu0 0.0
    %945 = vmatprep.subr.mxu0 0.0
    %946 = vmatpush1.msra.mxu0 0.0
    %947 = vmatprep.subr.mxu0 0.0
    %948 = vmatpush1.msra.mxu0 0.0
    %949 = vmatprep.subr.mxu0 0.0
    %950 = vmatpush1.msra.mxu0 0.0
    %951 = vmatprep.subr.mxu0 0.0
    %952 = vmatpush1.msra.mxu0 0.0
    %953 = vmatprep.subr.mxu0 0.0
    %954 = vmatpush1.msra.mxu0 0.0
    %955 = vmatprep.subr.mxu0 0.0
    %956 = vmatpush1.msra.mxu0 0.0
    %957 = vmatprep.subr.mxu0 0.0
    %958 = vmatpush1.msra.mxu0 0.0
    %959 = vmatprep.subr.mxu0 0.0
    %960 = vmatpush1.msra.mxu0 0.0
    %961 = vmatprep.subr.mxu0 0.0
    %962 = vmatpush1.msra.mxu0 0.0
    %963 = vmatprep.mubr.f32.mxu0 0.0
    %v964 = vand.u32 %v890, 4294901760
    %v965 = vsub.f32 %v890, %v964
    %v966 = vand.u32 %v965, 4294901760
    %v967 = vsub.f32 %v965, %v966
    %v968 = vand.u32 %v967, 4294901760
    %969 = vmatmul.mubr.f32.gmra.mrb[0].mxu0 %v968
    %v970 = vpop.f32.mrb[0].mxu0
    %v971 = vadd.f32 0.0, %v970
    %v972 = vpop.f32.mrb[0].mxu0
    %973 = vmatprep.mubr.f32.mxu0 0.0
    %v974 = vand.u32 %v893, 4294901760
    %v975 = vsub.f32 %v893, %v974
    %v976 = vand.u32 %v975, 4294901760
    %v977 = vsub.f32 %v975, %v976
    %v978 = vand.u32 %v977, 4294901760
    %979 = vmatmul.mubr.f32.gmra.mrb[0].mxu0 %v978
    %v980 = vpop.f32.mrb[0].mxu0
    %v981 = vadd.f32 0.0, %v980
    %v982 = vpop.f32.mrb[0].mxu0
    %983 = vdwg.mxu0
    %984 = vmatprep.subr.mxu0 0.0
    %v985 = vand.u32 %v139, 4294901760
    %v986 = vsub.f32 %v139, %v985
    %v987 = vand.u32 %v986, 4294901760
    %v988 = vsub.f32 %v986, %v987
    %v989 = vand.u32 %v988, 4294901760
    %990 = vmatpush1.msra.mxu0 %v989
    %991 = vmatprep.subr.mxu0 0.0
    %v992 = vand.u32 %v140, 4294901760
    %v993 = vsub.f32 %v140, %v992
    %v994 = vand.u32 %v993, 4294901760
    %v995 = vsub.f32 %v993, %v994
    %v996 = vand.u32 %v995, 4294901760
    %997 = vmatpush1.msra.mxu0 %v996
    %998 = vmatprep.subr.mxu0 0.0
    %v999 = vand.u32 %v141, 4294901760
    %v1000 = vsub.f32 %v141, %v999
    %v1001 = vand.u32 %v1000, 4294901760
    %v1002 = vsub.f32 %v1000, %v1001
    %v1003 = vand.u32 %v1002, 4294901760
    %1004 = vmatpush1.msra.mxu0 %v1003
    %1005 = vmatprep.subr.mxu0 0.0
    %v1006 = vand.u32 %v142, 4294901760
    %v1007 = vsub.f32 %v142, %v1006
    %v1008 = vand.u32 %v1007, 4294901760
    %v1009 = vsub.f32 %v1007, %v1008
    %v1010 = vand.u32 %v1009, 4294901760
    %1011 = vmatpush1.msra.mxu0 %v1010
    %1012 = vmatprep.subr.mxu0 0.0
    %1013 = vmatpush1.msra.mxu0 0.0
    %1014 = vmatprep.subr.mxu0 0.0
    %1015 = vmatpush1.msra.mxu0 0.0
    %1016 = vmatprep.subr.mxu0 0.0
    %1017 = vmatpush1.msra.mxu0 0.0
    %1018 = vmatprep.subr.mxu0 0.0
    %1019 = vmatpush1.msra.mxu0 0.0
    %1020 = vmatprep.subr.mxu0 0.0
    %1021 = vmatpush1.msra.mxu0 0.0
    %1022 = vmatprep.subr.mxu0 0.0
    %1023 = vmatpush1.msra.mxu0 0.0
    %1024 = vmatprep.subr.mxu0 0.0
    %1025 = vmatpush1.msra.mxu0 0.0
    %1026 = vmatprep.subr.mxu0 0.0
    %1027 = vmatpush1.msra.mxu0 0.0
    %1028 = vmatprep.subr.mxu0 0.0
    %1029 = vmatpush1.msra.mxu0 0.0
    %1030 = vmatprep.subr.mxu0 0.0
    %1031 = vmatpush1.msra.mxu0 0.0
    %1032 = vmatprep.subr.mxu0 0.0
    %1033 = vmatpush1.msra.mxu0 0.0
    %1034 = vmatprep.subr.mxu0 0.0
    %1035 = vmatpush1.msra.mxu0 0.0
    %1036 = vmatprep.subr.mxu0 0.0
    %1037 = vmatpush1.msra.mxu0 0.0
    %1038 = vmatprep.subr.mxu0 0.0
    %1039 = vmatpush1.msra.mxu0 0.0
    %1040 = vmatprep.subr.mxu0 0.0
    %1041 = vmatpush1.msra.mxu0 0.0
    %1042 = vmatprep.subr.mxu0 0.0
    %1043 = vmatpush1.msra.mxu0 0.0
    %1044 = vmatprep.subr.mxu0 0.0
    %1045 = vmatpush1.msra.mxu0 0.0
    %1046 = vmatprep.subr.mxu0 0.0
    %1047 = vmatpush1.msra.mxu0 0.0
    %1048 = vmatprep.subr.mxu0 0.0
    %1049 = vmatpush1.msra.mxu0 0.0
    %1050 = vmatprep.subr.mxu0 0.0
    %1051 = vmatpush1.msra.mxu0 0.0
    %1052 = vmatprep.subr.mxu0 0.0
    %1053 = vmatpush1.msra.mxu0 0.0
    %1054 = vmatprep.subr.mxu0 0.0
    %1055 = vmatpush1.msra.mxu0 0.0
    %1056 = vmatprep.subr.mxu0 0.0
    %1057 = vmatpush1.msra.mxu0 0.0
    %1058 = vmatprep.subr.mxu0 0.0
    %1059 = vmatpush1.msra.mxu0 0.0
    %1060 = vmatprep.subr.mxu0 0.0
    %1061 = vmatpush1.msra.mxu0 0.0
    %1062 = vmatprep.subr.mxu0 0.0
    %1063 = vmatpush1.msra.mxu0 0.0
    %1064 = vmatprep.subr.mxu0 0.0
    %1065 = vmatpush1.msra.mxu0 0.0
    %1066 = vmatprep.subr.mxu0 0.0
    %1067 = vmatpush1.msra.mxu0 0.0
    %1068 = vmatprep.mubr.f32.mxu0 0.0
    %v1069 = vand.u32 %v890, 4294901760
    %1070 = vmatmul.mubr.f32.gmra.mrb[0].mxu0 %v1069
    %v1071 = vpop.f32.mrb[0].mxu0
    %v1072 = vadd.f32 %v971, %v1071
    %v1073 = vpop.f32.mrb[0].mxu0
    %1074 = vmatprep.mubr.f32.mxu0 0.0
    %v1075 = vand.u32 %v893, 4294901760
    %1076 = vmatmul.mubr.f32.gmra.mrb[0].mxu0 %v1075
    %v1077 = vpop.f32.mrb[0].mxu0
    %v1078 = vadd.f32 %v981, %v1077
    %v1079 = vpop.f32.mrb[0].mxu0
    %1080 = vdwg.mxu0
    %1081 = vmatprep.subr.mxu0 0.0
    %v1082 = vand.u32 %v139, 4294901760
    %v1083 = vsub.f32 %v139, %v1082
    %1084 = vmatpush1.msra.mxu0 %v1083
    %1085 = vmatprep.subr.mxu0 0.0
    %v1086 = vand.u32 %v140, 4294901760
    %v1087 = vsub.f32 %v140, %v1086
    %1088 = vmatpush1.msra.mxu0 %v1087
    %1089 = vmatprep.subr.mxu0 0.0
    %v1090 = vand.u32 %v141, 4294901760
    %v1091 = vsub.f32 %v141, %v1090
    %1092 = vmatpush1.msra.mxu0 %v1091
    %1093 = vmatprep.subr.mxu0 0.0
    %v1094 = vand.u32 %v142, 4294901760
    %v1095 = vsub.f32 %v142, %v1094
    %1096 = vmatpush1.msra.mxu0 %v1095
    %1097 = vmatprep.subr.mxu0 0.0
    %1098 = vmatpush1.msra.mxu0 0.0
    %1099 = vmatprep.subr.mxu0 0.0
    %1100 = vmatpush1.msra.mxu0 0.0
    %1101 = vmatprep.subr.mxu0 0.0
    %1102 = vmatpush1.msra.mxu0 0.0
    %1103 = vmatprep.subr.mxu0 0.0
    %1104 = vmatpush1.msra.mxu0 0.0
    %1105 = vmatprep.subr.mxu0 0.0
    %1106 = vmatpush1.msra.mxu0 0.0
    %1107 = vmatprep.subr.mxu0 0.0
    %1108 = vmatpush1.msra.mxu0 0.0
    %1109 = vmatprep.subr.mxu0 0.0
    %1110 = vmatpush1.msra.mxu0 0.0
    %1111 = vmatprep.subr.mxu0 0.0
    %1112 = vmatpush1.msra.mxu0 0.0
    %1113 = vmatprep.subr.mxu0 0.0
    %1114 = vmatpush1.msra.mxu0 0.0
    %1115 = vmatprep.subr.mxu0 0.0
    %1116 = vmatpush1.msra.mxu0 0.0
    %1117 = vmatprep.subr.mxu0 0.0
    %1118 = vmatpush1.msra.mxu0 0.0
    %1119 = vmatprep.subr.mxu0 0.0
    %1120 = vmatpush1.msra.mxu0 0.0
    %1121 = vmatprep.subr.mxu0 0.0
    %1122 = vmatpush1.msra.mxu0 0.0
    %1123 = vmatprep.subr.mxu0 0.0
    %1124 = vmatpush1.msra.mxu0 0.0
    %1125 = vmatprep.subr.mxu0 0.0
    %1126 = vmatpush1.msra.mxu0 0.0
    %1127 = vmatprep.subr.mxu0 0.0
    %1128 = vmatpush1.msra.mxu0 0.0
    %1129 = vmatprep.subr.mxu0 0.0
    %1130 = vmatpush1.msra.mxu0 0.0
    %1131 = vmatprep.subr.mxu0 0.0
    %1132 = vmatpush1.msra.mxu0 0.0
    %1133 = vmatprep.subr.mxu0 0.0
    %1134 = vmatpush1.msra.mxu0 0.0
    %1135 = vmatprep.subr.mxu0 0.0
    %1136 = vmatpush1.msra.mxu0 0.0
    %1137 = vmatprep.subr.mxu0 0.0
    %1138 = vmatpush1.msra.mxu0 0.0
    %1139 = vmatprep.subr.mxu0 0.0
    %1140 = vmatpush1.msra.mxu0 0.0
    %1141 = vmatprep.subr.mxu0 0.0
    %1142 = vmatpush1.msra.mxu0 0.0
    %1143 = vmatprep.subr.mxu0 0.0
    %1144 = vmatpush1.msra.mxu0 0.0
    %1145 = vmatprep.subr.mxu0 0.0
    %1146 = vmatpush1.msra.mxu0 0.0
    %1147 = vmatprep.subr.mxu0 0.0
    %1148 = vmatpush1.msra.mxu0 0.0
    %1149 = vmatprep.subr.mxu0 0.0
    %1150 = vmatpush1.msra.mxu0 0.0
    %1151 = vmatprep.subr.mxu0 0.0
    %1152 = vmatpush1.msra.mxu0 0.0
    %1153 = vmatprep.mubr.f32.mxu0 0.0
    %v1154 = vand.u32 %v890, 4294901760
    %v1155 = vsub.f32 %v890, %v1154
    %1156 = vmatmul.mubr.f32.gmra.mrb[0].mxu0 %v1155
    %v1157 = vpop.f32.mrb[0].mxu0
    %v1158 = vadd.f32 %v1072, %v1157
    %v1159 = vpop.f32.mrb[0].mxu0
    %1160 = vmatprep.mubr.f32.mxu0 0.0
    %v1161 = vand.u32 %v893, 4294901760
    %v1162 = vsub.f32 %v893, %v1161
    %1163 = vmatmul.mubr.f32.gmra.mrb[0].mxu0 %v1162
    %v1164 = vpop.f32.mrb[0].mxu0
    %v1165 = vadd.f32 %v1078, %v1164
    %v1166 = vpop.f32.mrb[0].mxu0
    %1167 = vdwg.mxu0
    %1168 = vmatprep.subr.mxu0 0.0
    %v1169 = vand.u32 %v139, 4294901760
    %1170 = vmatpush1.msra.mxu0 %v1169
    %1171 = vmatprep.subr.mxu0 0.0
    %v1172 = vand.u32 %v140, 4294901760
    %1173 = vmatpush1.msra.mxu0 %v1172
    %1174 = vmatprep.subr.mxu0 0.0
    %v1175 = vand.u32 %v141, 4294901760
    %1176 = vmatpush1.msra.mxu0 %v1175
    %1177 = vmatprep.subr.mxu0 0.0
    %v1178 = vand.u32 %v142, 4294901760
    %1179 = vmatpush1.msra.mxu0 %v1178
    %1180 = vmatprep.subr.mxu0 0.0
    %1181 = vmatpush1.msra.mxu0 0.0
    %1182 = vmatprep.subr.mxu0 0.0
    %1183 = vmatpush1.msra.mxu0 0.0
    %1184 = vmatprep.subr.mxu0 0.0
    %1185 = vmatpush1.msra.mxu0 0.0
    %1186 = vmatprep.subr.mxu0 0.0
    %1187 = vmatpush1.msra.mxu0 0.0
    %1188 = vmatprep.subr.mxu0 0.0
    %1189 = vmatpush1.msra.mxu0 0.0
    %1190 = vmatprep.subr.mxu0 0.0
    %1191 = vmatpush1.msra.mxu0 0.0
    %1192 = vmatprep.subr.mxu0 0.0
    %1193 = vmatpush1.msra.mxu0 0.0
    %1194 = vmatprep.subr.mxu0 0.0
    %1195 = vmatpush1.msra.mxu0 0.0
    %1196 = vmatprep.subr.mxu0 0.0
    %1197 = vmatpush1.msra.mxu0 0.0
    %1198 = vmatprep.subr.mxu0 0.0
    %1199 = vmatpush1.msra.mxu0 0.0
    %1200 = vmatprep.subr.mxu0 0.0
    %1201 = vmatpush1.msra.mxu0 0.0
    %1202 = vmatprep.subr.mxu0 0.0
    %1203 = vmatpush1.msra.mxu0 0.0
    %1204 = vmatprep.subr.mxu0 0.0
    %1205 = vmatpush1.msra.mxu0 0.0
    %1206 = vmatprep.subr.mxu0 0.0
    %1207 = vmatpush1.msra.mxu0 0.0
    %1208 = vmatprep.subr.mxu0 0.0
    %1209 = vmatpush1.msra.mxu0 0.0
    %1210 = vmatprep.subr.mxu0 0.0
    %1211 = vmatpush1.msra.mxu0 0.0
    %1212 = vmatprep.subr.mxu0 0.0
    %1213 = vmatpush1.msra.mxu0 0.0
    %1214 = vmatprep.subr.mxu0 0.0
    %1215 = vmatpush1.msra.mxu0 0.0
    %1216 = vmatprep.subr.mxu0 0.0
    %1217 = vmatpush1.msra.mxu0 0.0
    %1218 = vmatprep.subr.mxu0 0.0
    %1219 = vmatpush1.msra.mxu0 0.0
    %1220 = vmatprep.subr.mxu0 0.0
    %1221 = vmatpush1.msra.mxu0 0.0
    %1222 = vmatprep.subr.mxu0 0.0
    %1223 = vmatpush1.msra.mxu0 0.0
    %1224 = vmatprep.subr.mxu0 0.0
    %1225 = vmatpush1.msra.mxu0 0.0
    %1226 = vmatprep.subr.mxu0 0.0
    %1227 = vmatpush1.msra.mxu0 0.0
    %1228 = vmatprep.subr.mxu0 0.0
    %1229 = vmatpush1.msra.mxu0 0.0
    %1230 = vmatprep.subr.mxu0 0.0
    %1231 = vmatpush1.msra.mxu0 0.0
    %1232 = vmatprep.subr.mxu0 0.0
    %1233 = vmatpush1.msra.mxu0 0.0
    %1234 = vmatprep.subr.mxu0 0.0
    %1235 = vmatpush1.msra.mxu0 0.0
    %1236 = vmatprep.mubr.f32.mxu0 0.0
    %v1237 = vand.u32 %v890, 4294901760
    %v1238 = vsub.f32 %v890, %v1237
    %v1239 = vand.u32 %v1238, 4294901760
    %1240 = vmatmul.mubr.f32.gmra.mrb[0].mxu0 %v1239
    %v1241 = vpop.f32.mrb[0].mxu0
    %v1242 = vadd.f32 %v1158, %v1241
    %v1243 = vpop.f32.mrb[0].mxu0
    %1244 = vmatprep.mubr.f32.mxu0 0.0
    %v1245 = vand.u32 %v893, 4294901760
    %v1246 = vsub.f32 %v893, %v1245
    %v1247 = vand.u32 %v1246, 4294901760
    %1248 = vmatmul.mubr.f32.gmra.mrb[0].mxu0 %v1247
    %v1249 = vpop.f32.mrb[0].mxu0
    %v1250 = vadd.f32 %v1165, %v1249
    %v1251 = vpop.f32.mrb[0].mxu0
    %1252 = vdwg.mxu0
    %1253 = vmatprep.subr.mxu0 0.0
    %v1254 = vand.u32 %v139, 4294901760
    %v1255 = vsub.f32 %v139, %v1254
    %v1256 = vand.u32 %v1255, 4294901760
    %1257 = vmatpush1.msra.mxu0 %v1256
    %1258 = vmatprep.subr.mxu0 0.0
    %v1259 = vand.u32 %v140, 4294901760
    %v1260 = vsub.f32 %v140, %v1259
    %v1261 = vand.u32 %v1260, 4294901760
    %1262 = vmatpush1.msra.mxu0 %v1261
    %1263 = vmatprep.subr.mxu0 0.0
    %v1264 = vand.u32 %v141, 4294901760
    %v1265 = vsub.f32 %v141, %v1264
    %v1266 = vand.u32 %v1265, 4294901760
    %1267 = vmatpush1.msra.mxu0 %v1266
    %1268 = vmatprep.subr.mxu0 0.0
    %v1269 = vand.u32 %v142, 4294901760
    %v1270 = vsub.f32 %v142, %v1269
    %v1271 = vand.u32 %v1270, 4294901760
    %1272 = vmatpush1.msra.mxu0 %v1271
    %1273 = vmatprep.subr.mxu0 0.0
    %1274 = vmatpush1.msra.mxu0 0.0
    %1275 = vmatprep.subr.mxu0 0.0
    %1276 = vmatpush1.msra.mxu0 0.0
    %1277 = vmatprep.subr.mxu0 0.0
    %1278 = vmatpush1.msra.mxu0 0.0
    %1279 = vmatprep.subr.mxu0 0.0
    %1280 = vmatpush1.msra.mxu0 0.0
    %1281 = vmatprep.subr.mxu0 0.0
    %1282 = vmatpush1.msra.mxu0 0.0
    %1283 = vmatprep.subr.mxu0 0.0
    %1284 = vmatpush1.msra.mxu0 0.0
    %1285 = vmatprep.subr.mxu0 0.0
    %1286 = vmatpush1.msra.mxu0 0.0
    %1287 = vmatprep.subr.mxu0 0.0
    %1288 = vmatpush1.msra.mxu0 0.0
    %1289 = vmatprep.subr.mxu0 0.0
    %1290 = vmatpush1.msra.mxu0 0.0
    %1291 = vmatprep.subr.mxu0 0.0
    %1292 = vmatpush1.msra.mxu0 0.0
    %1293 = vmatprep.subr.mxu0 0.0
    %1294 = vmatpush1.msra.mxu0 0.0
    %1295 = vmatprep.subr.mxu0 0.0
    %1296 = vmatpush1.msra.mxu0 0.0
    %1297 = vmatprep.subr.mxu0 0.0
    %1298 = vmatpush1.msra.mxu0 0.0
    %1299 = vmatprep.subr.mxu0 0.0
    %1300 = vmatpush1.msra.mxu0 0.0
    %1301 = vmatprep.subr.mxu0 0.0
    %1302 = vmatpush1.msra.mxu0 0.0
    %1303 = vmatprep.subr.mxu0 0.0
    %1304 = vmatpush1.msra.mxu0 0.0
    %1305 = vmatprep.subr.mxu0 0.0
    %1306 = vmatpush1.msra.mxu0 0.0
    %1307 = vmatprep.subr.mxu0 0.0
    %1308 = vmatpush1.msra.mxu0 0.0
    %1309 = vmatprep.subr.mxu0 0.0
    %1310 = vmatpush1.msra.mxu0 0.0
    %1311 = vmatprep.subr.mxu0 0.0
    %1312 = vmatpush1.msra.mxu0 0.0
    %1313 = vmatprep.subr.mxu0 0.0
    %1314 = vmatpush1.msra.mxu0 0.0
    %1315 = vmatprep.subr.mxu0 0.0
    %1316 = vmatpush1.msra.mxu0 0.0
    %1317 = vmatprep.subr.mxu0 0.0
    %1318 = vmatpush1.msra.mxu0 0.0
    %1319 = vmatprep.subr.mxu0 0.0
    %1320 = vmatpush1.msra.mxu0 0.0
    %1321 = vmatprep.subr.mxu0 0.0
    %1322 = vmatpush1.msra.mxu0 0.0
    %1323 = vmatprep.subr.mxu0 0.0
    %1324 = vmatpush1.msra.mxu0 0.0
    %1325 = vmatprep.subr.mxu0 0.0
    %1326 = vmatpush1.msra.mxu0 0.0
    %1327 = vmatprep.subr.mxu0 0.0
    %1328 = vmatpush1.msra.mxu0 0.0
    %1329 = vmatprep.mubr.f32.mxu0 0.0
    %v1330 = vand.u32 %v890, 4294901760
    %1331 = vmatmul.mubr.f32.gmra.mrb[0].mxu0 %v1330
    %v1332 = vpop.f32.mrb[0].mxu0
    %v1333 = vadd.f32 %v1242, %v1332
    %v1334 = vpop.f32.mrb[0].mxu0
    %1335 = vmatprep.mubr.f32.mxu0 0.0
    %v1336 = vand.u32 %v893, 4294901760
    %1337 = vmatmul.mubr.f32.gmra.mrb[0].mxu0 %v1336
    %v1338 = vpop.f32.mrb[0].mxu0
    %v1339 = vadd.f32 %v1250, %v1338
    %v1340 = vpop.f32.mrb[0].mxu0
    %1341 = vdwg.mxu0
    %1342 = vmatprep.subr.mxu0 0.0
    %v1343 = vand.u32 %v139, 4294901760
    %1344 = vmatpush1.msra.mxu0 %v1343
    %1345 = vmatprep.subr.mxu0 0.0
    %v1346 = vand.u32 %v140, 4294901760
    %1347 = vmatpush1.msra.mxu0 %v1346
    %1348 = vmatprep.subr.mxu0 0.0
    %v1349 = vand.u32 %v141, 4294901760
    %1350 = vmatpush1.msra.mxu0 %v1349
    %1351 = vmatprep.subr.mxu0 0.0
    %v1352 = vand.u32 %v142, 4294901760
    %1353 = vmatpush1.msra.mxu0 %v1352
    %1354 = vmatprep.subr.mxu0 0.0
    %1355 = vmatpush1.msra.mxu0 0.0
    %1356 = vmatprep.subr.mxu0 0.0
    %1357 = vmatpush1.msra.mxu0 0.0
    %1358 = vmatprep.subr.mxu0 0.0
    %1359 = vmatpush1.msra.mxu0 0.0
    %1360 = vmatprep.subr.mxu0 0.0
    %1361 = vmatpush1.msra.mxu0 0.0
    %1362 = vmatprep.subr.mxu0 0.0
    %1363 = vmatpush1.msra.mxu0 0.0
    %1364 = vmatprep.subr.mxu0 0.0
    %1365 = vmatpush1.msra.mxu0 0.0
    %1366 = vmatprep.subr.mxu0 0.0
    %1367 = vmatpush1.msra.mxu0 0.0
    %1368 = vmatprep.subr.mxu0 0.0
    %1369 = vmatpush1.msra.mxu0 0.0
    %1370 = vmatprep.subr.mxu0 0.0
    %1371 = vmatpush1.msra.mxu0 0.0
    %1372 = vmatprep.subr.mxu0 0.0
    %1373 = vmatpush1.msra.mxu0 0.0
    %1374 = vmatprep.subr.mxu0 0.0
    %1375 = vmatpush1.msra.mxu0 0.0
    %1376 = vmatprep.subr.mxu0 0.0
    %1377 = vmatpush1.msra.mxu0 0.0
    %1378 = vmatprep.subr.mxu0 0.0
    %1379 = vmatpush1.msra.mxu0 0.0
    %1380 = vmatprep.subr.mxu0 0.0
    %1381 = vmatpush1.msra.mxu0 0.0
    %1382 = vmatprep.subr.mxu0 0.0
    %1383 = vmatpush1.msra.mxu0 0.0
    %1384 = vmatprep.subr.mxu0 0.0
    %1385 = vmatpush1.msra.mxu0 0.0
    %1386 = vmatprep.subr.mxu0 0.0
    %1387 = vmatpush1.msra.mxu0 0.0
    %1388 = vmatprep.subr.mxu0 0.0
    %1389 = vmatpush1.msra.mxu0 0.0
    %1390 = vmatprep.subr.mxu0 0.0
    %1391 = vmatpush1.msra.mxu0 0.0
    %1392 = vmatprep.subr.mxu0 0.0
    %1393 = vmatpush1.msra.mxu0 0.0
    %1394 = vmatprep.subr.mxu0 0.0
    %1395 = vmatpush1.msra.mxu0 0.0
    %1396 = vmatprep.subr.mxu0 0.0
    %1397 = vmatpush1.msra.mxu0 0.0
    %1398 = vmatprep.subr.mxu0 0.0
    %1399 = vmatpush1.msra.mxu0 0.0
    %1400 = vmatprep.subr.mxu0 0.0
    %1401 = vmatpush1.msra.mxu0 0.0
    %1402 = vmatprep.subr.mxu0 0.0
    %1403 = vmatpush1.msra.mxu0 0.0
    %1404 = vmatprep.subr.mxu0 0.0
    %1405 = vmatpush1.msra.mxu0 0.0
    %1406 = vmatprep.subr.mxu0 0.0
    %1407 = vmatpush1.msra.mxu0 0.0
    %1408 = vmatprep.subr.mxu0 0.0
    %1409 = vmatpush1.msra.mxu0 0.0
    %1410 = vmatprep.mubr.f32.mxu0 0.0
    %v1411 = vand.u32 %v890, 4294901760
    %1412 = vmatmul.mubr.f32.gmra.mrb[0].mxu0 %v1411
    %v1413 = vpop.f32.mrb[0].mxu0
    %v1414 = vadd.f32 %v1333, %v1413
    %v1415 = vpop.f32.mrb[0].mxu0
    %1416 = vmatprep.mubr.f32.mxu0 0.0
    %v1417 = vand.u32 %v893, 4294901760
    %1418 = vmatmul.mubr.f32.gmra.mrb[0].mxu0 %v1417
    %v1419 = vpop.f32.mrb[0].mxu0
    %v1420 = vadd.f32 %v1339, %v1419
    %v1421 = vpop.f32.mrb[0].mxu0
    %1422 = vdwg.mxu0
    %v1423 = vmul.f32 %v1414, 0.17677669
    %v1424 = vmul.f32 %v1420, 0.17677669
    %v1426 = vsel %vm151, %v1423, 0
    %v1429 = vsel %vm151, %v830, 0
    %v1432 = vsel %vm151, %v836, 0
    %1434 = vmatprep.subr.mxu0 0.0
    %v1435 = vand.u32 %v1429, 4294901760
    %1436 = vmatpush1.xpose.msra.mxu0 %v1435
    %1437 = vmatprep.subr.mxu0 0.0
    %v1438 = vand.u32 %v1432, 4294901760
    %1439 = vmatpush1.xpose.msra.mxu0 %v1438
    %1440 = vmatprep.subr.mxu0 0.0
    %1441 = vmatpush1.xpose.msra.mxu0 0.0
    %1442 = vmatprep.subr.mxu0 0.0
    %1443 = vmatpush1.xpose.msra.mxu0 0.0
    %1444 = vmatprep.subr.mxu0 0.0
    %1445 = vmatpush1.xpose.msra.mxu0 0.0
    %1446 = vmatprep.subr.mxu0 0.0
    %1447 = vmatpush1.xpose.msra.mxu0 0.0
    %1448 = vmatprep.subr.mxu0 0.0
    %1449 = vmatpush1.xpose.msra.mxu0 0.0
    %1450 = vmatprep.subr.mxu0 0.0
    %1451 = vmatpush1.xpose.msra.mxu0 0.0
    %1452 = vmatprep.subr.mxu0 0.0
    %1453 = vmatpush1.xpose.msra.mxu0 0.0
    %1454 = vmatprep.subr.mxu0 0.0
    %1455 = vmatpush1.xpose.msra.mxu0 0.0
    %1456 = vmatprep.subr.mxu0 0.0
    %1457 = vmatpush1.xpose.msra.mxu0 0.0
    %1458 = vmatprep.subr.mxu0 0.0
    %1459 = vmatpush1.xpose.msra.mxu0 0.0
    %1460 = vmatprep.subr.mxu0 0.0
    %1461 = vmatpush1.xpose.msra.mxu0 0.0
    %1462 = vmatprep.subr.mxu0 0.0
    %1463 = vmatpush1.xpose.msra.mxu0 0.0
    %1464 = vmatprep.subr.mxu0 0.0
    %1465 = vmatpush1.xpose.msra.mxu0 0.0
    %1466 = vmatprep.subr.mxu0 0.0
    %1467 = vmatpush1.xpose.msra.mxu0 0.0
    %1468 = vmatprep.subr.mxu0 0.0
    %1469 = vmatpush1.xpose.msra.mxu0 0.0
    %1470 = vmatprep.subr.mxu0 0.0
    %1471 = vmatpush1.xpose.msra.mxu0 0.0
    %1472 = vmatprep.subr.mxu0 0.0
    %1473 = vmatpush1.xpose.msra.mxu0 0.0
    %1474 = vmatprep.subr.mxu0 0.0
    %1475 = vmatpush1.xpose.msra.mxu0 0.0
    %1476 = vmatprep.subr.mxu0 0.0
    %1477 = vmatpush1.xpose.msra.mxu0 0.0
    %1478 = vmatprep.subr.mxu0 0.0
    %1479 = vmatpush1.xpose.msra.mxu0 0.0
    %1480 = vmatprep.subr.mxu0 0.0
    %1481 = vmatpush1.xpose.msra.mxu0 0.0
    %1482 = vmatprep.subr.mxu0 0.0
    %1483 = vmatpush1.xpose.msra.mxu0 0.0
    %1484 = vmatprep.subr.mxu0 0.0
    %1485 = vmatpush1.xpose.msra.mxu0 0.0
    %1486 = vmatprep.subr.mxu0 0.0
    %1487 = vmatpush1.xpose.msra.mxu0 0.0
    %1488 = vmatprep.subr.mxu0 0.0
    %1489 = vmatpush1.xpose.msra.mxu0 0.0
    %1490 = vmatprep.subr.mxu0 0.0
    %1491 = vmatpush1.xpose.msra.mxu0 0.0
    %1492 = vmatprep.subr.mxu0 0.0
    %1493 = vmatpush1.xpose.msra.mxu0 0.0
    %1494 = vmatprep.subr.mxu0 0.0
    %1495 = vmatpush1.xpose.msra.mxu0 0.0
    %1496 = vmatprep.subr.mxu0 0.0
    %1497 = vmatpush1.xpose.msra.mxu0 0.0
    %1498 = vmatprep.subr.mxu0 0.0
    %1499 = vmatpush1.xpose.msra.mxu0 0.0
    %1500 = vmatprep.mubr.f32.mxu0 0.0
    %v1501 = vand.u32 %v1426, 4294901760
    %v1502 = vsub.f32 %v1426, %v1501
    %v1503 = vand.u32 %v1502, 4294901760
    %v1504 = vsub.f32 %v1502, %v1503
    %v1505 = vand.u32 %v1504, 4294901760
    %1506 = vmatmul.mubr.f32.gmra.mrb[0].mxu0 %v1505
    %v1507 = vpop.f32.mrb[0].mxu0
    %v1508 = vadd.f32 0.0, %v1507
    %v1509 = vpop.f32.mrb[0].mxu0
    %1510 = vdwg.mxu0
    %1511 = vmatprep.subr.mxu0 0.0
    %v1512 = vand.u32 %v1429, 4294901760
    %v1513 = vsub.f32 %v1429, %v1512
    %v1514 = vand.u32 %v1513, 4294901760
    %v1515 = vsub.f32 %v1513, %v1514
    %v1516 = vand.u32 %v1515, 4294901760
    %1517 = vmatpush1.xpose.msra.mxu0 %v1516
    %1518 = vmatprep.subr.mxu0 0.0
    %v1519 = vand.u32 %v1432, 4294901760
    %v1520 = vsub.f32 %v1432, %v1519
    %v1521 = vand.u32 %v1520, 4294901760
    %v1522 = vsub.f32 %v1520, %v1521
    %v1523 = vand.u32 %v1522, 4294901760
    %1524 = vmatpush1.xpose.msra.mxu0 %v1523
    %1525 = vmatprep.subr.mxu0 0.0
    %1526 = vmatpush1.xpose.msra.mxu0 0.0
    %1527 = vmatprep.subr.mxu0 0.0
    %1528 = vmatpush1.xpose.msra.mxu0 0.0
    %1529 = vmatprep.subr.mxu0 0.0
    %1530 = vmatpush1.xpose.msra.mxu0 0.0
    %1531 = vmatprep.subr.mxu0 0.0
    %1532 = vmatpush1.xpose.msra.mxu0 0.0
    %1533 = vmatprep.subr.mxu0 0.0
    %1534 = vmatpush1.xpose.msra.mxu0 0.0
    %1535 = vmatprep.subr.mxu0 0.0
    %1536 = vmatpush1.xpose.msra.mxu0 0.0
    %1537 = vmatprep.subr.mxu0 0.0
    %1538 = vmatpush1.xpose.msra.mxu0 0.0
    %1539 = vmatprep.subr.mxu0 0.0
    %1540 = vmatpush1.xpose.msra.mxu0 0.0
    %1541 = vmatprep.subr.mxu0 0.0
    %1542 = vmatpush1.xpose.msra.mxu0 0.0
    %1543 = vmatprep.subr.mxu0 0.0
    %1544 = vmatpush1.xpose.msra.mxu0 0.0
    %1545 = vmatprep.subr.mxu0 0.0
    %1546 = vmatpush1.xpose.msra.mxu0 0.0
    %1547 = vmatprep.subr.mxu0 0.0
    %1548 = vmatpush1.xpose.msra.mxu0 0.0
    %1549 = vmatprep.subr.mxu0 0.0
    %1550 = vmatpush1.xpose.msra.mxu0 0.0
    %1551 = vmatprep.subr.mxu0 0.0
    %1552 = vmatpush1.xpose.msra.mxu0 0.0
    %1553 = vmatprep.subr.mxu0 0.0
    %1554 = vmatpush1.xpose.msra.mxu0 0.0
    %1555 = vmatprep.subr.mxu0 0.0
    %1556 = vmatpush1.xpose.msra.mxu0 0.0
    %1557 = vmatprep.subr.mxu0 0.0
    %1558 = vmatpush1.xpose.msra.mxu0 0.0
    %1559 = vmatprep.subr.mxu0 0.0
    %1560 = vmatpush1.xpose.msra.mxu0 0.0
    %1561 = vmatprep.subr.mxu0 0.0
    %1562 = vmatpush1.xpose.msra.mxu0 0.0
    %1563 = vmatprep.subr.mxu0 0.0
    %1564 = vmatpush1.xpose.msra.mxu0 0.0
    %1565 = vmatprep.subr.mxu0 0.0
    %1566 = vmatpush1.xpose.msra.mxu0 0.0
    %1567 = vmatprep.subr.mxu0 0.0
    %1568 = vmatpush1.xpose.msra.mxu0 0.0
    %1569 = vmatprep.subr.mxu0 0.0
    %1570 = vmatpush1.xpose.msra.mxu0 0.0
    %1571 = vmatprep.subr.mxu0 0.0
    %1572 = vmatpush1.xpose.msra.mxu0 0.0
    %1573 = vmatprep.subr.mxu0 0.0
    %1574 = vmatpush1.xpose.msra.mxu0 0.0
    %1575 = vmatprep.subr.mxu0 0.0
    %1576 = vmatpush1.xpose.msra.mxu0 0.0
    %1577 = vmatprep.subr.mxu0 0.0
    %1578 = vmatpush1.xpose.msra.mxu0 0.0
    %1579 = vmatprep.subr.mxu0 0.0
    %1580 = vmatpush1.xpose.msra.mxu0 0.0
    %1581 = vmatprep.subr.mxu0 0.0
    %1582 = vmatpush1.xpose.msra.mxu0 0.0
    %1583 = vmatprep.subr.mxu0 0.0
    %1584 = vmatpush1.xpose.msra.mxu0 0.0
    %1585 = vmatprep.mubr.f32.mxu0 0.0
    %v1586 = vand.u32 %v1426, 4294901760
    %1587 = vmatmul.mubr.f32.gmra.mrb[0].mxu0 %v1586
    %v1588 = vpop.f32.mrb[0].mxu0
    %v1589 = vadd.f32 %v1508, %v1588
    %v1590 = vpop.f32.mrb[0].mxu0
    %1591 = vdwg.mxu0
    %1592 = vmatprep.subr.mxu0 0.0
    %v1593 = vand.u32 %v1429, 4294901760
    %v1594 = vsub.f32 %v1429, %v1593
    %1595 = vmatpush1.xpose.msra.mxu0 %v1594
    %1596 = vmatprep.subr.mxu0 0.0
    %v1597 = vand.u32 %v1432, 4294901760
    %v1598 = vsub.f32 %v1432, %v1597
    %1599 = vmatpush1.xpose.msra.mxu0 %v1598
    %1600 = vmatprep.subr.mxu0 0.0
    %1601 = vmatpush1.xpose.msra.mxu0 0.0
    %1602 = vmatprep.subr.mxu0 0.0
    %1603 = vmatpush1.xpose.msra.mxu0 0.0
    %1604 = vmatprep.subr.mxu0 0.0
    %1605 = vmatpush1.xpose.msra.mxu0 0.0
    %1606 = vmatprep.subr.mxu0 0.0
    %1607 = vmatpush1.xpose.msra.mxu0 0.0
    %1608 = vmatprep.subr.mxu0 0.0
    %1609 = vmatpush1.xpose.msra.mxu0 0.0
    %1610 = vmatprep.subr.mxu0 0.0
    %1611 = vmatpush1.xpose.msra.mxu0 0.0
    %1612 = vmatprep.subr.mxu0 0.0
    %1613 = vmatpush1.xpose.msra.mxu0 0.0
    %1614 = vmatprep.subr.mxu0 0.0
    %1615 = vmatpush1.xpose.msra.mxu0 0.0
    %1616 = vmatprep.subr.mxu0 0.0
    %1617 = vmatpush1.xpose.msra.mxu0 0.0
    %1618 = vmatprep.subr.mxu0 0.0
    %1619 = vmatpush1.xpose.msra.mxu0 0.0
    %1620 = vmatprep.subr.mxu0 0.0
    %1621 = vmatpush1.xpose.msra.mxu0 0.0
    %1622 = vmatprep.subr.mxu0 0.0
    %1623 = vmatpush1.xpose.msra.mxu0 0.0
    %1624 = vmatprep.subr.mxu0 0.0
    %1625 = vmatpush1.xpose.msra.mxu0 0.0
    %1626 = vmatprep.subr.mxu0 0.0
    %1627 = vmatpush1.xpose.msra.mxu0 0.0
    %1628 = vmatprep.subr.mxu0 0.0
    %1629 = vmatpush1.xpose.msra.mxu0 0.0
    %1630 = vmatprep.subr.mxu0 0.0
    %1631 = vmatpush1.xpose.msra.mxu0 0.0
    %1632 = vmatprep.subr.mxu0 0.0
    %1633 = vmatpush1.xpose.msra.mxu0 0.0
    %1634 = vmatprep.subr.mxu0 0.0
    %1635 = vmatpush1.xpose.msra.mxu0 0.0
    %1636 = vmatprep.subr.mxu0 0.0
    %1637 = vmatpush1.xpose.msra.mxu0 0.0
    %1638 = vmatprep.subr.mxu0 0.0
    %1639 = vmatpush1.xpose.msra.mxu0 0.0
    %1640 = vmatprep.subr.mxu0 0.0
    %1641 = vmatpush1.xpose.msra.mxu0 0.0
    %1642 = vmatprep.subr.mxu0 0.0
    %1643 = vmatpush1.xpose.msra.mxu0 0.0
    %1644 = vmatprep.subr.mxu0 0.0
    %1645 = vmatpush1.xpose.msra.mxu0 0.0
    %1646 = vmatprep.subr.mxu0 0.0
    %1647 = vmatpush1.xpose.msra.mxu0 0.0
    %1648 = vmatprep.subr.mxu0 0.0
    %1649 = vmatpush1.xpose.msra.mxu0 0.0
    %1650 = vmatprep.subr.mxu0 0.0
    %1651 = vmatpush1.xpose.msra.mxu0 0.0
    %1652 = vmatprep.subr.mxu0 0.0
    %1653 = vmatpush1.xpose.msra.mxu0 0.0
    %1654 = vmatprep.subr.mxu0 0.0
    %1655 = vmatpush1.xpose.msra.mxu0 0.0
    %1656 = vmatprep.subr.mxu0 0.0
    %1657 = vmatpush1.xpose.msra.mxu0 0.0
    %1658 = vmatprep.subr.mxu0 0.0
    %1659 = vmatpush1.xpose.msra.mxu0 0.0
    %1660 = vmatprep.mubr.f32.mxu0 0.0
    %v1661 = vand.u32 %v1426, 4294901760
    %v1662 = vsub.f32 %v1426, %v1661
    %1663 = vmatmul.mubr.f32.gmra.mrb[0].mxu0 %v1662
    %v1664 = vpop.f32.mrb[0].mxu0
    %v1665 = vadd.f32 %v1589, %v1664
    %v1666 = vpop.f32.mrb[0].mxu0
    %1667 = vdwg.mxu0
    %1668 = vmatprep.subr.mxu0 0.0
    %v1669 = vand.u32 %v1429, 4294901760
    %1670 = vmatpush1.xpose.msra.mxu0 %v1669
    %1671 = vmatprep.subr.mxu0 0.0
    %v1672 = vand.u32 %v1432, 4294901760
    %1673 = vmatpush1.xpose.msra.mxu0 %v1672
    %1674 = vmatprep.subr.mxu0 0.0
    %1675 = vmatpush1.xpose.msra.mxu0 0.0
    %1676 = vmatprep.subr.mxu0 0.0
    %1677 = vmatpush1.xpose.msra.mxu0 0.0
    %1678 = vmatprep.subr.mxu0 0.0
    %1679 = vmatpush1.xpose.msra.mxu0 0.0
    %1680 = vmatprep.subr.mxu0 0.0
    %1681 = vmatpush1.xpose.msra.mxu0 0.0
    %1682 = vmatprep.subr.mxu0 0.0
    %1683 = vmatpush1.xpose.msra.mxu0 0.0
    %1684 = vmatprep.subr.mxu0 0.0
    %1685 = vmatpush1.xpose.msra.mxu0 0.0
    %1686 = vmatprep.subr.mxu0 0.0
    %1687 = vmatpush1.xpose.msra.mxu0 0.0
    %1688 = vmatprep.subr.mxu0 0.0
    %1689 = vmatpush1.xpose.msra.mxu0 0.0
    %1690 = vmatprep.subr.mxu0 0.0
    %1691 = vmatpush1.xpose.msra.mxu0 0.0
    %1692 = vmatprep.subr.mxu0 0.0
    %1693 = vmatpush1.xpose.msra.mxu0 0.0
    %1694 = vmatprep.subr.mxu0 0.0
    %1695 = vmatpush1.xpose.msra.mxu0 0.0
    %1696 = vmatprep.subr.mxu0 0.0
    %1697 = vmatpush1.xpose.msra.mxu0 0.0
    %1698 = vmatprep.subr.mxu0 0.0
    %1699 = vmatpush1.xpose.msra.mxu0 0.0
    %1700 = vmatprep.subr.mxu0 0.0
    %1701 = vmatpush1.xpose.msra.mxu0 0.0
    %1702 = vmatprep.subr.mxu0 0.0
    %1703 = vmatpush1.xpose.msra.mxu0 0.0
    %1704 = vmatprep.subr.mxu0 0.0
    %1705 = vmatpush1.xpose.msra.mxu0 0.0
    %1706 = vmatprep.subr.mxu0 0.0
    %1707 = vmatpush1.xpose.msra.mxu0 0.0
    %1708 = vmatprep.subr.mxu0 0.0
    %1709 = vmatpush1.xpose.msra.mxu0 0.0
    %1710 = vmatprep.subr.mxu0 0.0
    %1711 = vmatpush1.xpose.msra.mxu0 0.0
    %1712 = vmatprep.subr.mxu0 0.0
    %1713 = vmatpush1.xpose.msra.mxu0 0.0
    %1714 = vmatprep.subr.mxu0 0.0
    %1715 = vmatpush1.xpose.msra.mxu0 0.0
    %1716 = vmatprep.subr.mxu0 0.0
    %1717 = vmatpush1.xpose.msra.mxu0 0.0
    %1718 = vmatprep.subr.mxu0 0.0
    %1719 = vmatpush1.xpose.msra.mxu0 0.0
    %1720 = vmatprep.subr.mxu0 0.0
    %1721 = vmatpush1.xpose.msra.mxu0 0.0
    %1722 = vmatprep.subr.mxu0 0.0
    %1723 = vmatpush1.xpose.msra.mxu0 0.0
    %1724 = vmatprep.subr.mxu0 0.0
    %1725 = vmatpush1.xpose.msra.mxu0 0.0
    %1726 = vmatprep.subr.mxu0 0.0
    %1727 = vmatpush1.xpose.msra.mxu0 0.0
    %1728 = vmatprep.subr.mxu0 0.0
    %1729 = vmatpush1.xpose.msra.mxu0 0.0
    %1730 = vmatprep.subr.mxu0 0.0
    %1731 = vmatpush1.xpose.msra.mxu0 0.0
    %1732 = vmatprep.subr.mxu0 0.0
    %1733 = vmatpush1.xpose.msra.mxu0 0.0
    %1734 = vmatprep.mubr.f32.mxu0 0.0
    %v1735 = vand.u32 %v1426, 4294901760
    %v1736 = vsub.f32 %v1426, %v1735
    %v1737 = vand.u32 %v1736, 4294901760
    %1738 = vmatmul.mubr.f32.gmra.mrb[0].mxu0 %v1737
    %v1739 = vpop.f32.mrb[0].mxu0
    %v1740 = vadd.f32 %v1665, %v1739
    %v1741 = vpop.f32.mrb[0].mxu0
    %1742 = vdwg.mxu0
    %1743 = vmatprep.subr.mxu0 0.0
    %v1744 = vand.u32 %v1429, 4294901760
    %v1745 = vsub.f32 %v1429, %v1744
    %v1746 = vand.u32 %v1745, 4294901760
    %1747 = vmatpush1.xpose.msra.mxu0 %v1746
    %1748 = vmatprep.subr.mxu0 0.0
    %v1749 = vand.u32 %v1432, 4294901760
    %v1750 = vsub.f32 %v1432, %v1749
    %v1751 = vand.u32 %v1750, 4294901760
    %1752 = vmatpush1.xpose.msra.mxu0 %v1751
    %1753 = vmatprep.subr.mxu0 0.0
    %1754 = vmatpush1.xpose.msra.mxu0 0.0
    %1755 = vmatprep.subr.mxu0 0.0
    %1756 = vmatpush1.xpose.msra.mxu0 0.0
    %1757 = vmatprep.subr.mxu0 0.0
    %1758 = vmatpush1.xpose.msra.mxu0 0.0
    %1759 = vmatprep.subr.mxu0 0.0
    %1760 = vmatpush1.xpose.msra.mxu0 0.0
    %1761 = vmatprep.subr.mxu0 0.0
    %1762 = vmatpush1.xpose.msra.mxu0 0.0
    %1763 = vmatprep.subr.mxu0 0.0
    %1764 = vmatpush1.xpose.msra.mxu0 0.0
    %1765 = vmatprep.subr.mxu0 0.0
    %1766 = vmatpush1.xpose.msra.mxu0 0.0
    %1767 = vmatprep.subr.mxu0 0.0
    %1768 = vmatpush1.xpose.msra.mxu0 0.0
    %1769 = vmatprep.subr.mxu0 0.0
    %1770 = vmatpush1.xpose.msra.mxu0 0.0
    %1771 = vmatprep.subr.mxu0 0.0
    %1772 = vmatpush1.xpose.msra.mxu0 0.0
    %1773 = vmatprep.subr.mxu0 0.0
    %1774 = vmatpush1.xpose.msra.mxu0 0.0
    %1775 = vmatprep.subr.mxu0 0.0
    %1776 = vmatpush1.xpose.msra.mxu0 0.0
    %1777 = vmatprep.subr.mxu0 0.0
    %1778 = vmatpush1.xpose.msra.mxu0 0.0
    %1779 = vmatprep.subr.mxu0 0.0
    %1780 = vmatpush1.xpose.msra.mxu0 0.0
    %1781 = vmatprep.subr.mxu0 0.0
    %1782 = vmatpush1.xpose.msra.mxu0 0.0
    %1783 = vmatprep.subr.mxu0 0.0
    %1784 = vmatpush1.xpose.msra.mxu0 0.0
    %1785 = vmatprep.subr.mxu0 0.0
    %1786 = vmatpush1.xpose.msra.mxu0 0.0
    %1787 = vmatprep.subr.mxu0 0.0
    %1788 = vmatpush1.xpose.msra.mxu0 0.0
    %1789 = vmatprep.subr.mxu0 0.0
    %1790 = vmatpush1.xpose.msra.mxu0 0.0
    %1791 = vmatprep.subr.mxu0 0.0
    %1792 = vmatpush1.xpose.msra.mxu0 0.0
    %1793 = vmatprep.subr.mxu0 0.0
    %1794 = vmatpush1.xpose.msra.mxu0 0.0
    %1795 = vmatprep.subr.mxu0 0.0
    %1796 = vmatpush1.xpose.msra.mxu0 0.0
    %1797 = vmatprep.subr.mxu0 0.0
    %1798 = vmatpush1.xpose.msra.mxu0 0.0
    %1799 = vmatprep.subr.mxu0 0.0
    %1800 = vmatpush1.xpose.msra.mxu0 0.0
    %1801 = vmatprep.subr.mxu0 0.0
    %1802 = vmatpush1.xpose.msra.mxu0 0.0
    %1803 = vmatprep.subr.mxu0 0.0
    %1804 = vmatpush1.xpose.msra.mxu0 0.0
    %1805 = vmatprep.subr.mxu0 0.0
    %1806 = vmatpush1.xpose.msra.mxu0 0.0
    %1807 = vmatprep.subr.mxu0 0.0
    %1808 = vmatpush1.xpose.msra.mxu0 0.0
    %1809 = vmatprep.subr.mxu0 0.0
    %1810 = vmatpush1.xpose.msra.mxu0 0.0
    %1811 = vmatprep.subr.mxu0 0.0
    %1812 = vmatpush1.xpose.msra.mxu0 0.0
    %1813 = vmatprep.mubr.f32.mxu0 0.0
    %v1814 = vand.u32 %v1426, 4294901760
    %1815 = vmatmul.mubr.f32.gmra.mrb[0].mxu0 %v1814
    %v1816 = vpop.f32.mrb[0].mxu0
    %v1817 = vadd.f32 %v1740, %v1816
    %v1818 = vpop.f32.mrb[0].mxu0
    %1819 = vdwg.mxu0
    %1820 = vmatprep.subr.mxu0 0.0
    %v1821 = vand.u32 %v1429, 4294901760
    %1822 = vmatpush1.xpose.msra.mxu0 %v1821
    %1823 = vmatprep.subr.mxu0 0.0
    %v1824 = vand.u32 %v1432, 4294901760
    %1825 = vmatpush1.xpose.msra.mxu0 %v1824
    %1826 = vmatprep.subr.mxu0 0.0
    %1827 = vmatpush1.xpose.msra.mxu0 0.0
    %1828 = vmatprep.subr.mxu0 0.0
    %1829 = vmatpush1.xpose.msra.mxu0 0.0
    %1830 = vmatprep.subr.mxu0 0.0
    %1831 = vmatpush1.xpose.msra.mxu0 0.0
    %1832 = vmatprep.subr.mxu0 0.0
    %1833 = vmatpush1.xpose.msra.mxu0 0.0
    %1834 = vmatprep.subr.mxu0 0.0
    %1835 = vmatpush1.xpose.msra.mxu0 0.0
    %1836 = vmatprep.subr.mxu0 0.0
    %1837 = vmatpush1.xpose.msra.mxu0 0.0
    %1838 = vmatprep.subr.mxu0 0.0
    %1839 = vmatpush1.xpose.msra.mxu0 0.0
    %1840 = vmatprep.subr.mxu0 0.0
    %1841 = vmatpush1.xpose.msra.mxu0 0.0
    %1842 = vmatprep.subr.mxu0 0.0
    %1843 = vmatpush1.xpose.msra.mxu0 0.0
    %1844 = vmatprep.subr.mxu0 0.0
    %1845 = vmatpush1.xpose.msra.mxu0 0.0
    %1846 = vmatprep.subr.mxu0 0.0
    %1847 = vmatpush1.xpose.msra.mxu0 0.0
    %1848 = vmatprep.subr.mxu0 0.0
    %1849 = vmatpush1.xpose.msra.mxu0 0.0
    %1850 = vmatprep.subr.mxu0 0.0
    %1851 = vmatpush1.xpose.msra.mxu0 0.0
    %1852 = vmatprep.subr.mxu0 0.0
    %1853 = vmatpush1.xpose.msra.mxu0 0.0
    %1854 = vmatprep.subr.mxu0 0.0
    %1855 = vmatpush1.xpose.msra.mxu0 0.0
    %1856 = vmatprep.subr.mxu0 0.0
    %1857 = vmatpush1.xpose.msra.mxu0 0.0
    %1858 = vmatprep.subr.mxu0 0.0
    %1859 = vmatpush1.xpose.msra.mxu0 0.0
    %1860 = vmatprep.subr.mxu0 0.0
    %1861 = vmatpush1.xpose.msra.mxu0 0.0
    %1862 = vmatprep.subr.mxu0 0.0
    %1863 = vmatpush1.xpose.msra.mxu0 0.0
    %1864 = vmatprep.subr.mxu0 0.0
    %1865 = vmatpush1.xpose.msra.mxu0 0.0
    %1866 = vmatprep.subr.mxu0 0.0
    %1867 = vmatpush1.xpose.msra.mxu0 0.0
    %1868 = vmatprep.subr.mxu0 0.0
    %1869 = vmatpush1.xpose.msra.mxu0 0.0
    %1870 = vmatprep.subr.mxu0 0.0
    %1871 = vmatpush1.xpose.msra.mxu0 0.0
    %1872 = vmatprep.subr.mxu0 0.0
    %1873 = vmatpush1.xpose.msra.mxu0 0.0
    %1874 = vmatprep.subr.mxu0 0.0
    %1875 = vmatpush1.xpose.msra.mxu0 0.0
    %1876 = vmatprep.subr.mxu0 0.0
    %1877 = vmatpush1.xpose.msra.mxu0 0.0
    %1878 = vmatprep.subr.mxu0 0.0
    %1879 = vmatpush1.xpose.msra.mxu0 0.0
    %1880 = vmatprep.subr.mxu0 0.0
    %1881 = vmatpush1.xpose.msra.mxu0 0.0
    %1882 = vmatprep.subr.mxu0 0.0
    %1883 = vmatpush1.xpose.msra.mxu0 0.0
    %1884 = vmatprep.subr.mxu0 0.0
    %1885 = vmatpush1.xpose.msra.mxu0 0.0
    %1886 = vmatprep.mubr.f32.mxu0 0.0
    %v1887 = vand.u32 %v1426, 4294901760
    %1888 = vmatmul.mubr.f32.gmra.mrb[0].mxu0 %v1887
    %v1889 = vpop.f32.mrb[0].mxu0
    %v1890 = vadd.f32 %v1817, %v1889
    %v1891 = vpop.f32.mrb[0].mxu0
    %1892 = vdwg.mxu0
    %vm1893 = vcmask 130048
    %v1894 = vsel %vm1893, %v1890, -inf
    %v1895 = vrot.slane %v1894, 4
    %v1896 = vmax.f32 %v1894, %v1895
    %v1897 = vrot.slane %v1896, 2
    %v1898 = vmax.f32 %v1896, %v1897
    %v1899 = vrot.slane %v1898, 1
    %v1900 = vmax.f32 %v1898, %v1899
    %v1901 = vsub.f32 %v1890, %v1900
    %v1902 = vmul.f32 %v1901, 1.442695
    %v1903 = vpow.pop %v1902
    %v1904 = vsel %vm1893, %v1903, 0.0
    %v1905 = vrot.slane %v1904, 4
    %v1906 = vadd.f32 %v1904, %v1905
    %v1907 = vrot.slane %v1906, 2
    %v1908 = vadd.f32 %v1906, %v1907
    %v1909 = vrot.slane %v1908, 1
    %v1910 = vadd.f32 %v1908, %v1909
    %v1911 = vrcp.pop %v1910
    %v1912 = vmul.f32 %v1903, %v1911
    %v1913 = vsel %vm1893, %v1912, 0.0
    %1914 = vadd.xlane.f32.xlu0 %v1913
    %v1915 = vpop.xlane.xlu0 %1914
    %v1916 = vadd.f32 %v1915, 1e-08
    %v1917 = vrcp.pop %v1916
    %v1918 = vmul.f32 %v1912, %v1917
    %1919 = vrot.lane.b32.xlu0 %v830, 96
    %v1920 = vpop.permute.xlu0 %1919
    %1921 = vrot.lane.b32.xlu0 %v836, 96
    %v1922 = vpop.permute.xlu0 %1921
    %v1926 = vsel %vm1893, %v1918, 0
    %1928 = vmatprep.subr.mxu0 0.0
    %v1929 = vand.u32 %v1920, 4294901760
    %1930 = vmatpush1.msra.mxu0 %v1929
    %1931 = vmatprep.subr.mxu0 0.0
    %v1932 = vand.u32 %v1922, 4294901760
    %1933 = vmatpush1.msra.mxu0 %v1932
    %1934 = vmatprep.subr.mxu0 0.0
    %1935 = vmatpush1.msra.mxu0 0.0
    %1936 = vmatprep.subr.mxu0 0.0
    %1937 = vmatpush1.msra.mxu0 0.0
    %1938 = vmatprep.subr.mxu0 0.0
    %1939 = vmatpush1.msra.mxu0 0.0
    %1940 = vmatprep.subr.mxu0 0.0
    %1941 = vmatpush1.msra.mxu0 0.0
    %1942 = vmatprep.subr.mxu0 0.0
    %1943 = vmatpush1.msra.mxu0 0.0
    %1944 = vmatprep.subr.mxu0 0.0
    %1945 = vmatpush1.msra.mxu0 0.0
    %1946 = vmatprep.subr.mxu0 0.0
    %1947 = vmatpush1.msra.mxu0 0.0
    %1948 = vmatprep.subr.mxu0 0.0
    %1949 = vmatpush1.msra.mxu0 0.0
    %1950 = vmatprep.subr.mxu0 0.0
    %1951 = vmatpush1.msra.mxu0 0.0
    %1952 = vmatprep.subr.mxu0 0.0
    %1953 = vmatpush1.msra.mxu0 0.0
    %1954 = vmatprep.subr.mxu0 0.0
    %1955 = vmatpush1.msra.mxu0 0.0
    %1956 = vmatprep.subr.mxu0 0.0
    %1957 = vmatpush1.msra.mxu0 0.0
    %1958 = vmatprep.subr.mxu0 0.0
    %1959 = vmatpush1.msra.mxu0 0.0
    %1960 = vmatprep.subr.mxu0 0.0
    %1961 = vmatpush1.msra.mxu0 0.0
    %1962 = vmatprep.subr.mxu0 0.0
    %1963 = vmatpush1.msra.mxu0 0.0
    %1964 = vmatprep.subr.mxu0 0.0
    %1965 = vmatpush1.msra.mxu0 0.0
    %1966 = vmatprep.subr.mxu0 0.0
    %1967 = vmatpush1.msra.mxu0 0.0
    %1968 = vmatprep.subr.mxu0 0.0
    %1969 = vmatpush1.msra.mxu0 0.0
    %1970 = vmatprep.subr.mxu0 0.0
    %1971 = vmatpush1.msra.mxu0 0.0
    %1972 = vmatprep.subr.mxu0 0.0
    %1973 = vmatpush1.msra.mxu0 0.0
    %1974 = vmatprep.subr.mxu0 0.0
    %1975 = vmatpush1.msra.mxu0 0.0
    %1976 = vmatprep.subr.mxu0 0.0
    %1977 = vmatpush1.msra.mxu0 0.0
    %1978 = vmatprep.subr.mxu0 0.0
    %1979 = vmatpush1.msra.mxu0 0.0
    %1980 = vmatprep.subr.mxu0 0.0
    %1981 = vmatpush1.msra.mxu0 0.0
    %1982 = vmatprep.subr.mxu0 0.0
    %1983 = vmatpush1.msra.mxu0 0.0
    %1984 = vmatprep.subr.mxu0 0.0
    %1985 = vmatpush1.msra.mxu0 0.0
    %1986 = vmatprep.subr.mxu0 0.0
    %1987 = vmatpush1.msra.mxu0 0.0
    %1988 = vmatprep.subr.mxu0 0.0
    %1989 = vmatpush1.msra.mxu0 0.0
    %1990 = vmatprep.subr.mxu0 0.0
    %1991 = vmatpush1.msra.mxu0 0.0
    %1992 = vmatprep.subr.mxu0 0.0
    %1993 = vmatpush1.msra.mxu0 0.0
    %1994 = vmatprep.mubr.f32.mxu0 0.0
    %v1995 = vand.u32 %v1926, 4294901760
    %v1996 = vsub.f32 %v1926, %v1995
    %v1997 = vand.u32 %v1996, 4294901760
    %v1998 = vsub.f32 %v1996, %v1997
    %v1999 = vand.u32 %v1998, 4294901760
    %2000 = vmatmul.mubr.f32.gmra.mrb[0].mxu0 %v1999
    %v2001 = vpop.f32.mrb[0].mxu0
    %v2002 = vadd.f32 0.0, %v2001
    %v2003 = vpop.f32.mrb[0].mxu0
    %2004 = vdwg.mxu0
    %2005 = vmatprep.subr.mxu0 0.0
    %v2006 = vand.u32 %v1920, 4294901760
    %v2007 = vsub.f32 %v1920, %v2006
    %v2008 = vand.u32 %v2007, 4294901760
    %v2009 = vsub.f32 %v2007, %v2008
    %v2010 = vand.u32 %v2009, 4294901760
    %2011 = vmatpush1.msra.mxu0 %v2010
    %2012 = vmatprep.subr.mxu0 0.0
    %v2013 = vand.u32 %v1922, 4294901760
    %v2014 = vsub.f32 %v1922, %v2013
    %v2015 = vand.u32 %v2014, 4294901760
    %v2016 = vsub.f32 %v2014, %v2015
    %v2017 = vand.u32 %v2016, 4294901760
    %2018 = vmatpush1.msra.mxu0 %v2017
    %2019 = vmatprep.subr.mxu0 0.0
    %2020 = vmatpush1.msra.mxu0 0.0
    %2021 = vmatprep.subr.mxu0 0.0
    %2022 = vmatpush1.msra.mxu0 0.0
    %2023 = vmatprep.subr.mxu0 0.0
    %2024 = vmatpush1.msra.mxu0 0.0
    %2025 = vmatprep.subr.mxu0 0.0
    %2026 = vmatpush1.msra.mxu0 0.0
    %2027 = vmatprep.subr.mxu0 0.0
    %2028 = vmatpush1.msra.mxu0 0.0
    %2029 = vmatprep.subr.mxu0 0.0
    %2030 = vmatpush1.msra.mxu0 0.0
    %2031 = vmatprep.subr.mxu0 0.0
    %2032 = vmatpush1.msra.mxu0 0.0
    %2033 = vmatprep.subr.mxu0 0.0
    %2034 = vmatpush1.msra.mxu0 0.0
    %2035 = vmatprep.subr.mxu0 0.0
    %2036 = vmatpush1.msra.mxu0 0.0
    %2037 = vmatprep.subr.mxu0 0.0
    %2038 = vmatpush1.msra.mxu0 0.0
    %2039 = vmatprep.subr.mxu0 0.0
    %2040 = vmatpush1.msra.mxu0 0.0
    %2041 = vmatprep.subr.mxu0 0.0
    %2042 = vmatpush1.msra.mxu0 0.0
    %2043 = vmatprep.subr.mxu0 0.0
    %2044 = vmatpush1.msra.mxu0 0.0
    %2045 = vmatprep.subr.mxu0 0.0
    %2046 = vmatpush1.msra.mxu0 0.0
    %2047 = vmatprep.subr.mxu0 0.0
    %2048 = vmatpush1.msra.mxu0 0.0
    %2049 = vmatprep.subr.mxu0 0.0
    %2050 = vmatpush1.msra.mxu0 0.0
    %2051 = vmatprep.subr.mxu0 0.0
    %2052 = vmatpush1.msra.mxu0 0.0
    %2053 = vmatprep.subr.mxu0 0.0
    %2054 = vmatpush1.msra.mxu0 0.0
    %2055 = vmatprep.subr.mxu0 0.0
    %2056 = vmatpush1.msra.mxu0 0.0
    %2057 = vmatprep.subr.mxu0 0.0
    %2058 = vmatpush1.msra.mxu0 0.0
    %2059 = vmatprep.subr.mxu0 0.0
    %2060 = vmatpush1.msra.mxu0 0.0
    %2061 = vmatprep.subr.mxu0 0.0
    %2062 = vmatpush1.msra.mxu0 0.0
    %2063 = vmatprep.subr.mxu0 0.0
    %2064 = vmatpush1.msra.mxu0 0.0
    %2065 = vmatprep.subr.mxu0 0.0
    %2066 = vmatpush1.msra.mxu0 0.0
    %2067 = vmatprep.subr.mxu0 0.0
    %2068 = vmatpush1.msra.mxu0 0.0
    %2069 = vmatprep.subr.mxu0 0.0
    %2070 = vmatpush1.msra.mxu0 0.0
    %2071 = vmatprep.subr.mxu0 0.0
    %2072 = vmatpush1.msra.mxu0 0.0
    %2073 = vmatprep.subr.mxu0 0.0
    %2074 = vmatpush1.msra.mxu0 0.0
    %2075 = vmatprep.subr.mxu0 0.0
    %2076 = vmatpush1.msra.mxu0 0.0
    %2077 = vmatprep.subr.mxu0 0.0
    %2078 = vmatpush1.msra.mxu0 0.0
    %2079 = vmatprep.mubr.f32.mxu0 0.0
    %v2080 = vand.u32 %v1926, 4294901760
    %2081 = vmatmul.mubr.f32.gmra.mrb[0].mxu0 %v2080
    %v2082 = vpop.f32.mrb[0].mxu0
    %v2083 = vadd.f32 %v2002, %v2082
    %v2084 = vpop.f32.mrb[0].mxu0
    %2085 = vdwg.mxu0
    %2086 = vmatprep.subr.mxu0 0.0
    %v2087 = vand.u32 %v1920, 4294901760
    %v2088 = vsub.f32 %v1920, %v2087
    %2089 = vmatpush1.msra.mxu0 %v2088
    %2090 = vmatprep.subr.mxu0 0.0
    %v2091 = vand.u32 %v1922, 4294901760
    %v2092 = vsub.f32 %v1922, %v2091
    %2093 = vmatpush1.msra.mxu0 %v2092
    %2094 = vmatprep.subr.mxu0 0.0
    %2095 = vmatpush1.msra.mxu0 0.0
    %2096 = vmatprep.subr.mxu0 0.0
    %2097 = vmatpush1.msra.mxu0 0.0
    %2098 = vmatprep.subr.mxu0 0.0
    %2099 = vmatpush1.msra.mxu0 0.0
    %2100 = vmatprep.subr.mxu0 0.0
    %2101 = vmatpush1.msra.mxu0 0.0
    %2102 = vmatprep.subr.mxu0 0.0
    %2103 = vmatpush1.msra.mxu0 0.0
    %2104 = vmatprep.subr.mxu0 0.0
    %2105 = vmatpush1.msra.mxu0 0.0
    %2106 = vmatprep.subr.mxu0 0.0
    %2107 = vmatpush1.msra.mxu0 0.0
    %2108 = vmatprep.subr.mxu0 0.0
    %2109 = vmatpush1.msra.mxu0 0.0
    %2110 = vmatprep.subr.mxu0 0.0
    %2111 = vmatpush1.msra.mxu0 0.0
    %2112 = vmatprep.subr.mxu0 0.0
    %2113 = vmatpush1.msra.mxu0 0.0
    %2114 = vmatprep.subr.mxu0 0.0
    %2115 = vmatpush1.msra.mxu0 0.0
    %2116 = vmatprep.subr.mxu0 0.0
    %2117 = vmatpush1.msra.mxu0 0.0
    %2118 = vmatprep.subr.mxu0 0.0
    %2119 = vmatpush1.msra.mxu0 0.0
    %2120 = vmatprep.subr.mxu0 0.0
    %2121 = vmatpush1.msra.mxu0 0.0
    %2122 = vmatprep.subr.mxu0 0.0
    %2123 = vmatpush1.msra.mxu0 0.0
    %2124 = vmatprep.subr.mxu0 0.0
    %2125 = vmatpush1.msra.mxu0 0.0
    %2126 = vmatprep.subr.mxu0 0.0
    %2127 = vmatpush1.msra.mxu0 0.0
    %2128 = vmatprep.subr.mxu0 0.0
    %2129 = vmatpush1.msra.mxu0 0.0
    %2130 = vmatprep.subr.mxu0 0.0
    %2131 = vmatpush1.msra.mxu0 0.0
    %2132 = vmatprep.subr.mxu0 0.0
    %2133 = vmatpush1.msra.mxu0 0.0
    %2134 = vmatprep.subr.mxu0 0.0
    %2135 = vmatpush1.msra.mxu0 0.0
    %2136 = vmatprep.subr.mxu0 0.0
    %2137 = vmatpush1.msra.mxu0 0.0
    %2138 = vmatprep.subr.mxu0 0.0
    %2139 = vmatpush1.msra.mxu0 0.0
    %2140 = vmatprep.subr.mxu0 0.0
    %2141 = vmatpush1.msra.mxu0 0.0
    %2142 = vmatprep.subr.mxu0 0.0
    %2143 = vmatpush1.msra.mxu0 0.0
    %2144 = vmatprep.subr.mxu0 0.0
    %2145 = vmatpush1.msra.mxu0 0.0
    %2146 = vmatprep.subr.mxu0 0.0
    %2147 = vmatpush1.msra.mxu0 0.0
    %2148 = vmatprep.subr.mxu0 0.0
    %2149 = vmatpush1.msra.mxu0 0.0
    %2150 = vmatprep.subr.mxu0 0.0
    %2151 = vmatpush1.msra.mxu0 0.0
    %2152 = vmatprep.subr.mxu0 0.0
    %2153 = vmatpush1.msra.mxu0 0.0
    %2154 = vmatprep.mubr.f32.mxu0 0.0
    %v2155 = vand.u32 %v1926, 4294901760
    %v2156 = vsub.f32 %v1926, %v2155
    %2157 = vmatmul.mubr.f32.gmra.mrb[0].mxu0 %v2156
    %v2158 = vpop.f32.mrb[0].mxu0
    %v2159 = vadd.f32 %v2083, %v2158
    %v2160 = vpop.f32.mrb[0].mxu0
    %2161 = vdwg.mxu0
    %2162 = vmatprep.subr.mxu0 0.0
    %v2163 = vand.u32 %v1920, 4294901760
    %2164 = vmatpush1.msra.mxu0 %v2163
    %2165 = vmatprep.subr.mxu0 0.0
    %v2166 = vand.u32 %v1922, 4294901760
    %2167 = vmatpush1.msra.mxu0 %v2166
    %2168 = vmatprep.subr.mxu0 0.0
    %2169 = vmatpush1.msra.mxu0 0.0
    %2170 = vmatprep.subr.mxu0 0.0
    %2171 = vmatpush1.msra.mxu0 0.0
    %2172 = vmatprep.subr.mxu0 0.0
    %2173 = vmatpush1.msra.mxu0 0.0
    %2174 = vmatprep.subr.mxu0 0.0
    %2175 = vmatpush1.msra.mxu0 0.0
    %2176 = vmatprep.subr.mxu0 0.0
    %2177 = vmatpush1.msra.mxu0 0.0
    %2178 = vmatprep.subr.mxu0 0.0
    %2179 = vmatpush1.msra.mxu0 0.0
    %2180 = vmatprep.subr.mxu0 0.0
    %2181 = vmatpush1.msra.mxu0 0.0
    %2182 = vmatprep.subr.mxu0 0.0
    %2183 = vmatpush1.msra.mxu0 0.0
    %2184 = vmatprep.subr.mxu0 0.0
    %2185 = vmatpush1.msra.mxu0 0.0
    %2186 = vmatprep.subr.mxu0 0.0
    %2187 = vmatpush1.msra.mxu0 0.0
    %2188 = vmatprep.subr.mxu0 0.0
    %2189 = vmatpush1.msra.mxu0 0.0
    %2190 = vmatprep.subr.mxu0 0.0
    %2191 = vmatpush1.msra.mxu0 0.0
    %2192 = vmatprep.subr.mxu0 0.0
    %2193 = vmatpush1.msra.mxu0 0.0
    %2194 = vmatprep.subr.mxu0 0.0
    %2195 = vmatpush1.msra.mxu0 0.0
    %2196 = vmatprep.subr.mxu0 0.0
    %2197 = vmatpush1.msra.mxu0 0.0
    %2198 = vmatprep.subr.mxu0 0.0
    %2199 = vmatpush1.msra.mxu0 0.0
    %2200 = vmatprep.subr.mxu0 0.0
    %2201 = vmatpush1.msra.mxu0 0.0
    %2202 = vmatprep.subr.mxu0 0.0
    %2203 = vmatpush1.msra.mxu0 0.0
    %2204 = vmatprep.subr.mxu0 0.0
    %2205 = vmatpush1.msra.mxu0 0.0
    %2206 = vmatprep.subr.mxu0 0.0
    %2207 = vmatpush1.msra.mxu0 0.0
    %2208 = vmatprep.subr.mxu0 0.0
    %2209 = vmatpush1.msra.mxu0 0.0
    %2210 = vmatprep.subr.mxu0 0.0
    %2211 = vmatpush1.msra.mxu0 0.0
    %2212 = vmatprep.subr.mxu0 0.0
    %2213 = vmatpush1.msra.mxu0 0.0
    %2214 = vmatprep.subr.mxu0 0.0
    %2215 = vmatpush1.msra.mxu0 0.0
    %2216 = vmatprep.subr.mxu0 0.0
    %2217 = vmatpush1.msra.mxu0 0.0
    %2218 = vmatprep.subr.mxu0 0.0
    %2219 = vmatpush1.msra.mxu0 0.0
    %2220 = vmatprep.subr.mxu0 0.0
    %2221 = vmatpush1.msra.mxu0 0.0
    %2222 = vmatprep.subr.mxu0 0.0
    %2223 = vmatpush1.msra.mxu0 0.0
    %2224 = vmatprep.subr.mxu0 0.0
    %2225 = vmatpush1.msra.mxu0 0.0
    %2226 = vmatprep.subr.mxu0 0.0
    %2227 = vmatpush1.msra.mxu0 0.0
    %2228 = vmatprep.mubr.f32.mxu0 0.0
    %v2229 = vand.u32 %v1926, 4294901760
    %v2230 = vsub.f32 %v1926, %v2229
    %v2231 = vand.u32 %v2230, 4294901760
    %2232 = vmatmul.mubr.f32.gmra.mrb[0].mxu0 %v2231
    %v2233 = vpop.f32.mrb[0].mxu0
    %v2234 = vadd.f32 %v2159, %v2233
    %v2235 = vpop.f32.mrb[0].mxu0
    %2236 = vdwg.mxu0
    %2237 = vmatprep.subr.mxu0 0.0
    %v2238 = vand.u32 %v1920, 4294901760
    %v2239 = vsub.f32 %v1920, %v2238
    %v2240 = vand.u32 %v2239, 4294901760
    %2241 = vmatpush1.msra.mxu0 %v2240
    %2242 = vmatprep.subr.mxu0 0.0
    %v2243 = vand.u32 %v1922, 4294901760
    %v2244 = vsub.f32 %v1922, %v2243
    %v2245 = vand.u32 %v2244, 4294901760
    %2246 = vmatpush1.msra.mxu0 %v2245
    %2247 = vmatprep.subr.mxu0 0.0
    %2248 = vmatpush1.msra.mxu0 0.0
    %2249 = vmatprep.subr.mxu0 0.0
    %2250 = vmatpush1.msra.mxu0 0.0
    %2251 = vmatprep.subr.mxu0 0.0
    %2252 = vmatpush1.msra.mxu0 0.0
    %2253 = vmatprep.subr.mxu0 0.0
    %2254 = vmatpush1.msra.mxu0 0.0
    %2255 = vmatprep.subr.mxu0 0.0
    %2256 = vmatpush1.msra.mxu0 0.0
    %2257 = vmatprep.subr.mxu0 0.0
    %2258 = vmatpush1.msra.mxu0 0.0
    %2259 = vmatprep.subr.mxu0 0.0
    %2260 = vmatpush1.msra.mxu0 0.0
    %2261 = vmatprep.subr.mxu0 0.0
    %2262 = vmatpush1.msra.mxu0 0.0
    %2263 = vmatprep.subr.mxu0 0.0
    %2264 = vmatpush1.msra.mxu0 0.0
    %2265 = vmatprep.subr.mxu0 0.0
    %2266 = vmatpush1.msra.mxu0 0.0
    %2267 = vmatprep.subr.mxu0 0.0
    %2268 = vmatpush1.msra.mxu0 0.0
    %2269 = vmatprep.subr.mxu0 0.0
    %2270 = vmatpush1.msra.mxu0 0.0
    %2271 = vmatprep.subr.mxu0 0.0
    %2272 = vmatpush1.msra.mxu0 0.0
    %2273 = vmatprep.subr.mxu0 0.0
    %2274 = vmatpush1.msra.mxu0 0.0
    %2275 = vmatprep.subr.mxu0 0.0
    %2276 = vmatpush1.msra.mxu0 0.0
    %2277 = vmatprep.subr.mxu0 0.0
    %2278 = vmatpush1.msra.mxu0 0.0
    %2279 = vmatprep.subr.mxu0 0.0
    %2280 = vmatpush1.msra.mxu0 0.0
    %2281 = vmatprep.subr.mxu0 0.0
    %2282 = vmatpush1.msra.mxu0 0.0
    %2283 = vmatprep.subr.mxu0 0.0
    %2284 = vmatpush1.msra.mxu0 0.0
    %2285 = vmatprep.subr.mxu0 0.0
    %2286 = vmatpush1.msra.mxu0 0.0
    %2287 = vmatprep.subr.mxu0 0.0
    %2288 = vmatpush1.msra.mxu0 0.0
    %2289 = vmatprep.subr.mxu0 0.0
    %2290 = vmatpush1.msra.mxu0 0.0
    %2291 = vmatprep.subr.mxu0 0.0
    %2292 = vmatpush1.msra.mxu0 0.0
    %2293 = vmatprep.subr.mxu0 0.0
    %2294 = vmatpush1.msra.mxu0 0.0
    %2295 = vmatprep.subr.mxu0 0.0
    %2296 = vmatpush1.msra.mxu0 0.0
    %2297 = vmatprep.subr.mxu0 0.0
    %2298 = vmatpush1.msra.mxu0 0.0
    %2299 = vmatprep.subr.mxu0 0.0
    %2300 = vmatpush1.msra.mxu0 0.0
    %2301 = vmatprep.subr.mxu0 0.0
    %2302 = vmatpush1.msra.mxu0 0.0
    %2303 = vmatprep.subr.mxu0 0.0
    %2304 = vmatpush1.msra.mxu0 0.0
    %2305 = vmatprep.subr.mxu0 0.0
    %2306 = vmatpush1.msra.mxu0 0.0
    %2307 = vmatprep.mubr.f32.mxu0 0.0
    %v2308 = vand.u32 %v1926, 4294901760
    %2309 = vmatmul.mubr.f32.gmra.mrb[0].mxu0 %v2308
    %v2310 = vpop.f32.mrb[0].mxu0
    %v2311 = vadd.f32 %v2234, %v2310
    %v2312 = vpop.f32.mrb[0].mxu0
    %2313 = vdwg.mxu0
    %2314 = vmatprep.subr.mxu0 0.0
    %v2315 = vand.u32 %v1920, 4294901760
    %2316 = vmatpush1.msra.mxu0 %v2315
    %2317 = vmatprep.subr.mxu0 0.0
    %v2318 = vand.u32 %v1922, 4294901760
    %2319 = vmatpush1.msra.mxu0 %v2318
    %2320 = vmatprep.subr.mxu0 0.0
    %2321 = vmatpush1.msra.mxu0 0.0
    %2322 = vmatprep.subr.mxu0 0.0
    %2323 = vmatpush1.msra.mxu0 0.0
    %2324 = vmatprep.subr.mxu0 0.0
    %2325 = vmatpush1.msra.mxu0 0.0
    %2326 = vmatprep.subr.mxu0 0.0
    %2327 = vmatpush1.msra.mxu0 0.0
    %2328 = vmatprep.subr.mxu0 0.0
    %2329 = vmatpush1.msra.mxu0 0.0
    %2330 = vmatprep.subr.mxu0 0.0
    %2331 = vmatpush1.msra.mxu0 0.0
    %2332 = vmatprep.subr.mxu0 0.0
    %2333 = vmatpush1.msra.mxu0 0.0
    %2334 = vmatprep.subr.mxu0 0.0
    %2335 = vmatpush1.msra.mxu0 0.0
    %2336 = vmatprep.subr.mxu0 0.0
    %2337 = vmatpush1.msra.mxu0 0.0
    %2338 = vmatprep.subr.mxu0 0.0
    %2339 = vmatpush1.msra.mxu0 0.0
    %2340 = vmatprep.subr.mxu0 0.0
    %2341 = vmatpush1.msra.mxu0 0.0
    %2342 = vmatprep.subr.mxu0 0.0
    %2343 = vmatpush1.msra.mxu0 0.0
    %2344 = vmatprep.subr.mxu0 0.0
    %2345 = vmatpush1.msra.mxu0 0.0
    %2346 = vmatprep.subr.mxu0 0.0
    %2347 = vmatpush1.msra.mxu0 0.0
    %2348 = vmatprep.subr.mxu0 0.0
    %2349 = vmatpush1.msra.mxu0 0.0
    %2350 = vmatprep.subr.mxu0 0.0
    %2351 = vmatpush1.msra.mxu0 0.0
    %2352 = vmatprep.subr.mxu0 0.0
    %2353 = vmatpush1.msra.mxu0 0.0
    %2354 = vmatprep.subr.mxu0 0.0
    %2355 = vmatpush1.msra.mxu0 0.0
    %2356 = vmatprep.subr.mxu0 0.0
    %2357 = vmatpush1.msra.mxu0 0.0
    %2358 = vmatprep.subr.mxu0 0.0
    %2359 = vmatpush1.msra.mxu0 0.0
    %2360 = vmatprep.subr.mxu0 0.0
    %2361 = vmatpush1.msra.mxu0 0.0
    %2362 = vmatprep.subr.mxu0 0.0
    %2363 = vmatpush1.msra.mxu0 0.0
    %2364 = vmatprep.subr.mxu0 0.0
    %2365 = vmatpush1.msra.mxu0 0.0
    %2366 = vmatprep.subr.mxu0 0.0
    %2367 = vmatpush1.msra.mxu0 0.0
    %2368 = vmatprep.subr.mxu0 0.0
    %2369 = vmatpush1.msra.mxu0 0.0
    %2370 = vmatprep.subr.mxu0 0.0
    %2371 = vmatpush1.msra.mxu0 0.0
    %2372 = vmatprep.subr.mxu0 0.0
    %2373 = vmatpush1.msra.mxu0 0.0
    %2374 = vmatprep.subr.mxu0 0.0
    %2375 = vmatpush1.msra.mxu0 0.0
    %2376 = vmatprep.subr.mxu0 0.0
    %2377 = vmatpush1.msra.mxu0 0.0
    %2378 = vmatprep.subr.mxu0 0.0
    %2379 = vmatpush1.msra.mxu0 0.0
    %2380 = vmatprep.mubr.f32.mxu0 0.0
    %v2381 = vand.u32 %v1926, 4294901760
    %2382 = vmatmul.mubr.f32.gmra.mrb[0].mxu0 %v2381
    %v2383 = vpop.f32.mrb[0].mxu0
    %v2384 = vadd.f32 %v2311, %v2383
    %v2385 = vpop.f32.mrb[0].mxu0
    %2386 = vdwg.mxu0
    %v2388 = vsel %vm151, %v1424, 0
    %v2391 = vsel %vm151, %v842, 0
    %v2394 = vsel %vm151, %v848, 0
    %2396 = vmatprep.subr.mxu0 0.0
    %v2397 = vand.u32 %v2391, 4294901760
    %2398 = vmatpush1.xpose.msra.mxu0 %v2397
    %2399 = vmatprep.subr.mxu0 0.0
    %v2400 = vand.u32 %v2394, 4294901760
    %2401 = vmatpush1.xpose.msra.mxu0 %v2400
    %2402 = vmatprep.subr.mxu0 0.0
    %2403 = vmatpush1.xpose.msra.mxu0 0.0
    %2404 = vmatprep.subr.mxu0 0.0
    %2405 = vmatpush1.xpose.msra.mxu0 0.0
    %2406 = vmatprep.subr.mxu0 0.0
    %2407 = vmatpush1.xpose.msra.mxu0 0.0
    %2408 = vmatprep.subr.mxu0 0.0
    %2409 = vmatpush1.xpose.msra.mxu0 0.0
    %2410 = vmatprep.subr.mxu0 0.0
    %2411 = vmatpush1.xpose.msra.mxu0 0.0
    %2412 = vmatprep.subr.mxu0 0.0
    %2413 = vmatpush1.xpose.msra.mxu0 0.0
    %2414 = vmatprep.subr.mxu0 0.0
    %2415 = vmatpush1.xpose.msra.mxu0 0.0
    %2416 = vmatprep.subr.mxu0 0.0
    %2417 = vmatpush1.xpose.msra.mxu0 0.0
    %2418 = vmatprep.subr.mxu0 0.0
    %2419 = vmatpush1.xpose.msra.mxu0 0.0
    %2420 = vmatprep.subr.mxu0 0.0
    %2421 = vmatpush1.xpose.msra.mxu0 0.0
    %2422 = vmatprep.subr.mxu0 0.0
    %2423 = vmatpush1.xpose.msra.mxu0 0.0
    %2424 = vmatprep.subr.mxu0 0.0
    %2425 = vmatpush1.xpose.msra.mxu0 0.0
    %2426 = vmatprep.subr.mxu0 0.0
    %2427 = vmatpush1.xpose.msra.mxu0 0.0
    %2428 = vmatprep.subr.mxu0 0.0
    %2429 = vmatpush1.xpose.msra.mxu0 0.0
    %2430 = vmatprep.subr.mxu0 0.0
    %2431 = vmatpush1.xpose.msra.mxu0 0.0
    %2432 = vmatprep.subr.mxu0 0.0
    %2433 = vmatpush1.xpose.msra.mxu0 0.0
    %2434 = vmatprep.subr.mxu0 0.0
    %2435 = vmatpush1.xpose.msra.mxu0 0.0
    %2436 = vmatprep.subr.mxu0 0.0
    %2437 = vmatpush1.xpose.msra.mxu0 0.0
    %2438 = vmatprep.subr.mxu0 0.0
    %2439 = vmatpush1.xpose.msra.mxu0 0.0
    %2440 = vmatprep.subr.mxu0 0.0
    %2441 = vmatpush1.xpose.msra.mxu0 0.0
    %2442 = vmatprep.subr.mxu0 0.0
    %2443 = vmatpush1.xpose.msra.mxu0 0.0
    %2444 = vmatprep.subr.mxu0 0.0
    %2445 = vmatpush1.xpose.msra.mxu0 0.0
    %2446 = vmatprep.subr.mxu0 0.0
    %2447 = vmatpush1.xpose.msra.mxu0 0.0
    %2448 = vmatprep.subr.mxu0 0.0
    %2449 = vmatpush1.xpose.msra.mxu0 0.0
    %2450 = vmatprep.subr.mxu0 0.0
    %2451 = vmatpush1.xpose.msra.mxu0 0.0
    %2452 = vmatprep.subr.mxu0 0.0
    %2453 = vmatpush1.xpose.msra.mxu0 0.0
    %2454 = vmatprep.subr.mxu0 0.0
    %2455 = vmatpush1.xpose.msra.mxu0 0.0
    %2456 = vmatprep.subr.mxu0 0.0
    %2457 = vmatpush1.xpose.msra.mxu0 0.0
    %2458 = vmatprep.subr.mxu0 0.0
    %2459 = vmatpush1.xpose.msra.mxu0 0.0
    %2460 = vmatprep.subr.mxu0 0.0
    %2461 = vmatpush1.xpose.msra.mxu0 0.0
    %2462 = vmatprep.mubr.f32.mxu0 0.0
    %v2463 = vand.u32 %v2388, 4294901760
    %v2464 = vsub.f32 %v2388, %v2463
    %v2465 = vand.u32 %v2464, 4294901760
    %v2466 = vsub.f32 %v2464, %v2465
    %v2467 = vand.u32 %v2466, 4294901760
    %2468 = vmatmul.mubr.f32.gmra.mrb[0].mxu0 %v2467
    %v2469 = vpop.f32.mrb[0].mxu0
    %v2470 = vadd.f32 0.0, %v2469
    %v2471 = vpop.f32.mrb[0].mxu0
    %2472 = vdwg.mxu0
    %2473 = vmatprep.subr.mxu0 0.0
    %v2474 = vand.u32 %v2391, 4294901760
    %v2475 = vsub.f32 %v2391, %v2474
    %v2476 = vand.u32 %v2475, 4294901760
    %v2477 = vsub.f32 %v2475, %v2476
    %v2478 = vand.u32 %v2477, 4294901760
    %2479 = vmatpush1.xpose.msra.mxu0 %v2478
    %2480 = vmatprep.subr.mxu0 0.0
    %v2481 = vand.u32 %v2394, 4294901760
    %v2482 = vsub.f32 %v2394, %v2481
    %v2483 = vand.u32 %v2482, 4294901760
    %v2484 = vsub.f32 %v2482, %v2483
    %v2485 = vand.u32 %v2484, 4294901760
    %2486 = vmatpush1.xpose.msra.mxu0 %v2485
    %2487 = vmatprep.subr.mxu0 0.0
    %2488 = vmatpush1.xpose.msra.mxu0 0.0
    %2489 = vmatprep.subr.mxu0 0.0
    %2490 = vmatpush1.xpose.msra.mxu0 0.0
    %2491 = vmatprep.subr.mxu0 0.0
    %2492 = vmatpush1.xpose.msra.mxu0 0.0
    %2493 = vmatprep.subr.mxu0 0.0
    %2494 = vmatpush1.xpose.msra.mxu0 0.0
    %2495 = vmatprep.subr.mxu0 0.0
    %2496 = vmatpush1.xpose.msra.mxu0 0.0
    %2497 = vmatprep.subr.mxu0 0.0
    %2498 = vmatpush1.xpose.msra.mxu0 0.0
    %2499 = vmatprep.subr.mxu0 0.0
    %2500 = vmatpush1.xpose.msra.mxu0 0.0
    %2501 = vmatprep.subr.mxu0 0.0
    %2502 = vmatpush1.xpose.msra.mxu0 0.0
    %2503 = vmatprep.subr.mxu0 0.0
    %2504 = vmatpush1.xpose.msra.mxu0 0.0
    %2505 = vmatprep.subr.mxu0 0.0
    %2506 = vmatpush1.xpose.msra.mxu0 0.0
    %2507 = vmatprep.subr.mxu0 0.0
    %2508 = vmatpush1.xpose.msra.mxu0 0.0
    %2509 = vmatprep.subr.mxu0 0.0
    %2510 = vmatpush1.xpose.msra.mxu0 0.0
    %2511 = vmatprep.subr.mxu0 0.0
    %2512 = vmatpush1.xpose.msra.mxu0 0.0
    %2513 = vmatprep.subr.mxu0 0.0
    %2514 = vmatpush1.xpose.msra.mxu0 0.0
    %2515 = vmatprep.subr.mxu0 0.0
    %2516 = vmatpush1.xpose.msra.mxu0 0.0
    %2517 = vmatprep.subr.mxu0 0.0
    %2518 = vmatpush1.xpose.msra.mxu0 0.0
    %2519 = vmatprep.subr.mxu0 0.0
    %2520 = vmatpush1.xpose.msra.mxu0 0.0
    %2521 = vmatprep.subr.mxu0 0.0
    %2522 = vmatpush1.xpose.msra.mxu0 0.0
    %2523 = vmatprep.subr.mxu0 0.0
    %2524 = vmatpush1.xpose.msra.mxu0 0.0
    %2525 = vmatprep.subr.mxu0 0.0
    %2526 = vmatpush1.xpose.msra.mxu0 0.0
    %2527 = vmatprep.subr.mxu0 0.0
    %2528 = vmatpush1.xpose.msra.mxu0 0.0
    %2529 = vmatprep.subr.mxu0 0.0
    %2530 = vmatpush1.xpose.msra.mxu0 0.0
    %2531 = vmatprep.subr.mxu0 0.0
    %2532 = vmatpush1.xpose.msra.mxu0 0.0
    %2533 = vmatprep.subr.mxu0 0.0
    %2534 = vmatpush1.xpose.msra.mxu0 0.0
    %2535 = vmatprep.subr.mxu0 0.0
    %2536 = vmatpush1.xpose.msra.mxu0 0.0
    %2537 = vmatprep.subr.mxu0 0.0
    %2538 = vmatpush1.xpose.msra.mxu0 0.0
    %2539 = vmatprep.subr.mxu0 0.0
    %2540 = vmatpush1.xpose.msra.mxu0 0.0
    %2541 = vmatprep.subr.mxu0 0.0
    %2542 = vmatpush1.xpose.msra.mxu0 0.0
    %2543 = vmatprep.subr.mxu0 0.0
    %2544 = vmatpush1.xpose.msra.mxu0 0.0
    %2545 = vmatprep.subr.mxu0 0.0
    %2546 = vmatpush1.xpose.msra.mxu0 0.0
    %2547 = vmatprep.mubr.f32.mxu0 0.0
    %v2548 = vand.u32 %v2388, 4294901760
    %2549 = vmatmul.mubr.f32.gmra.mrb[0].mxu0 %v2548
    %v2550 = vpop.f32.mrb[0].mxu0
    %v2551 = vadd.f32 %v2470, %v2550
    %v2552 = vpop.f32.mrb[0].mxu0
    %2553 = vdwg.mxu0
    %2554 = vmatprep.subr.mxu0 0.0
    %v2555 = vand.u32 %v2391, 4294901760
    %v2556 = vsub.f32 %v2391, %v2555
    %2557 = vmatpush1.xpose.msra.mxu0 %v2556
    %2558 = vmatprep.subr.mxu0 0.0
    %v2559 = vand.u32 %v2394, 4294901760
    %v2560 = vsub.f32 %v2394, %v2559
    %2561 = vmatpush1.xpose.msra.mxu0 %v2560
    %2562 = vmatprep.subr.mxu0 0.0
    %2563 = vmatpush1.xpose.msra.mxu0 0.0
    %2564 = vmatprep.subr.mxu0 0.0
    %2565 = vmatpush1.xpose.msra.mxu0 0.0
    %2566 = vmatprep.subr.mxu0 0.0
    %2567 = vmatpush1.xpose.msra.mxu0 0.0
    %2568 = vmatprep.subr.mxu0 0.0
    %2569 = vmatpush1.xpose.msra.mxu0 0.0
    %2570 = vmatprep.subr.mxu0 0.0
    %2571 = vmatpush1.xpose.msra.mxu0 0.0
    %2572 = vmatprep.subr.mxu0 0.0
    %2573 = vmatpush1.xpose.msra.mxu0 0.0
    %2574 = vmatprep.subr.mxu0 0.0
    %2575 = vmatpush1.xpose.msra.mxu0 0.0
    %2576 = vmatprep.subr.mxu0 0.0
    %2577 = vmatpush1.xpose.msra.mxu0 0.0
    %2578 = vmatprep.subr.mxu0 0.0
    %2579 = vmatpush1.xpose.msra.mxu0 0.0
    %2580 = vmatprep.subr.mxu0 0.0
    %2581 = vmatpush1.xpose.msra.mxu0 0.0
    %2582 = vmatprep.subr.mxu0 0.0
    %2583 = vmatpush1.xpose.msra.mxu0 0.0
    %2584 = vmatprep.subr.mxu0 0.0
    %2585 = vmatpush1.xpose.msra.mxu0 0.0
    %2586 = vmatprep.subr.mxu0 0.0
    %2587 = vmatpush1.xpose.msra.mxu0 0.0
    %2588 = vmatprep.subr.mxu0 0.0
    %2589 = vmatpush1.xpose.msra.mxu0 0.0
    %2590 = vmatprep.subr.mxu0 0.0
    %2591 = vmatpush1.xpose.msra.mxu0 0.0
    %2592 = vmatprep.subr.mxu0 0.0
    %2593 = vmatpush1.xpose.msra.mxu0 0.0
    %2594 = vmatprep.subr.mxu0 0.0
    %2595 = vmatpush1.xpose.msra.mxu0 0.0
    %2596 = vmatprep.subr.mxu0 0.0
    %2597 = vmatpush1.xpose.msra.mxu0 0.0
    %2598 = vmatprep.subr.mxu0 0.0
    %2599 = vmatpush1.xpose.msra.mxu0 0.0
    %2600 = vmatprep.subr.mxu0 0.0
    %2601 = vmatpush1.xpose.msra.mxu0 0.0
    %2602 = vmatprep.subr.mxu0 0.0
    %2603 = vmatpush1.xpose.msra.mxu0 0.0
    %2604 = vmatprep.subr.mxu0 0.0
    %2605 = vmatpush1.xpose.msra.mxu0 0.0
    %2606 = vmatprep.subr.mxu0 0.0
    %2607 = vmatpush1.xpose.msra.mxu0 0.0
    %2608 = vmatprep.subr.mxu0 0.0
    %2609 = vmatpush1.xpose.msra.mxu0 0.0
    %2610 = vmatprep.subr.mxu0 0.0
    %2611 = vmatpush1.xpose.msra.mxu0 0.0
    %2612 = vmatprep.subr.mxu0 0.0
    %2613 = vmatpush1.xpose.msra.mxu0 0.0
    %2614 = vmatprep.subr.mxu0 0.0
    %2615 = vmatpush1.xpose.msra.mxu0 0.0
    %2616 = vmatprep.subr.mxu0 0.0
    %2617 = vmatpush1.xpose.msra.mxu0 0.0
    %2618 = vmatprep.subr.mxu0 0.0
    %2619 = vmatpush1.xpose.msra.mxu0 0.0
    %2620 = vmatprep.subr.mxu0 0.0
    %2621 = vmatpush1.xpose.msra.mxu0 0.0
    %2622 = vmatprep.mubr.f32.mxu0 0.0
    %v2623 = vand.u32 %v2388, 4294901760
    %v2624 = vsub.f32 %v2388, %v2623
    %2625 = vmatmul.mubr.f32.gmra.mrb[0].mxu0 %v2624
    %v2626 = vpop.f32.mrb[0].mxu0
    %v2627 = vadd.f32 %v2551, %v2626
    %v2628 = vpop.f32.mrb[0].mxu0
    %2629 = vdwg.mxu0
    %2630 = vmatprep.subr.mxu0 0.0
    %v2631 = vand.u32 %v2391, 4294901760
    %2632 = vmatpush1.xpose.msra.mxu0 %v2631
    %2633 = vmatprep.subr.mxu0 0.0
    %v2634 = vand.u32 %v2394, 4294901760
    %2635 = vmatpush1.xpose.msra.mxu0 %v2634
    %2636 = vmatprep.subr.mxu0 0.0
    %2637 = vmatpush1.xpose.msra.mxu0 0.0
    %2638 = vmatprep.subr.mxu0 0.0
    %2639 = vmatpush1.xpose.msra.mxu0 0.0
    %2640 = vmatprep.subr.mxu0 0.0
    %2641 = vmatpush1.xpose.msra.mxu0 0.0
    %2642 = vmatprep.subr.mxu0 0.0
    %2643 = vmatpush1.xpose.msra.mxu0 0.0
    %2644 = vmatprep.subr.mxu0 0.0
    %2645 = vmatpush1.xpose.msra.mxu0 0.0
    %2646 = vmatprep.subr.mxu0 0.0
    %2647 = vmatpush1.xpose.msra.mxu0 0.0
    %2648 = vmatprep.subr.mxu0 0.0
    %2649 = vmatpush1.xpose.msra.mxu0 0.0
    %2650 = vmatprep.subr.mxu0 0.0
    %2651 = vmatpush1.xpose.msra.mxu0 0.0
    %2652 = vmatprep.subr.mxu0 0.0
    %2653 = vmatpush1.xpose.msra.mxu0 0.0
    %2654 = vmatprep.subr.mxu0 0.0
    %2655 = vmatpush1.xpose.msra.mxu0 0.0
    %2656 = vmatprep.subr.mxu0 0.0
    %2657 = vmatpush1.xpose.msra.mxu0 0.0
    %2658 = vmatprep.subr.mxu0 0.0
    %2659 = vmatpush1.xpose.msra.mxu0 0.0
    %2660 = vmatprep.subr.mxu0 0.0
    %2661 = vmatpush1.xpose.msra.mxu0 0.0
    %2662 = vmatprep.subr.mxu0 0.0
    %2663 = vmatpush1.xpose.msra.mxu0 0.0
    %2664 = vmatprep.subr.mxu0 0.0
    %2665 = vmatpush1.xpose.msra.mxu0 0.0
    %2666 = vmatprep.subr.mxu0 0.0
    %2667 = vmatpush1.xpose.msra.mxu0 0.0
    %2668 = vmatprep.subr.mxu0 0.0
    %2669 = vmatpush1.xpose.msra.mxu0 0.0
    %2670 = vmatprep.subr.mxu0 0.0
    %2671 = vmatpush1.xpose.msra.mxu0 0.0
    %2672 = vmatprep.subr.mxu0 0.0
    %2673 = vmatpush1.xpose.msra.mxu0 0.0
    %2674 = vmatprep.subr.mxu0 0.0
    %2675 = vmatpush1.xpose.msra.mxu0 0.0
    %2676 = vmatprep.subr.mxu0 0.0
    %2677 = vmatpush1.xpose.msra.mxu0 0.0
    %2678 = vmatprep.subr.mxu0 0.0
    %2679 = vmatpush1.xpose.msra.mxu0 0.0
    %2680 = vmatprep.subr.mxu0 0.0
    %2681 = vmatpush1.xpose.msra.mxu0 0.0
    %2682 = vmatprep.subr.mxu0 0.0
    %2683 = vmatpush1.xpose.msra.mxu0 0.0
    %2684 = vmatprep.subr.mxu0 0.0
    %2685 = vmatpush1.xpose.msra.mxu0 0.0
    %2686 = vmatprep.subr.mxu0 0.0
    %2687 = vmatpush1.xpose.msra.mxu0 0.0
    %2688 = vmatprep.subr.mxu0 0.0
    %2689 = vmatpush1.xpose.msra.mxu0 0.0
    %2690 = vmatprep.subr.mxu0 0.0
    %2691 = vmatpush1.xpose.msra.mxu0 0.0
    %2692 = vmatprep.subr.mxu0 0.0
    %2693 = vmatpush1.xpose.msra.mxu0 0.0
    %2694 = vmatprep.subr.mxu0 0.0
    %2695 = vmatpush1.xpose.msra.mxu0 0.0
    %2696 = vmatprep.mubr.f32.mxu0 0.0
    %v2697 = vand.u32 %v2388, 4294901760
    %v2698 = vsub.f32 %v2388, %v2697
    %v2699 = vand.u32 %v2698, 4294901760
    %2700 = vmatmul.mubr.f32.gmra.mrb[0].mxu0 %v2699
    %v2701 = vpop.f32.mrb[0].mxu0
    %v2702 = vadd.f32 %v2627, %v2701
    %v2703 = vpop.f32.mrb[0].mxu0
    %2704 = vdwg.mxu0
    %2705 = vmatprep.subr.mxu0 0.0
    %v2706 = vand.u32 %v2391, 4294901760
    %v2707 = vsub.f32 %v2391, %v2706
    %v2708 = vand.u32 %v2707, 4294901760
    %2709 = vmatpush1.xpose.msra.mxu0 %v2708
    %2710 = vmatprep.subr.mxu0 0.0
    %v2711 = vand.u32 %v2394, 4294901760
    %v2712 = vsub.f32 %v2394, %v2711
    %v2713 = vand.u32 %v2712, 4294901760
    %2714 = vmatpush1.xpose.msra.mxu0 %v2713
    %2715 = vmatprep.subr.mxu0 0.0
    %2716 = vmatpush1.xpose.msra.mxu0 0.0
    %2717 = vmatprep.subr.mxu0 0.0
    %2718 = vmatpush1.xpose.msra.mxu0 0.0
    %2719 = vmatprep.subr.mxu0 0.0
    %2720 = vmatpush1.xpose.msra.mxu0 0.0
    %2721 = vmatprep.subr.mxu0 0.0
    %2722 = vmatpush1.xpose.msra.mxu0 0.0
    %2723 = vmatprep.subr.mxu0 0.0
    %2724 = vmatpush1.xpose.msra.mxu0 0.0
    %2725 = vmatprep.subr.mxu0 0.0
    %2726 = vmatpush1.xpose.msra.mxu0 0.0
    %2727 = vmatprep.subr.mxu0 0.0
    %2728 = vmatpush1.xpose.msra.mxu0 0.0
    %2729 = vmatprep.subr.mxu0 0.0
    %2730 = vmatpush1.xpose.msra.mxu0 0.0
    %2731 = vmatprep.subr.mxu0 0.0
    %2732 = vmatpush1.xpose.msra.mxu0 0.0
    %2733 = vmatprep.subr.mxu0 0.0
    %2734 = vmatpush1.xpose.msra.mxu0 0.0
    %2735 = vmatprep.subr.mxu0 0.0
    %2736 = vmatpush1.xpose.msra.mxu0 0.0
    %2737 = vmatprep.subr.mxu0 0.0
    %2738 = vmatpush1.xpose.msra.mxu0 0.0
    %2739 = vmatprep.subr.mxu0 0.0
    %2740 = vmatpush1.xpose.msra.mxu0 0.0
    %2741 = vmatprep.subr.mxu0 0.0
    %2742 = vmatpush1.xpose.msra.mxu0 0.0
    %2743 = vmatprep.subr.mxu0 0.0
    %2744 = vmatpush1.xpose.msra.mxu0 0.0
    %2745 = vmatprep.subr.mxu0 0.0
    %2746 = vmatpush1.xpose.msra.mxu0 0.0
    %2747 = vmatprep.subr.mxu0 0.0
    %2748 = vmatpush1.xpose.msra.mxu0 0.0
    %2749 = vmatprep.subr.mxu0 0.0
    %2750 = vmatpush1.xpose.msra.mxu0 0.0
    %2751 = vmatprep.subr.mxu0 0.0
    %2752 = vmatpush1.xpose.msra.mxu0 0.0
    %2753 = vmatprep.subr.mxu0 0.0
    %2754 = vmatpush1.xpose.msra.mxu0 0.0
    %2755 = vmatprep.subr.mxu0 0.0
    %2756 = vmatpush1.xpose.msra.mxu0 0.0
    %2757 = vmatprep.subr.mxu0 0.0
    %2758 = vmatpush1.xpose.msra.mxu0 0.0
    %2759 = vmatprep.subr.mxu0 0.0
    %2760 = vmatpush1.xpose.msra.mxu0 0.0
    %2761 = vmatprep.subr.mxu0 0.0
    %2762 = vmatpush1.xpose.msra.mxu0 0.0
    %2763 = vmatprep.subr.mxu0 0.0
    %2764 = vmatpush1.xpose.msra.mxu0 0.0
    %2765 = vmatprep.subr.mxu0 0.0
    %2766 = vmatpush1.xpose.msra.mxu0 0.0
    %2767 = vmatprep.subr.mxu0 0.0
    %2768 = vmatpush1.xpose.msra.mxu0 0.0
    %2769 = vmatprep.subr.mxu0 0.0
    %2770 = vmatpush1.xpose.msra.mxu0 0.0
    %2771 = vmatprep.subr.mxu0 0.0
    %2772 = vmatpush1.xpose.msra.mxu0 0.0
    %2773 = vmatprep.subr.mxu0 0.0
    %2774 = vmatpush1.xpose.msra.mxu0 0.0
    %2775 = vmatprep.mubr.f32.mxu0 0.0
    %v2776 = vand.u32 %v2388, 4294901760
    %2777 = vmatmul.mubr.f32.gmra.mrb[0].mxu0 %v2776
    %v2778 = vpop.f32.mrb[0].mxu0
    %v2779 = vadd.f32 %v2702, %v2778
    %v2780 = vpop.f32.mrb[0].mxu0
    %2781 = vdwg.mxu0
    %2782 = vmatprep.subr.mxu0 0.0
    %v2783 = vand.u32 %v2391, 4294901760
    %2784 = vmatpush1.xpose.msra.mxu0 %v2783
    %2785 = vmatprep.subr.mxu0 0.0
    %v2786 = vand.u32 %v2394, 4294901760
    %2787 = vmatpush1.xpose.msra.mxu0 %v2786
    %2788 = vmatprep.subr.mxu0 0.0
    %2789 = vmatpush1.xpose.msra.mxu0 0.0
    %2790 = vmatprep.subr.mxu0 0.0
    %2791 = vmatpush1.xpose.msra.mxu0 0.0
    %2792 = vmatprep.subr.mxu0 0.0
    %2793 = vmatpush1.xpose.msra.mxu0 0.0
    %2794 = vmatprep.subr.mxu0 0.0
    %2795 = vmatpush1.xpose.msra.mxu0 0.0
    %2796 = vmatprep.subr.mxu0 0.0
    %2797 = vmatpush1.xpose.msra.mxu0 0.0
    %2798 = vmatprep.subr.mxu0 0.0
    %2799 = vmatpush1.xpose.msra.mxu0 0.0
    %2800 = vmatprep.subr.mxu0 0.0
    %2801 = vmatpush1.xpose.msra.mxu0 0.0
    %2802 = vmatprep.subr.mxu0 0.0
    %2803 = vmatpush1.xpose.msra.mxu0 0.0
    %2804 = vmatprep.subr.mxu0 0.0
    %2805 = vmatpush1.xpose.msra.mxu0 0.0
    %2806 = vmatprep.subr.mxu0 0.0
    %2807 = vmatpush1.xpose.msra.mxu0 0.0
    %2808 = vmatprep.subr.mxu0 0.0
    %2809 = vmatpush1.xpose.msra.mxu0 0.0
    %2810 = vmatprep.subr.mxu0 0.0
    %2811 = vmatpush1.xpose.msra.mxu0 0.0
    %2812 = vmatprep.subr.mxu0 0.0
    %2813 = vmatpush1.xpose.msra.mxu0 0.0
    %2814 = vmatprep.subr.mxu0 0.0
    %2815 = vmatpush1.xpose.msra.mxu0 0.0
    %2816 = vmatprep.subr.mxu0 0.0
    %2817 = vmatpush1.xpose.msra.mxu0 0.0
    %2818 = vmatprep.subr.mxu0 0.0
    %2819 = vmatpush1.xpose.msra.mxu0 0.0
    %2820 = vmatprep.subr.mxu0 0.0
    %2821 = vmatpush1.xpose.msra.mxu0 0.0
    %2822 = vmatprep.subr.mxu0 0.0
    %2823 = vmatpush1.xpose.msra.mxu0 0.0
    %2824 = vmatprep.subr.mxu0 0.0
    %2825 = vmatpush1.xpose.msra.mxu0 0.0
    %2826 = vmatprep.subr.mxu0 0.0
    %2827 = vmatpush1.xpose.msra.mxu0 0.0
    %2828 = vmatprep.subr.mxu0 0.0
    %2829 = vmatpush1.xpose.msra.mxu0 0.0
    %2830 = vmatprep.subr.mxu0 0.0
    %2831 = vmatpush1.xpose.msra.mxu0 0.0
    %2832 = vmatprep.subr.mxu0 0.0
    %2833 = vmatpush1.xpose.msra.mxu0 0.0
    %2834 = vmatprep.subr.mxu0 0.0
    %2835 = vmatpush1.xpose.msra.mxu0 0.0
    %2836 = vmatprep.subr.mxu0 0.0
    %2837 = vmatpush1.xpose.msra.mxu0 0.0
    %2838 = vmatprep.subr.mxu0 0.0
    %2839 = vmatpush1.xpose.msra.mxu0 0.0
    %2840 = vmatprep.subr.mxu0 0.0
    %2841 = vmatpush1.xpose.msra.mxu0 0.0
    %2842 = vmatprep.subr.mxu0 0.0
    %2843 = vmatpush1.xpose.msra.mxu0 0.0
    %2844 = vmatprep.subr.mxu0 0.0
    %2845 = vmatpush1.xpose.msra.mxu0 0.0
    %2846 = vmatprep.subr.mxu0 0.0
    %2847 = vmatpush1.xpose.msra.mxu0 0.0
    %2848 = vmatprep.mubr.f32.mxu0 0.0
    %v2849 = vand.u32 %v2388, 4294901760
    %2850 = vmatmul.mubr.f32.gmra.mrb[0].mxu0 %v2849
    %v2851 = vpop.f32.mrb[0].mxu0
    %v2852 = vadd.f32 %v2779, %v2851
    %v2853 = vpop.f32.mrb[0].mxu0
    %2854 = vdwg.mxu0
    %v2855 = vsel %vm1893, %v2852, -inf
    %v2856 = vrot.slane %v2855, 4
    %v2857 = vmax.f32 %v2855, %v2856
    %v2858 = vrot.slane %v2857, 2
    %v2859 = vmax.f32 %v2857, %v2858
    %v2860 = vrot.slane %v2859, 1
    %v2861 = vmax.f32 %v2859, %v2860
    %v2862 = vsub.f32 %v2852, %v2861
    %v2863 = vmul.f32 %v2862, 1.442695
    %v2864 = vpow.pop %v2863
    %v2865 = vsel %vm1893, %v2864, 0.0
    %v2866 = vrot.slane %v2865, 4
    %v2867 = vadd.f32 %v2865, %v2866
    %v2868 = vrot.slane %v2867, 2
    %v2869 = vadd.f32 %v2867, %v2868
    %v2870 = vrot.slane %v2869, 1
    %v2871 = vadd.f32 %v2869, %v2870
    %v2872 = vrcp.pop %v2871
    %v2873 = vmul.f32 %v2864, %v2872
    %v2874 = vsel %vm1893, %v2873, 0.0
    %2875 = vadd.xlane.f32.xlu0 %v2874
    %v2876 = vpop.xlane.xlu0 %2875
    %v2877 = vadd.f32 %v2876, 1e-08
    %v2878 = vrcp.pop %v2877
    %v2879 = vmul.f32 %v2873, %v2878
    %2880 = vrot.lane.b32.xlu0 %v842, 96
    %v2881 = vpop.permute.xlu0 %2880
    %2882 = vrot.lane.b32.xlu0 %v848, 96
    %v2883 = vpop.permute.xlu0 %2882
    %v2887 = vsel %vm1893, %v2879, 0
    %2889 = vmatprep.subr.mxu0 0.0
    %v2890 = vand.u32 %v2881, 4294901760
    %2891 = vmatpush1.msra.mxu0 %v2890
    %2892 = vmatprep.subr.mxu0 0.0
    %v2893 = vand.u32 %v2883, 4294901760
    %2894 = vmatpush1.msra.mxu0 %v2893
    %2895 = vmatprep.subr.mxu0 0.0
    %2896 = vmatpush1.msra.mxu0 0.0
    %2897 = vmatprep.subr.mxu0 0.0
    %2898 = vmatpush1.msra.mxu0 0.0
    %2899 = vmatprep.subr.mxu0 0.0
    %2900 = vmatpush1.msra.mxu0 0.0
    %2901 = vmatprep.subr.mxu0 0.0
    %2902 = vmatpush1.msra.mxu0 0.0
    %2903 = vmatprep.subr.mxu0 0.0
    %2904 = vmatpush1.msra.mxu0 0.0
    %2905 = vmatprep.subr.mxu0 0.0
    %2906 = vmatpush1.msra.mxu0 0.0
    %2907 = vmatprep.subr.mxu0 0.0
    %2908 = vmatpush1.msra.mxu0 0.0
    %2909 = vmatprep.subr.mxu0 0.0
    %2910 = vmatpush1.msra.mxu0 0.0
    %2911 = vmatprep.subr.mxu0 0.0
    %2912 = vmatpush1.msra.mxu0 0.0
    %2913 = vmatprep.subr.mxu0 0.0
    %2914 = vmatpush1.msra.mxu0 0.0
    %2915 = vmatprep.subr.mxu0 0.0
    %2916 = vmatpush1.msra.mxu0 0.0
    %2917 = vmatprep.subr.mxu0 0.0
    %2918 = vmatpush1.msra.mxu0 0.0
    %2919 = vmatprep.subr.mxu0 0.0
    %2920 = vmatpush1.msra.mxu0 0.0
    %2921 = vmatprep.subr.mxu0 0.0
    %2922 = vmatpush1.msra.mxu0 0.0
    %2923 = vmatprep.subr.mxu0 0.0
    %2924 = vmatpush1.msra.mxu0 0.0
    %2925 = vmatprep.subr.mxu0 0.0
    %2926 = vmatpush1.msra.mxu0 0.0
    %2927 = vmatprep.subr.mxu0 0.0
    %2928 = vmatpush1.msra.mxu0 0.0
    %2929 = vmatprep.subr.mxu0 0.0
    %2930 = vmatpush1.msra.mxu0 0.0
    %2931 = vmatprep.subr.mxu0 0.0
    %2932 = vmatpush1.msra.mxu0 0.0
    %2933 = vmatprep.subr.mxu0 0.0
    %2934 = vmatpush1.msra.mxu0 0.0
    %2935 = vmatprep.subr.mxu0 0.0
    %2936 = vmatpush1.msra.mxu0 0.0
    %2937 = vmatprep.subr.mxu0 0.0
    %2938 = vmatpush1.msra.mxu0 0.0
    %2939 = vmatprep.subr.mxu0 0.0
    %2940 = vmatpush1.msra.mxu0 0.0
    %2941 = vmatprep.subr.mxu0 0.0
    %2942 = vmatpush1.msra.mxu0 0.0
    %2943 = vmatprep.subr.mxu0 0.0
    %2944 = vmatpush1.msra.mxu0 0.0
    %2945 = vmatprep.subr.mxu0 0.0
    %2946 = vmatpush1.msra.mxu0 0.0
    %2947 = vmatprep.subr.mxu0 0.0
    %2948 = vmatpush1.msra.mxu0 0.0
    %2949 = vmatprep.subr.mxu0 0.0
    %2950 = vmatpush1.msra.mxu0 0.0
    %2951 = vmatprep.subr.mxu0 0.0
    %2952 = vmatpush1.msra.mxu0 0.0
    %2953 = vmatprep.subr.mxu0 0.0
    %2954 = vmatpush1.msra.mxu0 0.0
    %2955 = vmatprep.mubr.f32.mxu0 0.0
    %v2956 = vand.u32 %v2887, 4294901760
    %v2957 = vsub.f32 %v2887, %v2956
    %v2958 = vand.u32 %v2957, 4294901760
    %v2959 = vsub.f32 %v2957, %v2958
    %v2960 = vand.u32 %v2959, 4294901760
    %2961 = vmatmul.mubr.f32.gmra.mrb[0].mxu0 %v2960
    %v2962 = vpop.f32.mrb[0].mxu0
    %v2963 = vadd.f32 0.0, %v2962
    %v2964 = vpop.f32.mrb[0].mxu0
    %2965 = vdwg.mxu0
    %2966 = vmatprep.subr.mxu0 0.0
    %v2967 = vand.u32 %v2881, 4294901760
    %v2968 = vsub.f32 %v2881, %v2967
    %v2969 = vand.u32 %v2968, 4294901760
    %v2970 = vsub.f32 %v2968, %v2969
    %v2971 = vand.u32 %v2970, 4294901760
    %2972 = vmatpush1.msra.mxu0 %v2971
    %2973 = vmatprep.subr.mxu0 0.0
    %v2974 = vand.u32 %v2883, 4294901760
    %v2975 = vsub.f32 %v2883, %v2974
    %v2976 = vand.u32 %v2975, 4294901760
    %v2977 = vsub.f32 %v2975, %v2976
    %v2978 = vand.u32 %v2977, 4294901760
    %2979 = vmatpush1.msra.mxu0 %v2978
    %2980 = vmatprep.subr.mxu0 0.0
    %2981 = vmatpush1.msra.mxu0 0.0
    %2982 = vmatprep.subr.mxu0 0.0
    %2983 = vmatpush1.msra.mxu0 0.0
    %2984 = vmatprep.subr.mxu0 0.0
    %2985 = vmatpush1.msra.mxu0 0.0
    %2986 = vmatprep.subr.mxu0 0.0
    %2987 = vmatpush1.msra.mxu0 0.0
    %2988 = vmatprep.subr.mxu0 0.0
    %2989 = vmatpush1.msra.mxu0 0.0
    %2990 = vmatprep.subr.mxu0 0.0
    %2991 = vmatpush1.msra.mxu0 0.0
    %2992 = vmatprep.subr.mxu0 0.0
    %2993 = vmatpush1.msra.mxu0 0.0
    %2994 = vmatprep.subr.mxu0 0.0
    %2995 = vmatpush1.msra.mxu0 0.0
    %2996 = vmatprep.subr.mxu0 0.0
    %2997 = vmatpush1.msra.mxu0 0.0
    %2998 = vmatprep.subr.mxu0 0.0
    %2999 = vmatpush1.msra.mxu0 0.0
    %3000 = vmatprep.subr.mxu0 0.0
    %3001 = vmatpush1.msra.mxu0 0.0
    %3002 = vmatprep.subr.mxu0 0.0
    %3003 = vmatpush1.msra.mxu0 0.0
    %3004 = vmatprep.subr.mxu0 0.0
    %3005 = vmatpush1.msra.mxu0 0.0
    %3006 = vmatprep.subr.mxu0 0.0
    %3007 = vmatpush1.msra.mxu0 0.0
    %3008 = vmatprep.subr.mxu0 0.0
    %3009 = vmatpush1.msra.mxu0 0.0
    %3010 = vmatprep.subr.mxu0 0.0
    %3011 = vmatpush1.msra.mxu0 0.0
    %3012 = vmatprep.subr.mxu0 0.0
    %3013 = vmatpush1.msra.mxu0 0.0
    %3014 = vmatprep.subr.mxu0 0.0
    %3015 = vmatpush1.msra.mxu0 0.0
    %3016 = vmatprep.subr.mxu0 0.0
    %3017 = vmatpush1.msra.mxu0 0.0
    %3018 = vmatprep.subr.mxu0 0.0
    %3019 = vmatpush1.msra.mxu0 0.0
    %3020 = vmatprep.subr.mxu0 0.0
    %3021 = vmatpush1.msra.mxu0 0.0
    %3022 = vmatprep.subr.mxu0 0.0
    %3023 = vmatpush1.msra.mxu0 0.0
    %3024 = vmatprep.subr.mxu0 0.0
    %3025 = vmatpush1.msra.mxu0 0.0
    %3026 = vmatprep.subr.mxu0 0.0
    %3027 = vmatpush1.msra.mxu0 0.0
    %3028 = vmatprep.subr.mxu0 0.0
    %3029 = vmatpush1.msra.mxu0 0.0
    %3030 = vmatprep.subr.mxu0 0.0
    %3031 = vmatpush1.msra.mxu0 0.0
    %3032 = vmatprep.subr.mxu0 0.0
    %3033 = vmatpush1.msra.mxu0 0.0
    %3034 = vmatprep.subr.mxu0 0.0
    %3035 = vmatpush1.msra.mxu0 0.0
    %3036 = vmatprep.subr.mxu0 0.0
    %3037 = vmatpush1.msra.mxu0 0.0
    %3038 = vmatprep.subr.mxu0 0.0
    %3039 = vmatpush1.msra.mxu0 0.0
    %3040 = vmatprep.mubr.f32.mxu0 0.0
    %v3041 = vand.u32 %v2887, 4294901760
    %3042 = vmatmul.mubr.f32.gmra.mrb[0].mxu0 %v3041
    %v3043 = vpop.f32.mrb[0].mxu0
    %v3044 = vadd.f32 %v2963, %v3043
    %v3045 = vpop.f32.mrb[0].mxu0
    %3046 = vdwg.mxu0
    %3047 = vmatprep.subr.mxu0 0.0
    %v3048 = vand.u32 %v2881, 4294901760
    %v3049 = vsub.f32 %v2881, %v3048
    %3050 = vmatpush1.msra.mxu0 %v3049
    %3051 = vmatprep.subr.mxu0 0.0
    %v3052 = vand.u32 %v2883, 4294901760
    %v3053 = vsub.f32 %v2883, %v3052
    %3054 = vmatpush1.msra.mxu0 %v3053
    %3055 = vmatprep.subr.mxu0 0.0
    %3056 = vmatpush1.msra.mxu0 0.0
    %3057 = vmatprep.subr.mxu0 0.0
    %3058 = vmatpush1.msra.mxu0 0.0
    %3059 = vmatprep.subr.mxu0 0.0
    %3060 = vmatpush1.msra.mxu0 0.0
    %3061 = vmatprep.subr.mxu0 0.0
    %3062 = vmatpush1.msra.mxu0 0.0
    %3063 = vmatprep.subr.mxu0 0.0
    %3064 = vmatpush1.msra.mxu0 0.0
    %3065 = vmatprep.subr.mxu0 0.0
    %3066 = vmatpush1.msra.mxu0 0.0
    %3067 = vmatprep.subr.mxu0 0.0
    %3068 = vmatpush1.msra.mxu0 0.0
    %3069 = vmatprep.subr.mxu0 0.0
    %3070 = vmatpush1.msra.mxu0 0.0
    %3071 = vmatprep.subr.mxu0 0.0
    %3072 = vmatpush1.msra.mxu0 0.0
    %3073 = vmatprep.subr.mxu0 0.0
    %3074 = vmatpush1.msra.mxu0 0.0
    %3075 = vmatprep.subr.mxu0 0.0
    %3076 = vmatpush1.msra.mxu0 0.0
    %3077 = vmatprep.subr.mxu0 0.0
    %3078 = vmatpush1.msra.mxu0 0.0
    %3079 = vmatprep.subr.mxu0 0.0
    %3080 = vmatpush1.msra.mxu0 0.0
    %3081 = vmatprep.subr.mxu0 0.0
    %3082 = vmatpush1.msra.mxu0 0.0
    %3083 = vmatprep.subr.mxu0 0.0
    %3084 = vmatpush1.msra.mxu0 0.0
    %3085 = vmatprep.subr.mxu0 0.0
    %3086 = vmatpush1.msra.mxu0 0.0
    %3087 = vmatprep.subr.mxu0 0.0
    %3088 = vmatpush1.msra.mxu0 0.0
    %3089 = vmatprep.subr.mxu0 0.0
    %3090 = vmatpush1.msra.mxu0 0.0
    %3091 = vmatprep.subr.mxu0 0.0
    %3092 = vmatpush1.msra.mxu0 0.0
    %3093 = vmatprep.subr.mxu0 0.0
    %3094 = vmatpush1.msra.mxu0 0.0
    %3095 = vmatprep.subr.mxu0 0.0
    %3096 = vmatpush1.msra.mxu0 0.0
    %3097 = vmatprep.subr.mxu0 0.0
    %3098 = vmatpush1.msra.mxu0 0.0
    %3099 = vmatprep.subr.mxu0 0.0
    %3100 = vmatpush1.msra.mxu0 0.0
    %3101 = vmatprep.subr.mxu0 0.0
    %3102 = vmatpush1.msra.mxu0 0.0
    %3103 = vmatprep.subr.mxu0 0.0
    %3104 = vmatpush1.msra.mxu0 0.0
    %3105 = vmatprep.subr.mxu0 0.0
    %3106 = vmatpush1.msra.mxu0 0.0
    %3107 = vmatprep.subr.mxu0 0.0
    %3108 = vmatpush1.msra.mxu0 0.0
    %3109 = vmatprep.subr.mxu0 0.0
    %3110 = vmatpush1.msra.mxu0 0.0
    %3111 = vmatprep.subr.mxu0 0.0
    %3112 = vmatpush1.msra.mxu0 0.0
    %3113 = vmatprep.subr.mxu0 0.0
    %3114 = vmatpush1.msra.mxu0 0.0
    %3115 = vmatprep.mubr.f32.mxu0 0.0
    %v3116 = vand.u32 %v2887, 4294901760
    %v3117 = vsub.f32 %v2887, %v3116
    %3118 = vmatmul.mubr.f32.gmra.mrb[0].mxu0 %v3117
    %v3119 = vpop.f32.mrb[0].mxu0
    %v3120 = vadd.f32 %v3044, %v3119
    %v3121 = vpop.f32.mrb[0].mxu0
    %3122 = vdwg.mxu0
    %3123 = vmatprep.subr.mxu0 0.0
    %v3124 = vand.u32 %v2881, 4294901760
    %3125 = vmatpush1.msra.mxu0 %v3124
    %3126 = vmatprep.subr.mxu0 0.0
    %v3127 = vand.u32 %v2883, 4294901760
    %3128 = vmatpush1.msra.mxu0 %v3127
    %3129 = vmatprep.subr.mxu0 0.0
    %3130 = vmatpush1.msra.mxu0 0.0
    %3131 = vmatprep.subr.mxu0 0.0
    %3132 = vmatpush1.msra.mxu0 0.0
    %3133 = vmatprep.subr.mxu0 0.0
    %3134 = vmatpush1.msra.mxu0 0.0
    %3135 = vmatprep.subr.mxu0 0.0
    %3136 = vmatpush1.msra.mxu0 0.0
    %3137 = vmatprep.subr.mxu0 0.0
    %3138 = vmatpush1.msra.mxu0 0.0
    %3139 = vmatprep.subr.mxu0 0.0
    %3140 = vmatpush1.msra.mxu0 0.0
    %3141 = vmatprep.subr.mxu0 0.0
    %3142 = vmatpush1.msra.mxu0 0.0
    %3143 = vmatprep.subr.mxu0 0.0
    %3144 = vmatpush1.msra.mxu0 0.0
    %3145 = vmatprep.subr.mxu0 0.0
    %3146 = vmatpush1.msra.mxu0 0.0
    %3147 = vmatprep.subr.mxu0 0.0
    %3148 = vmatpush1.msra.mxu0 0.0
    %3149 = vmatprep.subr.mxu0 0.0
    %3150 = vmatpush1.msra.mxu0 0.0
    %3151 = vmatprep.subr.mxu0 0.0
    %3152 = vmatpush1.msra.mxu0 0.0
    %3153 = vmatprep.subr.mxu0 0.0
    %3154 = vmatpush1.msra.mxu0 0.0
    %3155 = vmatprep.subr.mxu0 0.0
    %3156 = vmatpush1.msra.mxu0 0.0
    %3157 = vmatprep.subr.mxu0 0.0
    %3158 = vmatpush1.msra.mxu0 0.0
    %3159 = vmatprep.subr.mxu0 0.0
    %3160 = vmatpush1.msra.mxu0 0.0
    %3161 = vmatprep.subr.mxu0 0.0
    %3162 = vmatpush1.msra.mxu0 0.0
    %3163 = vmatprep.subr.mxu0 0.0
    %3164 = vmatpush1.msra.mxu0 0.0
    %3165 = vmatprep.subr.mxu0 0.0
    %3166 = vmatpush1.msra.mxu0 0.0
    %3167 = vmatprep.subr.mxu0 0.0
    %3168 = vmatpush1.msra.mxu0 0.0
    %3169 = vmatprep.subr.mxu0 0.0
    %3170 = vmatpush1.msra.mxu0 0.0
    %3171 = vmatprep.subr.mxu0 0.0
    %3172 = vmatpush1.msra.mxu0 0.0
    %3173 = vmatprep.subr.mxu0 0.0
    %3174 = vmatpush1.msra.mxu0 0.0
    %3175 = vmatprep.subr.mxu0 0.0
    %3176 = vmatpush1.msra.mxu0 0.0
    %3177 = vmatprep.subr.mxu0 0.0
    %3178 = vmatpush1.msra.mxu0 0.0
    %3179 = vmatprep.subr.mxu0 0.0
    %3180 = vmatpush1.msra.mxu0 0.0
    %3181 = vmatprep.subr.mxu0 0.0
    %3182 = vmatpush1.msra.mxu0 0.0
    %3183 = vmatprep.subr.mxu0 0.0
    %3184 = vmatpush1.msra.mxu0 0.0
    %3185 = vmatprep.subr.mxu0 0.0
    %3186 = vmatpush1.msra.mxu0 0.0
    %3187 = vmatprep.subr.mxu0 0.0
    %3188 = vmatpush1.msra.mxu0 0.0
    %3189 = vmatprep.mubr.f32.mxu0 0.0
    %v3190 = vand.u32 %v2887, 4294901760
    %v3191 = vsub.f32 %v2887, %v3190
    %v3192 = vand.u32 %v3191, 4294901760
    %3193 = vmatmul.mubr.f32.gmra.mrb[0].mxu0 %v3192
    %v3194 = vpop.f32.mrb[0].mxu0
    %v3195 = vadd.f32 %v3120, %v3194
    %v3196 = vpop.f32.mrb[0].mxu0
    %3197 = vdwg.mxu0
    %3198 = vmatprep.subr.mxu0 0.0
    %v3199 = vand.u32 %v2881, 4294901760
    %v3200 = vsub.f32 %v2881, %v3199
    %v3201 = vand.u32 %v3200, 4294901760
    %3202 = vmatpush1.msra.mxu0 %v3201
    %3203 = vmatprep.subr.mxu0 0.0
    %v3204 = vand.u32 %v2883, 4294901760
    %v3205 = vsub.f32 %v2883, %v3204
    %v3206 = vand.u32 %v3205, 4294901760
    %3207 = vmatpush1.msra.mxu0 %v3206
    %3208 = vmatprep.subr.mxu0 0.0
    %3209 = vmatpush1.msra.mxu0 0.0
    %3210 = vmatprep.subr.mxu0 0.0
    %3211 = vmatpush1.msra.mxu0 0.0
    %3212 = vmatprep.subr.mxu0 0.0
    %3213 = vmatpush1.msra.mxu0 0.0
    %3214 = vmatprep.subr.mxu0 0.0
    %3215 = vmatpush1.msra.mxu0 0.0
    %3216 = vmatprep.subr.mxu0 0.0
    %3217 = vmatpush1.msra.mxu0 0.0
    %3218 = vmatprep.subr.mxu0 0.0
    %3219 = vmatpush1.msra.mxu0 0.0
    %3220 = vmatprep.subr.mxu0 0.0
    %3221 = vmatpush1.msra.mxu0 0.0
    %3222 = vmatprep.subr.mxu0 0.0
    %3223 = vmatpush1.msra.mxu0 0.0
    %3224 = vmatprep.subr.mxu0 0.0
    %3225 = vmatpush1.msra.mxu0 0.0
    %3226 = vmatprep.subr.mxu0 0.0
    %3227 = vmatpush1.msra.mxu0 0.0
    %3228 = vmatprep.subr.mxu0 0.0
    %3229 = vmatpush1.msra.mxu0 0.0
    %3230 = vmatprep.subr.mxu0 0.0
    %3231 = vmatpush1.msra.mxu0 0.0
    %3232 = vmatprep.subr.mxu0 0.0
    %3233 = vmatpush1.msra.mxu0 0.0
    %3234 = vmatprep.subr.mxu0 0.0
    %3235 = vmatpush1.msra.mxu0 0.0
    %3236 = vmatprep.subr.mxu0 0.0
    %3237 = vmatpush1.msra.mxu0 0.0
    %3238 = vmatprep.subr.mxu0 0.0
    %3239 = vmatpush1.msra.mxu0 0.0
    %3240 = vmatprep.subr.mxu0 0.0
    %3241 = vmatpush1.msra.mxu0 0.0
    %3242 = vmatprep.subr.mxu0 0.0
    %3243 = vmatpush1.msra.mxu0 0.0
    %3244 = vmatprep.subr.mxu0 0.0
    %3245 = vmatpush1.msra.mxu0 0.0
    %3246 = vmatprep.subr.mxu0 0.0
    %3247 = vmatpush1.msra.mxu0 0.0
    %3248 = vmatprep.subr.mxu0 0.0
    %3249 = vmatpush1.msra.mxu0 0.0
    %3250 = vmatprep.subr.mxu0 0.0
    %3251 = vmatpush1.msra.mxu0 0.0
    %3252 = vmatprep.subr.mxu0 0.0
    %3253 = vmatpush1.msra.mxu0 0.0
    %3254 = vmatprep.subr.mxu0 0.0
    %3255 = vmatpush1.msra.mxu0 0.0
    %3256 = vmatprep.subr.mxu0 0.0
    %3257 = vmatpush1.msra.mxu0 0.0
    %3258 = vmatprep.subr.mxu0 0.0
    %3259 = vmatpush1.msra.mxu0 0.0
    %3260 = vmatprep.subr.mxu0 0.0
    %3261 = vmatpush1.msra.mxu0 0.0
    %3262 = vmatprep.subr.mxu0 0.0
    %3263 = vmatpush1.msra.mxu0 0.0
    %3264 = vmatprep.subr.mxu0 0.0
    %3265 = vmatpush1.msra.mxu0 0.0
    %3266 = vmatprep.subr.mxu0 0.0
    %3267 = vmatpush1.msra.mxu0 0.0
    %3268 = vmatprep.mubr.f32.mxu0 0.0
    %v3269 = vand.u32 %v2887, 4294901760
    %3270 = vmatmul.mubr.f32.gmra.mrb[0].mxu0 %v3269
    %v3271 = vpop.f32.mrb[0].mxu0
    %v3272 = vadd.f32 %v3195, %v3271
    %v3273 = vpop.f32.mrb[0].mxu0
    %3274 = vdwg.mxu0
    %3275 = vmatprep.subr.mxu0 0.0
    %v3276 = vand.u32 %v2881, 4294901760
    %3277 = vmatpush1.msra.mxu0 %v3276
    %3278 = vmatprep.subr.mxu0 0.0
    %v3279 = vand.u32 %v2883, 4294901760
    %3280 = vmatpush1.msra.mxu0 %v3279
    %3281 = vmatprep.subr.mxu0 0.0
    %3282 = vmatpush1.msra.mxu0 0.0
    %3283 = vmatprep.subr.mxu0 0.0
    %3284 = vmatpush1.msra.mxu0 0.0
    %3285 = vmatprep.subr.mxu0 0.0
    %3286 = vmatpush1.msra.mxu0 0.0
    %3287 = vmatprep.subr.mxu0 0.0
    %3288 = vmatpush1.msra.mxu0 0.0
    %3289 = vmatprep.subr.mxu0 0.0
    %3290 = vmatpush1.msra.mxu0 0.0
    %3291 = vmatprep.subr.mxu0 0.0
    %3292 = vmatpush1.msra.mxu0 0.0
    %3293 = vmatprep.subr.mxu0 0.0
    %3294 = vmatpush1.msra.mxu0 0.0
    %3295 = vmatprep.subr.mxu0 0.0
    %3296 = vmatpush1.msra.mxu0 0.0
    %3297 = vmatprep.subr.mxu0 0.0
    %3298 = vmatpush1.msra.mxu0 0.0
    %3299 = vmatprep.subr.mxu0 0.0
    %3300 = vmatpush1.msra.mxu0 0.0
    %3301 = vmatprep.subr.mxu0 0.0
    %3302 = vmatpush1.msra.mxu0 0.0
    %3303 = vmatprep.subr.mxu0 0.0
    %3304 = vmatpush1.msra.mxu0 0.0
    %3305 = vmatprep.subr.mxu0 0.0
    %3306 = vmatpush1.msra.mxu0 0.0
    %3307 = vmatprep.subr.mxu0 0.0
    %3308 = vmatpush1.msra.mxu0 0.0
    %3309 = vmatprep.subr.mxu0 0.0
    %3310 = vmatpush1.msra.mxu0 0.0
    %3311 = vmatprep.subr.mxu0 0.0
    %3312 = vmatpush1.msra.mxu0 0.0
    %3313 = vmatprep.subr.mxu0 0.0
    %3314 = vmatpush1.msra.mxu0 0.0
    %3315 = vmatprep.subr.mxu0 0.0
    %3316 = vmatpush1.msra.mxu0 0.0
    %3317 = vmatprep.subr.mxu0 0.0
    %3318 = vmatpush1.msra.mxu0 0.0
    %3319 = vmatprep.subr.mxu0 0.0
    %3320 = vmatpush1.msra.mxu0 0.0
    %3321 = vmatprep.subr.mxu0 0.0
    %3322 = vmatpush1.msra.mxu0 0.0
    %3323 = vmatprep.subr.mxu0 0.0
    %3324 = vmatpush1.msra.mxu0 0.0
    %3325 = vmatprep.subr.mxu0 0.0
    %3326 = vmatpush1.msra.mxu0 0.0
    %3327 = vmatprep.subr.mxu0 0.0
    %3328 = vmatpush1.msra.mxu0 0.0
    %3329 = vmatprep.subr.mxu0 0.0
    %3330 = vmatpush1.msra.mxu0 0.0
    %3331 = vmatprep.subr.mxu0 0.0
    %3332 = vmatpush1.msra.mxu0 0.0
    %3333 = vmatprep.subr.mxu0 0.0
    %3334 = vmatpush1.msra.mxu0 0.0
    %3335 = vmatprep.subr.mxu0 0.0
    %3336 = vmatpush1.msra.mxu0 0.0
    %3337 = vmatprep.subr.mxu0 0.0
    %3338 = vmatpush1.msra.mxu0 0.0
    %3339 = vmatprep.subr.mxu0 0.0
    %3340 = vmatpush1.msra.mxu0 0.0
    %3341 = vmatprep.mubr.f32.mxu0 0.0
    %v3342 = vand.u32 %v2887, 4294901760
    %3343 = vmatmul.mubr.f32.gmra.mrb[0].mxu0 %v3342
    %v3344 = vpop.f32.mrb[0].mxu0
    %v3345 = vadd.f32 %v3272, %v3344
    %v3346 = vpop.f32.mrb[0].mxu0
    %3347 = vdwg.mxu0
    %v3349 = vsel %vm151, %v2384, 0
    %v3352 = vsel %vm151, %v3345, 0
    %3354 = vmatprep.subr.mxu0 0.0
    %v3355 = vand.u32 %v143, 4294901760
    %3356 = vmatpush1.msra.mxu0 %v3355
    %3357 = vmatprep.subr.mxu0 0.0
    %v3358 = vand.u32 %v144, 4294901760
    %3359 = vmatpush1.msra.mxu0 %v3358
    %3360 = vmatprep.subr.mxu0 0.0
    %v3361 = vand.u32 %v145, 4294901760
    %3362 = vmatpush1.msra.mxu0 %v3361
    %3363 = vmatprep.subr.mxu0 0.0
    %v3364 = vand.u32 %v146, 4294901760
    %3365 = vmatpush1.msra.mxu0 %v3364
    %3366 = vmatprep.subr.mxu0 0.0
    %3367 = vmatpush1.msra.mxu0 0.0
    %3368 = vmatprep.subr.mxu0 0.0
    %3369 = vmatpush1.msra.mxu0 0.0
    %3370 = vmatprep.subr.mxu0 0.0
    %3371 = vmatpush1.msra.mxu0 0.0
    %3372 = vmatprep.subr.mxu0 0.0
    %3373 = vmatpush1.msra.mxu0 0.0
    %3374 = vmatprep.subr.mxu0 0.0
    %3375 = vmatpush1.msra.mxu0 0.0
    %3376 = vmatprep.subr.mxu0 0.0
    %3377 = vmatpush1.msra.mxu0 0.0
    %3378 = vmatprep.subr.mxu0 0.0
    %3379 = vmatpush1.msra.mxu0 0.0
    %3380 = vmatprep.subr.mxu0 0.0
    %3381 = vmatpush1.msra.mxu0 0.0
    %3382 = vmatprep.subr.mxu0 0.0
    %3383 = vmatpush1.msra.mxu0 0.0
    %3384 = vmatprep.subr.mxu0 0.0
    %3385 = vmatpush1.msra.mxu0 0.0
    %3386 = vmatprep.subr.mxu0 0.0
    %3387 = vmatpush1.msra.mxu0 0.0
    %3388 = vmatprep.subr.mxu0 0.0
    %3389 = vmatpush1.msra.mxu0 0.0
    %3390 = vmatprep.subr.mxu0 0.0
    %3391 = vmatpush1.msra.mxu0 0.0
    %3392 = vmatprep.subr.mxu0 0.0
    %3393 = vmatpush1.msra.mxu0 0.0
    %3394 = vmatprep.subr.mxu0 0.0
    %3395 = vmatpush1.msra.mxu0 0.0
    %3396 = vmatprep.subr.mxu0 0.0
    %3397 = vmatpush1.msra.mxu0 0.0
    %3398 = vmatprep.subr.mxu0 0.0
    %3399 = vmatpush1.msra.mxu0 0.0
    %3400 = vmatprep.subr.mxu0 0.0
    %3401 = vmatpush1.msra.mxu0 0.0
    %3402 = vmatprep.subr.mxu0 0.0
    %3403 = vmatpush1.msra.mxu0 0.0
    %3404 = vmatprep.subr.mxu0 0.0
    %3405 = vmatpush1.msra.mxu0 0.0
    %3406 = vmatprep.subr.mxu0 0.0
    %3407 = vmatpush1.msra.mxu0 0.0
    %3408 = vmatprep.subr.mxu0 0.0
    %3409 = vmatpush1.msra.mxu0 0.0
    %3410 = vmatprep.subr.mxu0 0.0
    %3411 = vmatpush1.msra.mxu0 0.0
    %3412 = vmatprep.subr.mxu0 0.0
    %3413 = vmatpush1.msra.mxu0 0.0
    %3414 = vmatprep.subr.mxu0 0.0
    %3415 = vmatpush1.msra.mxu0 0.0
    %3416 = vmatprep.subr.mxu0 0.0
    %3417 = vmatpush1.msra.mxu0 0.0
    %3418 = vmatprep.subr.mxu0 0.0
    %3419 = vmatpush1.msra.mxu0 0.0
    %3420 = vmatprep.subr.mxu0 0.0
    %3421 = vmatpush1.msra.mxu0 0.0
    %3422 = vmatprep.mubr.f32.mxu0 0.0
    %v3423 = vand.u32 %v3349, 4294901760
    %v3424 = vsub.f32 %v3349, %v3423
    %v3425 = vand.u32 %v3424, 4294901760
    %v3426 = vsub.f32 %v3424, %v3425
    %v3427 = vand.u32 %v3426, 4294901760
    %3428 = vmatmul.mubr.f32.gmra.mrb[0].mxu0 %v3427
    %v3429 = vpop.f32.mrb[0].mxu0
    %v3430 = vadd.f32 0.0, %v3429
    %v3431 = vpop.f32.mrb[0].mxu0
    %3432 = vmatprep.mubr.f32.mxu0 0.0
    %v3433 = vand.u32 %v3352, 4294901760
    %v3434 = vsub.f32 %v3352, %v3433
    %v3435 = vand.u32 %v3434, 4294901760
    %v3436 = vsub.f32 %v3434, %v3435
    %v3437 = vand.u32 %v3436, 4294901760
    %3438 = vmatmul.mubr.f32.gmra.mrb[0].mxu0 %v3437
    %v3439 = vpop.f32.mrb[0].mxu0
    %v3440 = vadd.f32 0.0, %v3439
    %v3441 = vpop.f32.mrb[0].mxu0
    %3442 = vdwg.mxu0
    %3443 = vmatprep.subr.mxu0 0.0
    %v3444 = vand.u32 %v143, 4294901760
    %v3445 = vsub.f32 %v143, %v3444
    %v3446 = vand.u32 %v3445, 4294901760
    %v3447 = vsub.f32 %v3445, %v3446
    %v3448 = vand.u32 %v3447, 4294901760
    %3449 = vmatpush1.msra.mxu0 %v3448
    %3450 = vmatprep.subr.mxu0 0.0
    %v3451 = vand.u32 %v144, 4294901760
    %v3452 = vsub.f32 %v144, %v3451
    %v3453 = vand.u32 %v3452, 4294901760
    %v3454 = vsub.f32 %v3452, %v3453
    %v3455 = vand.u32 %v3454, 4294901760
    %3456 = vmatpush1.msra.mxu0 %v3455
    %3457 = vmatprep.subr.mxu0 0.0
    %v3458 = vand.u32 %v145, 4294901760
    %v3459 = vsub.f32 %v145, %v3458
    %v3460 = vand.u32 %v3459, 4294901760
    %v3461 = vsub.f32 %v3459, %v3460
    %v3462 = vand.u32 %v3461, 4294901760
    %3463 = vmatpush1.msra.mxu0 %v3462
    %3464 = vmatprep.subr.mxu0 0.0
    %v3465 = vand.u32 %v146, 4294901760
    %v3466 = vsub.f32 %v146, %v3465
    %v3467 = vand.u32 %v3466, 4294901760
    %v3468 = vsub.f32 %v3466, %v3467
    %v3469 = vand.u32 %v3468, 4294901760
    %3470 = vmatpush1.msra.mxu0 %v3469
    %3471 = vmatprep.subr.mxu0 0.0
    %3472 = vmatpush1.msra.mxu0 0.0
    %3473 = vmatprep.subr.mxu0 0.0
    %3474 = vmatpush1.msra.mxu0 0.0
    %3475 = vmatprep.subr.mxu0 0.0
    %3476 = vmatpush1.msra.mxu0 0.0
    %3477 = vmatprep.subr.mxu0 0.0
    %3478 = vmatpush1.msra.mxu0 0.0
    %3479 = vmatprep.subr.mxu0 0.0
    %3480 = vmatpush1.msra.mxu0 0.0
    %3481 = vmatprep.subr.mxu0 0.0
    %3482 = vmatpush1.msra.mxu0 0.0
    %3483 = vmatprep.subr.mxu0 0.0
    %3484 = vmatpush1.msra.mxu0 0.0
    %3485 = vmatprep.subr.mxu0 0.0
    %3486 = vmatpush1.msra.mxu0 0.0
    %3487 = vmatprep.subr.mxu0 0.0
    %3488 = vmatpush1.msra.mxu0 0.0
    %3489 = vmatprep.subr.mxu0 0.0
    %3490 = vmatpush1.msra.mxu0 0.0
    %3491 = vmatprep.subr.mxu0 0.0
    %3492 = vmatpush1.msra.mxu0 0.0
    %3493 = vmatprep.subr.mxu0 0.0
    %3494 = vmatpush1.msra.mxu0 0.0
    %3495 = vmatprep.subr.mxu0 0.0
    %3496 = vmatpush1.msra.mxu0 0.0
    %3497 = vmatprep.subr.mxu0 0.0
    %3498 = vmatpush1.msra.mxu0 0.0
    %3499 = vmatprep.subr.mxu0 0.0
    %3500 = vmatpush1.msra.mxu0 0.0
    %3501 = vmatprep.subr.mxu0 0.0
    %3502 = vmatpush1.msra.mxu0 0.0
    %3503 = vmatprep.subr.mxu0 0.0
    %3504 = vmatpush1.msra.mxu0 0.0
    %3505 = vmatprep.subr.mxu0 0.0
    %3506 = vmatpush1.msra.mxu0 0.0
    %3507 = vmatprep.subr.mxu0 0.0
    %3508 = vmatpush1.msra.mxu0 0.0
    %3509 = vmatprep.subr.mxu0 0.0
    %3510 = vmatpush1.msra.mxu0 0.0
    %3511 = vmatprep.subr.mxu0 0.0
    %3512 = vmatpush1.msra.mxu0 0.0
    %3513 = vmatprep.subr.mxu0 0.0
    %3514 = vmatpush1.msra.mxu0 0.0
    %3515 = vmatprep.subr.mxu0 0.0
    %3516 = vmatpush1.msra.mxu0 0.0
    %3517 = vmatprep.subr.mxu0 0.0
    %3518 = vmatpush1.msra.mxu0 0.0
    %3519 = vmatprep.subr.mxu0 0.0
    %3520 = vmatpush1.msra.mxu0 0.0
    %3521 = vmatprep.subr.mxu0 0.0
    %3522 = vmatpush1.msra.mxu0 0.0
    %3523 = vmatprep.subr.mxu0 0.0
    %3524 = vmatpush1.msra.mxu0 0.0
    %3525 = vmatprep.subr.mxu0 0.0
    %3526 = vmatpush1.msra.mxu0 0.0
    %3527 = vmatprep.mubr.f32.mxu0 0.0
    %v3528 = vand.u32 %v3349, 4294901760
    %3529 = vmatmul.mubr.f32.gmra.mrb[0].mxu0 %v3528
    %v3530 = vpop.f32.mrb[0].mxu0
    %v3531 = vadd.f32 %v3430, %v3530
    %v3532 = vpop.f32.mrb[0].mxu0
    %3533 = vmatprep.mubr.f32.mxu0 0.0
    %v3534 = vand.u32 %v3352, 4294901760
    %3535 = vmatmul.mubr.f32.gmra.mrb[0].mxu0 %v3534
    %v3536 = vpop.f32.mrb[0].mxu0
    %v3537 = vadd.f32 %v3440, %v3536
    %v3538 = vpop.f32.mrb[0].mxu0
    %3539 = vdwg.mxu0
    %3540 = vmatprep.subr.mxu0 0.0
    %v3541 = vand.u32 %v143, 4294901760
    %v3542 = vsub.f32 %v143, %v3541
    %3543 = vmatpush1.msra.mxu0 %v3542
    %3544 = vmatprep.subr.mxu0 0.0
    %v3545 = vand.u32 %v144, 4294901760
    %v3546 = vsub.f32 %v144, %v3545
    %3547 = vmatpush1.msra.mxu0 %v3546
    %3548 = vmatprep.subr.mxu0 0.0
    %v3549 = vand.u32 %v145, 4294901760
    %v3550 = vsub.f32 %v145, %v3549
    %3551 = vmatpush1.msra.mxu0 %v3550
    %3552 = vmatprep.subr.mxu0 0.0
    %v3553 = vand.u32 %v146, 4294901760
    %v3554 = vsub.f32 %v146, %v3553
    %3555 = vmatpush1.msra.mxu0 %v3554
    %3556 = vmatprep.subr.mxu0 0.0
    %3557 = vmatpush1.msra.mxu0 0.0
    %3558 = vmatprep.subr.mxu0 0.0
    %3559 = vmatpush1.msra.mxu0 0.0
    %3560 = vmatprep.subr.mxu0 0.0
    %3561 = vmatpush1.msra.mxu0 0.0
    %3562 = vmatprep.subr.mxu0 0.0
    %3563 = vmatpush1.msra.mxu0 0.0
    %3564 = vmatprep.subr.mxu0 0.0
    %3565 = vmatpush1.msra.mxu0 0.0
    %3566 = vmatprep.subr.mxu0 0.0
    %3567 = vmatpush1.msra.mxu0 0.0
    %3568 = vmatprep.subr.mxu0 0.0
    %3569 = vmatpush1.msra.mxu0 0.0
    %3570 = vmatprep.subr.mxu0 0.0
    %3571 = vmatpush1.msra.mxu0 0.0
    %3572 = vmatprep.subr.mxu0 0.0
    %3573 = vmatpush1.msra.mxu0 0.0
    %3574 = vmatprep.subr.mxu0 0.0
    %3575 = vmatpush1.msra.mxu0 0.0
    %3576 = vmatprep.subr.mxu0 0.0
    %3577 = vmatpush1.msra.mxu0 0.0
    %3578 = vmatprep.subr.mxu0 0.0
    %3579 = vmatpush1.msra.mxu0 0.0
    %3580 = vmatprep.subr.mxu0 0.0
    %3581 = vmatpush1.msra.mxu0 0.0
    %3582 = vmatprep.subr.mxu0 0.0
    %3583 = vmatpush1.msra.mxu0 0.0
    %3584 = vmatprep.subr.mxu0 0.0
    %3585 = vmatpush1.msra.mxu0 0.0
    %3586 = vmatprep.subr.mxu0 0.0
    %3587 = vmatpush1.msra.mxu0 0.0
    %3588 = vmatprep.subr.mxu0 0.0
    %3589 = vmatpush1.msra.mxu0 0.0
    %3590 = vmatprep.subr.mxu0 0.0
    %3591 = vmatpush1.msra.mxu0 0.0
    %3592 = vmatprep.subr.mxu0 0.0
    %3593 = vmatpush1.msra.mxu0 0.0
    %3594 = vmatprep.subr.mxu0 0.0
    %3595 = vmatpush1.msra.mxu0 0.0
    %3596 = vmatprep.subr.mxu0 0.0
    %3597 = vmatpush1.msra.mxu0 0.0
    %3598 = vmatprep.subr.mxu0 0.0
    %3599 = vmatpush1.msra.mxu0 0.0
    %3600 = vmatprep.subr.mxu0 0.0
    %3601 = vmatpush1.msra.mxu0 0.0
    %3602 = vmatprep.subr.mxu0 0.0
    %3603 = vmatpush1.msra.mxu0 0.0
    %3604 = vmatprep.subr.mxu0 0.0
    %3605 = vmatpush1.msra.mxu0 0.0
    %3606 = vmatprep.subr.mxu0 0.0
    %3607 = vmatpush1.msra.mxu0 0.0
    %3608 = vmatprep.subr.mxu0 0.0
    %3609 = vmatpush1.msra.mxu0 0.0
    %3610 = vmatprep.subr.mxu0 0.0
    %3611 = vmatpush1.msra.mxu0 0.0
    %3612 = vmatprep.mubr.f32.mxu0 0.0
    %v3613 = vand.u32 %v3349, 4294901760
    %v3614 = vsub.f32 %v3349, %v3613
    %3615 = vmatmul.mubr.f32.gmra.mrb[0].mxu0 %v3614
    %v3616 = vpop.f32.mrb[0].mxu0
    %v3617 = vadd.f32 %v3531, %v3616
    %v3618 = vpop.f32.mrb[0].mxu0
    %3619 = vmatprep.mubr.f32.mxu0 0.0
    %v3620 = vand.u32 %v3352, 4294901760
    %v3621 = vsub.f32 %v3352, %v3620
    %3622 = vmatmul.mubr.f32.gmra.mrb[0].mxu0 %v3621
    %v3623 = vpop.f32.mrb[0].mxu0
    %v3624 = vadd.f32 %v3537, %v3623
    %v3625 = vpop.f32.mrb[0].mxu0
    %3626 = vdwg.mxu0
    %3627 = vmatprep.subr.mxu0 0.0
    %v3628 = vand.u32 %v143, 4294901760
    %3629 = vmatpush1.msra.mxu0 %v3628
    %3630 = vmatprep.subr.mxu0 0.0
    %v3631 = vand.u32 %v144, 4294901760
    %3632 = vmatpush1.msra.mxu0 %v3631
    %3633 = vmatprep.subr.mxu0 0.0
    %v3634 = vand.u32 %v145, 4294901760
    %3635 = vmatpush1.msra.mxu0 %v3634
    %3636 = vmatprep.subr.mxu0 0.0
    %v3637 = vand.u32 %v146, 4294901760
    %3638 = vmatpush1.msra.mxu0 %v3637
    %3639 = vmatprep.subr.mxu0 0.0
    %3640 = vmatpush1.msra.mxu0 0.0
    %3641 = vmatprep.subr.mxu0 0.0
    %3642 = vmatpush1.msra.mxu0 0.0
    %3643 = vmatprep.subr.mxu0 0.0
    %3644 = vmatpush1.msra.mxu0 0.0
    %3645 = vmatprep.subr.mxu0 0.0
    %3646 = vmatpush1.msra.mxu0 0.0
    %3647 = vmatprep.subr.mxu0 0.0
    %3648 = vmatpush1.msra.mxu0 0.0
    %3649 = vmatprep.subr.mxu0 0.0
    %3650 = vmatpush1.msra.mxu0 0.0
    %3651 = vmatprep.subr.mxu0 0.0
    %3652 = vmatpush1.msra.mxu0 0.0
    %3653 = vmatprep.subr.mxu0 0.0
    %3654 = vmatpush1.msra.mxu0 0.0
    %3655 = vmatprep.subr.mxu0 0.0
    %3656 = vmatpush1.msra.mxu0 0.0
    %3657 = vmatprep.subr.mxu0 0.0
    %3658 = vmatpush1.msra.mxu0 0.0
    %3659 = vmatprep.subr.mxu0 0.0
    %3660 = vmatpush1.msra.mxu0 0.0
    %3661 = vmatprep.subr.mxu0 0.0
    %3662 = vmatpush1.msra.mxu0 0.0
    %3663 = vmatprep.subr.mxu0 0.0
    %3664 = vmatpush1.msra.mxu0 0.0
    %3665 = vmatprep.subr.mxu0 0.0
    %3666 = vmatpush1.msra.mxu0 0.0
    %3667 = vmatprep.subr.mxu0 0.0
    %3668 = vmatpush1.msra.mxu0 0.0
    %3669 = vmatprep.subr.mxu0 0.0
    %3670 = vmatpush1.msra.mxu0 0.0
    %3671 = vmatprep.subr.mxu0 0.0
    %3672 = vmatpush1.msra.mxu0 0.0
    %3673 = vmatprep.subr.mxu0 0.0
    %3674 = vmatpush1.msra.mxu0 0.0
    %3675 = vmatprep.subr.mxu0 0.0
    %3676 = vmatpush1.msra.mxu0 0.0
    %3677 = vmatprep.subr.mxu0 0.0
    %3678 = vmatpush1.msra.mxu0 0.0
    %3679 = vmatprep.subr.mxu0 0.0
    %3680 = vmatpush1.msra.mxu0 0.0
    %3681 = vmatprep.subr.mxu0 0.0
    %3682 = vmatpush1.msra.mxu0 0.0
    %3683 = vmatprep.subr.mxu0 0.0
    %3684 = vmatpush1.msra.mxu0 0.0
    %3685 = vmatprep.subr.mxu0 0.0
    %3686 = vmatpush1.msra.mxu0 0.0
    %3687 = vmatprep.subr.mxu0 0.0
    %3688 = vmatpush1.msra.mxu0 0.0
    %3689 = vmatprep.subr.mxu0 0.0
    %3690 = vmatpush1.msra.mxu0 0.0
    %3691 = vmatprep.subr.mxu0 0.0
    %3692 = vmatpush1.msra.mxu0 0.0
    %3693 = vmatprep.subr.mxu0 0.0
    %3694 = vmatpush1.msra.mxu0 0.0
    %3695 = vmatprep.mubr.f32.mxu0 0.0
    %v3696 = vand.u32 %v3349, 4294901760
    %v3697 = vsub.f32 %v3349, %v3696
    %v3698 = vand.u32 %v3697, 4294901760
    %3699 = vmatmul.mubr.f32.gmra.mrb[0].mxu0 %v3698
    %v3700 = vpop.f32.mrb[0].mxu0
    %v3701 = vadd.f32 %v3617, %v3700
    %v3702 = vpop.f32.mrb[0].mxu0
    %3703 = vmatprep.mubr.f32.mxu0 0.0
    %v3704 = vand.u32 %v3352, 4294901760
    %v3705 = vsub.f32 %v3352, %v3704
    %v3706 = vand.u32 %v3705, 4294901760
    %3707 = vmatmul.mubr.f32.gmra.mrb[0].mxu0 %v3706
    %v3708 = vpop.f32.mrb[0].mxu0
    %v3709 = vadd.f32 %v3624, %v3708
    %v3710 = vpop.f32.mrb[0].mxu0
    %3711 = vdwg.mxu0
    %3712 = vmatprep.subr.mxu0 0.0
    %v3713 = vand.u32 %v143, 4294901760
    %v3714 = vsub.f32 %v143, %v3713
    %v3715 = vand.u32 %v3714, 4294901760
    %3716 = vmatpush1.msra.mxu0 %v3715
    %3717 = vmatprep.subr.mxu0 0.0
    %v3718 = vand.u32 %v144, 4294901760
    %v3719 = vsub.f32 %v144, %v3718
    %v3720 = vand.u32 %v3719, 4294901760
    %3721 = vmatpush1.msra.mxu0 %v3720
    %3722 = vmatprep.subr.mxu0 0.0
    %v3723 = vand.u32 %v145, 4294901760
    %v3724 = vsub.f32 %v145, %v3723
    %v3725 = vand.u32 %v3724, 4294901760
    %3726 = vmatpush1.msra.mxu0 %v3725
    %3727 = vmatprep.subr.mxu0 0.0
    %v3728 = vand.u32 %v146, 4294901760
    %v3729 = vsub.f32 %v146, %v3728
    %v3730 = vand.u32 %v3729, 4294901760
    %3731 = vmatpush1.msra.mxu0 %v3730
    %3732 = vmatprep.subr.mxu0 0.0
    %3733 = vmatpush1.msra.mxu0 0.0
    %3734 = vmatprep.subr.mxu0 0.0
    %3735 = vmatpush1.msra.mxu0 0.0
    %3736 = vmatprep.subr.mxu0 0.0
    %3737 = vmatpush1.msra.mxu0 0.0
    %3738 = vmatprep.subr.mxu0 0.0
    %3739 = vmatpush1.msra.mxu0 0.0
    %3740 = vmatprep.subr.mxu0 0.0
    %3741 = vmatpush1.msra.mxu0 0.0
    %3742 = vmatprep.subr.mxu0 0.0
    %3743 = vmatpush1.msra.mxu0 0.0
    %3744 = vmatprep.subr.mxu0 0.0
    %3745 = vmatpush1.msra.mxu0 0.0
    %3746 = vmatprep.subr.mxu0 0.0
    %3747 = vmatpush1.msra.mxu0 0.0
    %3748 = vmatprep.subr.mxu0 0.0
    %3749 = vmatpush1.msra.mxu0 0.0
    %3750 = vmatprep.subr.mxu0 0.0
    %3751 = vmatpush1.msra.mxu0 0.0
    %3752 = vmatprep.subr.mxu0 0.0
    %3753 = vmatpush1.msra.mxu0 0.0
    %3754 = vmatprep.subr.mxu0 0.0
    %3755 = vmatpush1.msra.mxu0 0.0
    %3756 = vmatprep.subr.mxu0 0.0
    %3757 = vmatpush1.msra.mxu0 0.0
    %3758 = vmatprep.subr.mxu0 0.0
    %3759 = vmatpush1.msra.mxu0 0.0
    %3760 = vmatprep.subr.mxu0 0.0
    %3761 = vmatpush1.msra.mxu0 0.0
    %3762 = vmatprep.subr.mxu0 0.0
    %3763 = vmatpush1.msra.mxu0 0.0
    %3764 = vmatprep.subr.mxu0 0.0
    %3765 = vmatpush1.msra.mxu0 0.0
    %3766 = vmatprep.subr.mxu0 0.0
    %3767 = vmatpush1.msra.mxu0 0.0
    %3768 = vmatprep.subr.mxu0 0.0
    %3769 = vmatpush1.msra.mxu0 0.0
    %3770 = vmatprep.subr.mxu0 0.0
    %3771 = vmatpush1.msra.mxu0 0.0
    %3772 = vmatprep.subr.mxu0 0.0
    %3773 = vmatpush1.msra.mxu0 0.0
    %3774 = vmatprep.subr.mxu0 0.0
    %3775 = vmatpush1.msra.mxu0 0.0
    %3776 = vmatprep.subr.mxu0 0.0
    %3777 = vmatpush1.msra.mxu0 0.0
    %3778 = vmatprep.subr.mxu0 0.0
    %3779 = vmatpush1.msra.mxu0 0.0
    %3780 = vmatprep.subr.mxu0 0.0
    %3781 = vmatpush1.msra.mxu0 0.0
    %3782 = vmatprep.subr.mxu0 0.0
    %3783 = vmatpush1.msra.mxu0 0.0
    %3784 = vmatprep.subr.mxu0 0.0
    %3785 = vmatpush1.msra.mxu0 0.0
    %3786 = vmatprep.subr.mxu0 0.0
    %3787 = vmatpush1.msra.mxu0 0.0
    %3788 = vmatprep.mubr.f32.mxu0 0.0
    %v3789 = vand.u32 %v3349, 4294901760
    %3790 = vmatmul.mubr.f32.gmra.mrb[0].mxu0 %v3789
    %v3791 = vpop.f32.mrb[0].mxu0
    %v3792 = vadd.f32 %v3701, %v3791
    %v3793 = vpop.f32.mrb[0].mxu0
    %3794 = vmatprep.mubr.f32.mxu0 0.0
    %v3795 = vand.u32 %v3352, 4294901760
    %3796 = vmatmul.mubr.f32.gmra.mrb[0].mxu0 %v3795
    %v3797 = vpop.f32.mrb[0].mxu0
    %v3798 = vadd.f32 %v3709, %v3797
    %v3799 = vpop.f32.mrb[0].mxu0
    %3800 = vdwg.mxu0
    %3801 = vmatprep.subr.mxu0 0.0
    %v3802 = vand.u32 %v143, 4294901760
    %3803 = vmatpush1.msra.mxu0 %v3802
    %3804 = vmatprep.subr.mxu0 0.0
    %v3805 = vand.u32 %v144, 4294901760
    %3806 = vmatpush1.msra.mxu0 %v3805
    %3807 = vmatprep.subr.mxu0 0.0
    %v3808 = vand.u32 %v145, 4294901760
    %3809 = vmatpush1.msra.mxu0 %v3808
    %3810 = vmatprep.subr.mxu0 0.0
    %v3811 = vand.u32 %v146, 4294901760
    %3812 = vmatpush1.msra.mxu0 %v3811
    %3813 = vmatprep.subr.mxu0 0.0
    %3814 = vmatpush1.msra.mxu0 0.0
    %3815 = vmatprep.subr.mxu0 0.0
    %3816 = vmatpush1.msra.mxu0 0.0
    %3817 = vmatprep.subr.mxu0 0.0
    %3818 = vmatpush1.msra.mxu0 0.0
    %3819 = vmatprep.subr.mxu0 0.0
    %3820 = vmatpush1.msra.mxu0 0.0
    %3821 = vmatprep.subr.mxu0 0.0
    %3822 = vmatpush1.msra.mxu0 0.0
    %3823 = vmatprep.subr.mxu0 0.0
    %3824 = vmatpush1.msra.mxu0 0.0
    %3825 = vmatprep.subr.mxu0 0.0
    %3826 = vmatpush1.msra.mxu0 0.0
    %3827 = vmatprep.subr.mxu0 0.0
    %3828 = vmatpush1.msra.mxu0 0.0
    %3829 = vmatprep.subr.mxu0 0.0
    %3830 = vmatpush1.msra.mxu0 0.0
    %3831 = vmatprep.subr.mxu0 0.0
    %3832 = vmatpush1.msra.mxu0 0.0
    %3833 = vmatprep.subr.mxu0 0.0
    %3834 = vmatpush1.msra.mxu0 0.0
    %3835 = vmatprep.subr.mxu0 0.0
    %3836 = vmatpush1.msra.mxu0 0.0
    %3837 = vmatprep.subr.mxu0 0.0
    %3838 = vmatpush1.msra.mxu0 0.0
    %3839 = vmatprep.subr.mxu0 0.0
    %3840 = vmatpush1.msra.mxu0 0.0
    %3841 = vmatprep.subr.mxu0 0.0
    %3842 = vmatpush1.msra.mxu0 0.0
    %3843 = vmatprep.subr.mxu0 0.0
    %3844 = vmatpush1.msra.mxu0 0.0
    %3845 = vmatprep.subr.mxu0 0.0
    %3846 = vmatpush1.msra.mxu0 0.0
    %3847 = vmatprep.subr.mxu0 0.0
    %3848 = vmatpush1.msra.mxu0 0.0
    %3849 = vmatprep.subr.mxu0 0.0
    %3850 = vmatpush1.msra.mxu0 0.0
    %3851 = vmatprep.subr.mxu0 0.0
    %3852 = vmatpush1.msra.mxu0 0.0
    %3853 = vmatprep.subr.mxu0 0.0
    %3854 = vmatpush1.msra.mxu0 0.0
    %3855 = vmatprep.subr.mxu0 0.0
    %3856 = vmatpush1.msra.mxu0 0.0
    %3857 = vmatprep.subr.mxu0 0.0
    %3858 = vmatpush1.msra.mxu0 0.0
    %3859 = vmatprep.subr.mxu0 0.0
    %3860 = vmatpush1.msra.mxu0 0.0
    %3861 = vmatprep.subr.mxu0 0.0
    %3862 = vmatpush1.msra.mxu0 0.0
    %3863 = vmatprep.subr.mxu0 0.0
    %3864 = vmatpush1.msra.mxu0 0.0
    %3865 = vmatprep.subr.mxu0 0.0
    %3866 = vmatpush1.msra.mxu0 0.0
    %3867 = vmatprep.subr.mxu0 0.0
    %3868 = vmatpush1.msra.mxu0 0.0
    %3869 = vmatprep.mubr.f32.mxu0 0.0
    %v3870 = vand.u32 %v3349, 4294901760
    %3871 = vmatmul.mubr.f32.gmra.mrb[0].mxu0 %v3870
    %v3872 = vpop.f32.mrb[0].mxu0
    %v3873 = vadd.f32 %v3792, %v3872
    %v3874 = vpop.f32.mrb[0].mxu0
    %3875 = vmatprep.mubr.f32.mxu0 0.0
    %v3876 = vand.u32 %v3352, 4294901760
    %3877 = vmatmul.mubr.f32.gmra.mrb[0].mxu0 %v3876
    %v3878 = vpop.f32.mrb[0].mxu0
    %v3879 = vadd.f32 %v3798, %v3878
    %v3880 = vpop.f32.mrb[0].mxu0
    %3881 = vdwg.mxu0
    %v3883 = vsel %vm151, %v128, 0
    %v3886 = vsel %vm151, %v130, 0
    %3888 = vmatprep.subr.mxu0 0.0
    %v3889 = vand.u32 %v147, 4294901760
    %3890 = vmatpush1.msra.mxu0 %v3889
    %3891 = vmatprep.subr.mxu0 0.0
    %v3892 = vand.u32 %v148, 4294901760
    %3893 = vmatpush1.msra.mxu0 %v3892
    %3894 = vmatprep.subr.mxu0 0.0
    %v3895 = vand.u32 %v149, 4294901760
    %3896 = vmatpush1.msra.mxu0 %v3895
    %3897 = vmatprep.subr.mxu0 0.0
    %v3898 = vand.u32 %v150, 4294901760
    %3899 = vmatpush1.msra.mxu0 %v3898
    %3900 = vmatprep.subr.mxu0 0.0
    %3901 = vmatpush1.msra.mxu0 0.0
    %3902 = vmatprep.subr.mxu0 0.0
    %3903 = vmatpush1.msra.mxu0 0.0
    %3904 = vmatprep.subr.mxu0 0.0
    %3905 = vmatpush1.msra.mxu0 0.0
    %3906 = vmatprep.subr.mxu0 0.0
    %3907 = vmatpush1.msra.mxu0 0.0
    %3908 = vmatprep.subr.mxu0 0.0
    %3909 = vmatpush1.msra.mxu0 0.0
    %3910 = vmatprep.subr.mxu0 0.0
    %3911 = vmatpush1.msra.mxu0 0.0
    %3912 = vmatprep.subr.mxu0 0.0
    %3913 = vmatpush1.msra.mxu0 0.0
    %3914 = vmatprep.subr.mxu0 0.0
    %3915 = vmatpush1.msra.mxu0 0.0
    %3916 = vmatprep.subr.mxu0 0.0
    %3917 = vmatpush1.msra.mxu0 0.0
    %3918 = vmatprep.subr.mxu0 0.0
    %3919 = vmatpush1.msra.mxu0 0.0
    %3920 = vmatprep.subr.mxu0 0.0
    %3921 = vmatpush1.msra.mxu0 0.0
    %3922 = vmatprep.subr.mxu0 0.0
    %3923 = vmatpush1.msra.mxu0 0.0
    %3924 = vmatprep.subr.mxu0 0.0
    %3925 = vmatpush1.msra.mxu0 0.0
    %3926 = vmatprep.subr.mxu0 0.0
    %3927 = vmatpush1.msra.mxu0 0.0
    %3928 = vmatprep.subr.mxu0 0.0
    %3929 = vmatpush1.msra.mxu0 0.0
    %3930 = vmatprep.subr.mxu0 0.0
    %3931 = vmatpush1.msra.mxu0 0.0
    %3932 = vmatprep.subr.mxu0 0.0
    %3933 = vmatpush1.msra.mxu0 0.0
    %3934 = vmatprep.subr.mxu0 0.0
    %3935 = vmatpush1.msra.mxu0 0.0
    %3936 = vmatprep.subr.mxu0 0.0
    %3937 = vmatpush1.msra.mxu0 0.0
    %3938 = vmatprep.subr.mxu0 0.0
    %3939 = vmatpush1.msra.mxu0 0.0
    %3940 = vmatprep.subr.mxu0 0.0
    %3941 = vmatpush1.msra.mxu0 0.0
    %3942 = vmatprep.subr.mxu0 0.0
    %3943 = vmatpush1.msra.mxu0 0.0
    %3944 = vmatprep.subr.mxu0 0.0
    %3945 = vmatpush1.msra.mxu0 0.0
    %3946 = vmatprep.subr.mxu0 0.0
    %3947 = vmatpush1.msra.mxu0 0.0
    %3948 = vmatprep.subr.mxu0 0.0
    %3949 = vmatpush1.msra.mxu0 0.0
    %3950 = vmatprep.subr.mxu0 0.0
    %3951 = vmatpush1.msra.mxu0 0.0
    %3952 = vmatprep.subr.mxu0 0.0
    %3953 = vmatpush1.msra.mxu0 0.0
    %3954 = vmatprep.subr.mxu0 0.0
    %3955 = vmatpush1.msra.mxu0 0.0
    %3956 = vmatprep.mubr.f32.mxu0 0.0
    %v3957 = vand.u32 %v3883, 4294901760
    %v3958 = vsub.f32 %v3883, %v3957
    %v3959 = vand.u32 %v3958, 4294901760
    %v3960 = vsub.f32 %v3958, %v3959
    %v3961 = vand.u32 %v3960, 4294901760
    %3962 = vmatmul.mubr.f32.gmra.mrb[0].mxu0 %v3961
    %v3963 = vpop.f32.mrb[0].mxu0
    %v3964 = vadd.f32 0.0, %v3963
    %v3965 = vpop.f32.mrb[0].mxu0
    %3966 = vmatprep.mubr.f32.mxu0 0.0
    %v3967 = vand.u32 %v3886, 4294901760
    %v3968 = vsub.f32 %v3886, %v3967
    %v3969 = vand.u32 %v3968, 4294901760
    %v3970 = vsub.f32 %v3968, %v3969
    %v3971 = vand.u32 %v3970, 4294901760
    %3972 = vmatmul.mubr.f32.gmra.mrb[0].mxu0 %v3971
    %v3973 = vpop.f32.mrb[0].mxu0
    %v3974 = vadd.f32 0.0, %v3973
    %v3975 = vpop.f32.mrb[0].mxu0
    %3976 = vdwg.mxu0
    %3977 = vmatprep.subr.mxu0 0.0
    %v3978 = vand.u32 %v147, 4294901760
    %v3979 = vsub.f32 %v147, %v3978
    %v3980 = vand.u32 %v3979, 4294901760
    %v3981 = vsub.f32 %v3979, %v3980
    %v3982 = vand.u32 %v3981, 4294901760
    %3983 = vmatpush1.msra.mxu0 %v3982
    %3984 = vmatprep.subr.mxu0 0.0
    %v3985 = vand.u32 %v148, 4294901760
    %v3986 = vsub.f32 %v148, %v3985
    %v3987 = vand.u32 %v3986, 4294901760
    %v3988 = vsub.f32 %v3986, %v3987
    %v3989 = vand.u32 %v3988, 4294901760
    %3990 = vmatpush1.msra.mxu0 %v3989
    %3991 = vmatprep.subr.mxu0 0.0
    %v3992 = vand.u32 %v149, 4294901760
    %v3993 = vsub.f32 %v149, %v3992
    %v3994 = vand.u32 %v3993, 4294901760
    %v3995 = vsub.f32 %v3993, %v3994
    %v3996 = vand.u32 %v3995, 4294901760
    %3997 = vmatpush1.msra.mxu0 %v3996
    %3998 = vmatprep.subr.mxu0 0.0
    %v3999 = vand.u32 %v150, 4294901760
    %v4000 = vsub.f32 %v150, %v3999
    %v4001 = vand.u32 %v4000, 4294901760
    %v4002 = vsub.f32 %v4000, %v4001
    %v4003 = vand.u32 %v4002, 4294901760
    %4004 = vmatpush1.msra.mxu0 %v4003
    %4005 = vmatprep.subr.mxu0 0.0
    %4006 = vmatpush1.msra.mxu0 0.0
    %4007 = vmatprep.subr.mxu0 0.0
    %4008 = vmatpush1.msra.mxu0 0.0
    %4009 = vmatprep.subr.mxu0 0.0
    %4010 = vmatpush1.msra.mxu0 0.0
    %4011 = vmatprep.subr.mxu0 0.0
    %4012 = vmatpush1.msra.mxu0 0.0
    %4013 = vmatprep.subr.mxu0 0.0
    %4014 = vmatpush1.msra.mxu0 0.0
    %4015 = vmatprep.subr.mxu0 0.0
    %4016 = vmatpush1.msra.mxu0 0.0
    %4017 = vmatprep.subr.mxu0 0.0
    %4018 = vmatpush1.msra.mxu0 0.0
    %4019 = vmatprep.subr.mxu0 0.0
    %4020 = vmatpush1.msra.mxu0 0.0
    %4021 = vmatprep.subr.mxu0 0.0
    %4022 = vmatpush1.msra.mxu0 0.0
    %4023 = vmatprep.subr.mxu0 0.0
    %4024 = vmatpush1.msra.mxu0 0.0
    %4025 = vmatprep.subr.mxu0 0.0
    %4026 = vmatpush1.msra.mxu0 0.0
    %4027 = vmatprep.subr.mxu0 0.0
    %4028 = vmatpush1.msra.mxu0 0.0
    %4029 = vmatprep.subr.mxu0 0.0
    %4030 = vmatpush1.msra.mxu0 0.0
    %4031 = vmatprep.subr.mxu0 0.0
    %4032 = vmatpush1.msra.mxu0 0.0
    %4033 = vmatprep.subr.mxu0 0.0
    %4034 = vmatpush1.msra.mxu0 0.0
    %4035 = vmatprep.subr.mxu0 0.0
    %4036 = vmatpush1.msra.mxu0 0.0
    %4037 = vmatprep.subr.mxu0 0.0
    %4038 = vmatpush1.msra.mxu0 0.0
    %4039 = vmatprep.subr.mxu0 0.0
    %4040 = vmatpush1.msra.mxu0 0.0
    %4041 = vmatprep.subr.mxu0 0.0
    %4042 = vmatpush1.msra.mxu0 0.0
    %4043 = vmatprep.subr.mxu0 0.0
    %4044 = vmatpush1.msra.mxu0 0.0
    %4045 = vmatprep.subr.mxu0 0.0
    %4046 = vmatpush1.msra.mxu0 0.0
    %4047 = vmatprep.subr.mxu0 0.0
    %4048 = vmatpush1.msra.mxu0 0.0
    %4049 = vmatprep.subr.mxu0 0.0
    %4050 = vmatpush1.msra.mxu0 0.0
    %4051 = vmatprep.subr.mxu0 0.0
    %4052 = vmatpush1.msra.mxu0 0.0
    %4053 = vmatprep.subr.mxu0 0.0
    %4054 = vmatpush1.msra.mxu0 0.0
    %4055 = vmatprep.subr.mxu0 0.0
    %4056 = vmatpush1.msra.mxu0 0.0
    %4057 = vmatprep.subr.mxu0 0.0
    %4058 = vmatpush1.msra.mxu0 0.0
    %4059 = vmatprep.subr.mxu0 0.0
    %4060 = vmatpush1.msra.mxu0 0.0
    %4061 = vmatprep.mubr.f32.mxu0 0.0
    %v4062 = vand.u32 %v3883, 4294901760
    %4063 = vmatmul.mubr.f32.gmra.mrb[0].mxu0 %v4062
    %v4064 = vpop.f32.mrb[0].mxu0
    %v4065 = vadd.f32 %v3964, %v4064
    %v4066 = vpop.f32.mrb[0].mxu0
    %4067 = vmatprep.mubr.f32.mxu0 0.0
    %v4068 = vand.u32 %v3886, 4294901760
    %4069 = vmatmul.mubr.f32.gmra.mrb[0].mxu0 %v4068
    %v4070 = vpop.f32.mrb[0].mxu0
    %v4071 = vadd.f32 %v3974, %v4070
    %v4072 = vpop.f32.mrb[0].mxu0
    %4073 = vdwg.mxu0
    %4074 = vmatprep.subr.mxu0 0.0
    %v4075 = vand.u32 %v147, 4294901760
    %v4076 = vsub.f32 %v147, %v4075
    %4077 = vmatpush1.msra.mxu0 %v4076
    %4078 = vmatprep.subr.mxu0 0.0
    %v4079 = vand.u32 %v148, 4294901760
    %v4080 = vsub.f32 %v148, %v4079
    %4081 = vmatpush1.msra.mxu0 %v4080
    %4082 = vmatprep.subr.mxu0 0.0
    %v4083 = vand.u32 %v149, 4294901760
    %v4084 = vsub.f32 %v149, %v4083
    %4085 = vmatpush1.msra.mxu0 %v4084
    %4086 = vmatprep.subr.mxu0 0.0
    %v4087 = vand.u32 %v150, 4294901760
    %v4088 = vsub.f32 %v150, %v4087
    %4089 = vmatpush1.msra.mxu0 %v4088
    %4090 = vmatprep.subr.mxu0 0.0
    %4091 = vmatpush1.msra.mxu0 0.0
    %4092 = vmatprep.subr.mxu0 0.0
    %4093 = vmatpush1.msra.mxu0 0.0
    %4094 = vmatprep.subr.mxu0 0.0
    %4095 = vmatpush1.msra.mxu0 0.0
    %4096 = vmatprep.subr.mxu0 0.0
    %4097 = vmatpush1.msra.mxu0 0.0
    %4098 = vmatprep.subr.mxu0 0.0
    %4099 = vmatpush1.msra.mxu0 0.0
    %4100 = vmatprep.subr.mxu0 0.0
    %4101 = vmatpush1.msra.mxu0 0.0
    %4102 = vmatprep.subr.mxu0 0.0
    %4103 = vmatpush1.msra.mxu0 0.0
    %4104 = vmatprep.subr.mxu0 0.0
    %4105 = vmatpush1.msra.mxu0 0.0
    %4106 = vmatprep.subr.mxu0 0.0
    %4107 = vmatpush1.msra.mxu0 0.0
    %4108 = vmatprep.subr.mxu0 0.0
    %4109 = vmatpush1.msra.mxu0 0.0
    %4110 = vmatprep.subr.mxu0 0.0
    %4111 = vmatpush1.msra.mxu0 0.0
    %4112 = vmatprep.subr.mxu0 0.0
    %4113 = vmatpush1.msra.mxu0 0.0
    %4114 = vmatprep.subr.mxu0 0.0
    %4115 = vmatpush1.msra.mxu0 0.0
    %4116 = vmatprep.subr.mxu0 0.0
    %4117 = vmatpush1.msra.mxu0 0.0
    %4118 = vmatprep.subr.mxu0 0.0
    %4119 = vmatpush1.msra.mxu0 0.0
    %4120 = vmatprep.subr.mxu0 0.0
    %4121 = vmatpush1.msra.mxu0 0.0
    %4122 = vmatprep.subr.mxu0 0.0
    %4123 = vmatpush1.msra.mxu0 0.0
    %4124 = vmatprep.subr.mxu0 0.0
    %4125 = vmatpush1.msra.mxu0 0.0
    %4126 = vmatprep.subr.mxu0 0.0
    %4127 = vmatpush1.msra.mxu0 0.0
    %4128 = vmatprep.subr.mxu0 0.0
    %4129 = vmatpush1.msra.mxu0 0.0
    %4130 = vmatprep.subr.mxu0 0.0
    %4131 = vmatpush1.msra.mxu0 0.0
    %4132 = vmatprep.subr.mxu0 0.0
    %4133 = vmatpush1.msra.mxu0 0.0
    %4134 = vmatprep.subr.mxu0 0.0
    %4135 = vmatpush1.msra.mxu0 0.0
    %4136 = vmatprep.subr.mxu0 0.0
    %4137 = vmatpush1.msra.mxu0 0.0
    %4138 = vmatprep.subr.mxu0 0.0
    %4139 = vmatpush1.msra.mxu0 0.0
    %4140 = vmatprep.subr.mxu0 0.0
    %4141 = vmatpush1.msra.mxu0 0.0
    %4142 = vmatprep.subr.mxu0 0.0
    %4143 = vmatpush1.msra.mxu0 0.0
    %4144 = vmatprep.subr.mxu0 0.0
    %4145 = vmatpush1.msra.mxu0 0.0
    %4146 = vmatprep.mubr.f32.mxu0 0.0
    %v4147 = vand.u32 %v3883, 4294901760
    %v4148 = vsub.f32 %v3883, %v4147
    %4149 = vmatmul.mubr.f32.gmra.mrb[0].mxu0 %v4148
    %v4150 = vpop.f32.mrb[0].mxu0
    %v4151 = vadd.f32 %v4065, %v4150
    %v4152 = vpop.f32.mrb[0].mxu0
    %4153 = vmatprep.mubr.f32.mxu0 0.0
    %v4154 = vand.u32 %v3886, 4294901760
    %v4155 = vsub.f32 %v3886, %v4154
    %4156 = vmatmul.mubr.f32.gmra.mrb[0].mxu0 %v4155
    %v4157 = vpop.f32.mrb[0].mxu0
    %v4158 = vadd.f32 %v4071, %v4157
    %v4159 = vpop.f32.mrb[0].mxu0
    %4160 = vdwg.mxu0
    %4161 = vmatprep.subr.mxu0 0.0
    %v4162 = vand.u32 %v147, 4294901760
    %4163 = vmatpush1.msra.mxu0 %v4162
    %4164 = vmatprep.subr.mxu0 0.0
    %v4165 = vand.u32 %v148, 4294901760
    %4166 = vmatpush1.msra.mxu0 %v4165
    %4167 = vmatprep.subr.mxu0 0.0
    %v4168 = vand.u32 %v149, 4294901760
    %4169 = vmatpush1.msra.mxu0 %v4168
    %4170 = vmatprep.subr.mxu0 0.0
    %v4171 = vand.u32 %v150, 4294901760
    %4172 = vmatpush1.msra.mxu0 %v4171
    %4173 = vmatprep.subr.mxu0 0.0
    %4174 = vmatpush1.msra.mxu0 0.0
    %4175 = vmatprep.subr.mxu0 0.0
    %4176 = vmatpush1.msra.mxu0 0.0
    %4177 = vmatprep.subr.mxu0 0.0
    %4178 = vmatpush1.msra.mxu0 0.0
    %4179 = vmatprep.subr.mxu0 0.0
    %4180 = vmatpush1.msra.mxu0 0.0
    %4181 = vmatprep.subr.mxu0 0.0
    %4182 = vmatpush1.msra.mxu0 0.0
    %4183 = vmatprep.subr.mxu0 0.0
    %4184 = vmatpush1.msra.mxu0 0.0
    %4185 = vmatprep.subr.mxu0 0.0
    %4186 = vmatpush1.msra.mxu0 0.0
    %4187 = vmatprep.subr.mxu0 0.0
    %4188 = vmatpush1.msra.mxu0 0.0
    %4189 = vmatprep.subr.mxu0 0.0
    %4190 = vmatpush1.msra.mxu0 0.0
    %4191 = vmatprep.subr.mxu0 0.0
    %4192 = vmatpush1.msra.mxu0 0.0
    %4193 = vmatprep.subr.mxu0 0.0
    %4194 = vmatpush1.msra.mxu0 0.0
    %4195 = vmatprep.subr.mxu0 0.0
    %4196 = vmatpush1.msra.mxu0 0.0
    %4197 = vmatprep.subr.mxu0 0.0
    %4198 = vmatpush1.msra.mxu0 0.0
    %4199 = vmatprep.subr.mxu0 0.0
    %4200 = vmatpush1.msra.mxu0 0.0
    %4201 = vmatprep.subr.mxu0 0.0
    %4202 = vmatpush1.msra.mxu0 0.0
    %4203 = vmatprep.subr.mxu0 0.0
    %4204 = vmatpush1.msra.mxu0 0.0
    %4205 = vmatprep.subr.mxu0 0.0
    %4206 = vmatpush1.msra.mxu0 0.0
    %4207 = vmatprep.subr.mxu0 0.0
    %4208 = vmatpush1.msra.mxu0 0.0
    %4209 = vmatprep.subr.mxu0 0.0
    %4210 = vmatpush1.msra.mxu0 0.0
    %4211 = vmatprep.subr.mxu0 0.0
    %4212 = vmatpush1.msra.mxu0 0.0
    %4213 = vmatprep.subr.mxu0 0.0
    %4214 = vmatpush1.msra.mxu0 0.0
    %4215 = vmatprep.subr.mxu0 0.0
    %4216 = vmatpush1.msra.mxu0 0.0
    %4217 = vmatprep.subr.mxu0 0.0
    %4218 = vmatpush1.msra.mxu0 0.0
    %4219 = vmatprep.subr.mxu0 0.0
    %4220 = vmatpush1.msra.mxu0 0.0
    %4221 = vmatprep.subr.mxu0 0.0
    %4222 = vmatpush1.msra.mxu0 0.0
    %4223 = vmatprep.subr.mxu0 0.0
    %4224 = vmatpush1.msra.mxu0 0.0
    %4225 = vmatprep.subr.mxu0 0.0
    %4226 = vmatpush1.msra.mxu0 0.0
    %4227 = vmatprep.subr.mxu0 0.0
    %4228 = vmatpush1.msra.mxu0 0.0
    %4229 = vmatprep.mubr.f32.mxu0 0.0
    %v4230 = vand.u32 %v3883, 4294901760
    %v4231 = vsub.f32 %v3883, %v4230
    %v4232 = vand.u32 %v4231, 4294901760
    %4233 = vmatmul.mubr.f32.gmra.mrb[0].mxu0 %v4232
    %v4234 = vpop.f32.mrb[0].mxu0
    %v4235 = vadd.f32 %v4151, %v4234
    %v4236 = vpop.f32.mrb[0].mxu0
    %4237 = vmatprep.mubr.f32.mxu0 0.0
    %v4238 = vand.u32 %v3886, 4294901760
    %v4239 = vsub.f32 %v3886, %v4238
    %v4240 = vand.u32 %v4239, 4294901760
    %4241 = vmatmul.mubr.f32.gmra.mrb[0].mxu0 %v4240
    %v4242 = vpop.f32.mrb[0].mxu0
    %v4243 = vadd.f32 %v4158, %v4242
    %v4244 = vpop.f32.mrb[0].mxu0
    %4245 = vdwg.mxu0
    %4246 = vmatprep.subr.mxu0 0.0
    %v4247 = vand.u32 %v147, 4294901760
    %v4248 = vsub.f32 %v147, %v4247
    %v4249 = vand.u32 %v4248, 4294901760
    %4250 = vmatpush1.msra.mxu0 %v4249
    %4251 = vmatprep.subr.mxu0 0.0
    %v4252 = vand.u32 %v148, 4294901760
    %v4253 = vsub.f32 %v148, %v4252
    %v4254 = vand.u32 %v4253, 4294901760
    %4255 = vmatpush1.msra.mxu0 %v4254
    %4256 = vmatprep.subr.mxu0 0.0
    %v4257 = vand.u32 %v149, 4294901760
    %v4258 = vsub.f32 %v149, %v4257
    %v4259 = vand.u32 %v4258, 4294901760
    %4260 = vmatpush1.msra.mxu0 %v4259
    %4261 = vmatprep.subr.mxu0 0.0
    %v4262 = vand.u32 %v150, 4294901760
    %v4263 = vsub.f32 %v150, %v4262
    %v4264 = vand.u32 %v4263, 4294901760
    %4265 = vmatpush1.msra.mxu0 %v4264
    %4266 = vmatprep.subr.mxu0 0.0
    %4267 = vmatpush1.msra.mxu0 0.0
    %4268 = vmatprep.subr.mxu0 0.0
    %4269 = vmatpush1.msra.mxu0 0.0
    %4270 = vmatprep.subr.mxu0 0.0
    %4271 = vmatpush1.msra.mxu0 0.0
    %4272 = vmatprep.subr.mxu0 0.0
    %4273 = vmatpush1.msra.mxu0 0.0
    %4274 = vmatprep.subr.mxu0 0.0
    %4275 = vmatpush1.msra.mxu0 0.0
    %4276 = vmatprep.subr.mxu0 0.0
    %4277 = vmatpush1.msra.mxu0 0.0
    %4278 = vmatprep.subr.mxu0 0.0
    %4279 = vmatpush1.msra.mxu0 0.0
    %4280 = vmatprep.subr.mxu0 0.0
    %4281 = vmatpush1.msra.mxu0 0.0
    %4282 = vmatprep.subr.mxu0 0.0
    %4283 = vmatpush1.msra.mxu0 0.0
    %4284 = vmatprep.subr.mxu0 0.0
    %4285 = vmatpush1.msra.mxu0 0.0
    %4286 = vmatprep.subr.mxu0 0.0
    %4287 = vmatpush1.msra.mxu0 0.0
    %4288 = vmatprep.subr.mxu0 0.0
    %4289 = vmatpush1.msra.mxu0 0.0
    %4290 = vmatprep.subr.mxu0 0.0
    %4291 = vmatpush1.msra.mxu0 0.0
    %4292 = vmatprep.subr.mxu0 0.0
    %4293 = vmatpush1.msra.mxu0 0.0
    %4294 = vmatprep.subr.mxu0 0.0
    %4295 = vmatpush1.msra.mxu0 0.0
    %4296 = vmatprep.subr.mxu0 0.0
    %4297 = vmatpush1.msra.mxu0 0.0
    %4298 = vmatprep.subr.mxu0 0.0
    %4299 = vmatpush1.msra.mxu0 0.0
    %4300 = vmatprep.subr.mxu0 0.0
    %4301 = vmatpush1.msra.mxu0 0.0
    %4302 = vmatprep.subr.mxu0 0.0
    %4303 = vmatpush1.msra.mxu0 0.0
    %4304 = vmatprep.subr.mxu0 0.0
    %4305 = vmatpush1.msra.mxu0 0.0
    %4306 = vmatprep.subr.mxu0 0.0
    %4307 = vmatpush1.msra.mxu0 0.0
    %4308 = vmatprep.subr.mxu0 0.0
    %4309 = vmatpush1.msra.mxu0 0.0
    %4310 = vmatprep.subr.mxu0 0.0
    %4311 = vmatpush1.msra.mxu0 0.0
    %4312 = vmatprep.subr.mxu0 0.0
    %4313 = vmatpush1.msra.mxu0 0.0
    %4314 = vmatprep.subr.mxu0 0.0
    %4315 = vmatpush1.msra.mxu0 0.0
    %4316 = vmatprep.subr.mxu0 0.0
    %4317 = vmatpush1.msra.mxu0 0.0
    %4318 = vmatprep.subr.mxu0 0.0
    %4319 = vmatpush1.msra.mxu0 0.0
    %4320 = vmatprep.subr.mxu0 0.0
    %4321 = vmatpush1.msra.mxu0 0.0
    %4322 = vmatprep.mubr.f32.mxu0 0.0
    %v4323 = vand.u32 %v3883, 4294901760
    %4324 = vmatmul.mubr.f32.gmra.mrb[0].mxu0 %v4323
    %v4325 = vpop.f32.mrb[0].mxu0
    %v4326 = vadd.f32 %v4235, %v4325
    %v4327 = vpop.f32.mrb[0].mxu0
    %4328 = vmatprep.mubr.f32.mxu0 0.0
    %v4329 = vand.u32 %v3886, 4294901760
    %4330 = vmatmul.mubr.f32.gmra.mrb[0].mxu0 %v4329
    %v4331 = vpop.f32.mrb[0].mxu0
    %v4332 = vadd.f32 %v4243, %v4331
    %v4333 = vpop.f32.mrb[0].mxu0
    %4334 = vdwg.mxu0
    %4335 = vmatprep.subr.mxu0 0.0
    %v4336 = vand.u32 %v147, 4294901760
    %4337 = vmatpush1.msra.mxu0 %v4336
    %4338 = vmatprep.subr.mxu0 0.0
    %v4339 = vand.u32 %v148, 4294901760
    %4340 = vmatpush1.msra.mxu0 %v4339
    %4341 = vmatprep.subr.mxu0 0.0
    %v4342 = vand.u32 %v149, 4294901760
    %4343 = vmatpush1.msra.mxu0 %v4342
    %4344 = vmatprep.subr.mxu0 0.0
    %v4345 = vand.u32 %v150, 4294901760
    %4346 = vmatpush1.msra.mxu0 %v4345
    %4347 = vmatprep.subr.mxu0 0.0
    %4348 = vmatpush1.msra.mxu0 0.0
    %4349 = vmatprep.subr.mxu0 0.0
    %4350 = vmatpush1.msra.mxu0 0.0
    %4351 = vmatprep.subr.mxu0 0.0
    %4352 = vmatpush1.msra.mxu0 0.0
    %4353 = vmatprep.subr.mxu0 0.0
    %4354 = vmatpush1.msra.mxu0 0.0
    %4355 = vmatprep.subr.mxu0 0.0
    %4356 = vmatpush1.msra.mxu0 0.0
    %4357 = vmatprep.subr.mxu0 0.0
    %4358 = vmatpush1.msra.mxu0 0.0
    %4359 = vmatprep.subr.mxu0 0.0
    %4360 = vmatpush1.msra.mxu0 0.0
    %4361 = vmatprep.subr.mxu0 0.0
    %4362 = vmatpush1.msra.mxu0 0.0
    %4363 = vmatprep.subr.mxu0 0.0
    %4364 = vmatpush1.msra.mxu0 0.0
    %4365 = vmatprep.subr.mxu0 0.0
    %4366 = vmatpush1.msra.mxu0 0.0
    %4367 = vmatprep.subr.mxu0 0.0
    %4368 = vmatpush1.msra.mxu0 0.0
    %4369 = vmatprep.subr.mxu0 0.0
    %4370 = vmatpush1.msra.mxu0 0.0
    %4371 = vmatprep.subr.mxu0 0.0
    %4372 = vmatpush1.msra.mxu0 0.0
    %4373 = vmatprep.subr.mxu0 0.0
    %4374 = vmatpush1.msra.mxu0 0.0
    %4375 = vmatprep.subr.mxu0 0.0
    %4376 = vmatpush1.msra.mxu0 0.0
    %4377 = vmatprep.subr.mxu0 0.0
    %4378 = vmatpush1.msra.mxu0 0.0
    %4379 = vmatprep.subr.mxu0 0.0
    %4380 = vmatpush1.msra.mxu0 0.0
    %4381 = vmatprep.subr.mxu0 0.0
    %4382 = vmatpush1.msra.mxu0 0.0
    %4383 = vmatprep.subr.mxu0 0.0
    %4384 = vmatpush1.msra.mxu0 0.0
    %4385 = vmatprep.subr.mxu0 0.0
    %4386 = vmatpush1.msra.mxu0 0.0
    %4387 = vmatprep.subr.mxu0 0.0
    %4388 = vmatpush1.msra.mxu0 0.0
    %4389 = vmatprep.subr.mxu0 0.0
    %4390 = vmatpush1.msra.mxu0 0.0
    %4391 = vmatprep.subr.mxu0 0.0
    %4392 = vmatpush1.msra.mxu0 0.0
    %4393 = vmatprep.subr.mxu0 0.0
    %4394 = vmatpush1.msra.mxu0 0.0
    %4395 = vmatprep.subr.mxu0 0.0
    %4396 = vmatpush1.msra.mxu0 0.0
    %4397 = vmatprep.subr.mxu0 0.0
    %4398 = vmatpush1.msra.mxu0 0.0
    %4399 = vmatprep.subr.mxu0 0.0
    %4400 = vmatpush1.msra.mxu0 0.0
    %4401 = vmatprep.subr.mxu0 0.0
    %4402 = vmatpush1.msra.mxu0 0.0
    %4403 = vmatprep.mubr.f32.mxu0 0.0
    %v4404 = vand.u32 %v3883, 4294901760
    %4405 = vmatmul.mubr.f32.gmra.mrb[0].mxu0 %v4404
    %v4406 = vpop.f32.mrb[0].mxu0
    %v4407 = vadd.f32 %v4326, %v4406
    %v4408 = vpop.f32.mrb[0].mxu0
    %4409 = vmatprep.mubr.f32.mxu0 0.0
    %v4410 = vand.u32 %v3886, 4294901760
    %4411 = vmatmul.mubr.f32.gmra.mrb[0].mxu0 %v4410
    %v4412 = vpop.f32.mrb[0].mxu0
    %v4413 = vadd.f32 %v4332, %v4412
    %v4414 = vpop.f32.mrb[0].mxu0
    %4415 = vdwg.mxu0
    %v4416 = vadd.f32 %v3873, %v4407
    %v4417 = vadd.f32 %v3879, %v4413
    %v4418 = vlaneseq
    %v4419 = vshrl.u32 %v4418, 7
    %v4420 = vsub.s32 0, %v4419
    %v4421 = vrot.slane %v135, %v4420
    %v4422 = vadd.f32 %v4416, %v4421
    %v4423 = vadd.f32 %v4417, %v4421
    %v4424 = vxor.u32 %v4422, 2147483648
    %v4425 = vxor.u32 %v4423, 2147483648
    %v4426 = vmul.f32 %v4424, 1.442695
    %v4427 = vpow.pop %v4426
    %v4428 = vmul.f32 %v4425, 1.442695
    %v4429 = vpow.pop %v4428
    %v4430 = vadd.f32 %v4427, 1.0
    %v4431 = vadd.f32 %v4429, 1.0
    %v4432 = vrcp.pop %v4430
    %v4433 = vmul.f32 1.0, %v4432
    %v4434 = vrcp.pop %v4431
    %v4435 = vmul.f32 1.0, %v4434
    %v4436 = vlaneseq
    %v4437 = vshrl.u32 %v4436, 7
    %v4438 = vsub.s32 0, %v4437
    %v4439 = vrot.slane %v136, %v4438
    %4441 = vrot.lane.b32.xlu0 %v4439, 32
    %v4442 = vpop.permute.xlu0 %4441
    %v4444 = vadd.f32 %v4416, %v4442
    %v4445 = vadd.f32 %v4417, %v4442
    %v4446 = vxor.u32 %v4444, 2147483648
    %v4447 = vxor.u32 %v4445, 2147483648
    %v4448 = vmul.f32 %v4446, 1.442695
    %v4449 = vpow.pop %v4448
    %v4450 = vmul.f32 %v4447, 1.442695
    %v4451 = vpow.pop %v4450
    %v4452 = vadd.f32 %v4449, 1.0
    %v4453 = vadd.f32 %v4451, 1.0
    %v4454 = vrcp.pop %v4452
    %v4455 = vmul.f32 1.0, %v4454
    %v4456 = vrcp.pop %v4453
    %v4457 = vmul.f32 1.0, %v4456
    %v4458 = vlaneseq
    %v4459 = vshrl.u32 %v4458, 7
    %v4460 = vsub.s32 0, %v4459
    %v4461 = vrot.slane %v137, %v4460
    %4463 = vrot.lane.b32.xlu0 %v4461, 64
    %v4464 = vpop.permute.xlu0 %4463
    %v4466 = vadd.f32 %v3873, %v4464
    %v4467 = vadd.f32 %v3879, %v4464
    %v4468 = vlaneseq
    %v4469 = vshrl.u32 %v4468, 7
    %v4470 = vsub.s32 0, %v4469
    %v4471 = vrot.slane %v138, %v4470
    %4473 = vrot.lane.b32.xlu0 %v4471, 64
    %v4474 = vpop.permute.xlu0 %4473
    %v4476 = vadd.f32 %v4407, %v4474
    %v4477 = vadd.f32 %v4413, %v4474
    %4480 = vrot.lane.b32.xlu0 %v4476, 64
    %v4481 = vpop.permute.xlu0 %4480
    %4482 = vrot.lane.b32.xlu0 %v4477, 64
    %v4483 = vpop.permute.xlu0 %4482
    %v4486 = vmul.f32 %v4433, %v4481
    %v4487 = vmul.f32 %v4435, %v4483
    %4490 = vrot.lane.b32.xlu0 %v4486, 64
    %v4491 = vpop.permute.xlu0 %4490
    %4492 = vrot.lane.b32.xlu0 %v4487, 64
    %v4493 = vpop.permute.xlu0 %4492
    %v4496 = vadd.f32 %v4466, %v4491
    %v4497 = vadd.f32 %v4467, %v4493
    %v4498 = vtanh.pop %v4496
    %v4499 = vtanh.pop %v4497
    %v4500 = vsub.f32 1.0, %v4455
    %v4501 = vsub.f32 1.0, %v4457
    %4504 = vrot.lane.b32.xlu0 %v4498, 96
    %v4505 = vpop.permute.xlu0 %4504
    %4506 = vrot.lane.b32.xlu0 %v4499, 96
    %v4507 = vpop.permute.xlu0 %4506
    %v4510 = vmul.f32 %v4500, %v4505
    %v4511 = vmul.f32 %v4501, %v4507
    %4512 = vrot.lane.b32.xlu0 %v128, 32
    %v4513 = vpop.permute.xlu0 %4512
    %4514 = vrot.lane.b32.xlu0 %v130, 32
    %v4515 = vpop.permute.xlu0 %4514
    %v4518 = vmul.f32 %v4455, %v4513
    %v4519 = vmul.f32 %v4457, %v4515
    %v4520 = vadd.f32 %v4510, %v4518
    %v4521 = vadd.f32 %v4511, %v4519
    %4524 = vrot.lane.b32.xlu0 %v4520, 96
    %v4525 = vpop.permute.xlu0 %4524
    %4526 = vrot.lane.b32.xlu0 %v4521, 96
    %v4527 = vpop.permute.xlu0 %4526
    %v4530 = vsel %vm151, %v4525, 0.0
    %4531 = vadd.xlane.f32.xlu0 %v4530
    %v4532 = vpop.xlane.xlu0 %4531
    %v4533 = vsel %vm151, %v4527, 0.0
    %4534 = vadd.xlane.f32.xlu0 %v4533
    %v4535 = vpop.xlane.xlu0 %4534
    %v4536 = vmul.f32 %v4532, %v164
    %v4537 = vmul.f32 %v4535, %v164
    %v4538 = vsub.f32 %v4520, %v4536
    %v4539 = vsub.f32 %v4521, %v4537
    %v4540 = vmul.f32 %v4538, %v4538
    %v4541 = vmul.f32 %v4539, %v4539
    %4544 = vrot.lane.b32.xlu0 %v4540, 96
    %v4545 = vpop.permute.xlu0 %4544
    %4546 = vrot.lane.b32.xlu0 %v4541, 96
    %v4547 = vpop.permute.xlu0 %4546
    %v4550 = vsel %vm151, %v4545, 0.0
    %4551 = vadd.xlane.f32.xlu0 %v4550
    %v4552 = vpop.xlane.xlu0 %4551
    %v4553 = vsel %vm151, %v4547, 0.0
    %4554 = vadd.xlane.f32.xlu0 %v4553
    %v4555 = vpop.xlane.xlu0 %4554
    %v4556 = vmul.f32 %v4552, %v164
    %v4557 = vmul.f32 %v4555, %v164
    %v4558 = vadd.f32 %v4556, 1e-05
    %v4559 = vadd.f32 %v4557, 1e-05
    %v4560 = vrsqrt.pop %v4558
    %v4561 = vrsqrt.pop %v4559
    %v4562 = vmul.f32 %v4538, %v4560
    %v4563 = vmul.f32 %v4539, %v4561
    %4565 = vrot.lane.b32.xlu0 %v880, 32
    %v4566 = vpop.permute.xlu0 %4565
    %v4568 = vmul.f32 %v4562, %v4566
    %v4569 = vmul.f32 %v4563, %v4566
    %4571 = vrot.lane.b32.xlu0 %v886, 32
    %v4572 = vpop.permute.xlu0 %4571
    %v4574 = vadd.f32 %v4568, %v4572
    %v4575 = vadd.f32 %v4569, %v4572
    %4578 = vrot.lane.b32.xlu0 %v4574, 96
    %v4579 = vpop.permute.xlu0 %4578
    %4580 = vrot.lane.b32.xlu0 %v4575, 96
    %v4581 = vpop.permute.xlu0 %4580
    %v4582 = vsel %vm151, %v4579, 0
    %v4584 = vsel %vm151, %v4581, 0
    %4586 = vmatprep.subr.mxu0 0.0
    %v4587 = vand.u32 %v139, 4294901760
    %4588 = vmatpush1.msra.mxu0 %v4587
    %4589 = vmatprep.subr.mxu0 0.0
    %v4590 = vand.u32 %v140, 4294901760
    %4591 = vmatpush1.msra.mxu0 %v4590
    %4592 = vmatprep.subr.mxu0 0.0
    %v4593 = vand.u32 %v141, 4294901760
    %4594 = vmatpush1.msra.mxu0 %v4593
    %4595 = vmatprep.subr.mxu0 0.0
    %v4596 = vand.u32 %v142, 4294901760
    %4597 = vmatpush1.msra.mxu0 %v4596
    %4598 = vmatprep.subr.mxu0 0.0
    %4599 = vmatpush1.msra.mxu0 0.0
    %4600 = vmatprep.subr.mxu0 0.0
    %4601 = vmatpush1.msra.mxu0 0.0
    %4602 = vmatprep.subr.mxu0 0.0
    %4603 = vmatpush1.msra.mxu0 0.0
    %4604 = vmatprep.subr.mxu0 0.0
    %4605 = vmatpush1.msra.mxu0 0.0
    %4606 = vmatprep.subr.mxu0 0.0
    %4607 = vmatpush1.msra.mxu0 0.0
    %4608 = vmatprep.subr.mxu0 0.0
    %4609 = vmatpush1.msra.mxu0 0.0
    %4610 = vmatprep.subr.mxu0 0.0
    %4611 = vmatpush1.msra.mxu0 0.0
    %4612 = vmatprep.subr.mxu0 0.0
    %4613 = vmatpush1.msra.mxu0 0.0
    %4614 = vmatprep.subr.mxu0 0.0
    %4615 = vmatpush1.msra.mxu0 0.0
    %4616 = vmatprep.subr.mxu0 0.0
    %4617 = vmatpush1.msra.mxu0 0.0
    %4618 = vmatprep.subr.mxu0 0.0
    %4619 = vmatpush1.msra.mxu0 0.0
    %4620 = vmatprep.subr.mxu0 0.0
    %4621 = vmatpush1.msra.mxu0 0.0
    %4622 = vmatprep.subr.mxu0 0.0
    %4623 = vmatpush1.msra.mxu0 0.0
    %4624 = vmatprep.subr.mxu0 0.0
    %4625 = vmatpush1.msra.mxu0 0.0
    %4626 = vmatprep.subr.mxu0 0.0
    %4627 = vmatpush1.msra.mxu0 0.0
    %4628 = vmatprep.subr.mxu0 0.0
    %4629 = vmatpush1.msra.mxu0 0.0
    %4630 = vmatprep.subr.mxu0 0.0
    %4631 = vmatpush1.msra.mxu0 0.0
    %4632 = vmatprep.subr.mxu0 0.0
    %4633 = vmatpush1.msra.mxu0 0.0
    %4634 = vmatprep.subr.mxu0 0.0
    %4635 = vmatpush1.msra.mxu0 0.0
    %4636 = vmatprep.subr.mxu0 0.0
    %4637 = vmatpush1.msra.mxu0 0.0
    %4638 = vmatprep.subr.mxu0 0.0
    %4639 = vmatpush1.msra.mxu0 0.0
    %4640 = vmatprep.subr.mxu0 0.0
    %4641 = vmatpush1.msra.mxu0 0.0
    %4642 = vmatprep.subr.mxu0 0.0
    %4643 = vmatpush1.msra.mxu0 0.0
    %4644 = vmatprep.subr.mxu0 0.0
    %4645 = vmatpush1.msra.mxu0 0.0
    %4646 = vmatprep.subr.mxu0 0.0
    %4647 = vmatpush1.msra.mxu0 0.0
    %4648 = vmatprep.subr.mxu0 0.0
    %4649 = vmatpush1.msra.mxu0 0.0
    %4650 = vmatprep.subr.mxu0 0.0
    %4651 = vmatpush1.msra.mxu0 0.0
    %4652 = vmatprep.subr.mxu0 0.0
    %4653 = vmatpush1.msra.mxu0 0.0
    %4654 = vmatprep.mubr.f32.mxu0 0.0
    %v4655 = vand.u32 %v4582, 4294901760
    %v4656 = vsub.f32 %v4582, %v4655
    %v4657 = vand.u32 %v4656, 4294901760
    %v4658 = vsub.f32 %v4656, %v4657
    %v4659 = vand.u32 %v4658, 4294901760
    %4660 = vmatmul.mubr.f32.gmra.mrb[0].mxu0 %v4659
    %v4661 = vpop.f32.mrb[0].mxu0
    %v4662 = vadd.f32 0.0, %v4661
    %v4663 = vpop.f32.mrb[0].mxu0
    %4664 = vmatprep.mubr.f32.mxu0 0.0
    %v4665 = vand.u32 %v4584, 4294901760
    %v4666 = vsub.f32 %v4584, %v4665
    %v4667 = vand.u32 %v4666, 4294901760
    %v4668 = vsub.f32 %v4666, %v4667
    %v4669 = vand.u32 %v4668, 4294901760
    %4670 = vmatmul.mubr.f32.gmra.mrb[0].mxu0 %v4669
    %v4671 = vpop.f32.mrb[0].mxu0
    %v4672 = vadd.f32 0.0, %v4671
    %v4673 = vpop.f32.mrb[0].mxu0
    %4674 = vdwg.mxu0
    %4675 = vmatprep.subr.mxu0 0.0
    %v4676 = vand.u32 %v139, 4294901760
    %v4677 = vsub.f32 %v139, %v4676
    %v4678 = vand.u32 %v4677, 4294901760
    %v4679 = vsub.f32 %v4677, %v4678
    %v4680 = vand.u32 %v4679, 4294901760
    %4681 = vmatpush1.msra.mxu0 %v4680
    %4682 = vmatprep.subr.mxu0 0.0
    %v4683 = vand.u32 %v140, 4294901760
    %v4684 = vsub.f32 %v140, %v4683
    %v4685 = vand.u32 %v4684, 4294901760
    %v4686 = vsub.f32 %v4684, %v4685
    %v4687 = vand.u32 %v4686, 4294901760
    %4688 = vmatpush1.msra.mxu0 %v4687
    %4689 = vmatprep.subr.mxu0 0.0
    %v4690 = vand.u32 %v141, 4294901760
    %v4691 = vsub.f32 %v141, %v4690
    %v4692 = vand.u32 %v4691, 4294901760
    %v4693 = vsub.f32 %v4691, %v4692
    %v4694 = vand.u32 %v4693, 4294901760
    %4695 = vmatpush1.msra.mxu0 %v4694
    %4696 = vmatprep.subr.mxu0 0.0
    %v4697 = vand.u32 %v142, 4294901760
    %v4698 = vsub.f32 %v142, %v4697
    %v4699 = vand.u32 %v4698, 4294901760
    %v4700 = vsub.f32 %v4698, %v4699
    %v4701 = vand.u32 %v4700, 4294901760
    %4702 = vmatpush1.msra.mxu0 %v4701
    %4703 = vmatprep.subr.mxu0 0.0
    %4704 = vmatpush1.msra.mxu0 0.0
    %4705 = vmatprep.subr.mxu0 0.0
    %4706 = vmatpush1.msra.mxu0 0.0
    %4707 = vmatprep.subr.mxu0 0.0
    %4708 = vmatpush1.msra.mxu0 0.0
    %4709 = vmatprep.subr.mxu0 0.0
    %4710 = vmatpush1.msra.mxu0 0.0
    %4711 = vmatprep.subr.mxu0 0.0
    %4712 = vmatpush1.msra.mxu0 0.0
    %4713 = vmatprep.subr.mxu0 0.0
    %4714 = vmatpush1.msra.mxu0 0.0
    %4715 = vmatprep.subr.mxu0 0.0
    %4716 = vmatpush1.msra.mxu0 0.0
    %4717 = vmatprep.subr.mxu0 0.0
    %4718 = vmatpush1.msra.mxu0 0.0
    %4719 = vmatprep.subr.mxu0 0.0
    %4720 = vmatpush1.msra.mxu0 0.0
    %4721 = vmatprep.subr.mxu0 0.0
    %4722 = vmatpush1.msra.mxu0 0.0
    %4723 = vmatprep.subr.mxu0 0.0
    %4724 = vmatpush1.msra.mxu0 0.0
    %4725 = vmatprep.subr.mxu0 0.0
    %4726 = vmatpush1.msra.mxu0 0.0
    %4727 = vmatprep.subr.mxu0 0.0
    %4728 = vmatpush1.msra.mxu0 0.0
    %4729 = vmatprep.subr.mxu0 0.0
    %4730 = vmatpush1.msra.mxu0 0.0
    %4731 = vmatprep.subr.mxu0 0.0
    %4732 = vmatpush1.msra.mxu0 0.0
    %4733 = vmatprep.subr.mxu0 0.0
    %4734 = vmatpush1.msra.mxu0 0.0
    %4735 = vmatprep.subr.mxu0 0.0
    %4736 = vmatpush1.msra.mxu0 0.0
    %4737 = vmatprep.subr.mxu0 0.0
    %4738 = vmatpush1.msra.mxu0 0.0
    %4739 = vmatprep.subr.mxu0 0.0
    %4740 = vmatpush1.msra.mxu0 0.0
    %4741 = vmatprep.subr.mxu0 0.0
    %4742 = vmatpush1.msra.mxu0 0.0
    %4743 = vmatprep.subr.mxu0 0.0
    %4744 = vmatpush1.msra.mxu0 0.0
    %4745 = vmatprep.subr.mxu0 0.0
    %4746 = vmatpush1.msra.mxu0 0.0
    %4747 = vmatprep.subr.mxu0 0.0
    %4748 = vmatpush1.msra.mxu0 0.0
    %4749 = vmatprep.subr.mxu0 0.0
    %4750 = vmatpush1.msra.mxu0 0.0
    %4751 = vmatprep.subr.mxu0 0.0
    %4752 = vmatpush1.msra.mxu0 0.0
    %4753 = vmatprep.subr.mxu0 0.0
    %4754 = vmatpush1.msra.mxu0 0.0
    %4755 = vmatprep.subr.mxu0 0.0
    %4756 = vmatpush1.msra.mxu0 0.0
    %4757 = vmatprep.subr.mxu0 0.0
    %4758 = vmatpush1.msra.mxu0 0.0
    %4759 = vmatprep.mubr.f32.mxu0 0.0
    %v4760 = vand.u32 %v4582, 4294901760
    %4761 = vmatmul.mubr.f32.gmra.mrb[0].mxu0 %v4760
    %v4762 = vpop.f32.mrb[0].mxu0
    %v4763 = vadd.f32 %v4662, %v4762
    %v4764 = vpop.f32.mrb[0].mxu0
    %4765 = vmatprep.mubr.f32.mxu0 0.0
    %v4766 = vand.u32 %v4584, 4294901760
    %4767 = vmatmul.mubr.f32.gmra.mrb[0].mxu0 %v4766
    %v4768 = vpop.f32.mrb[0].mxu0
    %v4769 = vadd.f32 %v4672, %v4768
    %v4770 = vpop.f32.mrb[0].mxu0
    %4771 = vdwg.mxu0
    %4772 = vmatprep.subr.mxu0 0.0
    %v4773 = vand.u32 %v139, 4294901760
    %v4774 = vsub.f32 %v139, %v4773
    %4775 = vmatpush1.msra.mxu0 %v4774
    %4776 = vmatprep.subr.mxu0 0.0
    %v4777 = vand.u32 %v140, 4294901760
    %v4778 = vsub.f32 %v140, %v4777
    %4779 = vmatpush1.msra.mxu0 %v4778
    %4780 = vmatprep.subr.mxu0 0.0
    %v4781 = vand.u32 %v141, 4294901760
    %v4782 = vsub.f32 %v141, %v4781
    %4783 = vmatpush1.msra.mxu0 %v4782
    %4784 = vmatprep.subr.mxu0 0.0
    %v4785 = vand.u32 %v142, 4294901760
    %v4786 = vsub.f32 %v142, %v4785
    %4787 = vmatpush1.msra.mxu0 %v4786
    %4788 = vmatprep.subr.mxu0 0.0
    %4789 = vmatpush1.msra.mxu0 0.0
    %4790 = vmatprep.subr.mxu0 0.0
    %4791 = vmatpush1.msra.mxu0 0.0
    %4792 = vmatprep.subr.mxu0 0.0
    %4793 = vmatpush1.msra.mxu0 0.0
    %4794 = vmatprep.subr.mxu0 0.0
    %4795 = vmatpush1.msra.mxu0 0.0
    %4796 = vmatprep.subr.mxu0 0.0
    %4797 = vmatpush1.msra.mxu0 0.0
    %4798 = vmatprep.subr.mxu0 0.0
    %4799 = vmatpush1.msra.mxu0 0.0
    %4800 = vmatprep.subr.mxu0 0.0
    %4801 = vmatpush1.msra.mxu0 0.0
    %4802 = vmatprep.subr.mxu0 0.0
    %4803 = vmatpush1.msra.mxu0 0.0
    %4804 = vmatprep.subr.mxu0 0.0
    %4805 = vmatpush1.msra.mxu0 0.0
    %4806 = vmatprep.subr.mxu0 0.0
    %4807 = vmatpush1.msra.mxu0 0.0
    %4808 = vmatprep.subr.mxu0 0.0
    %4809 = vmatpush1.msra.mxu0 0.0
    %4810 = vmatprep.subr.mxu0 0.0
    %4811 = vmatpush1.msra.mxu0 0.0
    %4812 = vmatprep.subr.mxu0 0.0
    %4813 = vmatpush1.msra.mxu0 0.0
    %4814 = vmatprep.subr.mxu0 0.0
    %4815 = vmatpush1.msra.mxu0 0.0
    %4816 = vmatprep.subr.mxu0 0.0
    %4817 = vmatpush1.msra.mxu0 0.0
    %4818 = vmatprep.subr.mxu0 0.0
    %4819 = vmatpush1.msra.mxu0 0.0
    %4820 = vmatprep.subr.mxu0 0.0
    %4821 = vmatpush1.msra.mxu0 0.0
    %4822 = vmatprep.subr.mxu0 0.0
    %4823 = vmatpush1.msra.mxu0 0.0
    %4824 = vmatprep.subr.mxu0 0.0
    %4825 = vmatpush1.msra.mxu0 0.0
    %4826 = vmatprep.subr.mxu0 0.0
    %4827 = vmatpush1.msra.mxu0 0.0
    %4828 = vmatprep.subr.mxu0 0.0
    %4829 = vmatpush1.msra.mxu0 0.0
    %4830 = vmatprep.subr.mxu0 0.0
    %4831 = vmatpush1.msra.mxu0 0.0
    %4832 = vmatprep.subr.mxu0 0.0
    %4833 = vmatpush1.msra.mxu0 0.0
    %4834 = vmatprep.subr.mxu0 0.0
    %4835 = vmatpush1.msra.mxu0 0.0
    %4836 = vmatprep.subr.mxu0 0.0
    %4837 = vmatpush1.msra.mxu0 0.0
    %4838 = vmatprep.subr.mxu0 0.0
    %4839 = vmatpush1.msra.mxu0 0.0
    %4840 = vmatprep.subr.mxu0 0.0
    %4841 = vmatpush1.msra.mxu0 0.0
    %4842 = vmatprep.subr.mxu0 0.0
    %4843 = vmatpush1.msra.mxu0 0.0
    %4844 = vmatprep.mubr.f32.mxu0 0.0
    %v4845 = vand.u32 %v4582, 4294901760
    %v4846 = vsub.f32 %v4582, %v4845
    %4847 = vmatmul.mubr.f32.gmra.mrb[0].mxu0 %v4846
    %v4848 = vpop.f32.mrb[0].mxu0
    %v4849 = vadd.f32 %v4763, %v4848
    %v4850 = vpop.f32.mrb[0].mxu0
    %4851 = vmatprep.mubr.f32.mxu0 0.0
    %v4852 = vand.u32 %v4584, 4294901760
    %v4853 = vsub.f32 %v4584, %v4852
    %4854 = vmatmul.mubr.f32.gmra.mrb[0].mxu0 %v4853
    %v4855 = vpop.f32.mrb[0].mxu0
    %v4856 = vadd.f32 %v4769, %v4855
    %v4857 = vpop.f32.mrb[0].mxu0
    %4858 = vdwg.mxu0
    %4859 = vmatprep.subr.mxu0 0.0
    %v4860 = vand.u32 %v139, 4294901760
    %4861 = vmatpush1.msra.mxu0 %v4860
    %4862 = vmatprep.subr.mxu0 0.0
    %v4863 = vand.u32 %v140, 4294901760
    %4864 = vmatpush1.msra.mxu0 %v4863
    %4865 = vmatprep.subr.mxu0 0.0
    %v4866 = vand.u32 %v141, 4294901760
    %4867 = vmatpush1.msra.mxu0 %v4866
    %4868 = vmatprep.subr.mxu0 0.0
    %v4869 = vand.u32 %v142, 4294901760
    %4870 = vmatpush1.msra.mxu0 %v4869
    %4871 = vmatprep.subr.mxu0 0.0
    %4872 = vmatpush1.msra.mxu0 0.0
    %4873 = vmatprep.subr.mxu0 0.0
    %4874 = vmatpush1.msra.mxu0 0.0
    %4875 = vmatprep.subr.mxu0 0.0
    %4876 = vmatpush1.msra.mxu0 0.0
    %4877 = vmatprep.subr.mxu0 0.0
    %4878 = vmatpush1.msra.mxu0 0.0
    %4879 = vmatprep.subr.mxu0 0.0
    %4880 = vmatpush1.msra.mxu0 0.0
    %4881 = vmatprep.subr.mxu0 0.0
    %4882 = vmatpush1.msra.mxu0 0.0
    %4883 = vmatprep.subr.mxu0 0.0
    %4884 = vmatpush1.msra.mxu0 0.0
    %4885 = vmatprep.subr.mxu0 0.0
    %4886 = vmatpush1.msra.mxu0 0.0
    %4887 = vmatprep.subr.mxu0 0.0
    %4888 = vmatpush1.msra.mxu0 0.0
    %4889 = vmatprep.subr.mxu0 0.0
    %4890 = vmatpush1.msra.mxu0 0.0
    %4891 = vmatprep.subr.mxu0 0.0
    %4892 = vmatpush1.msra.mxu0 0.0
    %4893 = vmatprep.subr.mxu0 0.0
    %4894 = vmatpush1.msra.mxu0 0.0
    %4895 = vmatprep.subr.mxu0 0.0
    %4896 = vmatpush1.msra.mxu0 0.0
    %4897 = vmatprep.subr.mxu0 0.0
    %4898 = vmatpush1.msra.mxu0 0.0
    %4899 = vmatprep.subr.mxu0 0.0
    %4900 = vmatpush1.msra.mxu0 0.0
    %4901 = vmatprep.subr.mxu0 0.0
    %4902 = vmatpush1.msra.mxu0 0.0
    %4903 = vmatprep.subr.mxu0 0.0
    %4904 = vmatpush1.msra.mxu0 0.0
    %4905 = vmatprep.subr.mxu0 0.0
    %4906 = vmatpush1.msra.mxu0 0.0
    %4907 = vmatprep.subr.mxu0 0.0
    %4908 = vmatpush1.msra.mxu0 0.0
    %4909 = vmatprep.subr.mxu0 0.0
    %4910 = vmatpush1.msra.mxu0 0.0
    %4911 = vmatprep.subr.mxu0 0.0
    %4912 = vmatpush1.msra.mxu0 0.0
    %4913 = vmatprep.subr.mxu0 0.0
    %4914 = vmatpush1.msra.mxu0 0.0
    %4915 = vmatprep.subr.mxu0 0.0
    %4916 = vmatpush1.msra.mxu0 0.0
    %4917 = vmatprep.subr.mxu0 0.0
    %4918 = vmatpush1.msra.mxu0 0.0
    %4919 = vmatprep.subr.mxu0 0.0
    %4920 = vmatpush1.msra.mxu0 0.0
    %4921 = vmatprep.subr.mxu0 0.0
    %4922 = vmatpush1.msra.mxu0 0.0
    %4923 = vmatprep.subr.mxu0 0.0
    %4924 = vmatpush1.msra.mxu0 0.0
    %4925 = vmatprep.subr.mxu0 0.0
    %4926 = vmatpush1.msra.mxu0 0.0
    %4927 = vmatprep.mubr.f32.mxu0 0.0
    %v4928 = vand.u32 %v4582, 4294901760
    %v4929 = vsub.f32 %v4582, %v4928
    %v4930 = vand.u32 %v4929, 4294901760
    %4931 = vmatmul.mubr.f32.gmra.mrb[0].mxu0 %v4930
    %v4932 = vpop.f32.mrb[0].mxu0
    %v4933 = vadd.f32 %v4849, %v4932
    %v4934 = vpop.f32.mrb[0].mxu0
    %4935 = vmatprep.mubr.f32.mxu0 0.0
    %v4936 = vand.u32 %v4584, 4294901760
    %v4937 = vsub.f32 %v4584, %v4936
    %v4938 = vand.u32 %v4937, 4294901760
    %4939 = vmatmul.mubr.f32.gmra.mrb[0].mxu0 %v4938
    %v4940 = vpop.f32.mrb[0].mxu0
    %v4941 = vadd.f32 %v4856, %v4940
    %v4942 = vpop.f32.mrb[0].mxu0
    %4943 = vdwg.mxu0
    %4944 = vmatprep.subr.mxu0 0.0
    %v4945 = vand.u32 %v139, 4294901760
    %v4946 = vsub.f32 %v139, %v4945
    %v4947 = vand.u32 %v4946, 4294901760
    %4948 = vmatpush1.msra.mxu0 %v4947
    %4949 = vmatprep.subr.mxu0 0.0
    %v4950 = vand.u32 %v140, 4294901760
    %v4951 = vsub.f32 %v140, %v4950
    %v4952 = vand.u32 %v4951, 4294901760
    %4953 = vmatpush1.msra.mxu0 %v4952
    %4954 = vmatprep.subr.mxu0 0.0
    %v4955 = vand.u32 %v141, 4294901760
    %v4956 = vsub.f32 %v141, %v4955
    %v4957 = vand.u32 %v4956, 4294901760
    %4958 = vmatpush1.msra.mxu0 %v4957
    %4959 = vmatprep.subr.mxu0 0.0
    %v4960 = vand.u32 %v142, 4294901760
    %v4961 = vsub.f32 %v142, %v4960
    %v4962 = vand.u32 %v4961, 4294901760
    %4963 = vmatpush1.msra.mxu0 %v4962
    %4964 = vmatprep.subr.mxu0 0.0
    %4965 = vmatpush1.msra.mxu0 0.0
    %4966 = vmatprep.subr.mxu0 0.0
    %4967 = vmatpush1.msra.mxu0 0.0
    %4968 = vmatprep.subr.mxu0 0.0
    %4969 = vmatpush1.msra.mxu0 0.0
    %4970 = vmatprep.subr.mxu0 0.0
    %4971 = vmatpush1.msra.mxu0 0.0
    %4972 = vmatprep.subr.mxu0 0.0
    %4973 = vmatpush1.msra.mxu0 0.0
    %4974 = vmatprep.subr.mxu0 0.0
    %4975 = vmatpush1.msra.mxu0 0.0
    %4976 = vmatprep.subr.mxu0 0.0
    %4977 = vmatpush1.msra.mxu0 0.0
    %4978 = vmatprep.subr.mxu0 0.0
    %4979 = vmatpush1.msra.mxu0 0.0
    %4980 = vmatprep.subr.mxu0 0.0
    %4981 = vmatpush1.msra.mxu0 0.0
    %4982 = vmatprep.subr.mxu0 0.0
    %4983 = vmatpush1.msra.mxu0 0.0
    %4984 = vmatprep.subr.mxu0 0.0
    %4985 = vmatpush1.msra.mxu0 0.0
    %4986 = vmatprep.subr.mxu0 0.0
    %4987 = vmatpush1.msra.mxu0 0.0
    %4988 = vmatprep.subr.mxu0 0.0
    %4989 = vmatpush1.msra.mxu0 0.0
    %4990 = vmatprep.subr.mxu0 0.0
    %4991 = vmatpush1.msra.mxu0 0.0
    %4992 = vmatprep.subr.mxu0 0.0
    %4993 = vmatpush1.msra.mxu0 0.0
    %4994 = vmatprep.subr.mxu0 0.0
    %4995 = vmatpush1.msra.mxu0 0.0
    %4996 = vmatprep.subr.mxu0 0.0
    %4997 = vmatpush1.msra.mxu0 0.0
    %4998 = vmatprep.subr.mxu0 0.0
    %4999 = vmatpush1.msra.mxu0 0.0
    %5000 = vmatprep.subr.mxu0 0.0
    %5001 = vmatpush1.msra.mxu0 0.0
    %5002 = vmatprep.subr.mxu0 0.0
    %5003 = vmatpush1.msra.mxu0 0.0
    %5004 = vmatprep.subr.mxu0 0.0
    %5005 = vmatpush1.msra.mxu0 0.0
    %5006 = vmatprep.subr.mxu0 0.0
    %5007 = vmatpush1.msra.mxu0 0.0
    %5008 = vmatprep.subr.mxu0 0.0
    %5009 = vmatpush1.msra.mxu0 0.0
    %5010 = vmatprep.subr.mxu0 0.0
    %5011 = vmatpush1.msra.mxu0 0.0
    %5012 = vmatprep.subr.mxu0 0.0
    %5013 = vmatpush1.msra.mxu0 0.0
    %5014 = vmatprep.subr.mxu0 0.0
    %5015 = vmatpush1.msra.mxu0 0.0
    %5016 = vmatprep.subr.mxu0 0.0
    %5017 = vmatpush1.msra.mxu0 0.0
    %5018 = vmatprep.subr.mxu0 0.0
    %5019 = vmatpush1.msra.mxu0 0.0
    %5020 = vmatprep.mubr.f32.mxu0 0.0
    %v5021 = vand.u32 %v4582, 4294901760
    %5022 = vmatmul.mubr.f32.gmra.mrb[0].mxu0 %v5021
    %v5023 = vpop.f32.mrb[0].mxu0
    %v5024 = vadd.f32 %v4933, %v5023
    %v5025 = vpop.f32.mrb[0].mxu0
    %5026 = vmatprep.mubr.f32.mxu0 0.0
    %v5027 = vand.u32 %v4584, 4294901760
    %5028 = vmatmul.mubr.f32.gmra.mrb[0].mxu0 %v5027
    %v5029 = vpop.f32.mrb[0].mxu0
    %v5030 = vadd.f32 %v4941, %v5029
    %v5031 = vpop.f32.mrb[0].mxu0
    %5032 = vdwg.mxu0
    %5033 = vmatprep.subr.mxu0 0.0
    %v5034 = vand.u32 %v139, 4294901760
    %5035 = vmatpush1.msra.mxu0 %v5034
    %5036 = vmatprep.subr.mxu0 0.0
    %v5037 = vand.u32 %v140, 4294901760
    %5038 = vmatpush1.msra.mxu0 %v5037
    %5039 = vmatprep.subr.mxu0 0.0
    %v5040 = vand.u32 %v141, 4294901760
    %5041 = vmatpush1.msra.mxu0 %v5040
    %5042 = vmatprep.subr.mxu0 0.0
    %v5043 = vand.u32 %v142, 4294901760
    %5044 = vmatpush1.msra.mxu0 %v5043
    %5045 = vmatprep.subr.mxu0 0.0
    %5046 = vmatpush1.msra.mxu0 0.0
    %5047 = vmatprep.subr.mxu0 0.0
    %5048 = vmatpush1.msra.mxu0 0.0
    %5049 = vmatprep.subr.mxu0 0.0
    %5050 = vmatpush1.msra.mxu0 0.0
    %5051 = vmatprep.subr.mxu0 0.0
    %5052 = vmatpush1.msra.mxu0 0.0
    %5053 = vmatprep.subr.mxu0 0.0
    %5054 = vmatpush1.msra.mxu0 0.0
    %5055 = vmatprep.subr.mxu0 0.0
    %5056 = vmatpush1.msra.mxu0 0.0
    %5057 = vmatprep.subr.mxu0 0.0
    %5058 = vmatpush1.msra.mxu0 0.0
    %5059 = vmatprep.subr.mxu0 0.0
    %5060 = vmatpush1.msra.mxu0 0.0
    %5061 = vmatprep.subr.mxu0 0.0
    %5062 = vmatpush1.msra.mxu0 0.0
    %5063 = vmatprep.subr.mxu0 0.0
    %5064 = vmatpush1.msra.mxu0 0.0
    %5065 = vmatprep.subr.mxu0 0.0
    %5066 = vmatpush1.msra.mxu0 0.0
    %5067 = vmatprep.subr.mxu0 0.0
    %5068 = vmatpush1.msra.mxu0 0.0
    %5069 = vmatprep.subr.mxu0 0.0
    %5070 = vmatpush1.msra.mxu0 0.0
    %5071 = vmatprep.subr.mxu0 0.0
    %5072 = vmatpush1.msra.mxu0 0.0
    %5073 = vmatprep.subr.mxu0 0.0
    %5074 = vmatpush1.msra.mxu0 0.0
    %5075 = vmatprep.subr.mxu0 0.0
    %5076 = vmatpush1.msra.mxu0 0.0
    %5077 = vmatprep.subr.mxu0 0.0
    %5078 = vmatpush1.msra.mxu0 0.0
    %5079 = vmatprep.subr.mxu0 0.0
    %5080 = vmatpush1.msra.mxu0 0.0
    %5081 = vmatprep.subr.mxu0 0.0
    %5082 = vmatpush1.msra.mxu0 0.0
    %5083 = vmatprep.subr.mxu0 0.0
    %5084 = vmatpush1.msra.mxu0 0.0
    %5085 = vmatprep.subr.mxu0 0.0
    %5086 = vmatpush1.msra.mxu0 0.0
    %5087 = vmatprep.subr.mxu0 0.0
    %5088 = vmatpush1.msra.mxu0 0.0
    %5089 = vmatprep.subr.mxu0 0.0
    %5090 = vmatpush1.msra.mxu0 0.0
    %5091 = vmatprep.subr.mxu0 0.0
    %5092 = vmatpush1.msra.mxu0 0.0
    %5093 = vmatprep.subr.mxu0 0.0
    %5094 = vmatpush1.msra.mxu0 0.0
    %5095 = vmatprep.subr.mxu0 0.0
    %5096 = vmatpush1.msra.mxu0 0.0
    %5097 = vmatprep.subr.mxu0 0.0
    %5098 = vmatpush1.msra.mxu0 0.0
    %5099 = vmatprep.subr.mxu0 0.0
    %5100 = vmatpush1.msra.mxu0 0.0
    %5101 = vmatprep.mubr.f32.mxu0 0.0
    %v5102 = vand.u32 %v4582, 4294901760
    %5103 = vmatmul.mubr.f32.gmra.mrb[0].mxu0 %v5102
    %v5104 = vpop.f32.mrb[0].mxu0
    %v5105 = vadd.f32 %v5024, %v5104
    %v5106 = vpop.f32.mrb[0].mxu0
    %5107 = vmatprep.mubr.f32.mxu0 0.0
    %v5108 = vand.u32 %v4584, 4294901760
    %5109 = vmatmul.mubr.f32.gmra.mrb[0].mxu0 %v5108
    %v5110 = vpop.f32.mrb[0].mxu0
    %v5111 = vadd.f32 %v5030, %v5110
    %v5112 = vpop.f32.mrb[0].mxu0
    %5113 = vdwg.mxu0
    %v5114 = vmul.f32 %v5105, 0.17677669
    %v5115 = vmul.f32 %v5111, 0.17677669
    %v5117 = vsel %vm151, %v5114, 0
    %5119 = vmatprep.subr.mxu0 0.0
    %v5120 = vand.u32 %v1429, 4294901760
    %5121 = vmatpush1.xpose.msra.mxu0 %v5120
    %5122 = vmatprep.subr.mxu0 0.0
    %v5123 = vand.u32 %v1432, 4294901760
    %5124 = vmatpush1.xpose.msra.mxu0 %v5123
    %5125 = vmatprep.subr.mxu0 0.0
    %5126 = vmatpush1.xpose.msra.mxu0 0.0
    %5127 = vmatprep.subr.mxu0 0.0
    %5128 = vmatpush1.xpose.msra.mxu0 0.0
    %5129 = vmatprep.subr.mxu0 0.0
    %5130 = vmatpush1.xpose.msra.mxu0 0.0
    %5131 = vmatprep.subr.mxu0 0.0
    %5132 = vmatpush1.xpose.msra.mxu0 0.0
    %5133 = vmatprep.subr.mxu0 0.0
    %5134 = vmatpush1.xpose.msra.mxu0 0.0
    %5135 = vmatprep.subr.mxu0 0.0
    %5136 = vmatpush1.xpose.msra.mxu0 0.0
    %5137 = vmatprep.subr.mxu0 0.0
    %5138 = vmatpush1.xpose.msra.mxu0 0.0
    %5139 = vmatprep.subr.mxu0 0.0
    %5140 = vmatpush1.xpose.msra.mxu0 0.0
    %5141 = vmatprep.subr.mxu0 0.0
    %5142 = vmatpush1.xpose.msra.mxu0 0.0
    %5143 = vmatprep.subr.mxu0 0.0
    %5144 = vmatpush1.xpose.msra.mxu0 0.0
    %5145 = vmatprep.subr.mxu0 0.0
    %5146 = vmatpush1.xpose.msra.mxu0 0.0
    %5147 = vmatprep.subr.mxu0 0.0
    %5148 = vmatpush1.xpose.msra.mxu0 0.0
    %5149 = vmatprep.subr.mxu0 0.0
    %5150 = vmatpush1.xpose.msra.mxu0 0.0
    %5151 = vmatprep.subr.mxu0 0.0
    %5152 = vmatpush1.xpose.msra.mxu0 0.0
    %5153 = vmatprep.subr.mxu0 0.0
    %5154 = vmatpush1.xpose.msra.mxu0 0.0
    %5155 = vmatprep.subr.mxu0 0.0
    %5156 = vmatpush1.xpose.msra.mxu0 0.0
    %5157 = vmatprep.subr.mxu0 0.0
    %5158 = vmatpush1.xpose.msra.mxu0 0.0
    %5159 = vmatprep.subr.mxu0 0.0
    %5160 = vmatpush1.xpose.msra.mxu0 0.0
    %5161 = vmatprep.subr.mxu0 0.0
    %5162 = vmatpush1.xpose.msra.mxu0 0.0
    %5163 = vmatprep.subr.mxu0 0.0
    %5164 = vmatpush1.xpose.msra.mxu0 0.0
    %5165 = vmatprep.subr.mxu0 0.0
    %5166 = vmatpush1.xpose.msra.mxu0 0.0
    %5167 = vmatprep.subr.mxu0 0.0
    %5168 = vmatpush1.xpose.msra.mxu0 0.0
    %5169 = vmatprep.subr.mxu0 0.0
    %5170 = vmatpush1.xpose.msra.mxu0 0.0
    %5171 = vmatprep.subr.mxu0 0.0
    %5172 = vmatpush1.xpose.msra.mxu0 0.0
    %5173 = vmatprep.subr.mxu0 0.0
    %5174 = vmatpush1.xpose.msra.mxu0 0.0
    %5175 = vmatprep.subr.mxu0 0.0
    %5176 = vmatpush1.xpose.msra.mxu0 0.0
    %5177 = vmatprep.subr.mxu0 0.0
    %5178 = vmatpush1.xpose.msra.mxu0 0.0
    %5179 = vmatprep.subr.mxu0 0.0
    %5180 = vmatpush1.xpose.msra.mxu0 0.0
    %5181 = vmatprep.subr.mxu0 0.0
    %5182 = vmatpush1.xpose.msra.mxu0 0.0
    %5183 = vmatprep.subr.mxu0 0.0
    %5184 = vmatpush1.xpose.msra.mxu0 0.0
    %5185 = vmatprep.mubr.f32.mxu0 0.0
    %v5186 = vand.u32 %v5117, 4294901760
    %v5187 = vsub.f32 %v5117, %v5186
    %v5188 = vand.u32 %v5187, 4294901760
    %v5189 = vsub.f32 %v5187, %v5188
    %v5190 = vand.u32 %v5189, 4294901760
    %5191 = vmatmul.mubr.f32.gmra.mrb[0].mxu0 %v5190
    %v5192 = vpop.f32.mrb[0].mxu0
    %v5193 = vadd.f32 0.0, %v5192
    %v5194 = vpop.f32.mrb[0].mxu0
    %5195 = vdwg.mxu0
    %5196 = vmatprep.subr.mxu0 0.0
    %v5197 = vand.u32 %v1429, 4294901760
    %v5198 = vsub.f32 %v1429, %v5197
    %v5199 = vand.u32 %v5198, 4294901760
    %v5200 = vsub.f32 %v5198, %v5199
    %v5201 = vand.u32 %v5200, 4294901760
    %5202 = vmatpush1.xpose.msra.mxu0 %v5201
    %5203 = vmatprep.subr.mxu0 0.0
    %v5204 = vand.u32 %v1432, 4294901760
    %v5205 = vsub.f32 %v1432, %v5204
    %v5206 = vand.u32 %v5205, 4294901760
    %v5207 = vsub.f32 %v5205, %v5206
    %v5208 = vand.u32 %v5207, 4294901760
    %5209 = vmatpush1.xpose.msra.mxu0 %v5208
    %5210 = vmatprep.subr.mxu0 0.0
    %5211 = vmatpush1.xpose.msra.mxu0 0.0
    %5212 = vmatprep.subr.mxu0 0.0
    %5213 = vmatpush1.xpose.msra.mxu0 0.0
    %5214 = vmatprep.subr.mxu0 0.0
    %5215 = vmatpush1.xpose.msra.mxu0 0.0
    %5216 = vmatprep.subr.mxu0 0.0
    %5217 = vmatpush1.xpose.msra.mxu0 0.0
    %5218 = vmatprep.subr.mxu0 0.0
    %5219 = vmatpush1.xpose.msra.mxu0 0.0
    %5220 = vmatprep.subr.mxu0 0.0
    %5221 = vmatpush1.xpose.msra.mxu0 0.0
    %5222 = vmatprep.subr.mxu0 0.0
    %5223 = vmatpush1.xpose.msra.mxu0 0.0
    %5224 = vmatprep.subr.mxu0 0.0
    %5225 = vmatpush1.xpose.msra.mxu0 0.0
    %5226 = vmatprep.subr.mxu0 0.0
    %5227 = vmatpush1.xpose.msra.mxu0 0.0
    %5228 = vmatprep.subr.mxu0 0.0
    %5229 = vmatpush1.xpose.msra.mxu0 0.0
    %5230 = vmatprep.subr.mxu0 0.0
    %5231 = vmatpush1.xpose.msra.mxu0 0.0
    %5232 = vmatprep.subr.mxu0 0.0
    %5233 = vmatpush1.xpose.msra.mxu0 0.0
    %5234 = vmatprep.subr.mxu0 0.0
    %5235 = vmatpush1.xpose.msra.mxu0 0.0
    %5236 = vmatprep.subr.mxu0 0.0
    %5237 = vmatpush1.xpose.msra.mxu0 0.0
    %5238 = vmatprep.subr.mxu0 0.0
    %5239 = vmatpush1.xpose.msra.mxu0 0.0
    %5240 = vmatprep.subr.mxu0 0.0
    %5241 = vmatpush1.xpose.msra.mxu0 0.0
    %5242 = vmatprep.subr.mxu0 0.0
    %5243 = vmatpush1.xpose.msra.mxu0 0.0
    %5244 = vmatprep.subr.mxu0 0.0
    %5245 = vmatpush1.xpose.msra.mxu0 0.0
    %5246 = vmatprep.subr.mxu0 0.0
    %5247 = vmatpush1.xpose.msra.mxu0 0.0
    %5248 = vmatprep.subr.mxu0 0.0
    %5249 = vmatpush1.xpose.msra.mxu0 0.0
    %5250 = vmatprep.subr.mxu0 0.0
    %5251 = vmatpush1.xpose.msra.mxu0 0.0
    %5252 = vmatprep.subr.mxu0 0.0
    %5253 = vmatpush1.xpose.msra.mxu0 0.0
    %5254 = vmatprep.subr.mxu0 0.0
    %5255 = vmatpush1.xpose.msra.mxu0 0.0
    %5256 = vmatprep.subr.mxu0 0.0
    %5257 = vmatpush1.xpose.msra.mxu0 0.0
    %5258 = vmatprep.subr.mxu0 0.0
    %5259 = vmatpush1.xpose.msra.mxu0 0.0
    %5260 = vmatprep.subr.mxu0 0.0
    %5261 = vmatpush1.xpose.msra.mxu0 0.0
    %5262 = vmatprep.subr.mxu0 0.0
    %5263 = vmatpush1.xpose.msra.mxu0 0.0
    %5264 = vmatprep.subr.mxu0 0.0
    %5265 = vmatpush1.xpose.msra.mxu0 0.0
    %5266 = vmatprep.subr.mxu0 0.0
    %5267 = vmatpush1.xpose.msra.mxu0 0.0
    %5268 = vmatprep.subr.mxu0 0.0
    %5269 = vmatpush1.xpose.msra.mxu0 0.0
    %5270 = vmatprep.mubr.f32.mxu0 0.0
    %v5271 = vand.u32 %v5117, 4294901760
    %5272 = vmatmul.mubr.f32.gmra.mrb[0].mxu0 %v5271
    %v5273 = vpop.f32.mrb[0].mxu0
    %v5274 = vadd.f32 %v5193, %v5273
    %v5275 = vpop.f32.mrb[0].mxu0
    %5276 = vdwg.mxu0
    %5277 = vmatprep.subr.mxu0 0.0
    %v5278 = vand.u32 %v1429, 4294901760
    %v5279 = vsub.f32 %v1429, %v5278
    %5280 = vmatpush1.xpose.msra.mxu0 %v5279
    %5281 = vmatprep.subr.mxu0 0.0
    %v5282 = vand.u32 %v1432, 4294901760
    %v5283 = vsub.f32 %v1432, %v5282
    %5284 = vmatpush1.xpose.msra.mxu0 %v5283
    %5285 = vmatprep.subr.mxu0 0.0
    %5286 = vmatpush1.xpose.msra.mxu0 0.0
    %5287 = vmatprep.subr.mxu0 0.0
    %5288 = vmatpush1.xpose.msra.mxu0 0.0
    %5289 = vmatprep.subr.mxu0 0.0
    %5290 = vmatpush1.xpose.msra.mxu0 0.0
    %5291 = vmatprep.subr.mxu0 0.0
    %5292 = vmatpush1.xpose.msra.mxu0 0.0
    %5293 = vmatprep.subr.mxu0 0.0
    %5294 = vmatpush1.xpose.msra.mxu0 0.0
    %5295 = vmatprep.subr.mxu0 0.0
    %5296 = vmatpush1.xpose.msra.mxu0 0.0
    %5297 = vmatprep.subr.mxu0 0.0
    %5298 = vmatpush1.xpose.msra.mxu0 0.0
    %5299 = vmatprep.subr.mxu0 0.0
    %5300 = vmatpush1.xpose.msra.mxu0 0.0
    %5301 = vmatprep.subr.mxu0 0.0
    %5302 = vmatpush1.xpose.msra.mxu0 0.0
    %5303 = vmatprep.subr.mxu0 0.0
    %5304 = vmatpush1.xpose.msra.mxu0 0.0
    %5305 = vmatprep.subr.mxu0 0.0
    %5306 = vmatpush1.xpose.msra.mxu0 0.0
    %5307 = vmatprep.subr.mxu0 0.0
    %5308 = vmatpush1.xpose.msra.mxu0 0.0
    %5309 = vmatprep.subr.mxu0 0.0
    %5310 = vmatpush1.xpose.msra.mxu0 0.0
    %5311 = vmatprep.subr.mxu0 0.0
    %5312 = vmatpush1.xpose.msra.mxu0 0.0
    %5313 = vmatprep.subr.mxu0 0.0
    %5314 = vmatpush1.xpose.msra.mxu0 0.0
    %5315 = vmatprep.subr.mxu0 0.0
    %5316 = vmatpush1.xpose.msra.mxu0 0.0
    %5317 = vmatprep.subr.mxu0 0.0
    %5318 = vmatpush1.xpose.msra.mxu0 0.0
    %5319 = vmatprep.subr.mxu0 0.0
    %5320 = vmatpush1.xpose.msra.mxu0 0.0
    %5321 = vmatprep.subr.mxu0 0.0
    %5322 = vmatpush1.xpose.msra.mxu0 0.0
    %5323 = vmatprep.subr.mxu0 0.0
    %5324 = vmatpush1.xpose.msra.mxu0 0.0
    %5325 = vmatprep.subr.mxu0 0.0
    %5326 = vmatpush1.xpose.msra.mxu0 0.0
    %5327 = vmatprep.subr.mxu0 0.0
    %5328 = vmatpush1.xpose.msra.mxu0 0.0
    %5329 = vmatprep.subr.mxu0 0.0
    %5330 = vmatpush1.xpose.msra.mxu0 0.0
    %5331 = vmatprep.subr.mxu0 0.0
    %5332 = vmatpush1.xpose.msra.mxu0 0.0
    %5333 = vmatprep.subr.mxu0 0.0
    %5334 = vmatpush1.xpose.msra.mxu0 0.0
    %5335 = vmatprep.subr.mxu0 0.0
    %5336 = vmatpush1.xpose.msra.mxu0 0.0
    %5337 = vmatprep.subr.mxu0 0.0
    %5338 = vmatpush1.xpose.msra.mxu0 0.0
    %5339 = vmatprep.subr.mxu0 0.0
    %5340 = vmatpush1.xpose.msra.mxu0 0.0
    %5341 = vmatprep.subr.mxu0 0.0
    %5342 = vmatpush1.xpose.msra.mxu0 0.0
    %5343 = vmatprep.subr.mxu0 0.0
    %5344 = vmatpush1.xpose.msra.mxu0 0.0
    %5345 = vmatprep.mubr.f32.mxu0 0.0
    %v5346 = vand.u32 %v5117, 4294901760
    %v5347 = vsub.f32 %v5117, %v5346
    %5348 = vmatmul.mubr.f32.gmra.mrb[0].mxu0 %v5347
    %v5349 = vpop.f32.mrb[0].mxu0
    %v5350 = vadd.f32 %v5274, %v5349
    %v5351 = vpop.f32.mrb[0].mxu0
    %5352 = vdwg.mxu0
    %5353 = vmatprep.subr.mxu0 0.0
    %v5354 = vand.u32 %v1429, 4294901760
    %5355 = vmatpush1.xpose.msra.mxu0 %v5354
    %5356 = vmatprep.subr.mxu0 0.0
    %v5357 = vand.u32 %v1432, 4294901760
    %5358 = vmatpush1.xpose.msra.mxu0 %v5357
    %5359 = vmatprep.subr.mxu0 0.0
    %5360 = vmatpush1.xpose.msra.mxu0 0.0
    %5361 = vmatprep.subr.mxu0 0.0
    %5362 = vmatpush1.xpose.msra.mxu0 0.0
    %5363 = vmatprep.subr.mxu0 0.0
    %5364 = vmatpush1.xpose.msra.mxu0 0.0
    %5365 = vmatprep.subr.mxu0 0.0
    %5366 = vmatpush1.xpose.msra.mxu0 0.0
    %5367 = vmatprep.subr.mxu0 0.0
    %5368 = vmatpush1.xpose.msra.mxu0 0.0
    %5369 = vmatprep.subr.mxu0 0.0
    %5370 = vmatpush1.xpose.msra.mxu0 0.0
    %5371 = vmatprep.subr.mxu0 0.0
    %5372 = vmatpush1.xpose.msra.mxu0 0.0
    %5373 = vmatprep.subr.mxu0 0.0
    %5374 = vmatpush1.xpose.msra.mxu0 0.0
    %5375 = vmatprep.subr.mxu0 0.0
    %5376 = vmatpush1.xpose.msra.mxu0 0.0
    %5377 = vmatprep.subr.mxu0 0.0
    %5378 = vmatpush1.xpose.msra.mxu0 0.0
    %5379 = vmatprep.subr.mxu0 0.0
    %5380 = vmatpush1.xpose.msra.mxu0 0.0
    %5381 = vmatprep.subr.mxu0 0.0
    %5382 = vmatpush1.xpose.msra.mxu0 0.0
    %5383 = vmatprep.subr.mxu0 0.0
    %5384 = vmatpush1.xpose.msra.mxu0 0.0
    %5385 = vmatprep.subr.mxu0 0.0
    %5386 = vmatpush1.xpose.msra.mxu0 0.0
    %5387 = vmatprep.subr.mxu0 0.0
    %5388 = vmatpush1.xpose.msra.mxu0 0.0
    %5389 = vmatprep.subr.mxu0 0.0
    %5390 = vmatpush1.xpose.msra.mxu0 0.0
    %5391 = vmatprep.subr.mxu0 0.0
    %5392 = vmatpush1.xpose.msra.mxu0 0.0
    %5393 = vmatprep.subr.mxu0 0.0
    %5394 = vmatpush1.xpose.msra.mxu0 0.0
    %5395 = vmatprep.subr.mxu0 0.0
    %5396 = vmatpush1.xpose.msra.mxu0 0.0
    %5397 = vmatprep.subr.mxu0 0.0
    %5398 = vmatpush1.xpose.msra.mxu0 0.0
    %5399 = vmatprep.subr.mxu0 0.0
    %5400 = vmatpush1.xpose.msra.mxu0 0.0
    %5401 = vmatprep.subr.mxu0 0.0
    %5402 = vmatpush1.xpose.msra.mxu0 0.0
    %5403 = vmatprep.subr.mxu0 0.0
    %5404 = vmatpush1.xpose.msra.mxu0 0.0
    %5405 = vmatprep.subr.mxu0 0.0
    %5406 = vmatpush1.xpose.msra.mxu0 0.0
    %5407 = vmatprep.subr.mxu0 0.0
    %5408 = vmatpush1.xpose.msra.mxu0 0.0
    %5409 = vmatprep.subr.mxu0 0.0
    %5410 = vmatpush1.xpose.msra.mxu0 0.0
    %5411 = vmatprep.subr.mxu0 0.0
    %5412 = vmatpush1.xpose.msra.mxu0 0.0
    %5413 = vmatprep.subr.mxu0 0.0
    %5414 = vmatpush1.xpose.msra.mxu0 0.0
    %5415 = vmatprep.subr.mxu0 0.0
    %5416 = vmatpush1.xpose.msra.mxu0 0.0
    %5417 = vmatprep.subr.mxu0 0.0
    %5418 = vmatpush1.xpose.msra.mxu0 0.0
    %5419 = vmatprep.mubr.f32.mxu0 0.0
    %v5420 = vand.u32 %v5117, 4294901760
    %v5421 = vsub.f32 %v5117, %v5420
    %v5422 = vand.u32 %v5421, 4294901760
    %5423 = vmatmul.mubr.f32.gmra.mrb[0].mxu0 %v5422
    %v5424 = vpop.f32.mrb[0].mxu0
    %v5425 = vadd.f32 %v5350, %v5424
    %v5426 = vpop.f32.mrb[0].mxu0
    %5427 = vdwg.mxu0
    %5428 = vmatprep.subr.mxu0 0.0
    %v5429 = vand.u32 %v1429, 4294901760
    %v5430 = vsub.f32 %v1429, %v5429
    %v5431 = vand.u32 %v5430, 4294901760
    %5432 = vmatpush1.xpose.msra.mxu0 %v5431
    %5433 = vmatprep.subr.mxu0 0.0
    %v5434 = vand.u32 %v1432, 4294901760
    %v5435 = vsub.f32 %v1432, %v5434
    %v5436 = vand.u32 %v5435, 4294901760
    %5437 = vmatpush1.xpose.msra.mxu0 %v5436
    %5438 = vmatprep.subr.mxu0 0.0
    %5439 = vmatpush1.xpose.msra.mxu0 0.0
    %5440 = vmatprep.subr.mxu0 0.0
    %5441 = vmatpush1.xpose.msra.mxu0 0.0
    %5442 = vmatprep.subr.mxu0 0.0
    %5443 = vmatpush1.xpose.msra.mxu0 0.0
    %5444 = vmatprep.subr.mxu0 0.0
    %5445 = vmatpush1.xpose.msra.mxu0 0.0
    %5446 = vmatprep.subr.mxu0 0.0
    %5447 = vmatpush1.xpose.msra.mxu0 0.0
    %5448 = vmatprep.subr.mxu0 0.0
    %5449 = vmatpush1.xpose.msra.mxu0 0.0
    %5450 = vmatprep.subr.mxu0 0.0
    %5451 = vmatpush1.xpose.msra.mxu0 0.0
    %5452 = vmatprep.subr.mxu0 0.0
    %5453 = vmatpush1.xpose.msra.mxu0 0.0
    %5454 = vmatprep.subr.mxu0 0.0
    %5455 = vmatpush1.xpose.msra.mxu0 0.0
    %5456 = vmatprep.subr.mxu0 0.0
    %5457 = vmatpush1.xpose.msra.mxu0 0.0
    %5458 = vmatprep.subr.mxu0 0.0
    %5459 = vmatpush1.xpose.msra.mxu0 0.0
    %5460 = vmatprep.subr.mxu0 0.0
    %5461 = vmatpush1.xpose.msra.mxu0 0.0
    %5462 = vmatprep.subr.mxu0 0.0
    %5463 = vmatpush1.xpose.msra.mxu0 0.0
    %5464 = vmatprep.subr.mxu0 0.0
    %5465 = vmatpush1.xpose.msra.mxu0 0.0
    %5466 = vmatprep.subr.mxu0 0.0
    %5467 = vmatpush1.xpose.msra.mxu0 0.0
    %5468 = vmatprep.subr.mxu0 0.0
    %5469 = vmatpush1.xpose.msra.mxu0 0.0
    %5470 = vmatprep.subr.mxu0 0.0
    %5471 = vmatpush1.xpose.msra.mxu0 0.0
    %5472 = vmatprep.subr.mxu0 0.0
    %5473 = vmatpush1.xpose.msra.mxu0 0.0
    %5474 = vmatprep.subr.mxu0 0.0
    %5475 = vmatpush1.xpose.msra.mxu0 0.0
    %5476 = vmatprep.subr.mxu0 0.0
    %5477 = vmatpush1.xpose.msra.mxu0 0.0
    %5478 = vmatprep.subr.mxu0 0.0
    %5479 = vmatpush1.xpose.msra.mxu0 0.0
    %5480 = vmatprep.subr.mxu0 0.0
    %5481 = vmatpush1.xpose.msra.mxu0 0.0
    %5482 = vmatprep.subr.mxu0 0.0
    %5483 = vmatpush1.xpose.msra.mxu0 0.0
    %5484 = vmatprep.subr.mxu0 0.0
    %5485 = vmatpush1.xpose.msra.mxu0 0.0
    %5486 = vmatprep.subr.mxu0 0.0
    %5487 = vmatpush1.xpose.msra.mxu0 0.0
    %5488 = vmatprep.subr.mxu0 0.0
    %5489 = vmatpush1.xpose.msra.mxu0 0.0
    %5490 = vmatprep.subr.mxu0 0.0
    %5491 = vmatpush1.xpose.msra.mxu0 0.0
    %5492 = vmatprep.subr.mxu0 0.0
    %5493 = vmatpush1.xpose.msra.mxu0 0.0
    %5494 = vmatprep.subr.mxu0 0.0
    %5495 = vmatpush1.xpose.msra.mxu0 0.0
    %5496 = vmatprep.subr.mxu0 0.0
    %5497 = vmatpush1.xpose.msra.mxu0 0.0
    %5498 = vmatprep.mubr.f32.mxu0 0.0
    %v5499 = vand.u32 %v5117, 4294901760
    %5500 = vmatmul.mubr.f32.gmra.mrb[0].mxu0 %v5499
    %v5501 = vpop.f32.mrb[0].mxu0
    %v5502 = vadd.f32 %v5425, %v5501
    %v5503 = vpop.f32.mrb[0].mxu0
    %5504 = vdwg.mxu0
    %5505 = vmatprep.subr.mxu0 0.0
    %v5506 = vand.u32 %v1429, 4294901760
    %5507 = vmatpush1.xpose.msra.mxu0 %v5506
    %5508 = vmatprep.subr.mxu0 0.0
    %v5509 = vand.u32 %v1432, 4294901760
    %5510 = vmatpush1.xpose.msra.mxu0 %v5509
    %5511 = vmatprep.subr.mxu0 0.0
    %5512 = vmatpush1.xpose.msra.mxu0 0.0
    %5513 = vmatprep.subr.mxu0 0.0
    %5514 = vmatpush1.xpose.msra.mxu0 0.0
    %5515 = vmatprep.subr.mxu0 0.0
    %5516 = vmatpush1.xpose.msra.mxu0 0.0
    %5517 = vmatprep.subr.mxu0 0.0
    %5518 = vmatpush1.xpose.msra.mxu0 0.0
    %5519 = vmatprep.subr.mxu0 0.0
    %5520 = vmatpush1.xpose.msra.mxu0 0.0
    %5521 = vmatprep.subr.mxu0 0.0
    %5522 = vmatpush1.xpose.msra.mxu0 0.0
    %5523 = vmatprep.subr.mxu0 0.0
    %5524 = vmatpush1.xpose.msra.mxu0 0.0
    %5525 = vmatprep.subr.mxu0 0.0
    %5526 = vmatpush1.xpose.msra.mxu0 0.0
    %5527 = vmatprep.subr.mxu0 0.0
    %5528 = vmatpush1.xpose.msra.mxu0 0.0
    %5529 = vmatprep.subr.mxu0 0.0
    %5530 = vmatpush1.xpose.msra.mxu0 0.0
    %5531 = vmatprep.subr.mxu0 0.0
    %5532 = vmatpush1.xpose.msra.mxu0 0.0
    %5533 = vmatprep.subr.mxu0 0.0
    %5534 = vmatpush1.xpose.msra.mxu0 0.0
    %5535 = vmatprep.subr.mxu0 0.0
    %5536 = vmatpush1.xpose.msra.mxu0 0.0
    %5537 = vmatprep.subr.mxu0 0.0
    %5538 = vmatpush1.xpose.msra.mxu0 0.0
    %5539 = vmatprep.subr.mxu0 0.0
    %5540 = vmatpush1.xpose.msra.mxu0 0.0
    %5541 = vmatprep.subr.mxu0 0.0
    %5542 = vmatpush1.xpose.msra.mxu0 0.0
    %5543 = vmatprep.subr.mxu0 0.0
    %5544 = vmatpush1.xpose.msra.mxu0 0.0
    %5545 = vmatprep.subr.mxu0 0.0
    %5546 = vmatpush1.xpose.msra.mxu0 0.0
    %5547 = vmatprep.subr.mxu0 0.0
    %5548 = vmatpush1.xpose.msra.mxu0 0.0
    %5549 = vmatprep.subr.mxu0 0.0
    %5550 = vmatpush1.xpose.msra.mxu0 0.0
    %5551 = vmatprep.subr.mxu0 0.0
    %5552 = vmatpush1.xpose.msra.mxu0 0.0
    %5553 = vmatprep.subr.mxu0 0.0
    %5554 = vmatpush1.xpose.msra.mxu0 0.0
    %5555 = vmatprep.subr.mxu0 0.0
    %5556 = vmatpush1.xpose.msra.mxu0 0.0
    %5557 = vmatprep.subr.mxu0 0.0
    %5558 = vmatpush1.xpose.msra.mxu0 0.0
    %5559 = vmatprep.subr.mxu0 0.0
    %5560 = vmatpush1.xpose.msra.mxu0 0.0
    %5561 = vmatprep.subr.mxu0 0.0
    %5562 = vmatpush1.xpose.msra.mxu0 0.0
    %5563 = vmatprep.subr.mxu0 0.0
    %5564 = vmatpush1.xpose.msra.mxu0 0.0
    %5565 = vmatprep.subr.mxu0 0.0
    %5566 = vmatpush1.xpose.msra.mxu0 0.0
    %5567 = vmatprep.subr.mxu0 0.0
    %5568 = vmatpush1.xpose.msra.mxu0 0.0
    %5569 = vmatprep.subr.mxu0 0.0
    %5570 = vmatpush1.xpose.msra.mxu0 0.0
    %5571 = vmatprep.mubr.f32.mxu0 0.0
    %v5572 = vand.u32 %v5117, 4294901760
    %5573 = vmatmul.mubr.f32.gmra.mrb[0].mxu0 %v5572
    %v5574 = vpop.f32.mrb[0].mxu0
    %v5575 = vadd.f32 %v5502, %v5574
    %v5576 = vpop.f32.mrb[0].mxu0
    %5577 = vdwg.mxu0
    %v5578 = vsel %vm1893, %v5575, -inf
    %v5579 = vrot.slane %v5578, 4
    %v5580 = vmax.f32 %v5578, %v5579
    %v5581 = vrot.slane %v5580, 2
    %v5582 = vmax.f32 %v5580, %v5581
    %v5583 = vrot.slane %v5582, 1
    %v5584 = vmax.f32 %v5582, %v5583
    %v5585 = vsub.f32 %v5575, %v5584
    %v5586 = vmul.f32 %v5585, 1.442695
    %v5587 = vpow.pop %v5586
    %v5588 = vsel %vm1893, %v5587, 0.0
    %v5589 = vrot.slane %v5588, 4
    %v5590 = vadd.f32 %v5588, %v5589
    %v5591 = vrot.slane %v5590, 2
    %v5592 = vadd.f32 %v5590, %v5591
    %v5593 = vrot.slane %v5592, 1
    %v5594 = vadd.f32 %v5592, %v5593
    %v5595 = vrcp.pop %v5594
    %v5596 = vmul.f32 %v5587, %v5595
    %v5597 = vsel %vm1893, %v5596, 0.0
    %5598 = vadd.xlane.f32.xlu0 %v5597
    %v5599 = vpop.xlane.xlu0 %5598
    %v5600 = vadd.f32 %v5599, 1e-08
    %v5601 = vrcp.pop %v5600
    %v5602 = vmul.f32 %v5596, %v5601
    %v5604 = vsel %vm1893, %v5602, 0
    %5606 = vmatprep.subr.mxu0 0.0
    %v5607 = vand.u32 %v1920, 4294901760
    %5608 = vmatpush1.msra.mxu0 %v5607
    %5609 = vmatprep.subr.mxu0 0.0
    %v5610 = vand.u32 %v1922, 4294901760
    %5611 = vmatpush1.msra.mxu0 %v5610
    %5612 = vmatprep.subr.mxu0 0.0
    %5613 = vmatpush1.msra.mxu0 0.0
    %5614 = vmatprep.subr.mxu0 0.0
    %5615 = vmatpush1.msra.mxu0 0.0
    %5616 = vmatprep.subr.mxu0 0.0
    %5617 = vmatpush1.msra.mxu0 0.0
    %5618 = vmatprep.subr.mxu0 0.0
    %5619 = vmatpush1.msra.mxu0 0.0
    %5620 = vmatprep.subr.mxu0 0.0
    %5621 = vmatpush1.msra.mxu0 0.0
    %5622 = vmatprep.subr.mxu0 0.0
    %5623 = vmatpush1.msra.mxu0 0.0
    %5624 = vmatprep.subr.mxu0 0.0
    %5625 = vmatpush1.msra.mxu0 0.0
    %5626 = vmatprep.subr.mxu0 0.0
    %5627 = vmatpush1.msra.mxu0 0.0
    %5628 = vmatprep.subr.mxu0 0.0
    %5629 = vmatpush1.msra.mxu0 0.0
    %5630 = vmatprep.subr.mxu0 0.0
    %5631 = vmatpush1.msra.mxu0 0.0
    %5632 = vmatprep.subr.mxu0 0.0
    %5633 = vmatpush1.msra.mxu0 0.0
    %5634 = vmatprep.subr.mxu0 0.0
    %5635 = vmatpush1.msra.mxu0 0.0
    %5636 = vmatprep.subr.mxu0 0.0
    %5637 = vmatpush1.msra.mxu0 0.0
    %5638 = vmatprep.subr.mxu0 0.0
    %5639 = vmatpush1.msra.mxu0 0.0
    %5640 = vmatprep.subr.mxu0 0.0
    %5641 = vmatpush1.msra.mxu0 0.0
    %5642 = vmatprep.subr.mxu0 0.0
    %5643 = vmatpush1.msra.mxu0 0.0
    %5644 = vmatprep.subr.mxu0 0.0
    %5645 = vmatpush1.msra.mxu0 0.0
    %5646 = vmatprep.subr.mxu0 0.0
    %5647 = vmatpush1.msra.mxu0 0.0
    %5648 = vmatprep.subr.mxu0 0.0
    %5649 = vmatpush1.msra.mxu0 0.0
    %5650 = vmatprep.subr.mxu0 0.0
    %5651 = vmatpush1.msra.mxu0 0.0
    %5652 = vmatprep.subr.mxu0 0.0
    %5653 = vmatpush1.msra.mxu0 0.0
    %5654 = vmatprep.subr.mxu0 0.0
    %5655 = vmatpush1.msra.mxu0 0.0
    %5656 = vmatprep.subr.mxu0 0.0
    %5657 = vmatpush1.msra.mxu0 0.0
    %5658 = vmatprep.subr.mxu0 0.0
    %5659 = vmatpush1.msra.mxu0 0.0
    %5660 = vmatprep.subr.mxu0 0.0
    %5661 = vmatpush1.msra.mxu0 0.0
    %5662 = vmatprep.subr.mxu0 0.0
    %5663 = vmatpush1.msra.mxu0 0.0
    %5664 = vmatprep.subr.mxu0 0.0
    %5665 = vmatpush1.msra.mxu0 0.0
    %5666 = vmatprep.subr.mxu0 0.0
    %5667 = vmatpush1.msra.mxu0 0.0
    %5668 = vmatprep.subr.mxu0 0.0
    %5669 = vmatpush1.msra.mxu0 0.0
    %5670 = vmatprep.subr.mxu0 0.0
    %5671 = vmatpush1.msra.mxu0 0.0
    %5672 = vmatprep.mubr.f32.mxu0 0.0
    %v5673 = vand.u32 %v5604, 4294901760
    %v5674 = vsub.f32 %v5604, %v5673
    %v5675 = vand.u32 %v5674, 4294901760
    %v5676 = vsub.f32 %v5674, %v5675
    %v5677 = vand.u32 %v5676, 4294901760
    %5678 = vmatmul.mubr.f32.gmra.mrb[0].mxu0 %v5677
    %v5679 = vpop.f32.mrb[0].mxu0
    %v5680 = vadd.f32 0.0, %v5679
    %v5681 = vpop.f32.mrb[0].mxu0
    %5682 = vdwg.mxu0
    %5683 = vmatprep.subr.mxu0 0.0
    %v5684 = vand.u32 %v1920, 4294901760
    %v5685 = vsub.f32 %v1920, %v5684
    %v5686 = vand.u32 %v5685, 4294901760
    %v5687 = vsub.f32 %v5685, %v5686
    %v5688 = vand.u32 %v5687, 4294901760
    %5689 = vmatpush1.msra.mxu0 %v5688
    %5690 = vmatprep.subr.mxu0 0.0
    %v5691 = vand.u32 %v1922, 4294901760
    %v5692 = vsub.f32 %v1922, %v5691
    %v5693 = vand.u32 %v5692, 4294901760
    %v5694 = vsub.f32 %v5692, %v5693
    %v5695 = vand.u32 %v5694, 4294901760
    %5696 = vmatpush1.msra.mxu0 %v5695
    %5697 = vmatprep.subr.mxu0 0.0
    %5698 = vmatpush1.msra.mxu0 0.0
    %5699 = vmatprep.subr.mxu0 0.0
    %5700 = vmatpush1.msra.mxu0 0.0
    %5701 = vmatprep.subr.mxu0 0.0
    %5702 = vmatpush1.msra.mxu0 0.0
    %5703 = vmatprep.subr.mxu0 0.0
    %5704 = vmatpush1.msra.mxu0 0.0
    %5705 = vmatprep.subr.mxu0 0.0
    %5706 = vmatpush1.msra.mxu0 0.0
    %5707 = vmatprep.subr.mxu0 0.0
    %5708 = vmatpush1.msra.mxu0 0.0
    %5709 = vmatprep.subr.mxu0 0.0
    %5710 = vmatpush1.msra.mxu0 0.0
    %5711 = vmatprep.subr.mxu0 0.0
    %5712 = vmatpush1.msra.mxu0 0.0
    %5713 = vmatprep.subr.mxu0 0.0
    %5714 = vmatpush1.msra.mxu0 0.0
    %5715 = vmatprep.subr.mxu0 0.0
    %5716 = vmatpush1.msra.mxu0 0.0
    %5717 = vmatprep.subr.mxu0 0.0
    %5718 = vmatpush1.msra.mxu0 0.0
    %5719 = vmatprep.subr.mxu0 0.0
    %5720 = vmatpush1.msra.mxu0 0.0
    %5721 = vmatprep.subr.mxu0 0.0
    %5722 = vmatpush1.msra.mxu0 0.0
    %5723 = vmatprep.subr.mxu0 0.0
    %5724 = vmatpush1.msra.mxu0 0.0
    %5725 = vmatprep.subr.mxu0 0.0
    %5726 = vmatpush1.msra.mxu0 0.0
    %5727 = vmatprep.subr.mxu0 0.0
    %5728 = vmatpush1.msra.mxu0 0.0
    %5729 = vmatprep.subr.mxu0 0.0
    %5730 = vmatpush1.msra.mxu0 0.0
    %5731 = vmatprep.subr.mxu0 0.0
    %5732 = vmatpush1.msra.mxu0 0.0
    %5733 = vmatprep.subr.mxu0 0.0
    %5734 = vmatpush1.msra.mxu0 0.0
    %5735 = vmatprep.subr.mxu0 0.0
    %5736 = vmatpush1.msra.mxu0 0.0
    %5737 = vmatprep.subr.mxu0 0.0
    %5738 = vmatpush1.msra.mxu0 0.0
    %5739 = vmatprep.subr.mxu0 0.0
    %5740 = vmatpush1.msra.mxu0 0.0
    %5741 = vmatprep.subr.mxu0 0.0
    %5742 = vmatpush1.msra.mxu0 0.0
    %5743 = vmatprep.subr.mxu0 0.0
    %5744 = vmatpush1.msra.mxu0 0.0
    %5745 = vmatprep.subr.mxu0 0.0
    %5746 = vmatpush1.msra.mxu0 0.0
    %5747 = vmatprep.subr.mxu0 0.0
    %5748 = vmatpush1.msra.mxu0 0.0
    %5749 = vmatprep.subr.mxu0 0.0
    %5750 = vmatpush1.msra.mxu0 0.0
    %5751 = vmatprep.subr.mxu0 0.0
    %5752 = vmatpush1.msra.mxu0 0.0
    %5753 = vmatprep.subr.mxu0 0.0
    %5754 = vmatpush1.msra.mxu0 0.0
    %5755 = vmatprep.subr.mxu0 0.0
    %5756 = vmatpush1.msra.mxu0 0.0
    %5757 = vmatprep.mubr.f32.mxu0 0.0
    %v5758 = vand.u32 %v5604, 4294901760
    %5759 = vmatmul.mubr.f32.gmra.mrb[0].mxu0 %v5758
    %v5760 = vpop.f32.mrb[0].mxu0
    %v5761 = vadd.f32 %v5680, %v5760
    %v5762 = vpop.f32.mrb[0].mxu0
    %5763 = vdwg.mxu0
    %5764 = vmatprep.subr.mxu0 0.0
    %v5765 = vand.u32 %v1920, 4294901760
    %v5766 = vsub.f32 %v1920, %v5765
    %5767 = vmatpush1.msra.mxu0 %v5766
    %5768 = vmatprep.subr.mxu0 0.0
    %v5769 = vand.u32 %v1922, 4294901760
    %v5770 = vsub.f32 %v1922, %v5769
    %5771 = vmatpush1.msra.mxu0 %v5770
    %5772 = vmatprep.subr.mxu0 0.0
    %5773 = vmatpush1.msra.mxu0 0.0
    %5774 = vmatprep.subr.mxu0 0.0
    %5775 = vmatpush1.msra.mxu0 0.0
    %5776 = vmatprep.subr.mxu0 0.0
    %5777 = vmatpush1.msra.mxu0 0.0
    %5778 = vmatprep.subr.mxu0 0.0
    %5779 = vmatpush1.msra.mxu0 0.0
    %5780 = vmatprep.subr.mxu0 0.0
    %5781 = vmatpush1.msra.mxu0 0.0
    %5782 = vmatprep.subr.mxu0 0.0
    %5783 = vmatpush1.msra.mxu0 0.0
    %5784 = vmatprep.subr.mxu0 0.0
    %5785 = vmatpush1.msra.mxu0 0.0
    %5786 = vmatprep.subr.mxu0 0.0
    %5787 = vmatpush1.msra.mxu0 0.0
    %5788 = vmatprep.subr.mxu0 0.0
    %5789 = vmatpush1.msra.mxu0 0.0
    %5790 = vmatprep.subr.mxu0 0.0
    %5791 = vmatpush1.msra.mxu0 0.0
    %5792 = vmatprep.subr.mxu0 0.0
    %5793 = vmatpush1.msra.mxu0 0.0
    %5794 = vmatprep.subr.mxu0 0.0
    %5795 = vmatpush1.msra.mxu0 0.0
    %5796 = vmatprep.subr.mxu0 0.0
    %5797 = vmatpush1.msra.mxu0 0.0
    %5798 = vmatprep.subr.mxu0 0.0
    %5799 = vmatpush1.msra.mxu0 0.0
    %5800 = vmatprep.subr.mxu0 0.0
    %5801 = vmatpush1.msra.mxu0 0.0
    %5802 = vmatprep.subr.mxu0 0.0
    %5803 = vmatpush1.msra.mxu0 0.0
    %5804 = vmatprep.subr.mxu0 0.0
    %5805 = vmatpush1.msra.mxu0 0.0
    %5806 = vmatprep.subr.mxu0 0.0
    %5807 = vmatpush1.msra.mxu0 0.0
    %5808 = vmatprep.subr.mxu0 0.0
    %5809 = vmatpush1.msra.mxu0 0.0
    %5810 = vmatprep.subr.mxu0 0.0
    %5811 = vmatpush1.msra.mxu0 0.0
    %5812 = vmatprep.subr.mxu0 0.0
    %5813 = vmatpush1.msra.mxu0 0.0
    %5814 = vmatprep.subr.mxu0 0.0
    %5815 = vmatpush1.msra.mxu0 0.0
    %5816 = vmatprep.subr.mxu0 0.0
    %5817 = vmatpush1.msra.mxu0 0.0
    %5818 = vmatprep.subr.mxu0 0.0
    %5819 = vmatpush1.msra.mxu0 0.0
    %5820 = vmatprep.subr.mxu0 0.0
    %5821 = vmatpush1.msra.mxu0 0.0
    %5822 = vmatprep.subr.mxu0 0.0
    %5823 = vmatpush1.msra.mxu0 0.0
    %5824 = vmatprep.subr.mxu0 0.0
    %5825 = vmatpush1.msra.mxu0 0.0
    %5826 = vmatprep.subr.mxu0 0.0
    %5827 = vmatpush1.msra.mxu0 0.0
    %5828 = vmatprep.subr.mxu0 0.0
    %5829 = vmatpush1.msra.mxu0 0.0
    %5830 = vmatprep.subr.mxu0 0.0
    %5831 = vmatpush1.msra.mxu0 0.0
    %5832 = vmatprep.mubr.f32.mxu0 0.0
    %v5833 = vand.u32 %v5604, 4294901760
    %v5834 = vsub.f32 %v5604, %v5833
    %5835 = vmatmul.mubr.f32.gmra.mrb[0].mxu0 %v5834
    %v5836 = vpop.f32.mrb[0].mxu0
    %v5837 = vadd.f32 %v5761, %v5836
    %v5838 = vpop.f32.mrb[0].mxu0
    %5839 = vdwg.mxu0
    %5840 = vmatprep.subr.mxu0 0.0
    %v5841 = vand.u32 %v1920, 4294901760
    %5842 = vmatpush1.msra.mxu0 %v5841
    %5843 = vmatprep.subr.mxu0 0.0
    %v5844 = vand.u32 %v1922, 4294901760
    %5845 = vmatpush1.msra.mxu0 %v5844
    %5846 = vmatprep.subr.mxu0 0.0
    %5847 = vmatpush1.msra.mxu0 0.0
    %5848 = vmatprep.subr.mxu0 0.0
    %5849 = vmatpush1.msra.mxu0 0.0
    %5850 = vmatprep.subr.mxu0 0.0
    %5851 = vmatpush1.msra.mxu0 0.0
    %5852 = vmatprep.subr.mxu0 0.0
    %5853 = vmatpush1.msra.mxu0 0.0
    %5854 = vmatprep.subr.mxu0 0.0
    %5855 = vmatpush1.msra.mxu0 0.0
    %5856 = vmatprep.subr.mxu0 0.0
    %5857 = vmatpush1.msra.mxu0 0.0
    %5858 = vmatprep.subr.mxu0 0.0
    %5859 = vmatpush1.msra.mxu0 0.0
    %5860 = vmatprep.subr.mxu0 0.0
    %5861 = vmatpush1.msra.mxu0 0.0
    %5862 = vmatprep.subr.mxu0 0.0
    %5863 = vmatpush1.msra.mxu0 0.0
    %5864 = vmatprep.subr.mxu0 0.0
    %5865 = vmatpush1.msra.mxu0 0.0
    %5866 = vmatprep.subr.mxu0 0.0
    %5867 = vmatpush1.msra.mxu0 0.0
    %5868 = vmatprep.subr.mxu0 0.0
    %5869 = vmatpush1.msra.mxu0 0.0
    %5870 = vmatprep.subr.mxu0 0.0
    %5871 = vmatpush1.msra.mxu0 0.0
    %5872 = vmatprep.subr.mxu0 0.0
    %5873 = vmatpush1.msra.mxu0 0.0
    %5874 = vmatprep.subr.mxu0 0.0
    %5875 = vmatpush1.msra.mxu0 0.0
    %5876 = vmatprep.subr.mxu0 0.0
    %5877 = vmatpush1.msra.mxu0 0.0
    %5878 = vmatprep.subr.mxu0 0.0
    %5879 = vmatpush1.msra.mxu0 0.0
    %5880 = vmatprep.subr.mxu0 0.0
    %5881 = vmatpush1.msra.mxu0 0.0
    %5882 = vmatprep.subr.mxu0 0.0
    %5883 = vmatpush1.msra.mxu0 0.0
    %5884 = vmatprep.subr.mxu0 0.0
    %5885 = vmatpush1.msra.mxu0 0.0
    %5886 = vmatprep.subr.mxu0 0.0
    %5887 = vmatpush1.msra.mxu0 0.0
    %5888 = vmatprep.subr.mxu0 0.0
    %5889 = vmatpush1.msra.mxu0 0.0
    %5890 = vmatprep.subr.mxu0 0.0
    %5891 = vmatpush1.msra.mxu0 0.0
    %5892 = vmatprep.subr.mxu0 0.0
    %5893 = vmatpush1.msra.mxu0 0.0
    %5894 = vmatprep.subr.mxu0 0.0
    %5895 = vmatpush1.msra.mxu0 0.0
    %5896 = vmatprep.subr.mxu0 0.0
    %5897 = vmatpush1.msra.mxu0 0.0
    %5898 = vmatprep.subr.mxu0 0.0
    %5899 = vmatpush1.msra.mxu0 0.0
    %5900 = vmatprep.subr.mxu0 0.0
    %5901 = vmatpush1.msra.mxu0 0.0
    %5902 = vmatprep.subr.mxu0 0.0
    %5903 = vmatpush1.msra.mxu0 0.0
    %5904 = vmatprep.subr.mxu0 0.0
    %5905 = vmatpush1.msra.mxu0 0.0
    %5906 = vmatprep.mubr.f32.mxu0 0.0
    %v5907 = vand.u32 %v5604, 4294901760
    %v5908 = vsub.f32 %v5604, %v5907
    %v5909 = vand.u32 %v5908, 4294901760
    %5910 = vmatmul.mubr.f32.gmra.mrb[0].mxu0 %v5909
    %v5911 = vpop.f32.mrb[0].mxu0
    %v5912 = vadd.f32 %v5837, %v5911
    %v5913 = vpop.f32.mrb[0].mxu0
    %5914 = vdwg.mxu0
    %5915 = vmatprep.subr.mxu0 0.0
    %v5916 = vand.u32 %v1920, 4294901760
    %v5917 = vsub.f32 %v1920, %v5916
    %v5918 = vand.u32 %v5917, 4294901760
    %5919 = vmatpush1.msra.mxu0 %v5918
    %5920 = vmatprep.subr.mxu0 0.0
    %v5921 = vand.u32 %v1922, 4294901760
    %v5922 = vsub.f32 %v1922, %v5921
    %v5923 = vand.u32 %v5922, 4294901760
    %5924 = vmatpush1.msra.mxu0 %v5923
    %5925 = vmatprep.subr.mxu0 0.0
    %5926 = vmatpush1.msra.mxu0 0.0
    %5927 = vmatprep.subr.mxu0 0.0
    %5928 = vmatpush1.msra.mxu0 0.0
    %5929 = vmatprep.subr.mxu0 0.0
    %5930 = vmatpush1.msra.mxu0 0.0
    %5931 = vmatprep.subr.mxu0 0.0
    %5932 = vmatpush1.msra.mxu0 0.0
    %5933 = vmatprep.subr.mxu0 0.0
    %5934 = vmatpush1.msra.mxu0 0.0
    %5935 = vmatprep.subr.mxu0 0.0
    %5936 = vmatpush1.msra.mxu0 0.0
    %5937 = vmatprep.subr.mxu0 0.0
    %5938 = vmatpush1.msra.mxu0 0.0
    %5939 = vmatprep.subr.mxu0 0.0
    %5940 = vmatpush1.msra.mxu0 0.0
    %5941 = vmatprep.subr.mxu0 0.0
    %5942 = vmatpush1.msra.mxu0 0.0
    %5943 = vmatprep.subr.mxu0 0.0
    %5944 = vmatpush1.msra.mxu0 0.0
    %5945 = vmatprep.subr.mxu0 0.0
    %5946 = vmatpush1.msra.mxu0 0.0
    %5947 = vmatprep.subr.mxu0 0.0
    %5948 = vmatpush1.msra.mxu0 0.0
    %5949 = vmatprep.subr.mxu0 0.0
    %5950 = vmatpush1.msra.mxu0 0.0
    %5951 = vmatprep.subr.mxu0 0.0
    %5952 = vmatpush1.msra.mxu0 0.0
    %5953 = vmatprep.subr.mxu0 0.0
    %5954 = vmatpush1.msra.mxu0 0.0
    %5955 = vmatprep.subr.mxu0 0.0
    %5956 = vmatpush1.msra.mxu0 0.0
    %5957 = vmatprep.subr.mxu0 0.0
    %5958 = vmatpush1.msra.mxu0 0.0
    %5959 = vmatprep.subr.mxu0 0.0
    %5960 = vmatpush1.msra.mxu0 0.0
    %5961 = vmatprep.subr.mxu0 0.0
    %5962 = vmatpush1.msra.mxu0 0.0
    %5963 = vmatprep.subr.mxu0 0.0
    %5964 = vmatpush1.msra.mxu0 0.0
    %5965 = vmatprep.subr.mxu0 0.0
    %5966 = vmatpush1.msra.mxu0 0.0
    %5967 = vmatprep.subr.mxu0 0.0
    %5968 = vmatpush1.msra.mxu0 0.0
    %5969 = vmatprep.subr.mxu0 0.0
    %5970 = vmatpush1.msra.mxu0 0.0
    %5971 = vmatprep.subr.mxu0 0.0
    %5972 = vmatpush1.msra.mxu0 0.0
    %5973 = vmatprep.subr.mxu0 0.0
    %5974 = vmatpush1.msra.mxu0 0.0
    %5975 = vmatprep.subr.mxu0 0.0
    %5976 = vmatpush1.msra.mxu0 0.0
    %5977 = vmatprep.subr.mxu0 0.0
    %5978 = vmatpush1.msra.mxu0 0.0
    %5979 = vmatprep.subr.mxu0 0.0
    %5980 = vmatpush1.msra.mxu0 0.0
    %5981 = vmatprep.subr.mxu0 0.0
    %5982 = vmatpush1.msra.mxu0 0.0
    %5983 = vmatprep.subr.mxu0 0.0
    %5984 = vmatpush1.msra.mxu0 0.0
    %5985 = vmatprep.mubr.f32.mxu0 0.0
    %v5986 = vand.u32 %v5604, 4294901760
    %5987 = vmatmul.mubr.f32.gmra.mrb[0].mxu0 %v5986
    %v5988 = vpop.f32.mrb[0].mxu0
    %v5989 = vadd.f32 %v5912, %v5988
    %v5990 = vpop.f32.mrb[0].mxu0
    %5991 = vdwg.mxu0
    %5992 = vmatprep.subr.mxu0 0.0
    %v5993 = vand.u32 %v1920, 4294901760
    %5994 = vmatpush1.msra.mxu0 %v5993
    %5995 = vmatprep.subr.mxu0 0.0
    %v5996 = vand.u32 %v1922, 4294901760
    %5997 = vmatpush1.msra.mxu0 %v5996
    %5998 = vmatprep.subr.mxu0 0.0
    %5999 = vmatpush1.msra.mxu0 0.0
    %6000 = vmatprep.subr.mxu0 0.0
    %6001 = vmatpush1.msra.mxu0 0.0
    %6002 = vmatprep.subr.mxu0 0.0
    %6003 = vmatpush1.msra.mxu0 0.0
    %6004 = vmatprep.subr.mxu0 0.0
    %6005 = vmatpush1.msra.mxu0 0.0
    %6006 = vmatprep.subr.mxu0 0.0
    %6007 = vmatpush1.msra.mxu0 0.0
    %6008 = vmatprep.subr.mxu0 0.0
    %6009 = vmatpush1.msra.mxu0 0.0
    %6010 = vmatprep.subr.mxu0 0.0
    %6011 = vmatpush1.msra.mxu0 0.0
    %6012 = vmatprep.subr.mxu0 0.0
    %6013 = vmatpush1.msra.mxu0 0.0
    %6014 = vmatprep.subr.mxu0 0.0
    %6015 = vmatpush1.msra.mxu0 0.0
    %6016 = vmatprep.subr.mxu0 0.0
    %6017 = vmatpush1.msra.mxu0 0.0
    %6018 = vmatprep.subr.mxu0 0.0
    %6019 = vmatpush1.msra.mxu0 0.0
    %6020 = vmatprep.subr.mxu0 0.0
    %6021 = vmatpush1.msra.mxu0 0.0
    %6022 = vmatprep.subr.mxu0 0.0
    %6023 = vmatpush1.msra.mxu0 0.0
    %6024 = vmatprep.subr.mxu0 0.0
    %6025 = vmatpush1.msra.mxu0 0.0
    %6026 = vmatprep.subr.mxu0 0.0
    %6027 = vmatpush1.msra.mxu0 0.0
    %6028 = vmatprep.subr.mxu0 0.0
    %6029 = vmatpush1.msra.mxu0 0.0
    %6030 = vmatprep.subr.mxu0 0.0
    %6031 = vmatpush1.msra.mxu0 0.0
    %6032 = vmatprep.subr.mxu0 0.0
    %6033 = vmatpush1.msra.mxu0 0.0
    %6034 = vmatprep.subr.mxu0 0.0
    %6035 = vmatpush1.msra.mxu0 0.0
    %6036 = vmatprep.subr.mxu0 0.0
    %6037 = vmatpush1.msra.mxu0 0.0
    %6038 = vmatprep.subr.mxu0 0.0
    %6039 = vmatpush1.msra.mxu0 0.0
    %6040 = vmatprep.subr.mxu0 0.0
    %6041 = vmatpush1.msra.mxu0 0.0
    %6042 = vmatprep.subr.mxu0 0.0
    %6043 = vmatpush1.msra.mxu0 0.0
    %6044 = vmatprep.subr.mxu0 0.0
    %6045 = vmatpush1.msra.mxu0 0.0
    %6046 = vmatprep.subr.mxu0 0.0
    %6047 = vmatpush1.msra.mxu0 0.0
    %6048 = vmatprep.subr.mxu0 0.0
    %6049 = vmatpush1.msra.mxu0 0.0
    %6050 = vmatprep.subr.mxu0 0.0
    %6051 = vmatpush1.msra.mxu0 0.0
    %6052 = vmatprep.subr.mxu0 0.0
    %6053 = vmatpush1.msra.mxu0 0.0
    %6054 = vmatprep.subr.mxu0 0.0
    %6055 = vmatpush1.msra.mxu0 0.0
    %6056 = vmatprep.subr.mxu0 0.0
    %6057 = vmatpush1.msra.mxu0 0.0
    %6058 = vmatprep.mubr.f32.mxu0 0.0
    %v6059 = vand.u32 %v5604, 4294901760
    %6060 = vmatmul.mubr.f32.gmra.mrb[0].mxu0 %v6059
    %v6061 = vpop.f32.mrb[0].mxu0
    %v6062 = vadd.f32 %v5989, %v6061
    %v6063 = vpop.f32.mrb[0].mxu0
    %6064 = vdwg.mxu0
    %v6066 = vsel %vm151, %v5115, 0
    %6068 = vmatprep.subr.mxu0 0.0
    %v6069 = vand.u32 %v2391, 4294901760
    %6070 = vmatpush1.xpose.msra.mxu0 %v6069
    %6071 = vmatprep.subr.mxu0 0.0
    %v6072 = vand.u32 %v2394, 4294901760
    %6073 = vmatpush1.xpose.msra.mxu0 %v6072
    %6074 = vmatprep.subr.mxu0 0.0
    %6075 = vmatpush1.xpose.msra.mxu0 0.0
    %6076 = vmatprep.subr.mxu0 0.0
    %6077 = vmatpush1.xpose.msra.mxu0 0.0
    %6078 = vmatprep.subr.mxu0 0.0
    %6079 = vmatpush1.xpose.msra.mxu0 0.0
    %6080 = vmatprep.subr.mxu0 0.0
    %6081 = vmatpush1.xpose.msra.mxu0 0.0
    %6082 = vmatprep.subr.mxu0 0.0
    %6083 = vmatpush1.xpose.msra.mxu0 0.0
    %6084 = vmatprep.subr.mxu0 0.0
    %6085 = vmatpush1.xpose.msra.mxu0 0.0
    %6086 = vmatprep.subr.mxu0 0.0
    %6087 = vmatpush1.xpose.msra.mxu0 0.0
    %6088 = vmatprep.subr.mxu0 0.0
    %6089 = vmatpush1.xpose.msra.mxu0 0.0
    %6090 = vmatprep.subr.mxu0 0.0
    %6091 = vmatpush1.xpose.msra.mxu0 0.0
    %6092 = vmatprep.subr.mxu0 0.0
    %6093 = vmatpush1.xpose.msra.mxu0 0.0
    %6094 = vmatprep.subr.mxu0 0.0
    %6095 = vmatpush1.xpose.msra.mxu0 0.0
    %6096 = vmatprep.subr.mxu0 0.0
    %6097 = vmatpush1.xpose.msra.mxu0 0.0
    %6098 = vmatprep.subr.mxu0 0.0
    %6099 = vmatpush1.xpose.msra.mxu0 0.0
    %6100 = vmatprep.subr.mxu0 0.0
    %6101 = vmatpush1.xpose.msra.mxu0 0.0
    %6102 = vmatprep.subr.mxu0 0.0
    %6103 = vmatpush1.xpose.msra.mxu0 0.0
    %6104 = vmatprep.subr.mxu0 0.0
    %6105 = vmatpush1.xpose.msra.mxu0 0.0
    %6106 = vmatprep.subr.mxu0 0.0
    %6107 = vmatpush1.xpose.msra.mxu0 0.0
    %6108 = vmatprep.subr.mxu0 0.0
    %6109 = vmatpush1.xpose.msra.mxu0 0.0
    %6110 = vmatprep.subr.mxu0 0.0
    %6111 = vmatpush1.xpose.msra.mxu0 0.0
    %6112 = vmatprep.subr.mxu0 0.0
    %6113 = vmatpush1.xpose.msra.mxu0 0.0
    %6114 = vmatprep.subr.mxu0 0.0
    %6115 = vmatpush1.xpose.msra.mxu0 0.0
    %6116 = vmatprep.subr.mxu0 0.0
    %6117 = vmatpush1.xpose.msra.mxu0 0.0
    %6118 = vmatprep.subr.mxu0 0.0
    %6119 = vmatpush1.xpose.msra.mxu0 0.0
    %6120 = vmatprep.subr.mxu0 0.0
    %6121 = vmatpush1.xpose.msra.mxu0 0.0
    %6122 = vmatprep.subr.mxu0 0.0
    %6123 = vmatpush1.xpose.msra.mxu0 0.0
    %6124 = vmatprep.subr.mxu0 0.0
    %6125 = vmatpush1.xpose.msra.mxu0 0.0
    %6126 = vmatprep.subr.mxu0 0.0
    %6127 = vmatpush1.xpose.msra.mxu0 0.0
    %6128 = vmatprep.subr.mxu0 0.0
    %6129 = vmatpush1.xpose.msra.mxu0 0.0
    %6130 = vmatprep.subr.mxu0 0.0
    %6131 = vmatpush1.xpose.msra.mxu0 0.0
    %6132 = vmatprep.subr.mxu0 0.0
    %6133 = vmatpush1.xpose.msra.mxu0 0.0
    %6134 = vmatprep.mubr.f32.mxu0 0.0
    %v6135 = vand.u32 %v6066, 4294901760
    %v6136 = vsub.f32 %v6066, %v6135
    %v6137 = vand.u32 %v6136, 4294901760
    %v6138 = vsub.f32 %v6136, %v6137
    %v6139 = vand.u32 %v6138, 4294901760
    %6140 = vmatmul.mubr.f32.gmra.mrb[0].mxu0 %v6139
    %v6141 = vpop.f32.mrb[0].mxu0
    %v6142 = vadd.f32 0.0, %v6141
    %v6143 = vpop.f32.mrb[0].mxu0
    %6144 = vdwg.mxu0
    %6145 = vmatprep.subr.mxu0 0.0
    %v6146 = vand.u32 %v2391, 4294901760
    %v6147 = vsub.f32 %v2391, %v6146
    %v6148 = vand.u32 %v6147, 4294901760
    %v6149 = vsub.f32 %v6147, %v6148
    %v6150 = vand.u32 %v6149, 4294901760
    %6151 = vmatpush1.xpose.msra.mxu0 %v6150
    %6152 = vmatprep.subr.mxu0 0.0
    %v6153 = vand.u32 %v2394, 4294901760
    %v6154 = vsub.f32 %v2394, %v6153
    %v6155 = vand.u32 %v6154, 4294901760
    %v6156 = vsub.f32 %v6154, %v6155
    %v6157 = vand.u32 %v6156, 4294901760
    %6158 = vmatpush1.xpose.msra.mxu0 %v6157
    %6159 = vmatprep.subr.mxu0 0.0
    %6160 = vmatpush1.xpose.msra.mxu0 0.0
    %6161 = vmatprep.subr.mxu0 0.0
    %6162 = vmatpush1.xpose.msra.mxu0 0.0
    %6163 = vmatprep.subr.mxu0 0.0
    %6164 = vmatpush1.xpose.msra.mxu0 0.0
    %6165 = vmatprep.subr.mxu0 0.0
    %6166 = vmatpush1.xpose.msra.mxu0 0.0
    %6167 = vmatprep.subr.mxu0 0.0
    %6168 = vmatpush1.xpose.msra.mxu0 0.0
    %6169 = vmatprep.subr.mxu0 0.0
    %6170 = vmatpush1.xpose.msra.mxu0 0.0
    %6171 = vmatprep.subr.mxu0 0.0
    %6172 = vmatpush1.xpose.msra.mxu0 0.0
    %6173 = vmatprep.subr.mxu0 0.0
    %6174 = vmatpush1.xpose.msra.mxu0 0.0
    %6175 = vmatprep.subr.mxu0 0.0
    %6176 = vmatpush1.xpose.msra.mxu0 0.0
    %6177 = vmatprep.subr.mxu0 0.0
    %6178 = vmatpush1.xpose.msra.mxu0 0.0
    %6179 = vmatprep.subr.mxu0 0.0
    %6180 = vmatpush1.xpose.msra.mxu0 0.0
    %6181 = vmatprep.subr.mxu0 0.0
    %6182 = vmatpush1.xpose.msra.mxu0 0.0
    %6183 = vmatprep.subr.mxu0 0.0
    %6184 = vmatpush1.xpose.msra.mxu0 0.0
    %6185 = vmatprep.subr.mxu0 0.0
    %6186 = vmatpush1.xpose.msra.mxu0 0.0
    %6187 = vmatprep.subr.mxu0 0.0
    %6188 = vmatpush1.xpose.msra.mxu0 0.0
    %6189 = vmatprep.subr.mxu0 0.0
    %6190 = vmatpush1.xpose.msra.mxu0 0.0
    %6191 = vmatprep.subr.mxu0 0.0
    %6192 = vmatpush1.xpose.msra.mxu0 0.0
    %6193 = vmatprep.subr.mxu0 0.0
    %6194 = vmatpush1.xpose.msra.mxu0 0.0
    %6195 = vmatprep.subr.mxu0 0.0
    %6196 = vmatpush1.xpose.msra.mxu0 0.0
    %6197 = vmatprep.subr.mxu0 0.0
    %6198 = vmatpush1.xpose.msra.mxu0 0.0
    %6199 = vmatprep.subr.mxu0 0.0
    %6200 = vmatpush1.xpose.msra.mxu0 0.0
    %6201 = vmatprep.subr.mxu0 0.0
    %6202 = vmatpush1.xpose.msra.mxu0 0.0
    %6203 = vmatprep.subr.mxu0 0.0
    %6204 = vmatpush1.xpose.msra.mxu0 0.0
    %6205 = vmatprep.subr.mxu0 0.0
    %6206 = vmatpush1.xpose.msra.mxu0 0.0
    %6207 = vmatprep.subr.mxu0 0.0
    %6208 = vmatpush1.xpose.msra.mxu0 0.0
    %6209 = vmatprep.subr.mxu0 0.0
    %6210 = vmatpush1.xpose.msra.mxu0 0.0
    %6211 = vmatprep.subr.mxu0 0.0
    %6212 = vmatpush1.xpose.msra.mxu0 0.0
    %6213 = vmatprep.subr.mxu0 0.0
    %6214 = vmatpush1.xpose.msra.mxu0 0.0
    %6215 = vmatprep.subr.mxu0 0.0
    %6216 = vmatpush1.xpose.msra.mxu0 0.0
    %6217 = vmatprep.subr.mxu0 0.0
    %6218 = vmatpush1.xpose.msra.mxu0 0.0
    %6219 = vmatprep.mubr.f32.mxu0 0.0
    %v6220 = vand.u32 %v6066, 4294901760
    %6221 = vmatmul.mubr.f32.gmra.mrb[0].mxu0 %v6220
    %v6222 = vpop.f32.mrb[0].mxu0
    %v6223 = vadd.f32 %v6142, %v6222
    %v6224 = vpop.f32.mrb[0].mxu0
    %6225 = vdwg.mxu0
    %6226 = vmatprep.subr.mxu0 0.0
    %v6227 = vand.u32 %v2391, 4294901760
    %v6228 = vsub.f32 %v2391, %v6227
    %6229 = vmatpush1.xpose.msra.mxu0 %v6228
    %6230 = vmatprep.subr.mxu0 0.0
    %v6231 = vand.u32 %v2394, 4294901760
    %v6232 = vsub.f32 %v2394, %v6231
    %6233 = vmatpush1.xpose.msra.mxu0 %v6232
    %6234 = vmatprep.subr.mxu0 0.0
    %6235 = vmatpush1.xpose.msra.mxu0 0.0
    %6236 = vmatprep.subr.mxu0 0.0
    %6237 = vmatpush1.xpose.msra.mxu0 0.0
    %6238 = vmatprep.subr.mxu0 0.0
    %6239 = vmatpush1.xpose.msra.mxu0 0.0
    %6240 = vmatprep.subr.mxu0 0.0
    %6241 = vmatpush1.xpose.msra.mxu0 0.0
    %6242 = vmatprep.subr.mxu0 0.0
    %6243 = vmatpush1.xpose.msra.mxu0 0.0
    %6244 = vmatprep.subr.mxu0 0.0
    %6245 = vmatpush1.xpose.msra.mxu0 0.0
    %6246 = vmatprep.subr.mxu0 0.0
    %6247 = vmatpush1.xpose.msra.mxu0 0.0
    %6248 = vmatprep.subr.mxu0 0.0
    %6249 = vmatpush1.xpose.msra.mxu0 0.0
    %6250 = vmatprep.subr.mxu0 0.0
    %6251 = vmatpush1.xpose.msra.mxu0 0.0
    %6252 = vmatprep.subr.mxu0 0.0
    %6253 = vmatpush1.xpose.msra.mxu0 0.0
    %6254 = vmatprep.subr.mxu0 0.0
    %6255 = vmatpush1.xpose.msra.mxu0 0.0
    %6256 = vmatprep.subr.mxu0 0.0
    %6257 = vmatpush1.xpose.msra.mxu0 0.0
    %6258 = vmatprep.subr.mxu0 0.0
    %6259 = vmatpush1.xpose.msra.mxu0 0.0
    %6260 = vmatprep.subr.mxu0 0.0
    %6261 = vmatpush1.xpose.msra.mxu0 0.0
    %6262 = vmatprep.subr.mxu0 0.0
    %6263 = vmatpush1.xpose.msra.mxu0 0.0
    %6264 = vmatprep.subr.mxu0 0.0
    %6265 = vmatpush1.xpose.msra.mxu0 0.0
    %6266 = vmatprep.subr.mxu0 0.0
    %6267 = vmatpush1.xpose.msra.mxu0 0.0
    %6268 = vmatprep.subr.mxu0 0.0
    %6269 = vmatpush1.xpose.msra.mxu0 0.0
    %6270 = vmatprep.subr.mxu0 0.0
    %6271 = vmatpush1.xpose.msra.mxu0 0.0
    %6272 = vmatprep.subr.mxu0 0.0
    %6273 = vmatpush1.xpose.msra.mxu0 0.0
    %6274 = vmatprep.subr.mxu0 0.0
    %6275 = vmatpush1.xpose.msra.mxu0 0.0
    %6276 = vmatprep.subr.mxu0 0.0
    %6277 = vmatpush1.xpose.msra.mxu0 0.0
    %6278 = vmatprep.subr.mxu0 0.0
    %6279 = vmatpush1.xpose.msra.mxu0 0.0
    %6280 = vmatprep.subr.mxu0 0.0
    %6281 = vmatpush1.xpose.msra.mxu0 0.0
    %6282 = vmatprep.subr.mxu0 0.0
    %6283 = vmatpush1.xpose.msra.mxu0 0.0
    %6284 = vmatprep.subr.mxu0 0.0
    %6285 = vmatpush1.xpose.msra.mxu0 0.0
    %6286 = vmatprep.subr.mxu0 0.0
    %6287 = vmatpush1.xpose.msra.mxu0 0.0
    %6288 = vmatprep.subr.mxu0 0.0
    %6289 = vmatpush1.xpose.msra.mxu0 0.0
    %6290 = vmatprep.subr.mxu0 0.0
    %6291 = vmatpush1.xpose.msra.mxu0 0.0
    %6292 = vmatprep.subr.mxu0 0.0
    %6293 = vmatpush1.xpose.msra.mxu0 0.0
    %6294 = vmatprep.mubr.f32.mxu0 0.0
    %v6295 = vand.u32 %v6066, 4294901760
    %v6296 = vsub.f32 %v6066, %v6295
    %6297 = vmatmul.mubr.f32.gmra.mrb[0].mxu0 %v6296
    %v6298 = vpop.f32.mrb[0].mxu0
    %v6299 = vadd.f32 %v6223, %v6298
    %v6300 = vpop.f32.mrb[0].mxu0
    %6301 = vdwg.mxu0
    %6302 = vmatprep.subr.mxu0 0.0
    %v6303 = vand.u32 %v2391, 4294901760
    %6304 = vmatpush1.xpose.msra.mxu0 %v6303
    %6305 = vmatprep.subr.mxu0 0.0
    %v6306 = vand.u32 %v2394, 4294901760
    %6307 = vmatpush1.xpose.msra.mxu0 %v6306
    %6308 = vmatprep.subr.mxu0 0.0
    %6309 = vmatpush1.xpose.msra.mxu0 0.0
    %6310 = vmatprep.subr.mxu0 0.0
    %6311 = vmatpush1.xpose.msra.mxu0 0.0
    %6312 = vmatprep.subr.mxu0 0.0
    %6313 = vmatpush1.xpose.msra.mxu0 0.0
    %6314 = vmatprep.subr.mxu0 0.0
    %6315 = vmatpush1.xpose.msra.mxu0 0.0
    %6316 = vmatprep.subr.mxu0 0.0
    %6317 = vmatpush1.xpose.msra.mxu0 0.0
    %6318 = vmatprep.subr.mxu0 0.0
    %6319 = vmatpush1.xpose.msra.mxu0 0.0
    %6320 = vmatprep.subr.mxu0 0.0
    %6321 = vmatpush1.xpose.msra.mxu0 0.0
    %6322 = vmatprep.subr.mxu0 0.0
    %6323 = vmatpush1.xpose.msra.mxu0 0.0
    %6324 = vmatprep.subr.mxu0 0.0
    %6325 = vmatpush1.xpose.msra.mxu0 0.0
    %6326 = vmatprep.subr.mxu0 0.0
    %6327 = vmatpush1.xpose.msra.mxu0 0.0
    %6328 = vmatprep.subr.mxu0 0.0
    %6329 = vmatpush1.xpose.msra.mxu0 0.0
    %6330 = vmatprep.subr.mxu0 0.0
    %6331 = vmatpush1.xpose.msra.mxu0 0.0
    %6332 = vmatprep.subr.mxu0 0.0
    %6333 = vmatpush1.xpose.msra.mxu0 0.0
    %6334 = vmatprep.subr.mxu0 0.0
    %6335 = vmatpush1.xpose.msra.mxu0 0.0
    %6336 = vmatprep.subr.mxu0 0.0
    %6337 = vmatpush1.xpose.msra.mxu0 0.0
    %6338 = vmatprep.subr.mxu0 0.0
    %6339 = vmatpush1.xpose.msra.mxu0 0.0
    %6340 = vmatprep.subr.mxu0 0.0
    %6341 = vmatpush1.xpose.msra.mxu0 0.0
    %6342 = vmatprep.subr.mxu0 0.0
    %6343 = vmatpush1.xpose.msra.mxu0 0.0
    %6344 = vmatprep.subr.mxu0 0.0
    %6345 = vmatpush1.xpose.msra.mxu0 0.0
    %6346 = vmatprep.subr.mxu0 0.0
    %6347 = vmatpush1.xpose.msra.mxu0 0.0
    %6348 = vmatprep.subr.mxu0 0.0
    %6349 = vmatpush1.xpose.msra.mxu0 0.0
    %6350 = vmatprep.subr.mxu0 0.0
    %6351 = vmatpush1.xpose.msra.mxu0 0.0
    %6352 = vmatprep.subr.mxu0 0.0
    %6353 = vmatpush1.xpose.msra.mxu0 0.0
    %6354 = vmatprep.subr.mxu0 0.0
    %6355 = vmatpush1.xpose.msra.mxu0 0.0
    %6356 = vmatprep.subr.mxu0 0.0
    %6357 = vmatpush1.xpose.msra.mxu0 0.0
    %6358 = vmatprep.subr.mxu0 0.0
    %6359 = vmatpush1.xpose.msra.mxu0 0.0
    %6360 = vmatprep.subr.mxu0 0.0
    %6361 = vmatpush1.xpose.msra.mxu0 0.0
    %6362 = vmatprep.subr.mxu0 0.0
    %6363 = vmatpush1.xpose.msra.mxu0 0.0
    %6364 = vmatprep.subr.mxu0 0.0
    %6365 = vmatpush1.xpose.msra.mxu0 0.0
    %6366 = vmatprep.subr.mxu0 0.0
    %6367 = vmatpush1.xpose.msra.mxu0 0.0
    %6368 = vmatprep.mubr.f32.mxu0 0.0
    %v6369 = vand.u32 %v6066, 4294901760
    %v6370 = vsub.f32 %v6066, %v6369
    %v6371 = vand.u32 %v6370, 4294901760
    %6372 = vmatmul.mubr.f32.gmra.mrb[0].mxu0 %v6371
    %v6373 = vpop.f32.mrb[0].mxu0
    %v6374 = vadd.f32 %v6299, %v6373
    %v6375 = vpop.f32.mrb[0].mxu0
    %6376 = vdwg.mxu0
    %6377 = vmatprep.subr.mxu0 0.0
    %v6378 = vand.u32 %v2391, 4294901760
    %v6379 = vsub.f32 %v2391, %v6378
    %v6380 = vand.u32 %v6379, 4294901760
    %6381 = vmatpush1.xpose.msra.mxu0 %v6380
    %6382 = vmatprep.subr.mxu0 0.0
    %v6383 = vand.u32 %v2394, 4294901760
    %v6384 = vsub.f32 %v2394, %v6383
    %v6385 = vand.u32 %v6384, 4294901760
    %6386 = vmatpush1.xpose.msra.mxu0 %v6385
    %6387 = vmatprep.subr.mxu0 0.0
    %6388 = vmatpush1.xpose.msra.mxu0 0.0
    %6389 = vmatprep.subr.mxu0 0.0
    %6390 = vmatpush1.xpose.msra.mxu0 0.0
    %6391 = vmatprep.subr.mxu0 0.0
    %6392 = vmatpush1.xpose.msra.mxu0 0.0
    %6393 = vmatprep.subr.mxu0 0.0
    %6394 = vmatpush1.xpose.msra.mxu0 0.0
    %6395 = vmatprep.subr.mxu0 0.0
    %6396 = vmatpush1.xpose.msra.mxu0 0.0
    %6397 = vmatprep.subr.mxu0 0.0
    %6398 = vmatpush1.xpose.msra.mxu0 0.0
    %6399 = vmatprep.subr.mxu0 0.0
    %6400 = vmatpush1.xpose.msra.mxu0 0.0
    %6401 = vmatprep.subr.mxu0 0.0
    %6402 = vmatpush1.xpose.msra.mxu0 0.0
    %6403 = vmatprep.subr.mxu0 0.0
    %6404 = vmatpush1.xpose.msra.mxu0 0.0
    %6405 = vmatprep.subr.mxu0 0.0
    %6406 = vmatpush1.xpose.msra.mxu0 0.0
    %6407 = vmatprep.subr.mxu0 0.0
    %6408 = vmatpush1.xpose.msra.mxu0 0.0
    %6409 = vmatprep.subr.mxu0 0.0
    %6410 = vmatpush1.xpose.msra.mxu0 0.0
    %6411 = vmatprep.subr.mxu0 0.0
    %6412 = vmatpush1.xpose.msra.mxu0 0.0
    %6413 = vmatprep.subr.mxu0 0.0
    %6414 = vmatpush1.xpose.msra.mxu0 0.0
    %6415 = vmatprep.subr.mxu0 0.0
    %6416 = vmatpush1.xpose.msra.mxu0 0.0
    %6417 = vmatprep.subr.mxu0 0.0
    %6418 = vmatpush1.xpose.msra.mxu0 0.0
    %6419 = vmatprep.subr.mxu0 0.0
    %6420 = vmatpush1.xpose.msra.mxu0 0.0
    %6421 = vmatprep.subr.mxu0 0.0
    %6422 = vmatpush1.xpose.msra.mxu0 0.0
    %6423 = vmatprep.subr.mxu0 0.0
    %6424 = vmatpush1.xpose.msra.mxu0 0.0
    %6425 = vmatprep.subr.mxu0 0.0
    %6426 = vmatpush1.xpose.msra.mxu0 0.0
    %6427 = vmatprep.subr.mxu0 0.0
    %6428 = vmatpush1.xpose.msra.mxu0 0.0
    %6429 = vmatprep.subr.mxu0 0.0
    %6430 = vmatpush1.xpose.msra.mxu0 0.0
    %6431 = vmatprep.subr.mxu0 0.0
    %6432 = vmatpush1.xpose.msra.mxu0 0.0
    %6433 = vmatprep.subr.mxu0 0.0
    %6434 = vmatpush1.xpose.msra.mxu0 0.0
    %6435 = vmatprep.subr.mxu0 0.0
    %6436 = vmatpush1.xpose.msra.mxu0 0.0
    %6437 = vmatprep.subr.mxu0 0.0
    %6438 = vmatpush1.xpose.msra.mxu0 0.0
    %6439 = vmatprep.subr.mxu0 0.0
    %6440 = vmatpush1.xpose.msra.mxu0 0.0
    %6441 = vmatprep.subr.mxu0 0.0
    %6442 = vmatpush1.xpose.msra.mxu0 0.0
    %6443 = vmatprep.subr.mxu0 0.0
    %6444 = vmatpush1.xpose.msra.mxu0 0.0
    %6445 = vmatprep.subr.mxu0 0.0
    %6446 = vmatpush1.xpose.msra.mxu0 0.0
    %6447 = vmatprep.mubr.f32.mxu0 0.0
    %v6448 = vand.u32 %v6066, 4294901760
    %6449 = vmatmul.mubr.f32.gmra.mrb[0].mxu0 %v6448
    %v6450 = vpop.f32.mrb[0].mxu0
    %v6451 = vadd.f32 %v6374, %v6450
    %v6452 = vpop.f32.mrb[0].mxu0
    %6453 = vdwg.mxu0
    %6454 = vmatprep.subr.mxu0 0.0
    %v6455 = vand.u32 %v2391, 4294901760
    %6456 = vmatpush1.xpose.msra.mxu0 %v6455
    %6457 = vmatprep.subr.mxu0 0.0
    %v6458 = vand.u32 %v2394, 4294901760
    %6459 = vmatpush1.xpose.msra.mxu0 %v6458
    %6460 = vmatprep.subr.mxu0 0.0
    %6461 = vmatpush1.xpose.msra.mxu0 0.0
    %6462 = vmatprep.subr.mxu0 0.0
    %6463 = vmatpush1.xpose.msra.mxu0 0.0
    %6464 = vmatprep.subr.mxu0 0.0
    %6465 = vmatpush1.xpose.msra.mxu0 0.0
    %6466 = vmatprep.subr.mxu0 0.0
    %6467 = vmatpush1.xpose.msra.mxu0 0.0
    %6468 = vmatprep.subr.mxu0 0.0
    %6469 = vmatpush1.xpose.msra.mxu0 0.0
    %6470 = vmatprep.subr.mxu0 0.0
    %6471 = vmatpush1.xpose.msra.mxu0 0.0
    %6472 = vmatprep.subr.mxu0 0.0
    %6473 = vmatpush1.xpose.msra.mxu0 0.0
    %6474 = vmatprep.subr.mxu0 0.0
    %6475 = vmatpush1.xpose.msra.mxu0 0.0
    %6476 = vmatprep.subr.mxu0 0.0
    %6477 = vmatpush1.xpose.msra.mxu0 0.0
    %6478 = vmatprep.subr.mxu0 0.0
    %6479 = vmatpush1.xpose.msra.mxu0 0.0
    %6480 = vmatprep.subr.mxu0 0.0
    %6481 = vmatpush1.xpose.msra.mxu0 0.0
    %6482 = vmatprep.subr.mxu0 0.0
    %6483 = vmatpush1.xpose.msra.mxu0 0.0
    %6484 = vmatprep.subr.mxu0 0.0
    %6485 = vmatpush1.xpose.msra.mxu0 0.0
    %6486 = vmatprep.subr.mxu0 0.0
    %6487 = vmatpush1.xpose.msra.mxu0 0.0
    %6488 = vmatprep.subr.mxu0 0.0
    %6489 = vmatpush1.xpose.msra.mxu0 0.0
    %6490 = vmatprep.subr.mxu0 0.0
    %6491 = vmatpush1.xpose.msra.mxu0 0.0
    %6492 = vmatprep.subr.mxu0 0.0
    %6493 = vmatpush1.xpose.msra.mxu0 0.0
    %6494 = vmatprep.subr.mxu0 0.0
    %6495 = vmatpush1.xpose.msra.mxu0 0.0
    %6496 = vmatprep.subr.mxu0 0.0
    %6497 = vmatpush1.xpose.msra.mxu0 0.0
    %6498 = vmatprep.subr.mxu0 0.0
    %6499 = vmatpush1.xpose.msra.mxu0 0.0
    %6500 = vmatprep.subr.mxu0 0.0
    %6501 = vmatpush1.xpose.msra.mxu0 0.0
    %6502 = vmatprep.subr.mxu0 0.0
    %6503 = vmatpush1.xpose.msra.mxu0 0.0
    %6504 = vmatprep.subr.mxu0 0.0
    %6505 = vmatpush1.xpose.msra.mxu0 0.0
    %6506 = vmatprep.subr.mxu0 0.0
    %6507 = vmatpush1.xpose.msra.mxu0 0.0
    %6508 = vmatprep.subr.mxu0 0.0
    %6509 = vmatpush1.xpose.msra.mxu0 0.0
    %6510 = vmatprep.subr.mxu0 0.0
    %6511 = vmatpush1.xpose.msra.mxu0 0.0
    %6512 = vmatprep.subr.mxu0 0.0
    %6513 = vmatpush1.xpose.msra.mxu0 0.0
    %6514 = vmatprep.subr.mxu0 0.0
    %6515 = vmatpush1.xpose.msra.mxu0 0.0
    %6516 = vmatprep.subr.mxu0 0.0
    %6517 = vmatpush1.xpose.msra.mxu0 0.0
    %6518 = vmatprep.subr.mxu0 0.0
    %6519 = vmatpush1.xpose.msra.mxu0 0.0
    %6520 = vmatprep.mubr.f32.mxu0 0.0
    %v6521 = vand.u32 %v6066, 4294901760
    %6522 = vmatmul.mubr.f32.gmra.mrb[0].mxu0 %v6521
    %v6523 = vpop.f32.mrb[0].mxu0
    %v6524 = vadd.f32 %v6451, %v6523
    %v6525 = vpop.f32.mrb[0].mxu0
    %6526 = vdwg.mxu0
    %v6527 = vsel %vm1893, %v6524, -inf
    %v6528 = vrot.slane %v6527, 4
    %v6529 = vmax.f32 %v6527, %v6528
    %v6530 = vrot.slane %v6529, 2
    %v6531 = vmax.f32 %v6529, %v6530
    %v6532 = vrot.slane %v6531, 1
    %v6533 = vmax.f32 %v6531, %v6532
    %v6534 = vsub.f32 %v6524, %v6533
    %v6535 = vmul.f32 %v6534, 1.442695
    %v6536 = vpow.pop %v6535
    %v6537 = vsel %vm1893, %v6536, 0.0
    %v6538 = vrot.slane %v6537, 4
    %v6539 = vadd.f32 %v6537, %v6538
    %v6540 = vrot.slane %v6539, 2
    %v6541 = vadd.f32 %v6539, %v6540
    %v6542 = vrot.slane %v6541, 1
    %v6543 = vadd.f32 %v6541, %v6542
    %v6544 = vrcp.pop %v6543
    %v6545 = vmul.f32 %v6536, %v6544
    %v6546 = vsel %vm1893, %v6545, 0.0
    %6547 = vadd.xlane.f32.xlu0 %v6546
    %v6548 = vpop.xlane.xlu0 %6547
    %v6549 = vadd.f32 %v6548, 1e-08
    %v6550 = vrcp.pop %v6549
    %v6551 = vmul.f32 %v6545, %v6550
    %v6553 = vsel %vm1893, %v6551, 0
    %6555 = vmatprep.subr.mxu0 0.0
    %v6556 = vand.u32 %v2881, 4294901760
    %6557 = vmatpush1.msra.mxu0 %v6556
    %6558 = vmatprep.subr.mxu0 0.0
    %v6559 = vand.u32 %v2883, 4294901760
    %6560 = vmatpush1.msra.mxu0 %v6559
    %6561 = vmatprep.subr.mxu0 0.0
    %6562 = vmatpush1.msra.mxu0 0.0
    %6563 = vmatprep.subr.mxu0 0.0
    %6564 = vmatpush1.msra.mxu0 0.0
    %6565 = vmatprep.subr.mxu0 0.0
    %6566 = vmatpush1.msra.mxu0 0.0
    %6567 = vmatprep.subr.mxu0 0.0
    %6568 = vmatpush1.msra.mxu0 0.0
    %6569 = vmatprep.subr.mxu0 0.0
    %6570 = vmatpush1.msra.mxu0 0.0
    %6571 = vmatprep.subr.mxu0 0.0
    %6572 = vmatpush1.msra.mxu0 0.0
    %6573 = vmatprep.subr.mxu0 0.0
    %6574 = vmatpush1.msra.mxu0 0.0
    %6575 = vmatprep.subr.mxu0 0.0
    %6576 = vmatpush1.msra.mxu0 0.0
    %6577 = vmatprep.subr.mxu0 0.0
    %6578 = vmatpush1.msra.mxu0 0.0
    %6579 = vmatprep.subr.mxu0 0.0
    %6580 = vmatpush1.msra.mxu0 0.0
    %6581 = vmatprep.subr.mxu0 0.0
    %6582 = vmatpush1.msra.mxu0 0.0
    %6583 = vmatprep.subr.mxu0 0.0
    %6584 = vmatpush1.msra.mxu0 0.0
    %6585 = vmatprep.subr.mxu0 0.0
    %6586 = vmatpush1.msra.mxu0 0.0
    %6587 = vmatprep.subr.mxu0 0.0
    %6588 = vmatpush1.msra.mxu0 0.0
    %6589 = vmatprep.subr.mxu0 0.0
    %6590 = vmatpush1.msra.mxu0 0.0
    %6591 = vmatprep.subr.mxu0 0.0
    %6592 = vmatpush1.msra.mxu0 0.0
    %6593 = vmatprep.subr.mxu0 0.0
    %6594 = vmatpush1.msra.mxu0 0.0
    %6595 = vmatprep.subr.mxu0 0.0
    %6596 = vmatpush1.msra.mxu0 0.0
    %6597 = vmatprep.subr.mxu0 0.0
    %6598 = vmatpush1.msra.mxu0 0.0
    %6599 = vmatprep.subr.mxu0 0.0
    %6600 = vmatpush1.msra.mxu0 0.0
    %6601 = vmatprep.subr.mxu0 0.0
    %6602 = vmatpush1.msra.mxu0 0.0
    %6603 = vmatprep.subr.mxu0 0.0
    %6604 = vmatpush1.msra.mxu0 0.0
    %6605 = vmatprep.subr.mxu0 0.0
    %6606 = vmatpush1.msra.mxu0 0.0
    %6607 = vmatprep.subr.mxu0 0.0
    %6608 = vmatpush1.msra.mxu0 0.0
    %6609 = vmatprep.subr.mxu0 0.0
    %6610 = vmatpush1.msra.mxu0 0.0
    %6611 = vmatprep.subr.mxu0 0.0
    %6612 = vmatpush1.msra.mxu0 0.0
    %6613 = vmatprep.subr.mxu0 0.0
    %6614 = vmatpush1.msra.mxu0 0.0
    %6615 = vmatprep.subr.mxu0 0.0
    %6616 = vmatpush1.msra.mxu0 0.0
    %6617 = vmatprep.subr.mxu0 0.0
    %6618 = vmatpush1.msra.mxu0 0.0
    %6619 = vmatprep.subr.mxu0 0.0
    %6620 = vmatpush1.msra.mxu0 0.0
    %6621 = vmatprep.mubr.f32.mxu0 0.0
    %v6622 = vand.u32 %v6553, 4294901760
    %v6623 = vsub.f32 %v6553, %v6622
    %v6624 = vand.u32 %v6623, 4294901760
    %v6625 = vsub.f32 %v6623, %v6624
    %v6626 = vand.u32 %v6625, 4294901760
    %6627 = vmatmul.mubr.f32.gmra.mrb[0].mxu0 %v6626
    %v6628 = vpop.f32.mrb[0].mxu0
    %v6629 = vadd.f32 0.0, %v6628
    %v6630 = vpop.f32.mrb[0].mxu0
    %6631 = vdwg.mxu0
    %6632 = vmatprep.subr.mxu0 0.0
    %v6633 = vand.u32 %v2881, 4294901760
    %v6634 = vsub.f32 %v2881, %v6633
    %v6635 = vand.u32 %v6634, 4294901760
    %v6636 = vsub.f32 %v6634, %v6635
    %v6637 = vand.u32 %v6636, 4294901760
    %6638 = vmatpush1.msra.mxu0 %v6637
    %6639 = vmatprep.subr.mxu0 0.0
    %v6640 = vand.u32 %v2883, 4294901760
    %v6641 = vsub.f32 %v2883, %v6640
    %v6642 = vand.u32 %v6641, 4294901760
    %v6643 = vsub.f32 %v6641, %v6642
    %v6644 = vand.u32 %v6643, 4294901760
    %6645 = vmatpush1.msra.mxu0 %v6644
    %6646 = vmatprep.subr.mxu0 0.0
    %6647 = vmatpush1.msra.mxu0 0.0
    %6648 = vmatprep.subr.mxu0 0.0
    %6649 = vmatpush1.msra.mxu0 0.0
    %6650 = vmatprep.subr.mxu0 0.0
    %6651 = vmatpush1.msra.mxu0 0.0
    %6652 = vmatprep.subr.mxu0 0.0
    %6653 = vmatpush1.msra.mxu0 0.0
    %6654 = vmatprep.subr.mxu0 0.0
    %6655 = vmatpush1.msra.mxu0 0.0
    %6656 = vmatprep.subr.mxu0 0.0
    %6657 = vmatpush1.msra.mxu0 0.0
    %6658 = vmatprep.subr.mxu0 0.0
    %6659 = vmatpush1.msra.mxu0 0.0
    %6660 = vmatprep.subr.mxu0 0.0
    %6661 = vmatpush1.msra.mxu0 0.0
    %6662 = vmatprep.subr.mxu0 0.0
    %6663 = vmatpush1.msra.mxu0 0.0
    %6664 = vmatprep.subr.mxu0 0.0
    %6665 = vmatpush1.msra.mxu0 0.0
    %6666 = vmatprep.subr.mxu0 0.0
    %6667 = vmatpush1.msra.mxu0 0.0
    %6668 = vmatprep.subr.mxu0 0.0
    %6669 = vmatpush1.msra.mxu0 0.0
    %6670 = vmatprep.subr.mxu0 0.0
    %6671 = vmatpush1.msra.mxu0 0.0
    %6672 = vmatprep.subr.mxu0 0.0
    %6673 = vmatpush1.msra.mxu0 0.0
    %6674 = vmatprep.subr.mxu0 0.0
    %6675 = vmatpush1.msra.mxu0 0.0
    %6676 = vmatprep.subr.mxu0 0.0
    %6677 = vmatpush1.msra.mxu0 0.0
    %6678 = vmatprep.subr.mxu0 0.0
    %6679 = vmatpush1.msra.mxu0 0.0
    %6680 = vmatprep.subr.mxu0 0.0
    %6681 = vmatpush1.msra.mxu0 0.0
    %6682 = vmatprep.subr.mxu0 0.0
    %6683 = vmatpush1.msra.mxu0 0.0
    %6684 = vmatprep.subr.mxu0 0.0
    %6685 = vmatpush1.msra.mxu0 0.0
    %6686 = vmatprep.subr.mxu0 0.0
    %6687 = vmatpush1.msra.mxu0 0.0
    %6688 = vmatprep.subr.mxu0 0.0
    %6689 = vmatpush1.msra.mxu0 0.0
    %6690 = vmatprep.subr.mxu0 0.0
    %6691 = vmatpush1.msra.mxu0 0.0
    %6692 = vmatprep.subr.mxu0 0.0
    %6693 = vmatpush1.msra.mxu0 0.0
    %6694 = vmatprep.subr.mxu0 0.0
    %6695 = vmatpush1.msra.mxu0 0.0
    %6696 = vmatprep.subr.mxu0 0.0
    %6697 = vmatpush1.msra.mxu0 0.0
    %6698 = vmatprep.subr.mxu0 0.0
    %6699 = vmatpush1.msra.mxu0 0.0
    %6700 = vmatprep.subr.mxu0 0.0
    %6701 = vmatpush1.msra.mxu0 0.0
    %6702 = vmatprep.subr.mxu0 0.0
    %6703 = vmatpush1.msra.mxu0 0.0
    %6704 = vmatprep.subr.mxu0 0.0
    %6705 = vmatpush1.msra.mxu0 0.0
    %6706 = vmatprep.mubr.f32.mxu0 0.0
    %v6707 = vand.u32 %v6553, 4294901760
    %6708 = vmatmul.mubr.f32.gmra.mrb[0].mxu0 %v6707
    %v6709 = vpop.f32.mrb[0].mxu0
    %v6710 = vadd.f32 %v6629, %v6709
    %v6711 = vpop.f32.mrb[0].mxu0
    %6712 = vdwg.mxu0
    %6713 = vmatprep.subr.mxu0 0.0
    %v6714 = vand.u32 %v2881, 4294901760
    %v6715 = vsub.f32 %v2881, %v6714
    %6716 = vmatpush1.msra.mxu0 %v6715
    %6717 = vmatprep.subr.mxu0 0.0
    %v6718 = vand.u32 %v2883, 4294901760
    %v6719 = vsub.f32 %v2883, %v6718
    %6720 = vmatpush1.msra.mxu0 %v6719
    %6721 = vmatprep.subr.mxu0 0.0
    %6722 = vmatpush1.msra.mxu0 0.0
    %6723 = vmatprep.subr.mxu0 0.0
    %6724 = vmatpush1.msra.mxu0 0.0
    %6725 = vmatprep.subr.mxu0 0.0
    %6726 = vmatpush1.msra.mxu0 0.0
    %6727 = vmatprep.subr.mxu0 0.0
    %6728 = vmatpush1.msra.mxu0 0.0
    %6729 = vmatprep.subr.mxu0 0.0
    %6730 = vmatpush1.msra.mxu0 0.0
    %6731 = vmatprep.subr.mxu0 0.0
    %6732 = vmatpush1.msra.mxu0 0.0
    %6733 = vmatprep.subr.mxu0 0.0
    %6734 = vmatpush1.msra.mxu0 0.0
    %6735 = vmatprep.subr.mxu0 0.0
    %6736 = vmatpush1.msra.mxu0 0.0
    %6737 = vmatprep.subr.mxu0 0.0
    %6738 = vmatpush1.msra.mxu0 0.0
    %6739 = vmatprep.subr.mxu0 0.0
    %6740 = vmatpush1.msra.mxu0 0.0
    %6741 = vmatprep.subr.mxu0 0.0
    %6742 = vmatpush1.msra.mxu0 0.0
    %6743 = vmatprep.subr.mxu0 0.0
    %6744 = vmatpush1.msra.mxu0 0.0
    %6745 = vmatprep.subr.mxu0 0.0
    %6746 = vmatpush1.msra.mxu0 0.0
    %6747 = vmatprep.subr.mxu0 0.0
    %6748 = vmatpush1.msra.mxu0 0.0
    %6749 = vmatprep.subr.mxu0 0.0
    %6750 = vmatpush1.msra.mxu0 0.0
    %6751 = vmatprep.subr.mxu0 0.0
    %6752 = vmatpush1.msra.mxu0 0.0
    %6753 = vmatprep.subr.mxu0 0.0
    %6754 = vmatpush1.msra.mxu0 0.0
    %6755 = vmatprep.subr.mxu0 0.0
    %6756 = vmatpush1.msra.mxu0 0.0
    %6757 = vmatprep.subr.mxu0 0.0
    %6758 = vmatpush1.msra.mxu0 0.0
    %6759 = vmatprep.subr.mxu0 0.0
    %6760 = vmatpush1.msra.mxu0 0.0
    %6761 = vmatprep.subr.mxu0 0.0
    %6762 = vmatpush1.msra.mxu0 0.0
    %6763 = vmatprep.subr.mxu0 0.0
    %6764 = vmatpush1.msra.mxu0 0.0
    %6765 = vmatprep.subr.mxu0 0.0
    %6766 = vmatpush1.msra.mxu0 0.0
    %6767 = vmatprep.subr.mxu0 0.0
    %6768 = vmatpush1.msra.mxu0 0.0
    %6769 = vmatprep.subr.mxu0 0.0
    %6770 = vmatpush1.msra.mxu0 0.0
    %6771 = vmatprep.subr.mxu0 0.0
    %6772 = vmatpush1.msra.mxu0 0.0
    %6773 = vmatprep.subr.mxu0 0.0
    %6774 = vmatpush1.msra.mxu0 0.0
    %6775 = vmatprep.subr.mxu0 0.0
    %6776 = vmatpush1.msra.mxu0 0.0
    %6777 = vmatprep.subr.mxu0 0.0
    %6778 = vmatpush1.msra.mxu0 0.0
    %6779 = vmatprep.subr.mxu0 0.0
    %6780 = vmatpush1.msra.mxu0 0.0
    %6781 = vmatprep.mubr.f32.mxu0 0.0
    %v6782 = vand.u32 %v6553, 4294901760
    %v6783 = vsub.f32 %v6553, %v6782
    %6784 = vmatmul.mubr.f32.gmra.mrb[0].mxu0 %v6783
    %v6785 = vpop.f32.mrb[0].mxu0
    %v6786 = vadd.f32 %v6710, %v6785
    %v6787 = vpop.f32.mrb[0].mxu0
    %6788 = vdwg.mxu0
    %6789 = vmatprep.subr.mxu0 0.0
    %v6790 = vand.u32 %v2881, 4294901760
    %6791 = vmatpush1.msra.mxu0 %v6790
    %6792 = vmatprep.subr.mxu0 0.0
    %v6793 = vand.u32 %v2883, 4294901760
    %6794 = vmatpush1.msra.mxu0 %v6793
    %6795 = vmatprep.subr.mxu0 0.0
    %6796 = vmatpush1.msra.mxu0 0.0
    %6797 = vmatprep.subr.mxu0 0.0
    %6798 = vmatpush1.msra.mxu0 0.0
    %6799 = vmatprep.subr.mxu0 0.0
    %6800 = vmatpush1.msra.mxu0 0.0
    %6801 = vmatprep.subr.mxu0 0.0
    %6802 = vmatpush1.msra.mxu0 0.0
    %6803 = vmatprep.subr.mxu0 0.0
    %6804 = vmatpush1.msra.mxu0 0.0
    %6805 = vmatprep.subr.mxu0 0.0
    %6806 = vmatpush1.msra.mxu0 0.0
    %6807 = vmatprep.subr.mxu0 0.0
    %6808 = vmatpush1.msra.mxu0 0.0
    %6809 = vmatprep.subr.mxu0 0.0
    %6810 = vmatpush1.msra.mxu0 0.0
    %6811 = vmatprep.subr.mxu0 0.0
    %6812 = vmatpush1.msra.mxu0 0.0
    %6813 = vmatprep.subr.mxu0 0.0
    %6814 = vmatpush1.msra.mxu0 0.0
    %6815 = vmatprep.subr.mxu0 0.0
    %6816 = vmatpush1.msra.mxu0 0.0
    %6817 = vmatprep.subr.mxu0 0.0
    %6818 = vmatpush1.msra.mxu0 0.0
    %6819 = vmatprep.subr.mxu0 0.0
    %6820 = vmatpush1.msra.mxu0 0.0
    %6821 = vmatprep.subr.mxu0 0.0
    %6822 = vmatpush1.msra.mxu0 0.0
    %6823 = vmatprep.subr.mxu0 0.0
    %6824 = vmatpush1.msra.mxu0 0.0
    %6825 = vmatprep.subr.mxu0 0.0
    %6826 = vmatpush1.msra.mxu0 0.0
    %6827 = vmatprep.subr.mxu0 0.0
    %6828 = vmatpush1.msra.mxu0 0.0
    %6829 = vmatprep.subr.mxu0 0.0
    %6830 = vmatpush1.msra.mxu0 0.0
    %6831 = vmatprep.subr.mxu0 0.0
    %6832 = vmatpush1.msra.mxu0 0.0
    %6833 = vmatprep.subr.mxu0 0.0
    %6834 = vmatpush1.msra.mxu0 0.0
    %6835 = vmatprep.subr.mxu0 0.0
    %6836 = vmatpush1.msra.mxu0 0.0
    %6837 = vmatprep.subr.mxu0 0.0
    %6838 = vmatpush1.msra.mxu0 0.0
    %6839 = vmatprep.subr.mxu0 0.0
    %6840 = vmatpush1.msra.mxu0 0.0
    %6841 = vmatprep.subr.mxu0 0.0
    %6842 = vmatpush1.msra.mxu0 0.0
    %6843 = vmatprep.subr.mxu0 0.0
    %6844 = vmatpush1.msra.mxu0 0.0
    %6845 = vmatprep.subr.mxu0 0.0
    %6846 = vmatpush1.msra.mxu0 0.0
    %6847 = vmatprep.subr.mxu0 0.0
    %6848 = vmatpush1.msra.mxu0 0.0
    %6849 = vmatprep.subr.mxu0 0.0
    %6850 = vmatpush1.msra.mxu0 0.0
    %6851 = vmatprep.subr.mxu0 0.0
    %6852 = vmatpush1.msra.mxu0 0.0
    %6853 = vmatprep.subr.mxu0 0.0
    %6854 = vmatpush1.msra.mxu0 0.0
    %6855 = vmatprep.mubr.f32.mxu0 0.0
    %v6856 = vand.u32 %v6553, 4294901760
    %v6857 = vsub.f32 %v6553, %v6856
    %v6858 = vand.u32 %v6857, 4294901760
    %6859 = vmatmul.mubr.f32.gmra.mrb[0].mxu0 %v6858
    %v6860 = vpop.f32.mrb[0].mxu0
    %v6861 = vadd.f32 %v6786, %v6860
    %v6862 = vpop.f32.mrb[0].mxu0
    %6863 = vdwg.mxu0
    %6864 = vmatprep.subr.mxu0 0.0
    %v6865 = vand.u32 %v2881, 4294901760
    %v6866 = vsub.f32 %v2881, %v6865
    %v6867 = vand.u32 %v6866, 4294901760
    %6868 = vmatpush1.msra.mxu0 %v6867
    %6869 = vmatprep.subr.mxu0 0.0
    %v6870 = vand.u32 %v2883, 4294901760
    %v6871 = vsub.f32 %v2883, %v6870
    %v6872 = vand.u32 %v6871, 4294901760
    %6873 = vmatpush1.msra.mxu0 %v6872
    %6874 = vmatprep.subr.mxu0 0.0
    %6875 = vmatpush1.msra.mxu0 0.0
    %6876 = vmatprep.subr.mxu0 0.0
    %6877 = vmatpush1.msra.mxu0 0.0
    %6878 = vmatprep.subr.mxu0 0.0
    %6879 = vmatpush1.msra.mxu0 0.0
    %6880 = vmatprep.subr.mxu0 0.0
    %6881 = vmatpush1.msra.mxu0 0.0
    %6882 = vmatprep.subr.mxu0 0.0
    %6883 = vmatpush1.msra.mxu0 0.0
    %6884 = vmatprep.subr.mxu0 0.0
    %6885 = vmatpush1.msra.mxu0 0.0
    %6886 = vmatprep.subr.mxu0 0.0
    %6887 = vmatpush1.msra.mxu0 0.0
    %6888 = vmatprep.subr.mxu0 0.0
    %6889 = vmatpush1.msra.mxu0 0.0
    %6890 = vmatprep.subr.mxu0 0.0
    %6891 = vmatpush1.msra.mxu0 0.0
    %6892 = vmatprep.subr.mxu0 0.0
    %6893 = vmatpush1.msra.mxu0 0.0
    %6894 = vmatprep.subr.mxu0 0.0
    %6895 = vmatpush1.msra.mxu0 0.0
    %6896 = vmatprep.subr.mxu0 0.0
    %6897 = vmatpush1.msra.mxu0 0.0
    %6898 = vmatprep.subr.mxu0 0.0
    %6899 = vmatpush1.msra.mxu0 0.0
    %6900 = vmatprep.subr.mxu0 0.0
    %6901 = vmatpush1.msra.mxu0 0.0
    %6902 = vmatprep.subr.mxu0 0.0
    %6903 = vmatpush1.msra.mxu0 0.0
    %6904 = vmatprep.subr.mxu0 0.0
    %6905 = vmatpush1.msra.mxu0 0.0
    %6906 = vmatprep.subr.mxu0 0.0
    %6907 = vmatpush1.msra.mxu0 0.0
    %6908 = vmatprep.subr.mxu0 0.0
    %6909 = vmatpush1.msra.mxu0 0.0
    %6910 = vmatprep.subr.mxu0 0.0
    %6911 = vmatpush1.msra.mxu0 0.0
    %6912 = vmatprep.subr.mxu0 0.0
    %6913 = vmatpush1.msra.mxu0 0.0
    %6914 = vmatprep.subr.mxu0 0.0
    %6915 = vmatpush1.msra.mxu0 0.0
    %6916 = vmatprep.subr.mxu0 0.0
    %6917 = vmatpush1.msra.mxu0 0.0
    %6918 = vmatprep.subr.mxu0 0.0
    %6919 = vmatpush1.msra.mxu0 0.0
    %6920 = vmatprep.subr.mxu0 0.0
    %6921 = vmatpush1.msra.mxu0 0.0
    %6922 = vmatprep.subr.mxu0 0.0
    %6923 = vmatpush1.msra.mxu0 0.0
    %6924 = vmatprep.subr.mxu0 0.0
    %6925 = vmatpush1.msra.mxu0 0.0
    %6926 = vmatprep.subr.mxu0 0.0
    %6927 = vmatpush1.msra.mxu0 0.0
    %6928 = vmatprep.subr.mxu0 0.0
    %6929 = vmatpush1.msra.mxu0 0.0
    %6930 = vmatprep.subr.mxu0 0.0
    %6931 = vmatpush1.msra.mxu0 0.0
    %6932 = vmatprep.subr.mxu0 0.0
    %6933 = vmatpush1.msra.mxu0 0.0
    %6934 = vmatprep.mubr.f32.mxu0 0.0
    %v6935 = vand.u32 %v6553, 4294901760
    %6936 = vmatmul.mubr.f32.gmra.mrb[0].mxu0 %v6935
    %v6937 = vpop.f32.mrb[0].mxu0
    %v6938 = vadd.f32 %v6861, %v6937
    %v6939 = vpop.f32.mrb[0].mxu0
    %6940 = vdwg.mxu0
    %6941 = vmatprep.subr.mxu0 0.0
    %v6942 = vand.u32 %v2881, 4294901760
    %6943 = vmatpush1.msra.mxu0 %v6942
    %6944 = vmatprep.subr.mxu0 0.0
    %v6945 = vand.u32 %v2883, 4294901760
    %6946 = vmatpush1.msra.mxu0 %v6945
    %6947 = vmatprep.subr.mxu0 0.0
    %6948 = vmatpush1.msra.mxu0 0.0
    %6949 = vmatprep.subr.mxu0 0.0
    %6950 = vmatpush1.msra.mxu0 0.0
    %6951 = vmatprep.subr.mxu0 0.0
    %6952 = vmatpush1.msra.mxu0 0.0
    %6953 = vmatprep.subr.mxu0 0.0
    %6954 = vmatpush1.msra.mxu0 0.0
    %6955 = vmatprep.subr.mxu0 0.0
    %6956 = vmatpush1.msra.mxu0 0.0
    %6957 = vmatprep.subr.mxu0 0.0
    %6958 = vmatpush1.msra.mxu0 0.0
    %6959 = vmatprep.subr.mxu0 0.0
    %6960 = vmatpush1.msra.mxu0 0.0
    %6961 = vmatprep.subr.mxu0 0.0
    %6962 = vmatpush1.msra.mxu0 0.0
    %6963 = vmatprep.subr.mxu0 0.0
    %6964 = vmatpush1.msra.mxu0 0.0
    %6965 = vmatprep.subr.mxu0 0.0
    %6966 = vmatpush1.msra.mxu0 0.0
    %6967 = vmatprep.subr.mxu0 0.0
    %6968 = vmatpush1.msra.mxu0 0.0
    %6969 = vmatprep.subr.mxu0 0.0
    %6970 = vmatpush1.msra.mxu0 0.0
    %6971 = vmatprep.subr.mxu0 0.0
    %6972 = vmatpush1.msra.mxu0 0.0
    %6973 = vmatprep.subr.mxu0 0.0
    %6974 = vmatpush1.msra.mxu0 0.0
    %6975 = vmatprep.subr.mxu0 0.0
    %6976 = vmatpush1.msra.mxu0 0.0
    %6977 = vmatprep.subr.mxu0 0.0
    %6978 = vmatpush1.msra.mxu0 0.0
    %6979 = vmatprep.subr.mxu0 0.0
    %6980 = vmatpush1.msra.mxu0 0.0
    %6981 = vmatprep.subr.mxu0 0.0
    %6982 = vmatpush1.msra.mxu0 0.0
    %6983 = vmatprep.subr.mxu0 0.0
    %6984 = vmatpush1.msra.mxu0 0.0
    %6985 = vmatprep.subr.mxu0 0.0
    %6986 = vmatpush1.msra.mxu0 0.0
    %6987 = vmatprep.subr.mxu0 0.0
    %6988 = vmatpush1.msra.mxu0 0.0
    %6989 = vmatprep.subr.mxu0 0.0
    %6990 = vmatpush1.msra.mxu0 0.0
    %6991 = vmatprep.subr.mxu0 0.0
    %6992 = vmatpush1.msra.mxu0 0.0
    %6993 = vmatprep.subr.mxu0 0.0
    %6994 = vmatpush1.msra.mxu0 0.0
    %6995 = vmatprep.subr.mxu0 0.0
    %6996 = vmatpush1.msra.mxu0 0.0
    %6997 = vmatprep.subr.mxu0 0.0
    %6998 = vmatpush1.msra.mxu0 0.0
    %6999 = vmatprep.subr.mxu0 0.0
    %7000 = vmatpush1.msra.mxu0 0.0
    %7001 = vmatprep.subr.mxu0 0.0
    %7002 = vmatpush1.msra.mxu0 0.0
    %7003 = vmatprep.subr.mxu0 0.0
    %7004 = vmatpush1.msra.mxu0 0.0
    %7005 = vmatprep.subr.mxu0 0.0
    %7006 = vmatpush1.msra.mxu0 0.0
    %7007 = vmatprep.mubr.f32.mxu0 0.0
    %v7008 = vand.u32 %v6553, 4294901760
    %7009 = vmatmul.mubr.f32.gmra.mrb[0].mxu0 %v7008
    %v7010 = vpop.f32.mrb[0].mxu0
    %v7011 = vadd.f32 %v6938, %v7010
    %v7012 = vpop.f32.mrb[0].mxu0
    %7013 = vdwg.mxu0
    %v7015 = vsel %vm151, %v6062, 0
    %v7018 = vsel %vm151, %v7011, 0
    %7020 = vmatprep.subr.mxu0 0.0
    %v7021 = vand.u32 %v143, 4294901760
    %7022 = vmatpush1.msra.mxu0 %v7021
    %7023 = vmatprep.subr.mxu0 0.0
    %v7024 = vand.u32 %v144, 4294901760
    %7025 = vmatpush1.msra.mxu0 %v7024
    %7026 = vmatprep.subr.mxu0 0.0
    %v7027 = vand.u32 %v145, 4294901760
    %7028 = vmatpush1.msra.mxu0 %v7027
    %7029 = vmatprep.subr.mxu0 0.0
    %v7030 = vand.u32 %v146, 4294901760
    %7031 = vmatpush1.msra.mxu0 %v7030
    %7032 = vmatprep.subr.mxu0 0.0
    %7033 = vmatpush1.msra.mxu0 0.0
    %7034 = vmatprep.subr.mxu0 0.0
    %7035 = vmatpush1.msra.mxu0 0.0
    %7036 = vmatprep.subr.mxu0 0.0
    %7037 = vmatpush1.msra.mxu0 0.0
    %7038 = vmatprep.subr.mxu0 0.0
    %7039 = vmatpush1.msra.mxu0 0.0
    %7040 = vmatprep.subr.mxu0 0.0
    %7041 = vmatpush1.msra.mxu0 0.0
    %7042 = vmatprep.subr.mxu0 0.0
    %7043 = vmatpush1.msra.mxu0 0.0
    %7044 = vmatprep.subr.mxu0 0.0
    %7045 = vmatpush1.msra.mxu0 0.0
    %7046 = vmatprep.subr.mxu0 0.0
    %7047 = vmatpush1.msra.mxu0 0.0
    %7048 = vmatprep.subr.mxu0 0.0
    %7049 = vmatpush1.msra.mxu0 0.0
    %7050 = vmatprep.subr.mxu0 0.0
    %7051 = vmatpush1.msra.mxu0 0.0
    %7052 = vmatprep.subr.mxu0 0.0
    %7053 = vmatpush1.msra.mxu0 0.0
    %7054 = vmatprep.subr.mxu0 0.0
    %7055 = vmatpush1.msra.mxu0 0.0
    %7056 = vmatprep.subr.mxu0 0.0
    %7057 = vmatpush1.msra.mxu0 0.0
    %7058 = vmatprep.subr.mxu0 0.0
    %7059 = vmatpush1.msra.mxu0 0.0
    %7060 = vmatprep.subr.mxu0 0.0
    %7061 = vmatpush1.msra.mxu0 0.0
    %7062 = vmatprep.subr.mxu0 0.0
    %7063 = vmatpush1.msra.mxu0 0.0
    %7064 = vmatprep.subr.mxu0 0.0
    %7065 = vmatpush1.msra.mxu0 0.0
    %7066 = vmatprep.subr.mxu0 0.0
    %7067 = vmatpush1.msra.mxu0 0.0
    %7068 = vmatprep.subr.mxu0 0.0
    %7069 = vmatpush1.msra.mxu0 0.0
    %7070 = vmatprep.subr.mxu0 0.0
    %7071 = vmatpush1.msra.mxu0 0.0
    %7072 = vmatprep.subr.mxu0 0.0
    %7073 = vmatpush1.msra.mxu0 0.0
    %7074 = vmatprep.subr.mxu0 0.0
    %7075 = vmatpush1.msra.mxu0 0.0
    %7076 = vmatprep.subr.mxu0 0.0
    %7077 = vmatpush1.msra.mxu0 0.0
    %7078 = vmatprep.subr.mxu0 0.0
    %7079 = vmatpush1.msra.mxu0 0.0
    %7080 = vmatprep.subr.mxu0 0.0
    %7081 = vmatpush1.msra.mxu0 0.0
    %7082 = vmatprep.subr.mxu0 0.0
    %7083 = vmatpush1.msra.mxu0 0.0
    %7084 = vmatprep.subr.mxu0 0.0
    %7085 = vmatpush1.msra.mxu0 0.0
    %7086 = vmatprep.subr.mxu0 0.0
    %7087 = vmatpush1.msra.mxu0 0.0
    %7088 = vmatprep.mubr.f32.mxu0 0.0
    %v7089 = vand.u32 %v7015, 4294901760
    %v7090 = vsub.f32 %v7015, %v7089
    %v7091 = vand.u32 %v7090, 4294901760
    %v7092 = vsub.f32 %v7090, %v7091
    %v7093 = vand.u32 %v7092, 4294901760
    %7094 = vmatmul.mubr.f32.gmra.mrb[0].mxu0 %v7093
    %v7095 = vpop.f32.mrb[0].mxu0
    %v7096 = vadd.f32 0.0, %v7095
    %v7097 = vpop.f32.mrb[0].mxu0
    %7098 = vmatprep.mubr.f32.mxu0 0.0
    %v7099 = vand.u32 %v7018, 4294901760
    %v7100 = vsub.f32 %v7018, %v7099
    %v7101 = vand.u32 %v7100, 4294901760
    %v7102 = vsub.f32 %v7100, %v7101
    %v7103 = vand.u32 %v7102, 4294901760
    %7104 = vmatmul.mubr.f32.gmra.mrb[0].mxu0 %v7103
    %v7105 = vpop.f32.mrb[0].mxu0
    %v7106 = vadd.f32 0.0, %v7105
    %v7107 = vpop.f32.mrb[0].mxu0
    %7108 = vdwg.mxu0
    %7109 = vmatprep.subr.mxu0 0.0
    %v7110 = vand.u32 %v143, 4294901760
    %v7111 = vsub.f32 %v143, %v7110
    %v7112 = vand.u32 %v7111, 4294901760
    %v7113 = vsub.f32 %v7111, %v7112
    %v7114 = vand.u32 %v7113, 4294901760
    %7115 = vmatpush1.msra.mxu0 %v7114
    %7116 = vmatprep.subr.mxu0 0.0
    %v7117 = vand.u32 %v144, 4294901760
    %v7118 = vsub.f32 %v144, %v7117
    %v7119 = vand.u32 %v7118, 4294901760
    %v7120 = vsub.f32 %v7118, %v7119
    %v7121 = vand.u32 %v7120, 4294901760
    %7122 = vmatpush1.msra.mxu0 %v7121
    %7123 = vmatprep.subr.mxu0 0.0
    %v7124 = vand.u32 %v145, 4294901760
    %v7125 = vsub.f32 %v145, %v7124
    %v7126 = vand.u32 %v7125, 4294901760
    %v7127 = vsub.f32 %v7125, %v7126
    %v7128 = vand.u32 %v7127, 4294901760
    %7129 = vmatpush1.msra.mxu0 %v7128
    %7130 = vmatprep.subr.mxu0 0.0
    %v7131 = vand.u32 %v146, 4294901760
    %v7132 = vsub.f32 %v146, %v7131
    %v7133 = vand.u32 %v7132, 4294901760
    %v7134 = vsub.f32 %v7132, %v7133
    %v7135 = vand.u32 %v7134, 4294901760
    %7136 = vmatpush1.msra.mxu0 %v7135
    %7137 = vmatprep.subr.mxu0 0.0
    %7138 = vmatpush1.msra.mxu0 0.0
    %7139 = vmatprep.subr.mxu0 0.0
    %7140 = vmatpush1.msra.mxu0 0.0
    %7141 = vmatprep.subr.mxu0 0.0
    %7142 = vmatpush1.msra.mxu0 0.0
    %7143 = vmatprep.subr.mxu0 0.0
    %7144 = vmatpush1.msra.mxu0 0.0
    %7145 = vmatprep.subr.mxu0 0.0
    %7146 = vmatpush1.msra.mxu0 0.0
    %7147 = vmatprep.subr.mxu0 0.0
    %7148 = vmatpush1.msra.mxu0 0.0
    %7149 = vmatprep.subr.mxu0 0.0
    %7150 = vmatpush1.msra.mxu0 0.0
    %7151 = vmatprep.subr.mxu0 0.0
    %7152 = vmatpush1.msra.mxu0 0.0
    %7153 = vmatprep.subr.mxu0 0.0
    %7154 = vmatpush1.msra.mxu0 0.0
    %7155 = vmatprep.subr.mxu0 0.0
    %7156 = vmatpush1.msra.mxu0 0.0
    %7157 = vmatprep.subr.mxu0 0.0
    %7158 = vmatpush1.msra.mxu0 0.0
    %7159 = vmatprep.subr.mxu0 0.0
    %7160 = vmatpush1.msra.mxu0 0.0
    %7161 = vmatprep.subr.mxu0 0.0
    %7162 = vmatpush1.msra.mxu0 0.0
    %7163 = vmatprep.subr.mxu0 0.0
    %7164 = vmatpush1.msra.mxu0 0.0
    %7165 = vmatprep.subr.mxu0 0.0
    %7166 = vmatpush1.msra.mxu0 0.0
    %7167 = vmatprep.subr.mxu0 0.0
    %7168 = vmatpush1.msra.mxu0 0.0
    %7169 = vmatprep.subr.mxu0 0.0
    %7170 = vmatpush1.msra.mxu0 0.0
    %7171 = vmatprep.subr.mxu0 0.0
    %7172 = vmatpush1.msra.mxu0 0.0
    %7173 = vmatprep.subr.mxu0 0.0
    %7174 = vmatpush1.msra.mxu0 0.0
    %7175 = vmatprep.subr.mxu0 0.0
    %7176 = vmatpush1.msra.mxu0 0.0
    %7177 = vmatprep.subr.mxu0 0.0
    %7178 = vmatpush1.msra.mxu0 0.0
    %7179 = vmatprep.subr.mxu0 0.0
    %7180 = vmatpush1.msra.mxu0 0.0
    %7181 = vmatprep.subr.mxu0 0.0
    %7182 = vmatpush1.msra.mxu0 0.0
    %7183 = vmatprep.subr.mxu0 0.0
    %7184 = vmatpush1.msra.mxu0 0.0
    %7185 = vmatprep.subr.mxu0 0.0
    %7186 = vmatpush1.msra.mxu0 0.0
    %7187 = vmatprep.subr.mxu0 0.0
    %7188 = vmatpush1.msra.mxu0 0.0
    %7189 = vmatprep.subr.mxu0 0.0
    %7190 = vmatpush1.msra.mxu0 0.0
    %7191 = vmatprep.subr.mxu0 0.0
    %7192 = vmatpush1.msra.mxu0 0.0
    %7193 = vmatprep.mubr.f32.mxu0 0.0
    %v7194 = vand.u32 %v7015, 4294901760
    %7195 = vmatmul.mubr.f32.gmra.mrb[0].mxu0 %v7194
    %v7196 = vpop.f32.mrb[0].mxu0
    %v7197 = vadd.f32 %v7096, %v7196
    %v7198 = vpop.f32.mrb[0].mxu0
    %7199 = vmatprep.mubr.f32.mxu0 0.0
    %v7200 = vand.u32 %v7018, 4294901760
    %7201 = vmatmul.mubr.f32.gmra.mrb[0].mxu0 %v7200
    %v7202 = vpop.f32.mrb[0].mxu0
    %v7203 = vadd.f32 %v7106, %v7202
    %v7204 = vpop.f32.mrb[0].mxu0
    %7205 = vdwg.mxu0
    %7206 = vmatprep.subr.mxu0 0.0
    %v7207 = vand.u32 %v143, 4294901760
    %v7208 = vsub.f32 %v143, %v7207
    %7209 = vmatpush1.msra.mxu0 %v7208
    %7210 = vmatprep.subr.mxu0 0.0
    %v7211 = vand.u32 %v144, 4294901760
    %v7212 = vsub.f32 %v144, %v7211
    %7213 = vmatpush1.msra.mxu0 %v7212
    %7214 = vmatprep.subr.mxu0 0.0
    %v7215 = vand.u32 %v145, 4294901760
    %v7216 = vsub.f32 %v145, %v7215
    %7217 = vmatpush1.msra.mxu0 %v7216
    %7218 = vmatprep.subr.mxu0 0.0
    %v7219 = vand.u32 %v146, 4294901760
    %v7220 = vsub.f32 %v146, %v7219
    %7221 = vmatpush1.msra.mxu0 %v7220
    %7222 = vmatprep.subr.mxu0 0.0
    %7223 = vmatpush1.msra.mxu0 0.0
    %7224 = vmatprep.subr.mxu0 0.0
    %7225 = vmatpush1.msra.mxu0 0.0
    %7226 = vmatprep.subr.mxu0 0.0
    %7227 = vmatpush1.msra.mxu0 0.0
    %7228 = vmatprep.subr.mxu0 0.0
    %7229 = vmatpush1.msra.mxu0 0.0
    %7230 = vmatprep.subr.mxu0 0.0
    %7231 = vmatpush1.msra.mxu0 0.0
    %7232 = vmatprep.subr.mxu0 0.0
    %7233 = vmatpush1.msra.mxu0 0.0
    %7234 = vmatprep.subr.mxu0 0.0
    %7235 = vmatpush1.msra.mxu0 0.0
    %7236 = vmatprep.subr.mxu0 0.0
    %7237 = vmatpush1.msra.mxu0 0.0
    %7238 = vmatprep.subr.mxu0 0.0
    %7239 = vmatpush1.msra.mxu0 0.0
    %7240 = vmatprep.subr.mxu0 0.0
    %7241 = vmatpush1.msra.mxu0 0.0
    %7242 = vmatprep.subr.mxu0 0.0
    %7243 = vmatpush1.msra.mxu0 0.0
    %7244 = vmatprep.subr.mxu0 0.0
    %7245 = vmatpush1.msra.mxu0 0.0
    %7246 = vmatprep.subr.mxu0 0.0
    %7247 = vmatpush1.msra.mxu0 0.0
    %7248 = vmatprep.subr.mxu0 0.0
    %7249 = vmatpush1.msra.mxu0 0.0
    %7250 = vmatprep.subr.mxu0 0.0
    %7251 = vmatpush1.msra.mxu0 0.0
    %7252 = vmatprep.subr.mxu0 0.0
    %7253 = vmatpush1.msra.mxu0 0.0
    %7254 = vmatprep.subr.mxu0 0.0
    %7255 = vmatpush1.msra.mxu0 0.0
    %7256 = vmatprep.subr.mxu0 0.0
    %7257 = vmatpush1.msra.mxu0 0.0
    %7258 = vmatprep.subr.mxu0 0.0
    %7259 = vmatpush1.msra.mxu0 0.0
    %7260 = vmatprep.subr.mxu0 0.0
    %7261 = vmatpush1.msra.mxu0 0.0
    %7262 = vmatprep.subr.mxu0 0.0
    %7263 = vmatpush1.msra.mxu0 0.0
    %7264 = vmatprep.subr.mxu0 0.0
    %7265 = vmatpush1.msra.mxu0 0.0
    %7266 = vmatprep.subr.mxu0 0.0
    %7267 = vmatpush1.msra.mxu0 0.0
    %7268 = vmatprep.subr.mxu0 0.0
    %7269 = vmatpush1.msra.mxu0 0.0
    %7270 = vmatprep.subr.mxu0 0.0
    %7271 = vmatpush1.msra.mxu0 0.0
    %7272 = vmatprep.subr.mxu0 0.0
    %7273 = vmatpush1.msra.mxu0 0.0
    %7274 = vmatprep.subr.mxu0 0.0
    %7275 = vmatpush1.msra.mxu0 0.0
    %7276 = vmatprep.subr.mxu0 0.0
    %7277 = vmatpush1.msra.mxu0 0.0
    %7278 = vmatprep.mubr.f32.mxu0 0.0
    %v7279 = vand.u32 %v7015, 4294901760
    %v7280 = vsub.f32 %v7015, %v7279
    %7281 = vmatmul.mubr.f32.gmra.mrb[0].mxu0 %v7280
    %v7282 = vpop.f32.mrb[0].mxu0
    %v7283 = vadd.f32 %v7197, %v7282
    %v7284 = vpop.f32.mrb[0].mxu0
    %7285 = vmatprep.mubr.f32.mxu0 0.0
    %v7286 = vand.u32 %v7018, 4294901760
    %v7287 = vsub.f32 %v7018, %v7286
    %7288 = vmatmul.mubr.f32.gmra.mrb[0].mxu0 %v7287
    %v7289 = vpop.f32.mrb[0].mxu0
    %v7290 = vadd.f32 %v7203, %v7289
    %v7291 = vpop.f32.mrb[0].mxu0
    %7292 = vdwg.mxu0
    %7293 = vmatprep.subr.mxu0 0.0
    %v7294 = vand.u32 %v143, 4294901760
    %7295 = vmatpush1.msra.mxu0 %v7294
    %7296 = vmatprep.subr.mxu0 0.0
    %v7297 = vand.u32 %v144, 4294901760
    %7298 = vmatpush1.msra.mxu0 %v7297
    %7299 = vmatprep.subr.mxu0 0.0
    %v7300 = vand.u32 %v145, 4294901760
    %7301 = vmatpush1.msra.mxu0 %v7300
    %7302 = vmatprep.subr.mxu0 0.0
    %v7303 = vand.u32 %v146, 4294901760
    %7304 = vmatpush1.msra.mxu0 %v7303
    %7305 = vmatprep.subr.mxu0 0.0
    %7306 = vmatpush1.msra.mxu0 0.0
    %7307 = vmatprep.subr.mxu0 0.0
    %7308 = vmatpush1.msra.mxu0 0.0
    %7309 = vmatprep.subr.mxu0 0.0
    %7310 = vmatpush1.msra.mxu0 0.0
    %7311 = vmatprep.subr.mxu0 0.0
    %7312 = vmatpush1.msra.mxu0 0.0
    %7313 = vmatprep.subr.mxu0 0.0
    %7314 = vmatpush1.msra.mxu0 0.0
    %7315 = vmatprep.subr.mxu0 0.0
    %7316 = vmatpush1.msra.mxu0 0.0
    %7317 = vmatprep.subr.mxu0 0.0
    %7318 = vmatpush1.msra.mxu0 0.0
    %7319 = vmatprep.subr.mxu0 0.0
    %7320 = vmatpush1.msra.mxu0 0.0
    %7321 = vmatprep.subr.mxu0 0.0
    %7322 = vmatpush1.msra.mxu0 0.0
    %7323 = vmatprep.subr.mxu0 0.0
    %7324 = vmatpush1.msra.mxu0 0.0
    %7325 = vmatprep.subr.mxu0 0.0
    %7326 = vmatpush1.msra.mxu0 0.0
    %7327 = vmatprep.subr.mxu0 0.0
    %7328 = vmatpush1.msra.mxu0 0.0
    %7329 = vmatprep.subr.mxu0 0.0
    %7330 = vmatpush1.msra.mxu0 0.0
    %7331 = vmatprep.subr.mxu0 0.0
    %7332 = vmatpush1.msra.mxu0 0.0
    %7333 = vmatprep.subr.mxu0 0.0
    %7334 = vmatpush1.msra.mxu0 0.0
    %7335 = vmatprep.subr.mxu0 0.0
    %7336 = vmatpush1.msra.mxu0 0.0
    %7337 = vmatprep.subr.mxu0 0.0
    %7338 = vmatpush1.msra.mxu0 0.0
    %7339 = vmatprep.subr.mxu0 0.0
    %7340 = vmatpush1.msra.mxu0 0.0
    %7341 = vmatprep.subr.mxu0 0.0
    %7342 = vmatpush1.msra.mxu0 0.0
    %7343 = vmatprep.subr.mxu0 0.0
    %7344 = vmatpush1.msra.mxu0 0.0
    %7345 = vmatprep.subr.mxu0 0.0
    %7346 = vmatpush1.msra.mxu0 0.0
    %7347 = vmatprep.subr.mxu0 0.0
    %7348 = vmatpush1.msra.mxu0 0.0
    %7349 = vmatprep.subr.mxu0 0.0
    %7350 = vmatpush1.msra.mxu0 0.0
    %7351 = vmatprep.subr.mxu0 0.0
    %7352 = vmatpush1.msra.mxu0 0.0
    %7353 = vmatprep.subr.mxu0 0.0
    %7354 = vmatpush1.msra.mxu0 0.0
    %7355 = vmatprep.subr.mxu0 0.0
    %7356 = vmatpush1.msra.mxu0 0.0
    %7357 = vmatprep.subr.mxu0 0.0
    %7358 = vmatpush1.msra.mxu0 0.0
    %7359 = vmatprep.subr.mxu0 0.0
    %7360 = vmatpush1.msra.mxu0 0.0
    %7361 = vmatprep.mubr.f32.mxu0 0.0
    %v7362 = vand.u32 %v7015, 4294901760
    %v7363 = vsub.f32 %v7015, %v7362
    %v7364 = vand.u32 %v7363, 4294901760
    %7365 = vmatmul.mubr.f32.gmra.mrb[0].mxu0 %v7364
    %v7366 = vpop.f32.mrb[0].mxu0
    %v7367 = vadd.f32 %v7283, %v7366
    %v7368 = vpop.f32.mrb[0].mxu0
    %7369 = vmatprep.mubr.f32.mxu0 0.0
    %v7370 = vand.u32 %v7018, 4294901760
    %v7371 = vsub.f32 %v7018, %v7370
    %v7372 = vand.u32 %v7371, 4294901760
    %7373 = vmatmul.mubr.f32.gmra.mrb[0].mxu0 %v7372
    %v7374 = vpop.f32.mrb[0].mxu0
    %v7375 = vadd.f32 %v7290, %v7374
    %v7376 = vpop.f32.mrb[0].mxu0
    %7377 = vdwg.mxu0
    %7378 = vmatprep.subr.mxu0 0.0
    %v7379 = vand.u32 %v143, 4294901760
    %v7380 = vsub.f32 %v143, %v7379
    %v7381 = vand.u32 %v7380, 4294901760
    %7382 = vmatpush1.msra.mxu0 %v7381
    %7383 = vmatprep.subr.mxu0 0.0
    %v7384 = vand.u32 %v144, 4294901760
    %v7385 = vsub.f32 %v144, %v7384
    %v7386 = vand.u32 %v7385, 4294901760
    %7387 = vmatpush1.msra.mxu0 %v7386
    %7388 = vmatprep.subr.mxu0 0.0
    %v7389 = vand.u32 %v145, 4294901760
    %v7390 = vsub.f32 %v145, %v7389
    %v7391 = vand.u32 %v7390, 4294901760
    %7392 = vmatpush1.msra.mxu0 %v7391
    %7393 = vmatprep.subr.mxu0 0.0
    %v7394 = vand.u32 %v146, 4294901760
    %v7395 = vsub.f32 %v146, %v7394
    %v7396 = vand.u32 %v7395, 4294901760
    %7397 = vmatpush1.msra.mxu0 %v7396
    %7398 = vmatprep.subr.mxu0 0.0
    %7399 = vmatpush1.msra.mxu0 0.0
    %7400 = vmatprep.subr.mxu0 0.0
    %7401 = vmatpush1.msra.mxu0 0.0
    %7402 = vmatprep.subr.mxu0 0.0
    %7403 = vmatpush1.msra.mxu0 0.0
    %7404 = vmatprep.subr.mxu0 0.0
    %7405 = vmatpush1.msra.mxu0 0.0
    %7406 = vmatprep.subr.mxu0 0.0
    %7407 = vmatpush1.msra.mxu0 0.0
    %7408 = vmatprep.subr.mxu0 0.0
    %7409 = vmatpush1.msra.mxu0 0.0
    %7410 = vmatprep.subr.mxu0 0.0
    %7411 = vmatpush1.msra.mxu0 0.0
    %7412 = vmatprep.subr.mxu0 0.0
    %7413 = vmatpush1.msra.mxu0 0.0
    %7414 = vmatprep.subr.mxu0 0.0
    %7415 = vmatpush1.msra.mxu0 0.0
    %7416 = vmatprep.subr.mxu0 0.0
    %7417 = vmatpush1.msra.mxu0 0.0
    %7418 = vmatprep.subr.mxu0 0.0
    %7419 = vmatpush1.msra.mxu0 0.0
    %7420 = vmatprep.subr.mxu0 0.0
    %7421 = vmatpush1.msra.mxu0 0.0
    %7422 = vmatprep.subr.mxu0 0.0
    %7423 = vmatpush1.msra.mxu0 0.0
    %7424 = vmatprep.subr.mxu0 0.0
    %7425 = vmatpush1.msra.mxu0 0.0
    %7426 = vmatprep.subr.mxu0 0.0
    %7427 = vmatpush1.msra.mxu0 0.0
    %7428 = vmatprep.subr.mxu0 0.0
    %7429 = vmatpush1.msra.mxu0 0.0
    %7430 = vmatprep.subr.mxu0 0.0
    %7431 = vmatpush1.msra.mxu0 0.0
    %7432 = vmatprep.subr.mxu0 0.0
    %7433 = vmatpush1.msra.mxu0 0.0
    %7434 = vmatprep.subr.mxu0 0.0
    %7435 = vmatpush1.msra.mxu0 0.0
    %7436 = vmatprep.subr.mxu0 0.0
    %7437 = vmatpush1.msra.mxu0 0.0
    %7438 = vmatprep.subr.mxu0 0.0
    %7439 = vmatpush1.msra.mxu0 0.0
    %7440 = vmatprep.subr.mxu0 0.0
    %7441 = vmatpush1.msra.mxu0 0.0
    %7442 = vmatprep.subr.mxu0 0.0
    %7443 = vmatpush1.msra.mxu0 0.0
    %7444 = vmatprep.subr.mxu0 0.0
    %7445 = vmatpush1.msra.mxu0 0.0
    %7446 = vmatprep.subr.mxu0 0.0
    %7447 = vmatpush1.msra.mxu0 0.0
    %7448 = vmatprep.subr.mxu0 0.0
    %7449 = vmatpush1.msra.mxu0 0.0
    %7450 = vmatprep.subr.mxu0 0.0
    %7451 = vmatpush1.msra.mxu0 0.0
    %7452 = vmatprep.subr.mxu0 0.0
    %7453 = vmatpush1.msra.mxu0 0.0
    %7454 = vmatprep.mubr.f32.mxu0 0.0
    %v7455 = vand.u32 %v7015, 4294901760
    %7456 = vmatmul.mubr.f32.gmra.mrb[0].mxu0 %v7455
    %v7457 = vpop.f32.mrb[0].mxu0
    %v7458 = vadd.f32 %v7367, %v7457
    %v7459 = vpop.f32.mrb[0].mxu0
    %7460 = vmatprep.mubr.f32.mxu0 0.0
    %v7461 = vand.u32 %v7018, 4294901760
    %7462 = vmatmul.mubr.f32.gmra.mrb[0].mxu0 %v7461
    %v7463 = vpop.f32.mrb[0].mxu0
    %v7464 = vadd.f32 %v7375, %v7463
    %v7465 = vpop.f32.mrb[0].mxu0
    %7466 = vdwg.mxu0
    %7467 = vmatprep.subr.mxu0 0.0
    %v7468 = vand.u32 %v143, 4294901760
    %7469 = vmatpush1.msra.mxu0 %v7468
    %7470 = vmatprep.subr.mxu0 0.0
    %v7471 = vand.u32 %v144, 4294901760
    %7472 = vmatpush1.msra.mxu0 %v7471
    %7473 = vmatprep.subr.mxu0 0.0
    %v7474 = vand.u32 %v145, 4294901760
    %7475 = vmatpush1.msra.mxu0 %v7474
    %7476 = vmatprep.subr.mxu0 0.0
    %v7477 = vand.u32 %v146, 4294901760
    %7478 = vmatpush1.msra.mxu0 %v7477
    %7479 = vmatprep.subr.mxu0 0.0
    %7480 = vmatpush1.msra.mxu0 0.0
    %7481 = vmatprep.subr.mxu0 0.0
    %7482 = vmatpush1.msra.mxu0 0.0
    %7483 = vmatprep.subr.mxu0 0.0
    %7484 = vmatpush1.msra.mxu0 0.0
    %7485 = vmatprep.subr.mxu0 0.0
    %7486 = vmatpush1.msra.mxu0 0.0
    %7487 = vmatprep.subr.mxu0 0.0
    %7488 = vmatpush1.msra.mxu0 0.0
    %7489 = vmatprep.subr.mxu0 0.0
    %7490 = vmatpush1.msra.mxu0 0.0
    %7491 = vmatprep.subr.mxu0 0.0
    %7492 = vmatpush1.msra.mxu0 0.0
    %7493 = vmatprep.subr.mxu0 0.0
    %7494 = vmatpush1.msra.mxu0 0.0
    %7495 = vmatprep.subr.mxu0 0.0
    %7496 = vmatpush1.msra.mxu0 0.0
    %7497 = vmatprep.subr.mxu0 0.0
    %7498 = vmatpush1.msra.mxu0 0.0
    %7499 = vmatprep.subr.mxu0 0.0
    %7500 = vmatpush1.msra.mxu0 0.0
    %7501 = vmatprep.subr.mxu0 0.0
    %7502 = vmatpush1.msra.mxu0 0.0
    %7503 = vmatprep.subr.mxu0 0.0
    %7504 = vmatpush1.msra.mxu0 0.0
    %7505 = vmatprep.subr.mxu0 0.0
    %7506 = vmatpush1.msra.mxu0 0.0
    %7507 = vmatprep.subr.mxu0 0.0
    %7508 = vmatpush1.msra.mxu0 0.0
    %7509 = vmatprep.subr.mxu0 0.0
    %7510 = vmatpush1.msra.mxu0 0.0
    %7511 = vmatprep.subr.mxu0 0.0
    %7512 = vmatpush1.msra.mxu0 0.0
    %7513 = vmatprep.subr.mxu0 0.0
    %7514 = vmatpush1.msra.mxu0 0.0
    %7515 = vmatprep.subr.mxu0 0.0
    %7516 = vmatpush1.msra.mxu0 0.0
    %7517 = vmatprep.subr.mxu0 0.0
    %7518 = vmatpush1.msra.mxu0 0.0
    %7519 = vmatprep.subr.mxu0 0.0
    %7520 = vmatpush1.msra.mxu0 0.0
    %7521 = vmatprep.subr.mxu0 0.0
    %7522 = vmatpush1.msra.mxu0 0.0
    %7523 = vmatprep.subr.mxu0 0.0
    %7524 = vmatpush1.msra.mxu0 0.0
    %7525 = vmatprep.subr.mxu0 0.0
    %7526 = vmatpush1.msra.mxu0 0.0
    %7527 = vmatprep.subr.mxu0 0.0
    %7528 = vmatpush1.msra.mxu0 0.0
    %7529 = vmatprep.subr.mxu0 0.0
    %7530 = vmatpush1.msra.mxu0 0.0
    %7531 = vmatprep.subr.mxu0 0.0
    %7532 = vmatpush1.msra.mxu0 0.0
    %7533 = vmatprep.subr.mxu0 0.0
    %7534 = vmatpush1.msra.mxu0 0.0
    %7535 = vmatprep.mubr.f32.mxu0 0.0
    %v7536 = vand.u32 %v7015, 4294901760
    %7537 = vmatmul.mubr.f32.gmra.mrb[0].mxu0 %v7536
    %v7538 = vpop.f32.mrb[0].mxu0
    %v7539 = vadd.f32 %v7458, %v7538
    %v7540 = vpop.f32.mrb[0].mxu0
    %7541 = vmatprep.mubr.f32.mxu0 0.0
    %v7542 = vand.u32 %v7018, 4294901760
    %7543 = vmatmul.mubr.f32.gmra.mrb[0].mxu0 %v7542
    %v7544 = vpop.f32.mrb[0].mxu0
    %v7545 = vadd.f32 %v7464, %v7544
    %v7546 = vpop.f32.mrb[0].mxu0
    %7547 = vdwg.mxu0
    %v7548 = vsel %vm151, %v4525, 0
    %v7550 = vsel %vm151, %v4527, 0
    %7552 = vmatprep.subr.mxu0 0.0
    %v7553 = vand.u32 %v147, 4294901760
    %7554 = vmatpush1.msra.mxu0 %v7553
    %7555 = vmatprep.subr.mxu0 0.0
    %v7556 = vand.u32 %v148, 4294901760
    %7557 = vmatpush1.msra.mxu0 %v7556
    %7558 = vmatprep.subr.mxu0 0.0
    %v7559 = vand.u32 %v149, 4294901760
    %7560 = vmatpush1.msra.mxu0 %v7559
    %7561 = vmatprep.subr.mxu0 0.0
    %v7562 = vand.u32 %v150, 4294901760
    %7563 = vmatpush1.msra.mxu0 %v7562
    %7564 = vmatprep.subr.mxu0 0.0
    %7565 = vmatpush1.msra.mxu0 0.0
    %7566 = vmatprep.subr.mxu0 0.0
    %7567 = vmatpush1.msra.mxu0 0.0
    %7568 = vmatprep.subr.mxu0 0.0
    %7569 = vmatpush1.msra.mxu0 0.0
    %7570 = vmatprep.subr.mxu0 0.0
    %7571 = vmatpush1.msra.mxu0 0.0
    %7572 = vmatprep.subr.mxu0 0.0
    %7573 = vmatpush1.msra.mxu0 0.0
    %7574 = vmatprep.subr.mxu0 0.0
    %7575 = vmatpush1.msra.mxu0 0.0
    %7576 = vmatprep.subr.mxu0 0.0
    %7577 = vmatpush1.msra.mxu0 0.0
    %7578 = vmatprep.subr.mxu0 0.0
    %7579 = vmatpush1.msra.mxu0 0.0
    %7580 = vmatprep.subr.mxu0 0.0
    %7581 = vmatpush1.msra.mxu0 0.0
    %7582 = vmatprep.subr.mxu0 0.0
    %7583 = vmatpush1.msra.mxu0 0.0
    %7584 = vmatprep.subr.mxu0 0.0
    %7585 = vmatpush1.msra.mxu0 0.0
    %7586 = vmatprep.subr.mxu0 0.0
    %7587 = vmatpush1.msra.mxu0 0.0
    %7588 = vmatprep.subr.mxu0 0.0
    %7589 = vmatpush1.msra.mxu0 0.0
    %7590 = vmatprep.subr.mxu0 0.0
    %7591 = vmatpush1.msra.mxu0 0.0
    %7592 = vmatprep.subr.mxu0 0.0
    %7593 = vmatpush1.msra.mxu0 0.0
    %7594 = vmatprep.subr.mxu0 0.0
    %7595 = vmatpush1.msra.mxu0 0.0
    %7596 = vmatprep.subr.mxu0 0.0
    %7597 = vmatpush1.msra.mxu0 0.0
    %7598 = vmatprep.subr.mxu0 0.0
    %7599 = vmatpush1.msra.mxu0 0.0
    %7600 = vmatprep.subr.mxu0 0.0
    %7601 = vmatpush1.msra.mxu0 0.0
    %7602 = vmatprep.subr.mxu0 0.0
    %7603 = vmatpush1.msra.mxu0 0.0
    %7604 = vmatprep.subr.mxu0 0.0
    %7605 = vmatpush1.msra.mxu0 0.0
    %7606 = vmatprep.subr.mxu0 0.0
    %7607 = vmatpush1.msra.mxu0 0.0
    %7608 = vmatprep.subr.mxu0 0.0
    %7609 = vmatpush1.msra.mxu0 0.0
    %7610 = vmatprep.subr.mxu0 0.0
    %7611 = vmatpush1.msra.mxu0 0.0
    %7612 = vmatprep.subr.mxu0 0.0
    %7613 = vmatpush1.msra.mxu0 0.0
    %7614 = vmatprep.subr.mxu0 0.0
    %7615 = vmatpush1.msra.mxu0 0.0
    %7616 = vmatprep.subr.mxu0 0.0
    %7617 = vmatpush1.msra.mxu0 0.0
    %7618 = vmatprep.subr.mxu0 0.0
    %7619 = vmatpush1.msra.mxu0 0.0
    %7620 = vmatprep.mubr.f32.mxu0 0.0
    %v7621 = vand.u32 %v7548, 4294901760
    %v7622 = vsub.f32 %v7548, %v7621
    %v7623 = vand.u32 %v7622, 4294901760
    %v7624 = vsub.f32 %v7622, %v7623
    %v7625 = vand.u32 %v7624, 4294901760
    %7626 = vmatmul.mubr.f32.gmra.mrb[0].mxu0 %v7625
    %v7627 = vpop.f32.mrb[0].mxu0
    %v7628 = vadd.f32 0.0, %v7627
    %v7629 = vpop.f32.mrb[0].mxu0
    %7630 = vmatprep.mubr.f32.mxu0 0.0
    %v7631 = vand.u32 %v7550, 4294901760
    %v7632 = vsub.f32 %v7550, %v7631
    %v7633 = vand.u32 %v7632, 4294901760
    %v7634 = vsub.f32 %v7632, %v7633
    %v7635 = vand.u32 %v7634, 4294901760
    %7636 = vmatmul.mubr.f32.gmra.mrb[0].mxu0 %v7635
    %v7637 = vpop.f32.mrb[0].mxu0
    %v7638 = vadd.f32 0.0, %v7637
    %v7639 = vpop.f32.mrb[0].mxu0
    %7640 = vdwg.mxu0
    %7641 = vmatprep.subr.mxu0 0.0
    %v7642 = vand.u32 %v147, 4294901760
    %v7643 = vsub.f32 %v147, %v7642
    %v7644 = vand.u32 %v7643, 4294901760
    %v7645 = vsub.f32 %v7643, %v7644
    %v7646 = vand.u32 %v7645, 4294901760
    %7647 = vmatpush1.msra.mxu0 %v7646
    %7648 = vmatprep.subr.mxu0 0.0
    %v7649 = vand.u32 %v148, 4294901760
    %v7650 = vsub.f32 %v148, %v7649
    %v7651 = vand.u32 %v7650, 4294901760
    %v7652 = vsub.f32 %v7650, %v7651
    %v7653 = vand.u32 %v7652, 4294901760
    %7654 = vmatpush1.msra.mxu0 %v7653
    %7655 = vmatprep.subr.mxu0 0.0
    %v7656 = vand.u32 %v149, 4294901760
    %v7657 = vsub.f32 %v149, %v7656
    %v7658 = vand.u32 %v7657, 4294901760
    %v7659 = vsub.f32 %v7657, %v7658
    %v7660 = vand.u32 %v7659, 4294901760
    %7661 = vmatpush1.msra.mxu0 %v7660
    %7662 = vmatprep.subr.mxu0 0.0
    %v7663 = vand.u32 %v150, 4294901760
    %v7664 = vsub.f32 %v150, %v7663
    %v7665 = vand.u32 %v7664, 4294901760
    %v7666 = vsub.f32 %v7664, %v7665
    %v7667 = vand.u32 %v7666, 4294901760
    %7668 = vmatpush1.msra.mxu0 %v7667
    %7669 = vmatprep.subr.mxu0 0.0
    %7670 = vmatpush1.msra.mxu0 0.0
    %7671 = vmatprep.subr.mxu0 0.0
    %7672 = vmatpush1.msra.mxu0 0.0
    %7673 = vmatprep.subr.mxu0 0.0
    %7674 = vmatpush1.msra.mxu0 0.0
    %7675 = vmatprep.subr.mxu0 0.0
    %7676 = vmatpush1.msra.mxu0 0.0
    %7677 = vmatprep.subr.mxu0 0.0
    %7678 = vmatpush1.msra.mxu0 0.0
    %7679 = vmatprep.subr.mxu0 0.0
    %7680 = vmatpush1.msra.mxu0 0.0
    %7681 = vmatprep.subr.mxu0 0.0
    %7682 = vmatpush1.msra.mxu0 0.0
    %7683 = vmatprep.subr.mxu0 0.0
    %7684 = vmatpush1.msra.mxu0 0.0
    %7685 = vmatprep.subr.mxu0 0.0
    %7686 = vmatpush1.msra.mxu0 0.0
    %7687 = vmatprep.subr.mxu0 0.0
    %7688 = vmatpush1.msra.mxu0 0.0
    %7689 = vmatprep.subr.mxu0 0.0
    %7690 = vmatpush1.msra.mxu0 0.0
    %7691 = vmatprep.subr.mxu0 0.0
    %7692 = vmatpush1.msra.mxu0 0.0
    %7693 = vmatprep.subr.mxu0 0.0
    %7694 = vmatpush1.msra.mxu0 0.0
    %7695 = vmatprep.subr.mxu0 0.0
    %7696 = vmatpush1.msra.mxu0 0.0
    %7697 = vmatprep.subr.mxu0 0.0
    %7698 = vmatpush1.msra.mxu0 0.0
    %7699 = vmatprep.subr.mxu0 0.0
    %7700 = vmatpush1.msra.mxu0 0.0
    %7701 = vmatprep.subr.mxu0 0.0
    %7702 = vmatpush1.msra.mxu0 0.0
    %7703 = vmatprep.subr.mxu0 0.0
    %7704 = vmatpush1.msra.mxu0 0.0
    %7705 = vmatprep.subr.mxu0 0.0
    %7706 = vmatpush1.msra.mxu0 0.0
    %7707 = vmatprep.subr.mxu0 0.0
    %7708 = vmatpush1.msra.mxu0 0.0
    %7709 = vmatprep.subr.mxu0 0.0
    %7710 = vmatpush1.msra.mxu0 0.0
    %7711 = vmatprep.subr.mxu0 0.0
    %7712 = vmatpush1.msra.mxu0 0.0
    %7713 = vmatprep.subr.mxu0 0.0
    %7714 = vmatpush1.msra.mxu0 0.0
    %7715 = vmatprep.subr.mxu0 0.0
    %7716 = vmatpush1.msra.mxu0 0.0
    %7717 = vmatprep.subr.mxu0 0.0
    %7718 = vmatpush1.msra.mxu0 0.0
    %7719 = vmatprep.subr.mxu0 0.0
    %7720 = vmatpush1.msra.mxu0 0.0
    %7721 = vmatprep.subr.mxu0 0.0
    %7722 = vmatpush1.msra.mxu0 0.0
    %7723 = vmatprep.subr.mxu0 0.0
    %7724 = vmatpush1.msra.mxu0 0.0
    %7725 = vmatprep.mubr.f32.mxu0 0.0
    %v7726 = vand.u32 %v7548, 4294901760
    %7727 = vmatmul.mubr.f32.gmra.mrb[0].mxu0 %v7726
    %v7728 = vpop.f32.mrb[0].mxu0
    %v7729 = vadd.f32 %v7628, %v7728
    %v7730 = vpop.f32.mrb[0].mxu0
    %7731 = vmatprep.mubr.f32.mxu0 0.0
    %v7732 = vand.u32 %v7550, 4294901760
    %7733 = vmatmul.mubr.f32.gmra.mrb[0].mxu0 %v7732
    %v7734 = vpop.f32.mrb[0].mxu0
    %v7735 = vadd.f32 %v7638, %v7734
    %v7736 = vpop.f32.mrb[0].mxu0
    %7737 = vdwg.mxu0
    %7738 = vmatprep.subr.mxu0 0.0
    %v7739 = vand.u32 %v147, 4294901760
    %v7740 = vsub.f32 %v147, %v7739
    %7741 = vmatpush1.msra.mxu0 %v7740
    %7742 = vmatprep.subr.mxu0 0.0
    %v7743 = vand.u32 %v148, 4294901760
    %v7744 = vsub.f32 %v148, %v7743
    %7745 = vmatpush1.msra.mxu0 %v7744
    %7746 = vmatprep.subr.mxu0 0.0
    %v7747 = vand.u32 %v149, 4294901760
    %v7748 = vsub.f32 %v149, %v7747
    %7749 = vmatpush1.msra.mxu0 %v7748
    %7750 = vmatprep.subr.mxu0 0.0
    %v7751 = vand.u32 %v150, 4294901760
    %v7752 = vsub.f32 %v150, %v7751
    %7753 = vmatpush1.msra.mxu0 %v7752
    %7754 = vmatprep.subr.mxu0 0.0
    %7755 = vmatpush1.msra.mxu0 0.0
    %7756 = vmatprep.subr.mxu0 0.0
    %7757 = vmatpush1.msra.mxu0 0.0
    %7758 = vmatprep.subr.mxu0 0.0
    %7759 = vmatpush1.msra.mxu0 0.0
    %7760 = vmatprep.subr.mxu0 0.0
    %7761 = vmatpush1.msra.mxu0 0.0
    %7762 = vmatprep.subr.mxu0 0.0
    %7763 = vmatpush1.msra.mxu0 0.0
    %7764 = vmatprep.subr.mxu0 0.0
    %7765 = vmatpush1.msra.mxu0 0.0
    %7766 = vmatprep.subr.mxu0 0.0
    %7767 = vmatpush1.msra.mxu0 0.0
    %7768 = vmatprep.subr.mxu0 0.0
    %7769 = vmatpush1.msra.mxu0 0.0
    %7770 = vmatprep.subr.mxu0 0.0
    %7771 = vmatpush1.msra.mxu0 0.0
    %7772 = vmatprep.subr.mxu0 0.0
    %7773 = vmatpush1.msra.mxu0 0.0
    %7774 = vmatprep.subr.mxu0 0.0
    %7775 = vmatpush1.msra.mxu0 0.0
    %7776 = vmatprep.subr.mxu0 0.0
    %7777 = vmatpush1.msra.mxu0 0.0
    %7778 = vmatprep.subr.mxu0 0.0
    %7779 = vmatpush1.msra.mxu0 0.0
    %7780 = vmatprep.subr.mxu0 0.0
    %7781 = vmatpush1.msra.mxu0 0.0
    %7782 = vmatprep.subr.mxu0 0.0
    %7783 = vmatpush1.msra.mxu0 0.0
    %7784 = vmatprep.subr.mxu0 0.0
    %7785 = vmatpush1.msra.mxu0 0.0
    %7786 = vmatprep.subr.mxu0 0.0
    %7787 = vmatpush1.msra.mxu0 0.0
    %7788 = vmatprep.subr.mxu0 0.0
    %7789 = vmatpush1.msra.mxu0 0.0
    %7790 = vmatprep.subr.mxu0 0.0
    %7791 = vmatpush1.msra.mxu0 0.0
    %7792 = vmatprep.subr.mxu0 0.0
    %7793 = vmatpush1.msra.mxu0 0.0
    %7794 = vmatprep.subr.mxu0 0.0
    %7795 = vmatpush1.msra.mxu0 0.0
    %7796 = vmatprep.subr.mxu0 0.0
    %7797 = vmatpush1.msra.mxu0 0.0
    %7798 = vmatprep.subr.mxu0 0.0
    %7799 = vmatpush1.msra.mxu0 0.0
    %7800 = vmatprep.subr.mxu0 0.0
    %7801 = vmatpush1.msra.mxu0 0.0
    %7802 = vmatprep.subr.mxu0 0.0
    %7803 = vmatpush1.msra.mxu0 0.0
    %7804 = vmatprep.subr.mxu0 0.0
    %7805 = vmatpush1.msra.mxu0 0.0
    %7806 = vmatprep.subr.mxu0 0.0
    %7807 = vmatpush1.msra.mxu0 0.0
    %7808 = vmatprep.subr.mxu0 0.0
    %7809 = vmatpush1.msra.mxu0 0.0
    %7810 = vmatprep.mubr.f32.mxu0 0.0
    %v7811 = vand.u32 %v7548, 4294901760
    %v7812 = vsub.f32 %v7548, %v7811
    %7813 = vmatmul.mubr.f32.gmra.mrb[0].mxu0 %v7812
    %v7814 = vpop.f32.mrb[0].mxu0
    %v7815 = vadd.f32 %v7729, %v7814
    %v7816 = vpop.f32.mrb[0].mxu0
    %7817 = vmatprep.mubr.f32.mxu0 0.0
    %v7818 = vand.u32 %v7550, 4294901760
    %v7819 = vsub.f32 %v7550, %v7818
    %7820 = vmatmul.mubr.f32.gmra.mrb[0].mxu0 %v7819
    %v7821 = vpop.f32.mrb[0].mxu0
    %v7822 = vadd.f32 %v7735, %v7821
    %v7823 = vpop.f32.mrb[0].mxu0
    %7824 = vdwg.mxu0
    %7825 = vmatprep.subr.mxu0 0.0
    %v7826 = vand.u32 %v147, 4294901760
    %7827 = vmatpush1.msra.mxu0 %v7826
    %7828 = vmatprep.subr.mxu0 0.0
    %v7829 = vand.u32 %v148, 4294901760
    %7830 = vmatpush1.msra.mxu0 %v7829
    %7831 = vmatprep.subr.mxu0 0.0
    %v7832 = vand.u32 %v149, 4294901760
    %7833 = vmatpush1.msra.mxu0 %v7832
    %7834 = vmatprep.subr.mxu0 0.0
    %v7835 = vand.u32 %v150, 4294901760
    %7836 = vmatpush1.msra.mxu0 %v7835
    %7837 = vmatprep.subr.mxu0 0.0
    %7838 = vmatpush1.msra.mxu0 0.0
    %7839 = vmatprep.subr.mxu0 0.0
    %7840 = vmatpush1.msra.mxu0 0.0
    %7841 = vmatprep.subr.mxu0 0.0
    %7842 = vmatpush1.msra.mxu0 0.0
    %7843 = vmatprep.subr.mxu0 0.0
    %7844 = vmatpush1.msra.mxu0 0.0
    %7845 = vmatprep.subr.mxu0 0.0
    %7846 = vmatpush1.msra.mxu0 0.0
    %7847 = vmatprep.subr.mxu0 0.0
    %7848 = vmatpush1.msra.mxu0 0.0
    %7849 = vmatprep.subr.mxu0 0.0
    %7850 = vmatpush1.msra.mxu0 0.0
    %7851 = vmatprep.subr.mxu0 0.0
    %7852 = vmatpush1.msra.mxu0 0.0
    %7853 = vmatprep.subr.mxu0 0.0
    %7854 = vmatpush1.msra.mxu0 0.0
    %7855 = vmatprep.subr.mxu0 0.0
    %7856 = vmatpush1.msra.mxu0 0.0
    %7857 = vmatprep.subr.mxu0 0.0
    %7858 = vmatpush1.msra.mxu0 0.0
    %7859 = vmatprep.subr.mxu0 0.0
    %7860 = vmatpush1.msra.mxu0 0.0
    %7861 = vmatprep.subr.mxu0 0.0
    %7862 = vmatpush1.msra.mxu0 0.0
    %7863 = vmatprep.subr.mxu0 0.0
    %7864 = vmatpush1.msra.mxu0 0.0
    %7865 = vmatprep.subr.mxu0 0.0
    %7866 = vmatpush1.msra.mxu0 0.0
    %7867 = vmatprep.subr.mxu0 0.0
    %7868 = vmatpush1.msra.mxu0 0.0
    %7869 = vmatprep.subr.mxu0 0.0
    %7870 = vmatpush1.msra.mxu0 0.0
    %7871 = vmatprep.subr.mxu0 0.0
    %7872 = vmatpush1.msra.mxu0 0.0
    %7873 = vmatprep.subr.mxu0 0.0
    %7874 = vmatpush1.msra.mxu0 0.0
    %7875 = vmatprep.subr.mxu0 0.0
    %7876 = vmatpush1.msra.mxu0 0.0
    %7877 = vmatprep.subr.mxu0 0.0
    %7878 = vmatpush1.msra.mxu0 0.0
    %7879 = vmatprep.subr.mxu0 0.0
    %7880 = vmatpush1.msra.mxu0 0.0
    %7881 = vmatprep.subr.mxu0 0.0
    %7882 = vmatpush1.msra.mxu0 0.0
    %7883 = vmatprep.subr.mxu0 0.0
    %7884 = vmatpush1.msra.mxu0 0.0
    %7885 = vmatprep.subr.mxu0 0.0
    %7886 = vmatpush1.msra.mxu0 0.0
    %7887 = vmatprep.subr.mxu0 0.0
    %7888 = vmatpush1.msra.mxu0 0.0
    %7889 = vmatprep.subr.mxu0 0.0
    %7890 = vmatpush1.msra.mxu0 0.0
    %7891 = vmatprep.subr.mxu0 0.0
    %7892 = vmatpush1.msra.mxu0 0.0
    %7893 = vmatprep.mubr.f32.mxu0 0.0
    %v7894 = vand.u32 %v7548, 4294901760
    %v7895 = vsub.f32 %v7548, %v7894
    %v7896 = vand.u32 %v7895, 4294901760
    %7897 = vmatmul.mubr.f32.gmra.mrb[0].mxu0 %v7896
    %v7898 = vpop.f32.mrb[0].mxu0
    %v7899 = vadd.f32 %v7815, %v7898
    %v7900 = vpop.f32.mrb[0].mxu0
    %7901 = vmatprep.mubr.f32.mxu0 0.0
    %v7902 = vand.u32 %v7550, 4294901760
    %v7903 = vsub.f32 %v7550, %v7902
    %v7904 = vand.u32 %v7903, 4294901760
    %7905 = vmatmul.mubr.f32.gmra.mrb[0].mxu0 %v7904
    %v7906 = vpop.f32.mrb[0].mxu0
    %v7907 = vadd.f32 %v7822, %v7906
    %v7908 = vpop.f32.mrb[0].mxu0
    %7909 = vdwg.mxu0
    %7910 = vmatprep.subr.mxu0 0.0
    %v7911 = vand.u32 %v147, 4294901760
    %v7912 = vsub.f32 %v147, %v7911
    %v7913 = vand.u32 %v7912, 4294901760
    %7914 = vmatpush1.msra.mxu0 %v7913
    %7915 = vmatprep.subr.mxu0 0.0
    %v7916 = vand.u32 %v148, 4294901760
    %v7917 = vsub.f32 %v148, %v7916
    %v7918 = vand.u32 %v7917, 4294901760
    %7919 = vmatpush1.msra.mxu0 %v7918
    %7920 = vmatprep.subr.mxu0 0.0
    %v7921 = vand.u32 %v149, 4294901760
    %v7922 = vsub.f32 %v149, %v7921
    %v7923 = vand.u32 %v7922, 4294901760
    %7924 = vmatpush1.msra.mxu0 %v7923
    %7925 = vmatprep.subr.mxu0 0.0
    %v7926 = vand.u32 %v150, 4294901760
    %v7927 = vsub.f32 %v150, %v7926
    %v7928 = vand.u32 %v7927, 4294901760
    %7929 = vmatpush1.msra.mxu0 %v7928
    %7930 = vmatprep.subr.mxu0 0.0
    %7931 = vmatpush1.msra.mxu0 0.0
    %7932 = vmatprep.subr.mxu0 0.0
    %7933 = vmatpush1.msra.mxu0 0.0
    %7934 = vmatprep.subr.mxu0 0.0
    %7935 = vmatpush1.msra.mxu0 0.0
    %7936 = vmatprep.subr.mxu0 0.0
    %7937 = vmatpush1.msra.mxu0 0.0
    %7938 = vmatprep.subr.mxu0 0.0
    %7939 = vmatpush1.msra.mxu0 0.0
    %7940 = vmatprep.subr.mxu0 0.0
    %7941 = vmatpush1.msra.mxu0 0.0
    %7942 = vmatprep.subr.mxu0 0.0
    %7943 = vmatpush1.msra.mxu0 0.0
    %7944 = vmatprep.subr.mxu0 0.0
    %7945 = vmatpush1.msra.mxu0 0.0
    %7946 = vmatprep.subr.mxu0 0.0
    %7947 = vmatpush1.msra.mxu0 0.0
    %7948 = vmatprep.subr.mxu0 0.0
    %7949 = vmatpush1.msra.mxu0 0.0
    %7950 = vmatprep.subr.mxu0 0.0
    %7951 = vmatpush1.msra.mxu0 0.0
    %7952 = vmatprep.subr.mxu0 0.0
    %7953 = vmatpush1.msra.mxu0 0.0
    %7954 = vmatprep.subr.mxu0 0.0
    %7955 = vmatpush1.msra.mxu0 0.0
    %7956 = vmatprep.subr.mxu0 0.0
    %7957 = vmatpush1.msra.mxu0 0.0
    %7958 = vmatprep.subr.mxu0 0.0
    %7959 = vmatpush1.msra.mxu0 0.0
    %7960 = vmatprep.subr.mxu0 0.0
    %7961 = vmatpush1.msra.mxu0 0.0
    %7962 = vmatprep.subr.mxu0 0.0
    %7963 = vmatpush1.msra.mxu0 0.0
    %7964 = vmatprep.subr.mxu0 0.0
    %7965 = vmatpush1.msra.mxu0 0.0
    %7966 = vmatprep.subr.mxu0 0.0
    %7967 = vmatpush1.msra.mxu0 0.0
    %7968 = vmatprep.subr.mxu0 0.0
    %7969 = vmatpush1.msra.mxu0 0.0
    %7970 = vmatprep.subr.mxu0 0.0
    %7971 = vmatpush1.msra.mxu0 0.0
    %7972 = vmatprep.subr.mxu0 0.0
    %7973 = vmatpush1.msra.mxu0 0.0
    %7974 = vmatprep.subr.mxu0 0.0
    %7975 = vmatpush1.msra.mxu0 0.0
    %7976 = vmatprep.subr.mxu0 0.0
    %7977 = vmatpush1.msra.mxu0 0.0
    %7978 = vmatprep.subr.mxu0 0.0
    %7979 = vmatpush1.msra.mxu0 0.0
    %7980 = vmatprep.subr.mxu0 0.0
    %7981 = vmatpush1.msra.mxu0 0.0
    %7982 = vmatprep.subr.mxu0 0.0
    %7983 = vmatpush1.msra.mxu0 0.0
    %7984 = vmatprep.subr.mxu0 0.0
    %7985 = vmatpush1.msra.mxu0 0.0
    %7986 = vmatprep.mubr.f32.mxu0 0.0
    %v7987 = vand.u32 %v7548, 4294901760
    %7988 = vmatmul.mubr.f32.gmra.mrb[0].mxu0 %v7987
    %v7989 = vpop.f32.mrb[0].mxu0
    %v7990 = vadd.f32 %v7899, %v7989
    %v7991 = vpop.f32.mrb[0].mxu0
    %7992 = vmatprep.mubr.f32.mxu0 0.0
    %v7993 = vand.u32 %v7550, 4294901760
    %7994 = vmatmul.mubr.f32.gmra.mrb[0].mxu0 %v7993
    %v7995 = vpop.f32.mrb[0].mxu0
    %v7996 = vadd.f32 %v7907, %v7995
    %v7997 = vpop.f32.mrb[0].mxu0
    %7998 = vdwg.mxu0
    %7999 = vmatprep.subr.mxu0 0.0
    %v8000 = vand.u32 %v147, 4294901760
    %8001 = vmatpush1.msra.mxu0 %v8000
    %8002 = vmatprep.subr.mxu0 0.0
    %v8003 = vand.u32 %v148, 4294901760
    %8004 = vmatpush1.msra.mxu0 %v8003
    %8005 = vmatprep.subr.mxu0 0.0
    %v8006 = vand.u32 %v149, 4294901760
    %8007 = vmatpush1.msra.mxu0 %v8006
    %8008 = vmatprep.subr.mxu0 0.0
    %v8009 = vand.u32 %v150, 4294901760
    %8010 = vmatpush1.msra.mxu0 %v8009
    %8011 = vmatprep.subr.mxu0 0.0
    %8012 = vmatpush1.msra.mxu0 0.0
    %8013 = vmatprep.subr.mxu0 0.0
    %8014 = vmatpush1.msra.mxu0 0.0
    %8015 = vmatprep.subr.mxu0 0.0
    %8016 = vmatpush1.msra.mxu0 0.0
    %8017 = vmatprep.subr.mxu0 0.0
    %8018 = vmatpush1.msra.mxu0 0.0
    %8019 = vmatprep.subr.mxu0 0.0
    %8020 = vmatpush1.msra.mxu0 0.0
    %8021 = vmatprep.subr.mxu0 0.0
    %8022 = vmatpush1.msra.mxu0 0.0
    %8023 = vmatprep.subr.mxu0 0.0
    %8024 = vmatpush1.msra.mxu0 0.0
    %8025 = vmatprep.subr.mxu0 0.0
    %8026 = vmatpush1.msra.mxu0 0.0
    %8027 = vmatprep.subr.mxu0 0.0
    %8028 = vmatpush1.msra.mxu0 0.0
    %8029 = vmatprep.subr.mxu0 0.0
    %8030 = vmatpush1.msra.mxu0 0.0
    %8031 = vmatprep.subr.mxu0 0.0
    %8032 = vmatpush1.msra.mxu0 0.0
    %8033 = vmatprep.subr.mxu0 0.0
    %8034 = vmatpush1.msra.mxu0 0.0
    %8035 = vmatprep.subr.mxu0 0.0
    %8036 = vmatpush1.msra.mxu0 0.0
    %8037 = vmatprep.subr.mxu0 0.0
    %8038 = vmatpush1.msra.mxu0 0.0
    %8039 = vmatprep.subr.mxu0 0.0
    %8040 = vmatpush1.msra.mxu0 0.0
    %8041 = vmatprep.subr.mxu0 0.0
    %8042 = vmatpush1.msra.mxu0 0.0
    %8043 = vmatprep.subr.mxu0 0.0
    %8044 = vmatpush1.msra.mxu0 0.0
    %8045 = vmatprep.subr.mxu0 0.0
    %8046 = vmatpush1.msra.mxu0 0.0
    %8047 = vmatprep.subr.mxu0 0.0
    %8048 = vmatpush1.msra.mxu0 0.0
    %8049 = vmatprep.subr.mxu0 0.0
    %8050 = vmatpush1.msra.mxu0 0.0
    %8051 = vmatprep.subr.mxu0 0.0
    %8052 = vmatpush1.msra.mxu0 0.0
    %8053 = vmatprep.subr.mxu0 0.0
    %8054 = vmatpush1.msra.mxu0 0.0
    %8055 = vmatprep.subr.mxu0 0.0
    %8056 = vmatpush1.msra.mxu0 0.0
    %8057 = vmatprep.subr.mxu0 0.0
    %8058 = vmatpush1.msra.mxu0 0.0
    %8059 = vmatprep.subr.mxu0 0.0
    %8060 = vmatpush1.msra.mxu0 0.0
    %8061 = vmatprep.subr.mxu0 0.0
    %8062 = vmatpush1.msra.mxu0 0.0
    %8063 = vmatprep.subr.mxu0 0.0
    %8064 = vmatpush1.msra.mxu0 0.0
    %8065 = vmatprep.subr.mxu0 0.0
    %8066 = vmatpush1.msra.mxu0 0.0
    %8067 = vmatprep.mubr.f32.mxu0 0.0
    %v8068 = vand.u32 %v7548, 4294901760
    %8069 = vmatmul.mubr.f32.gmra.mrb[0].mxu0 %v8068
    %v8070 = vpop.f32.mrb[0].mxu0
    %v8071 = vadd.f32 %v7990, %v8070
    %v8072 = vpop.f32.mrb[0].mxu0
    %8073 = vmatprep.mubr.f32.mxu0 0.0
    %v8074 = vand.u32 %v7550, 4294901760
    %8075 = vmatmul.mubr.f32.gmra.mrb[0].mxu0 %v8074
    %v8076 = vpop.f32.mrb[0].mxu0
    %v8077 = vadd.f32 %v7996, %v8076
    %v8078 = vpop.f32.mrb[0].mxu0
    %8079 = vdwg.mxu0
    %v8080 = vadd.f32 %v7539, %v8071
    %v8081 = vadd.f32 %v7545, %v8077
    %v8082 = vadd.f32 %v8080, %v4421
    %v8083 = vadd.f32 %v8081, %v4421
    %v8084 = vxor.u32 %v8082, 2147483648
    %v8085 = vxor.u32 %v8083, 2147483648
    %v8086 = vmul.f32 %v8084, 1.442695
    %v8087 = vpow.pop %v8086
    %v8088 = vmul.f32 %v8085, 1.442695
    %v8089 = vpow.pop %v8088
    %v8090 = vadd.f32 %v8087, 1.0
    %v8091 = vadd.f32 %v8089, 1.0
    %v8092 = vrcp.pop %v8090
    %v8093 = vmul.f32 1.0, %v8092
    %v8094 = vrcp.pop %v8091
    %v8095 = vmul.f32 1.0, %v8094
    %v8096 = vadd.f32 %v8080, %v4442
    %v8097 = vadd.f32 %v8081, %v4442
    %v8098 = vxor.u32 %v8096, 2147483648
    %v8099 = vxor.u32 %v8097, 2147483648
    %v8100 = vmul.f32 %v8098, 1.442695
    %v8101 = vpow.pop %v8100
    %v8102 = vmul.f32 %v8099, 1.442695
    %v8103 = vpow.pop %v8102
    %v8104 = vadd.f32 %v8101, 1.0
    %v8105 = vadd.f32 %v8103, 1.0
    %v8106 = vrcp.pop %v8104
    %v8107 = vmul.f32 1.0, %v8106
    %v8108 = vrcp.pop %v8105
    %v8109 = vmul.f32 1.0, %v8108
    %v8110 = vadd.f32 %v7539, %v4464
    %v8111 = vadd.f32 %v7545, %v4464
    %v8112 = vadd.f32 %v8071, %v4474
    %v8113 = vadd.f32 %v8077, %v4474
    %8116 = vrot.lane.b32.xlu0 %v8112, 64
    %v8117 = vpop.permute.xlu0 %8116
    %8118 = vrot.lane.b32.xlu0 %v8113, 64
    %v8119 = vpop.permute.xlu0 %8118
    %v8122 = vmul.f32 %v8093, %v8117
    %v8123 = vmul.f32 %v8095, %v8119
    %8126 = vrot.lane.b32.xlu0 %v8122, 64
    %v8127 = vpop.permute.xlu0 %8126
    %8128 = vrot.lane.b32.xlu0 %v8123, 64
    %v8129 = vpop.permute.xlu0 %8128
    %v8132 = vadd.f32 %v8110, %v8127
    %v8133 = vadd.f32 %v8111, %v8129
    %v8134 = vtanh.pop %v8132
    %v8135 = vtanh.pop %v8133
    %v8136 = vsub.f32 1.0, %v8107
    %v8137 = vsub.f32 1.0, %v8109
    %8140 = vrot.lane.b32.xlu0 %v8134, 96
    %v8141 = vpop.permute.xlu0 %8140
    %8142 = vrot.lane.b32.xlu0 %v8135, 96
    %v8143 = vpop.permute.xlu0 %8142
    %v8146 = vmul.f32 %v8136, %v8141
    %v8147 = vmul.f32 %v8137, %v8143
    %v8148 = vmul.f32 %v8107, %v4520
    %v8149 = vmul.f32 %v8109, %v4521
    %v8150 = vadd.f32 %v8146, %v8148
    %v8151 = vadd.f32 %v8147, %v8149
    %8154 = vrot.lane.b32.xlu0 %v8150, 96
    %v8155 = vpop.permute.xlu0 %8154
    %8156 = vrot.lane.b32.xlu0 %v8151, 96
    %v8157 = vpop.permute.xlu0 %8156
    %v8160 = vsel %vm151, %v8155, 0.0
    %8161 = vadd.xlane.f32.xlu0 %v8160
    %v8162 = vpop.xlane.xlu0 %8161
    %v8163 = vsel %vm151, %v8157, 0.0
    %8164 = vadd.xlane.f32.xlu0 %v8163
    %v8165 = vpop.xlane.xlu0 %8164
    %v8166 = vmul.f32 %v8162, %v164
    %v8167 = vmul.f32 %v8165, %v164
    %v8168 = vsub.f32 %v8150, %v8166
    %v8169 = vsub.f32 %v8151, %v8167
    %v8170 = vmul.f32 %v8168, %v8168
    %v8171 = vmul.f32 %v8169, %v8169
    %8174 = vrot.lane.b32.xlu0 %v8170, 96
    %v8175 = vpop.permute.xlu0 %8174
    %8176 = vrot.lane.b32.xlu0 %v8171, 96
    %v8177 = vpop.permute.xlu0 %8176
    %v8180 = vsel %vm151, %v8175, 0.0
    %8181 = vadd.xlane.f32.xlu0 %v8180
    %v8182 = vpop.xlane.xlu0 %8181
    %v8183 = vsel %vm151, %v8177, 0.0
    %8184 = vadd.xlane.f32.xlu0 %v8183
    %v8185 = vpop.xlane.xlu0 %8184
    %v8186 = vmul.f32 %v8182, %v164
    %v8187 = vmul.f32 %v8185, %v164
    %v8188 = vadd.f32 %v8186, 1e-05
    %v8189 = vadd.f32 %v8187, 1e-05
    %v8190 = vrsqrt.pop %v8188
    %v8191 = vrsqrt.pop %v8189
    %v8192 = vmul.f32 %v8168, %v8190
    %v8193 = vmul.f32 %v8169, %v8191
    %v8194 = vmul.f32 %v8192, %v4566
    %v8195 = vmul.f32 %v8193, %v4566
    %v8196 = vadd.f32 %v8194, %v4572
    %v8197 = vadd.f32 %v8195, %v4572
    %8200 = vrot.lane.b32.xlu0 %v8196, 96
    %v8201 = vpop.permute.xlu0 %8200
    %8202 = vrot.lane.b32.xlu0 %v8197, 96
    %v8203 = vpop.permute.xlu0 %8202
    %v8204 = vsel %vm151, %v8201, 0
    %v8206 = vsel %vm151, %v8203, 0
    %8208 = vmatprep.subr.mxu0 0.0
    %v8209 = vand.u32 %v139, 4294901760
    %8210 = vmatpush1.msra.mxu0 %v8209
    %8211 = vmatprep.subr.mxu0 0.0
    %v8212 = vand.u32 %v140, 4294901760
    %8213 = vmatpush1.msra.mxu0 %v8212
    %8214 = vmatprep.subr.mxu0 0.0
    %v8215 = vand.u32 %v141, 4294901760
    %8216 = vmatpush1.msra.mxu0 %v8215
    %8217 = vmatprep.subr.mxu0 0.0
    %v8218 = vand.u32 %v142, 4294901760
    %8219 = vmatpush1.msra.mxu0 %v8218
    %8220 = vmatprep.subr.mxu0 0.0
    %8221 = vmatpush1.msra.mxu0 0.0
    %8222 = vmatprep.subr.mxu0 0.0
    %8223 = vmatpush1.msra.mxu0 0.0
    %8224 = vmatprep.subr.mxu0 0.0
    %8225 = vmatpush1.msra.mxu0 0.0
    %8226 = vmatprep.subr.mxu0 0.0
    %8227 = vmatpush1.msra.mxu0 0.0
    %8228 = vmatprep.subr.mxu0 0.0
    %8229 = vmatpush1.msra.mxu0 0.0
    %8230 = vmatprep.subr.mxu0 0.0
    %8231 = vmatpush1.msra.mxu0 0.0
    %8232 = vmatprep.subr.mxu0 0.0
    %8233 = vmatpush1.msra.mxu0 0.0
    %8234 = vmatprep.subr.mxu0 0.0
    %8235 = vmatpush1.msra.mxu0 0.0
    %8236 = vmatprep.subr.mxu0 0.0
    %8237 = vmatpush1.msra.mxu0 0.0
    %8238 = vmatprep.subr.mxu0 0.0
    %8239 = vmatpush1.msra.mxu0 0.0
    %8240 = vmatprep.subr.mxu0 0.0
    %8241 = vmatpush1.msra.mxu0 0.0
    %8242 = vmatprep.subr.mxu0 0.0
    %8243 = vmatpush1.msra.mxu0 0.0
    %8244 = vmatprep.subr.mxu0 0.0
    %8245 = vmatpush1.msra.mxu0 0.0
    %8246 = vmatprep.subr.mxu0 0.0
    %8247 = vmatpush1.msra.mxu0 0.0
    %8248 = vmatprep.subr.mxu0 0.0
    %8249 = vmatpush1.msra.mxu0 0.0
    %8250 = vmatprep.subr.mxu0 0.0
    %8251 = vmatpush1.msra.mxu0 0.0
    %8252 = vmatprep.subr.mxu0 0.0
    %8253 = vmatpush1.msra.mxu0 0.0
    %8254 = vmatprep.subr.mxu0 0.0
    %8255 = vmatpush1.msra.mxu0 0.0
    %8256 = vmatprep.subr.mxu0 0.0
    %8257 = vmatpush1.msra.mxu0 0.0
    %8258 = vmatprep.subr.mxu0 0.0
    %8259 = vmatpush1.msra.mxu0 0.0
    %8260 = vmatprep.subr.mxu0 0.0
    %8261 = vmatpush1.msra.mxu0 0.0
    %8262 = vmatprep.subr.mxu0 0.0
    %8263 = vmatpush1.msra.mxu0 0.0
    %8264 = vmatprep.subr.mxu0 0.0
    %8265 = vmatpush1.msra.mxu0 0.0
    %8266 = vmatprep.subr.mxu0 0.0
    %8267 = vmatpush1.msra.mxu0 0.0
    %8268 = vmatprep.subr.mxu0 0.0
    %8269 = vmatpush1.msra.mxu0 0.0
    %8270 = vmatprep.subr.mxu0 0.0
    %8271 = vmatpush1.msra.mxu0 0.0
    %8272 = vmatprep.subr.mxu0 0.0
    %8273 = vmatpush1.msra.mxu0 0.0
    %8274 = vmatprep.subr.mxu0 0.0
    %8275 = vmatpush1.msra.mxu0 0.0
    %8276 = vmatprep.mubr.f32.mxu0 0.0
    %v8277 = vand.u32 %v8204, 4294901760
    %v8278 = vsub.f32 %v8204, %v8277
    %v8279 = vand.u32 %v8278, 4294901760
    %v8280 = vsub.f32 %v8278, %v8279
    %v8281 = vand.u32 %v8280, 4294901760
    %8282 = vmatmul.mubr.f32.gmra.mrb[0].mxu0 %v8281
    %v8283 = vpop.f32.mrb[0].mxu0
    %v8284 = vadd.f32 0.0, %v8283
    %v8285 = vpop.f32.mrb[0].mxu0
    %8286 = vmatprep.mubr.f32.mxu0 0.0
    %v8287 = vand.u32 %v8206, 4294901760
    %v8288 = vsub.f32 %v8206, %v8287
    %v8289 = vand.u32 %v8288, 4294901760
    %v8290 = vsub.f32 %v8288, %v8289
    %v8291 = vand.u32 %v8290, 4294901760
    %8292 = vmatmul.mubr.f32.gmra.mrb[0].mxu0 %v8291
    %v8293 = vpop.f32.mrb[0].mxu0
    %v8294 = vadd.f32 0.0, %v8293
    %v8295 = vpop.f32.mrb[0].mxu0
    %8296 = vdwg.mxu0
    %8297 = vmatprep.subr.mxu0 0.0
    %v8298 = vand.u32 %v139, 4294901760
    %v8299 = vsub.f32 %v139, %v8298
    %v8300 = vand.u32 %v8299, 4294901760
    %v8301 = vsub.f32 %v8299, %v8300
    %v8302 = vand.u32 %v8301, 4294901760
    %8303 = vmatpush1.msra.mxu0 %v8302
    %8304 = vmatprep.subr.mxu0 0.0
    %v8305 = vand.u32 %v140, 4294901760
    %v8306 = vsub.f32 %v140, %v8305
    %v8307 = vand.u32 %v8306, 4294901760
    %v8308 = vsub.f32 %v8306, %v8307
    %v8309 = vand.u32 %v8308, 4294901760
    %8310 = vmatpush1.msra.mxu0 %v8309
    %8311 = vmatprep.subr.mxu0 0.0
    %v8312 = vand.u32 %v141, 4294901760
    %v8313 = vsub.f32 %v141, %v8312
    %v8314 = vand.u32 %v8313, 4294901760
    %v8315 = vsub.f32 %v8313, %v8314
    %v8316 = vand.u32 %v8315, 4294901760
    %8317 = vmatpush1.msra.mxu0 %v8316
    %8318 = vmatprep.subr.mxu0 0.0
    %v8319 = vand.u32 %v142, 4294901760
    %v8320 = vsub.f32 %v142, %v8319
    %v8321 = vand.u32 %v8320, 4294901760
    %v8322 = vsub.f32 %v8320, %v8321
    %v8323 = vand.u32 %v8322, 4294901760
    %8324 = vmatpush1.msra.mxu0 %v8323
    %8325 = vmatprep.subr.mxu0 0.0
    %8326 = vmatpush1.msra.mxu0 0.0
    %8327 = vmatprep.subr.mxu0 0.0
    %8328 = vmatpush1.msra.mxu0 0.0
    %8329 = vmatprep.subr.mxu0 0.0
    %8330 = vmatpush1.msra.mxu0 0.0
    %8331 = vmatprep.subr.mxu0 0.0
    %8332 = vmatpush1.msra.mxu0 0.0
    %8333 = vmatprep.subr.mxu0 0.0
    %8334 = vmatpush1.msra.mxu0 0.0
    %8335 = vmatprep.subr.mxu0 0.0
    %8336 = vmatpush1.msra.mxu0 0.0
    %8337 = vmatprep.subr.mxu0 0.0
    %8338 = vmatpush1.msra.mxu0 0.0
    %8339 = vmatprep.subr.mxu0 0.0
    %8340 = vmatpush1.msra.mxu0 0.0
    %8341 = vmatprep.subr.mxu0 0.0
    %8342 = vmatpush1.msra.mxu0 0.0
    %8343 = vmatprep.subr.mxu0 0.0
    %8344 = vmatpush1.msra.mxu0 0.0
    %8345 = vmatprep.subr.mxu0 0.0
    %8346 = vmatpush1.msra.mxu0 0.0
    %8347 = vmatprep.subr.mxu0 0.0
    %8348 = vmatpush1.msra.mxu0 0.0
    %8349 = vmatprep.subr.mxu0 0.0
    %8350 = vmatpush1.msra.mxu0 0.0
    %8351 = vmatprep.subr.mxu0 0.0
    %8352 = vmatpush1.msra.mxu0 0.0
    %8353 = vmatprep.subr.mxu0 0.0
    %8354 = vmatpush1.msra.mxu0 0.0
    %8355 = vmatprep.subr.mxu0 0.0
    %8356 = vmatpush1.msra.mxu0 0.0
    %8357 = vmatprep.subr.mxu0 0.0
    %8358 = vmatpush1.msra.mxu0 0.0
    %8359 = vmatprep.subr.mxu0 0.0
    %8360 = vmatpush1.msra.mxu0 0.0
    %8361 = vmatprep.subr.mxu0 0.0
    %8362 = vmatpush1.msra.mxu0 0.0
    %8363 = vmatprep.subr.mxu0 0.0
    %8364 = vmatpush1.msra.mxu0 0.0
    %8365 = vmatprep.subr.mxu0 0.0
    %8366 = vmatpush1.msra.mxu0 0.0
    %8367 = vmatprep.subr.mxu0 0.0
    %8368 = vmatpush1.msra.mxu0 0.0
    %8369 = vmatprep.subr.mxu0 0.0
    %8370 = vmatpush1.msra.mxu0 0.0
    %8371 = vmatprep.subr.mxu0 0.0
    %8372 = vmatpush1.msra.mxu0 0.0
    %8373 = vmatprep.subr.mxu0 0.0
    %8374 = vmatpush1.msra.mxu0 0.0
    %8375 = vmatprep.subr.mxu0 0.0
    %8376 = vmatpush1.msra.mxu0 0.0
    %8377 = vmatprep.subr.mxu0 0.0
    %8378 = vmatpush1.msra.mxu0 0.0
    %8379 = vmatprep.subr.mxu0 0.0
    %8380 = vmatpush1.msra.mxu0 0.0
    %8381 = vmatprep.mubr.f32.mxu0 0.0
    %v8382 = vand.u32 %v8204, 4294901760
    %8383 = vmatmul.mubr.f32.gmra.mrb[0].mxu0 %v8382
    %v8384 = vpop.f32.mrb[0].mxu0
    %v8385 = vadd.f32 %v8284, %v8384
    %v8386 = vpop.f32.mrb[0].mxu0
    %8387 = vmatprep.mubr.f32.mxu0 0.0
    %v8388 = vand.u32 %v8206, 4294901760
    %8389 = vmatmul.mubr.f32.gmra.mrb[0].mxu0 %v8388
    %v8390 = vpop.f32.mrb[0].mxu0
    %v8391 = vadd.f32 %v8294, %v8390
    %v8392 = vpop.f32.mrb[0].mxu0
    %8393 = vdwg.mxu0
    %8394 = vmatprep.subr.mxu0 0.0
    %v8395 = vand.u32 %v139, 4294901760
    %v8396 = vsub.f32 %v139, %v8395
    %8397 = vmatpush1.msra.mxu0 %v8396
    %8398 = vmatprep.subr.mxu0 0.0
    %v8399 = vand.u32 %v140, 4294901760
    %v8400 = vsub.f32 %v140, %v8399
    %8401 = vmatpush1.msra.mxu0 %v8400
    %8402 = vmatprep.subr.mxu0 0.0
    %v8403 = vand.u32 %v141, 4294901760
    %v8404 = vsub.f32 %v141, %v8403
    %8405 = vmatpush1.msra.mxu0 %v8404
    %8406 = vmatprep.subr.mxu0 0.0
    %v8407 = vand.u32 %v142, 4294901760
    %v8408 = vsub.f32 %v142, %v8407
    %8409 = vmatpush1.msra.mxu0 %v8408
    %8410 = vmatprep.subr.mxu0 0.0
    %8411 = vmatpush1.msra.mxu0 0.0
    %8412 = vmatprep.subr.mxu0 0.0
    %8413 = vmatpush1.msra.mxu0 0.0
    %8414 = vmatprep.subr.mxu0 0.0
    %8415 = vmatpush1.msra.mxu0 0.0
    %8416 = vmatprep.subr.mxu0 0.0
    %8417 = vmatpush1.msra.mxu0 0.0
    %8418 = vmatprep.subr.mxu0 0.0
    %8419 = vmatpush1.msra.mxu0 0.0
    %8420 = vmatprep.subr.mxu0 0.0
    %8421 = vmatpush1.msra.mxu0 0.0
    %8422 = vmatprep.subr.mxu0 0.0
    %8423 = vmatpush1.msra.mxu0 0.0
    %8424 = vmatprep.subr.mxu0 0.0
    %8425 = vmatpush1.msra.mxu0 0.0
    %8426 = vmatprep.subr.mxu0 0.0
    %8427 = vmatpush1.msra.mxu0 0.0
    %8428 = vmatprep.subr.mxu0 0.0
    %8429 = vmatpush1.msra.mxu0 0.0
    %8430 = vmatprep.subr.mxu0 0.0
    %8431 = vmatpush1.msra.mxu0 0.0
    %8432 = vmatprep.subr.mxu0 0.0
    %8433 = vmatpush1.msra.mxu0 0.0
    %8434 = vmatprep.subr.mxu0 0.0
    %8435 = vmatpush1.msra.mxu0 0.0
    %8436 = vmatprep.subr.mxu0 0.0
    %8437 = vmatpush1.msra.mxu0 0.0
    %8438 = vmatprep.subr.mxu0 0.0
    %8439 = vmatpush1.msra.mxu0 0.0
    %8440 = vmatprep.subr.mxu0 0.0
    %8441 = vmatpush1.msra.mxu0 0.0
    %8442 = vmatprep.subr.mxu0 0.0
    %8443 = vmatpush1.msra.mxu0 0.0
    %8444 = vmatprep.subr.mxu0 0.0
    %8445 = vmatpush1.msra.mxu0 0.0
    %8446 = vmatprep.subr.mxu0 0.0
    %8447 = vmatpush1.msra.mxu0 0.0
    %8448 = vmatprep.subr.mxu0 0.0
    %8449 = vmatpush1.msra.mxu0 0.0
    %8450 = vmatprep.subr.mxu0 0.0
    %8451 = vmatpush1.msra.mxu0 0.0
    %8452 = vmatprep.subr.mxu0 0.0
    %8453 = vmatpush1.msra.mxu0 0.0
    %8454 = vmatprep.subr.mxu0 0.0
    %8455 = vmatpush1.msra.mxu0 0.0
    %8456 = vmatprep.subr.mxu0 0.0
    %8457 = vmatpush1.msra.mxu0 0.0
    %8458 = vmatprep.subr.mxu0 0.0
    %8459 = vmatpush1.msra.mxu0 0.0
    %8460 = vmatprep.subr.mxu0 0.0
    %8461 = vmatpush1.msra.mxu0 0.0
    %8462 = vmatprep.subr.mxu0 0.0
    %8463 = vmatpush1.msra.mxu0 0.0
    %8464 = vmatprep.subr.mxu0 0.0
    %8465 = vmatpush1.msra.mxu0 0.0
    %8466 = vmatprep.mubr.f32.mxu0 0.0
    %v8467 = vand.u32 %v8204, 4294901760
    %v8468 = vsub.f32 %v8204, %v8467
    %8469 = vmatmul.mubr.f32.gmra.mrb[0].mxu0 %v8468
    %v8470 = vpop.f32.mrb[0].mxu0
    %v8471 = vadd.f32 %v8385, %v8470
    %v8472 = vpop.f32.mrb[0].mxu0
    %8473 = vmatprep.mubr.f32.mxu0 0.0
    %v8474 = vand.u32 %v8206, 4294901760
    %v8475 = vsub.f32 %v8206, %v8474
    %8476 = vmatmul.mubr.f32.gmra.mrb[0].mxu0 %v8475
    %v8477 = vpop.f32.mrb[0].mxu0
    %v8478 = vadd.f32 %v8391, %v8477
    %v8479 = vpop.f32.mrb[0].mxu0
    %8480 = vdwg.mxu0
    %8481 = vmatprep.subr.mxu0 0.0
    %v8482 = vand.u32 %v139, 4294901760
    %8483 = vmatpush1.msra.mxu0 %v8482
    %8484 = vmatprep.subr.mxu0 0.0
    %v8485 = vand.u32 %v140, 4294901760
    %8486 = vmatpush1.msra.mxu0 %v8485
    %8487 = vmatprep.subr.mxu0 0.0
    %v8488 = vand.u32 %v141, 4294901760
    %8489 = vmatpush1.msra.mxu0 %v8488
    %8490 = vmatprep.subr.mxu0 0.0
    %v8491 = vand.u32 %v142, 4294901760
    %8492 = vmatpush1.msra.mxu0 %v8491
    %8493 = vmatprep.subr.mxu0 0.0
    %8494 = vmatpush1.msra.mxu0 0.0
    %8495 = vmatprep.subr.mxu0 0.0
    %8496 = vmatpush1.msra.mxu0 0.0
    %8497 = vmatprep.subr.mxu0 0.0
    %8498 = vmatpush1.msra.mxu0 0.0
    %8499 = vmatprep.subr.mxu0 0.0
    %8500 = vmatpush1.msra.mxu0 0.0
    %8501 = vmatprep.subr.mxu0 0.0
    %8502 = vmatpush1.msra.mxu0 0.0
    %8503 = vmatprep.subr.mxu0 0.0
    %8504 = vmatpush1.msra.mxu0 0.0
    %8505 = vmatprep.subr.mxu0 0.0
    %8506 = vmatpush1.msra.mxu0 0.0
    %8507 = vmatprep.subr.mxu0 0.0
    %8508 = vmatpush1.msra.mxu0 0.0
    %8509 = vmatprep.subr.mxu0 0.0
    %8510 = vmatpush1.msra.mxu0 0.0
    %8511 = vmatprep.subr.mxu0 0.0
    %8512 = vmatpush1.msra.mxu0 0.0
    %8513 = vmatprep.subr.mxu0 0.0
    %8514 = vmatpush1.msra.mxu0 0.0
    %8515 = vmatprep.subr.mxu0 0.0
    %8516 = vmatpush1.msra.mxu0 0.0
    %8517 = vmatprep.subr.mxu0 0.0
    %8518 = vmatpush1.msra.mxu0 0.0
    %8519 = vmatprep.subr.mxu0 0.0
    %8520 = vmatpush1.msra.mxu0 0.0
    %8521 = vmatprep.subr.mxu0 0.0
    %8522 = vmatpush1.msra.mxu0 0.0
    %8523 = vmatprep.subr.mxu0 0.0
    %8524 = vmatpush1.msra.mxu0 0.0
    %8525 = vmatprep.subr.mxu0 0.0
    %8526 = vmatpush1.msra.mxu0 0.0
    %8527 = vmatprep.subr.mxu0 0.0
    %8528 = vmatpush1.msra.mxu0 0.0
    %8529 = vmatprep.subr.mxu0 0.0
    %8530 = vmatpush1.msra.mxu0 0.0
    %8531 = vmatprep.subr.mxu0 0.0
    %8532 = vmatpush1.msra.mxu0 0.0
    %8533 = vmatprep.subr.mxu0 0.0
    %8534 = vmatpush1.msra.mxu0 0.0
    %8535 = vmatprep.subr.mxu0 0.0
    %8536 = vmatpush1.msra.mxu0 0.0
    %8537 = vmatprep.subr.mxu0 0.0
    %8538 = vmatpush1.msra.mxu0 0.0
    %8539 = vmatprep.subr.mxu0 0.0
    %8540 = vmatpush1.msra.mxu0 0.0
    %8541 = vmatprep.subr.mxu0 0.0
    %8542 = vmatpush1.msra.mxu0 0.0
    %8543 = vmatprep.subr.mxu0 0.0
    %8544 = vmatpush1.msra.mxu0 0.0
    %8545 = vmatprep.subr.mxu0 0.0
    %8546 = vmatpush1.msra.mxu0 0.0
    %8547 = vmatprep.subr.mxu0 0.0
    %8548 = vmatpush1.msra.mxu0 0.0
    %8549 = vmatprep.mubr.f32.mxu0 0.0
    %v8550 = vand.u32 %v8204, 4294901760
    %v8551 = vsub.f32 %v8204, %v8550
    %v8552 = vand.u32 %v8551, 4294901760
    %8553 = vmatmul.mubr.f32.gmra.mrb[0].mxu0 %v8552
    %v8554 = vpop.f32.mrb[0].mxu0
    %v8555 = vadd.f32 %v8471, %v8554
    %v8556 = vpop.f32.mrb[0].mxu0
    %8557 = vmatprep.mubr.f32.mxu0 0.0
    %v8558 = vand.u32 %v8206, 4294901760
    %v8559 = vsub.f32 %v8206, %v8558
    %v8560 = vand.u32 %v8559, 4294901760
    %8561 = vmatmul.mubr.f32.gmra.mrb[0].mxu0 %v8560
    %v8562 = vpop.f32.mrb[0].mxu0
    %v8563 = vadd.f32 %v8478, %v8562
    %v8564 = vpop.f32.mrb[0].mxu0
    %8565 = vdwg.mxu0
    %8566 = vmatprep.subr.mxu0 0.0
    %v8567 = vand.u32 %v139, 4294901760
    %v8568 = vsub.f32 %v139, %v8567
    %v8569 = vand.u32 %v8568, 4294901760
    %8570 = vmatpush1.msra.mxu0 %v8569
    %8571 = vmatprep.subr.mxu0 0.0
    %v8572 = vand.u32 %v140, 4294901760
    %v8573 = vsub.f32 %v140, %v8572
    %v8574 = vand.u32 %v8573, 4294901760
    %8575 = vmatpush1.msra.mxu0 %v8574
    %8576 = vmatprep.subr.mxu0 0.0
    %v8577 = vand.u32 %v141, 4294901760
    %v8578 = vsub.f32 %v141, %v8577
    %v8579 = vand.u32 %v8578, 4294901760
    %8580 = vmatpush1.msra.mxu0 %v8579
    %8581 = vmatprep.subr.mxu0 0.0
    %v8582 = vand.u32 %v142, 4294901760
    %v8583 = vsub.f32 %v142, %v8582
    %v8584 = vand.u32 %v8583, 4294901760
    %8585 = vmatpush1.msra.mxu0 %v8584
    %8586 = vmatprep.subr.mxu0 0.0
    %8587 = vmatpush1.msra.mxu0 0.0
    %8588 = vmatprep.subr.mxu0 0.0
    %8589 = vmatpush1.msra.mxu0 0.0
    %8590 = vmatprep.subr.mxu0 0.0
    %8591 = vmatpush1.msra.mxu0 0.0
    %8592 = vmatprep.subr.mxu0 0.0
    %8593 = vmatpush1.msra.mxu0 0.0
    %8594 = vmatprep.subr.mxu0 0.0
    %8595 = vmatpush1.msra.mxu0 0.0
    %8596 = vmatprep.subr.mxu0 0.0
    %8597 = vmatpush1.msra.mxu0 0.0
    %8598 = vmatprep.subr.mxu0 0.0
    %8599 = vmatpush1.msra.mxu0 0.0
    %8600 = vmatprep.subr.mxu0 0.0
    %8601 = vmatpush1.msra.mxu0 0.0
    %8602 = vmatprep.subr.mxu0 0.0
    %8603 = vmatpush1.msra.mxu0 0.0
    %8604 = vmatprep.subr.mxu0 0.0
    %8605 = vmatpush1.msra.mxu0 0.0
    %8606 = vmatprep.subr.mxu0 0.0
    %8607 = vmatpush1.msra.mxu0 0.0
    %8608 = vmatprep.subr.mxu0 0.0
    %8609 = vmatpush1.msra.mxu0 0.0
    %8610 = vmatprep.subr.mxu0 0.0
    %8611 = vmatpush1.msra.mxu0 0.0
    %8612 = vmatprep.subr.mxu0 0.0
    %8613 = vmatpush1.msra.mxu0 0.0
    %8614 = vmatprep.subr.mxu0 0.0
    %8615 = vmatpush1.msra.mxu0 0.0
    %8616 = vmatprep.subr.mxu0 0.0
    %8617 = vmatpush1.msra.mxu0 0.0
    %8618 = vmatprep.subr.mxu0 0.0
    %8619 = vmatpush1.msra.mxu0 0.0
    %8620 = vmatprep.subr.mxu0 0.0
    %8621 = vmatpush1.msra.mxu0 0.0
    %8622 = vmatprep.subr.mxu0 0.0
    %8623 = vmatpush1.msra.mxu0 0.0
    %8624 = vmatprep.subr.mxu0 0.0
    %8625 = vmatpush1.msra.mxu0 0.0
    %8626 = vmatprep.subr.mxu0 0.0
    %8627 = vmatpush1.msra.mxu0 0.0
    %8628 = vmatprep.subr.mxu0 0.0
    %8629 = vmatpush1.msra.mxu0 0.0
    %8630 = vmatprep.subr.mxu0 0.0
    %8631 = vmatpush1.msra.mxu0 0.0
    %8632 = vmatprep.subr.mxu0 0.0
    %8633 = vmatpush1.msra.mxu0 0.0
    %8634 = vmatprep.subr.mxu0 0.0
    %8635 = vmatpush1.msra.mxu0 0.0
    %8636 = vmatprep.subr.mxu0 0.0
    %8637 = vmatpush1.msra.mxu0 0.0
    %8638 = vmatprep.subr.mxu0 0.0
    %8639 = vmatpush1.msra.mxu0 0.0
    %8640 = vmatprep.subr.mxu0 0.0
    %8641 = vmatpush1.msra.mxu0 0.0
    %8642 = vmatprep.mubr.f32.mxu0 0.0
    %v8643 = vand.u32 %v8204, 4294901760
    %8644 = vmatmul.mubr.f32.gmra.mrb[0].mxu0 %v8643
    %v8645 = vpop.f32.mrb[0].mxu0
    %v8646 = vadd.f32 %v8555, %v8645
    %v8647 = vpop.f32.mrb[0].mxu0
    %8648 = vmatprep.mubr.f32.mxu0 0.0
    %v8649 = vand.u32 %v8206, 4294901760
    %8650 = vmatmul.mubr.f32.gmra.mrb[0].mxu0 %v8649
    %v8651 = vpop.f32.mrb[0].mxu0
    %v8652 = vadd.f32 %v8563, %v8651
    %v8653 = vpop.f32.mrb[0].mxu0
    %8654 = vdwg.mxu0
    %8655 = vmatprep.subr.mxu0 0.0
    %v8656 = vand.u32 %v139, 4294901760
    %8657 = vmatpush1.msra.mxu0 %v8656
    %8658 = vmatprep.subr.mxu0 0.0
    %v8659 = vand.u32 %v140, 4294901760
    %8660 = vmatpush1.msra.mxu0 %v8659
    %8661 = vmatprep.subr.mxu0 0.0
    %v8662 = vand.u32 %v141, 4294901760
    %8663 = vmatpush1.msra.mxu0 %v8662
    %8664 = vmatprep.subr.mxu0 0.0
    %v8665 = vand.u32 %v142, 4294901760
    %8666 = vmatpush1.msra.mxu0 %v8665
    %8667 = vmatprep.subr.mxu0 0.0
    %8668 = vmatpush1.msra.mxu0 0.0
    %8669 = vmatprep.subr.mxu0 0.0
    %8670 = vmatpush1.msra.mxu0 0.0
    %8671 = vmatprep.subr.mxu0 0.0
    %8672 = vmatpush1.msra.mxu0 0.0
    %8673 = vmatprep.subr.mxu0 0.0
    %8674 = vmatpush1.msra.mxu0 0.0
    %8675 = vmatprep.subr.mxu0 0.0
    %8676 = vmatpush1.msra.mxu0 0.0
    %8677 = vmatprep.subr.mxu0 0.0
    %8678 = vmatpush1.msra.mxu0 0.0
    %8679 = vmatprep.subr.mxu0 0.0
    %8680 = vmatpush1.msra.mxu0 0.0
    %8681 = vmatprep.subr.mxu0 0.0
    %8682 = vmatpush1.msra.mxu0 0.0
    %8683 = vmatprep.subr.mxu0 0.0
    %8684 = vmatpush1.msra.mxu0 0.0
    %8685 = vmatprep.subr.mxu0 0.0
    %8686 = vmatpush1.msra.mxu0 0.0
    %8687 = vmatprep.subr.mxu0 0.0
    %8688 = vmatpush1.msra.mxu0 0.0
    %8689 = vmatprep.subr.mxu0 0.0
    %8690 = vmatpush1.msra.mxu0 0.0
    %8691 = vmatprep.subr.mxu0 0.0
    %8692 = vmatpush1.msra.mxu0 0.0
    %8693 = vmatprep.subr.mxu0 0.0
    %8694 = vmatpush1.msra.mxu0 0.0
    %8695 = vmatprep.subr.mxu0 0.0
    %8696 = vmatpush1.msra.mxu0 0.0
    %8697 = vmatprep.subr.mxu0 0.0
    %8698 = vmatpush1.msra.mxu0 0.0
    %8699 = vmatprep.subr.mxu0 0.0
    %8700 = vmatpush1.msra.mxu0 0.0
    %8701 = vmatprep.subr.mxu0 0.0
    %8702 = vmatpush1.msra.mxu0 0.0
    %8703 = vmatprep.subr.mxu0 0.0
    %8704 = vmatpush1.msra.mxu0 0.0
    %8705 = vmatprep.subr.mxu0 0.0
    %8706 = vmatpush1.msra.mxu0 0.0
    %8707 = vmatprep.subr.mxu0 0.0
    %8708 = vmatpush1.msra.mxu0 0.0
    %8709 = vmatprep.subr.mxu0 0.0
    %8710 = vmatpush1.msra.mxu0 0.0
    %8711 = vmatprep.subr.mxu0 0.0
    %8712 = vmatpush1.msra.mxu0 0.0
    %8713 = vmatprep.subr.mxu0 0.0
    %8714 = vmatpush1.msra.mxu0 0.0
    %8715 = vmatprep.subr.mxu0 0.0
    %8716 = vmatpush1.msra.mxu0 0.0
    %8717 = vmatprep.subr.mxu0 0.0
    %8718 = vmatpush1.msra.mxu0 0.0
    %8719 = vmatprep.subr.mxu0 0.0
    %8720 = vmatpush1.msra.mxu0 0.0
    %8721 = vmatprep.subr.mxu0 0.0
    %8722 = vmatpush1.msra.mxu0 0.0
    %8723 = vmatprep.mubr.f32.mxu0 0.0
    %v8724 = vand.u32 %v8204, 4294901760
    %8725 = vmatmul.mubr.f32.gmra.mrb[0].mxu0 %v8724
    %v8726 = vpop.f32.mrb[0].mxu0
    %v8727 = vadd.f32 %v8646, %v8726
    %v8728 = vpop.f32.mrb[0].mxu0
    %8729 = vmatprep.mubr.f32.mxu0 0.0
    %v8730 = vand.u32 %v8206, 4294901760
    %8731 = vmatmul.mubr.f32.gmra.mrb[0].mxu0 %v8730
    %v8732 = vpop.f32.mrb[0].mxu0
    %v8733 = vadd.f32 %v8652, %v8732
    %v8734 = vpop.f32.mrb[0].mxu0
    %8735 = vdwg.mxu0
    %v8736 = vmul.f32 %v8727, 0.17677669
    %v8737 = vmul.f32 %v8733, 0.17677669
    %v8739 = vsel %vm151, %v8736, 0
    %8741 = vmatprep.subr.mxu0 0.0
    %v8742 = vand.u32 %v1429, 4294901760
    %8743 = vmatpush1.xpose.msra.mxu0 %v8742
    %8744 = vmatprep.subr.mxu0 0.0
    %v8745 = vand.u32 %v1432, 4294901760
    %8746 = vmatpush1.xpose.msra.mxu0 %v8745
    %8747 = vmatprep.subr.mxu0 0.0
    %8748 = vmatpush1.xpose.msra.mxu0 0.0
    %8749 = vmatprep.subr.mxu0 0.0
    %8750 = vmatpush1.xpose.msra.mxu0 0.0
    %8751 = vmatprep.subr.mxu0 0.0
    %8752 = vmatpush1.xpose.msra.mxu0 0.0
    %8753 = vmatprep.subr.mxu0 0.0
    %8754 = vmatpush1.xpose.msra.mxu0 0.0
    %8755 = vmatprep.subr.mxu0 0.0
    %8756 = vmatpush1.xpose.msra.mxu0 0.0
    %8757 = vmatprep.subr.mxu0 0.0
    %8758 = vmatpush1.xpose.msra.mxu0 0.0
    %8759 = vmatprep.subr.mxu0 0.0
    %8760 = vmatpush1.xpose.msra.mxu0 0.0
    %8761 = vmatprep.subr.mxu0 0.0
    %8762 = vmatpush1.xpose.msra.mxu0 0.0
    %8763 = vmatprep.subr.mxu0 0.0
    %8764 = vmatpush1.xpose.msra.mxu0 0.0
    %8765 = vmatprep.subr.mxu0 0.0
    %8766 = vmatpush1.xpose.msra.mxu0 0.0
    %8767 = vmatprep.subr.mxu0 0.0
    %8768 = vmatpush1.xpose.msra.mxu0 0.0
    %8769 = vmatprep.subr.mxu0 0.0
    %8770 = vmatpush1.xpose.msra.mxu0 0.0
    %8771 = vmatprep.subr.mxu0 0.0
    %8772 = vmatpush1.xpose.msra.mxu0 0.0
    %8773 = vmatprep.subr.mxu0 0.0
    %8774 = vmatpush1.xpose.msra.mxu0 0.0
    %8775 = vmatprep.subr.mxu0 0.0
    %8776 = vmatpush1.xpose.msra.mxu0 0.0
    %8777 = vmatprep.subr.mxu0 0.0
    %8778 = vmatpush1.xpose.msra.mxu0 0.0
    %8779 = vmatprep.subr.mxu0 0.0
    %8780 = vmatpush1.xpose.msra.mxu0 0.0
    %8781 = vmatprep.subr.mxu0 0.0
    %8782 = vmatpush1.xpose.msra.mxu0 0.0
    %8783 = vmatprep.subr.mxu0 0.0
    %8784 = vmatpush1.xpose.msra.mxu0 0.0
    %8785 = vmatprep.subr.mxu0 0.0
    %8786 = vmatpush1.xpose.msra.mxu0 0.0
    %8787 = vmatprep.subr.mxu0 0.0
    %8788 = vmatpush1.xpose.msra.mxu0 0.0
    %8789 = vmatprep.subr.mxu0 0.0
    %8790 = vmatpush1.xpose.msra.mxu0 0.0
    %8791 = vmatprep.subr.mxu0 0.0
    %8792 = vmatpush1.xpose.msra.mxu0 0.0
    %8793 = vmatprep.subr.mxu0 0.0
    %8794 = vmatpush1.xpose.msra.mxu0 0.0
    %8795 = vmatprep.subr.mxu0 0.0
    %8796 = vmatpush1.xpose.msra.mxu0 0.0
    %8797 = vmatprep.subr.mxu0 0.0
    %8798 = vmatpush1.xpose.msra.mxu0 0.0
    %8799 = vmatprep.subr.mxu0 0.0
    %8800 = vmatpush1.xpose.msra.mxu0 0.0
    %8801 = vmatprep.subr.mxu0 0.0
    %8802 = vmatpush1.xpose.msra.mxu0 0.0
    %8803 = vmatprep.subr.mxu0 0.0
    %8804 = vmatpush1.xpose.msra.mxu0 0.0
    %8805 = vmatprep.subr.mxu0 0.0
    %8806 = vmatpush1.xpose.msra.mxu0 0.0
    %8807 = vmatprep.mubr.f32.mxu0 0.0
    %v8808 = vand.u32 %v8739, 4294901760
    %v8809 = vsub.f32 %v8739, %v8808
    %v8810 = vand.u32 %v8809, 4294901760
    %v8811 = vsub.f32 %v8809, %v8810
    %v8812 = vand.u32 %v8811, 4294901760
    %8813 = vmatmul.mubr.f32.gmra.mrb[0].mxu0 %v8812
    %v8814 = vpop.f32.mrb[0].mxu0
    %v8815 = vadd.f32 0.0, %v8814
    %v8816 = vpop.f32.mrb[0].mxu0
    %8817 = vdwg.mxu0
    %8818 = vmatprep.subr.mxu0 0.0
    %v8819 = vand.u32 %v1429, 4294901760
    %v8820 = vsub.f32 %v1429, %v8819
    %v8821 = vand.u32 %v8820, 4294901760
    %v8822 = vsub.f32 %v8820, %v8821
    %v8823 = vand.u32 %v8822, 4294901760
    %8824 = vmatpush1.xpose.msra.mxu0 %v8823
    %8825 = vmatprep.subr.mxu0 0.0
    %v8826 = vand.u32 %v1432, 4294901760
    %v8827 = vsub.f32 %v1432, %v8826
    %v8828 = vand.u32 %v8827, 4294901760
    %v8829 = vsub.f32 %v8827, %v8828
    %v8830 = vand.u32 %v8829, 4294901760
    %8831 = vmatpush1.xpose.msra.mxu0 %v8830
    %8832 = vmatprep.subr.mxu0 0.0
    %8833 = vmatpush1.xpose.msra.mxu0 0.0
    %8834 = vmatprep.subr.mxu0 0.0
    %8835 = vmatpush1.xpose.msra.mxu0 0.0
    %8836 = vmatprep.subr.mxu0 0.0
    %8837 = vmatpush1.xpose.msra.mxu0 0.0
    %8838 = vmatprep.subr.mxu0 0.0
    %8839 = vmatpush1.xpose.msra.mxu0 0.0
    %8840 = vmatprep.subr.mxu0 0.0
    %8841 = vmatpush1.xpose.msra.mxu0 0.0
    %8842 = vmatprep.subr.mxu0 0.0
    %8843 = vmatpush1.xpose.msra.mxu0 0.0
    %8844 = vmatprep.subr.mxu0 0.0
    %8845 = vmatpush1.xpose.msra.mxu0 0.0
    %8846 = vmatprep.subr.mxu0 0.0
    %8847 = vmatpush1.xpose.msra.mxu0 0.0
    %8848 = vmatprep.subr.mxu0 0.0
    %8849 = vmatpush1.xpose.msra.mxu0 0.0
    %8850 = vmatprep.subr.mxu0 0.0
    %8851 = vmatpush1.xpose.msra.mxu0 0.0
    %8852 = vmatprep.subr.mxu0 0.0
    %8853 = vmatpush1.xpose.msra.mxu0 0.0
    %8854 = vmatprep.subr.mxu0 0.0
    %8855 = vmatpush1.xpose.msra.mxu0 0.0
    %8856 = vmatprep.subr.mxu0 0.0
    %8857 = vmatpush1.xpose.msra.mxu0 0.0
    %8858 = vmatprep.subr.mxu0 0.0
    %8859 = vmatpush1.xpose.msra.mxu0 0.0
    %8860 = vmatprep.subr.mxu0 0.0
    %8861 = vmatpush1.xpose.msra.mxu0 0.0
    %8862 = vmatprep.subr.mxu0 0.0
    %8863 = vmatpush1.xpose.msra.mxu0 0.0
    %8864 = vmatprep.subr.mxu0 0.0
    %8865 = vmatpush1.xpose.msra.mxu0 0.0
    %8866 = vmatprep.subr.mxu0 0.0
    %8867 = vmatpush1.xpose.msra.mxu0 0.0
    %8868 = vmatprep.subr.mxu0 0.0
    %8869 = vmatpush1.xpose.msra.mxu0 0.0
    %8870 = vmatprep.subr.mxu0 0.0
    %8871 = vmatpush1.xpose.msra.mxu0 0.0
    %8872 = vmatprep.subr.mxu0 0.0
    %8873 = vmatpush1.xpose.msra.mxu0 0.0
    %8874 = vmatprep.subr.mxu0 0.0
    %8875 = vmatpush1.xpose.msra.mxu0 0.0
    %8876 = vmatprep.subr.mxu0 0.0
    %8877 = vmatpush1.xpose.msra.mxu0 0.0
    %8878 = vmatprep.subr.mxu0 0.0
    %8879 = vmatpush1.xpose.msra.mxu0 0.0
    %8880 = vmatprep.subr.mxu0 0.0
    %8881 = vmatpush1.xpose.msra.mxu0 0.0
    %8882 = vmatprep.subr.mxu0 0.0
    %8883 = vmatpush1.xpose.msra.mxu0 0.0
    %8884 = vmatprep.subr.mxu0 0.0
    %8885 = vmatpush1.xpose.msra.mxu0 0.0
    %8886 = vmatprep.subr.mxu0 0.0
    %8887 = vmatpush1.xpose.msra.mxu0 0.0
    %8888 = vmatprep.subr.mxu0 0.0
    %8889 = vmatpush1.xpose.msra.mxu0 0.0
    %8890 = vmatprep.subr.mxu0 0.0
    %8891 = vmatpush1.xpose.msra.mxu0 0.0
    %8892 = vmatprep.mubr.f32.mxu0 0.0
    %v8893 = vand.u32 %v8739, 4294901760
    %8894 = vmatmul.mubr.f32.gmra.mrb[0].mxu0 %v8893
    %v8895 = vpop.f32.mrb[0].mxu0
    %v8896 = vadd.f32 %v8815, %v8895
    %v8897 = vpop.f32.mrb[0].mxu0
    %8898 = vdwg.mxu0
    %8899 = vmatprep.subr.mxu0 0.0
    %v8900 = vand.u32 %v1429, 4294901760
    %v8901 = vsub.f32 %v1429, %v8900
    %8902 = vmatpush1.xpose.msra.mxu0 %v8901
    %8903 = vmatprep.subr.mxu0 0.0
    %v8904 = vand.u32 %v1432, 4294901760
    %v8905 = vsub.f32 %v1432, %v8904
    %8906 = vmatpush1.xpose.msra.mxu0 %v8905
    %8907 = vmatprep.subr.mxu0 0.0
    %8908 = vmatpush1.xpose.msra.mxu0 0.0
    %8909 = vmatprep.subr.mxu0 0.0
    %8910 = vmatpush1.xpose.msra.mxu0 0.0
    %8911 = vmatprep.subr.mxu0 0.0
    %8912 = vmatpush1.xpose.msra.mxu0 0.0
    %8913 = vmatprep.subr.mxu0 0.0
    %8914 = vmatpush1.xpose.msra.mxu0 0.0
    %8915 = vmatprep.subr.mxu0 0.0
    %8916 = vmatpush1.xpose.msra.mxu0 0.0
    %8917 = vmatprep.subr.mxu0 0.0
    %8918 = vmatpush1.xpose.msra.mxu0 0.0
    %8919 = vmatprep.subr.mxu0 0.0
    %8920 = vmatpush1.xpose.msra.mxu0 0.0
    %8921 = vmatprep.subr.mxu0 0.0
    %8922 = vmatpush1.xpose.msra.mxu0 0.0
    %8923 = vmatprep.subr.mxu0 0.0
    %8924 = vmatpush1.xpose.msra.mxu0 0.0
    %8925 = vmatprep.subr.mxu0 0.0
    %8926 = vmatpush1.xpose.msra.mxu0 0.0
    %8927 = vmatprep.subr.mxu0 0.0
    %8928 = vmatpush1.xpose.msra.mxu0 0.0
    %8929 = vmatprep.subr.mxu0 0.0
    %8930 = vmatpush1.xpose.msra.mxu0 0.0
    %8931 = vmatprep.subr.mxu0 0.0
    %8932 = vmatpush1.xpose.msra.mxu0 0.0
    %8933 = vmatprep.subr.mxu0 0.0
    %8934 = vmatpush1.xpose.msra.mxu0 0.0
    %8935 = vmatprep.subr.mxu0 0.0
    %8936 = vmatpush1.xpose.msra.mxu0 0.0
    %8937 = vmatprep.subr.mxu0 0.0
    %8938 = vmatpush1.xpose.msra.mxu0 0.0
    %8939 = vmatprep.subr.mxu0 0.0
    %8940 = vmatpush1.xpose.msra.mxu0 0.0
    %8941 = vmatprep.subr.mxu0 0.0
    %8942 = vmatpush1.xpose.msra.mxu0 0.0
    %8943 = vmatprep.subr.mxu0 0.0
    %8944 = vmatpush1.xpose.msra.mxu0 0.0
    %8945 = vmatprep.subr.mxu0 0.0
    %8946 = vmatpush1.xpose.msra.mxu0 0.0
    %8947 = vmatprep.subr.mxu0 0.0
    %8948 = vmatpush1.xpose.msra.mxu0 0.0
    %8949 = vmatprep.subr.mxu0 0.0
    %8950 = vmatpush1.xpose.msra.mxu0 0.0
    %8951 = vmatprep.subr.mxu0 0.0
    %8952 = vmatpush1.xpose.msra.mxu0 0.0
    %8953 = vmatprep.subr.mxu0 0.0
    %8954 = vmatpush1.xpose.msra.mxu0 0.0
    %8955 = vmatprep.subr.mxu0 0.0
    %8956 = vmatpush1.xpose.msra.mxu0 0.0
    %8957 = vmatprep.subr.mxu0 0.0
    %8958 = vmatpush1.xpose.msra.mxu0 0.0
    %8959 = vmatprep.subr.mxu0 0.0
    %8960 = vmatpush1.xpose.msra.mxu0 0.0
    %8961 = vmatprep.subr.mxu0 0.0
    %8962 = vmatpush1.xpose.msra.mxu0 0.0
    %8963 = vmatprep.subr.mxu0 0.0
    %8964 = vmatpush1.xpose.msra.mxu0 0.0
    %8965 = vmatprep.subr.mxu0 0.0
    %8966 = vmatpush1.xpose.msra.mxu0 0.0
    %8967 = vmatprep.mubr.f32.mxu0 0.0
    %v8968 = vand.u32 %v8739, 4294901760
    %v8969 = vsub.f32 %v8739, %v8968
    %8970 = vmatmul.mubr.f32.gmra.mrb[0].mxu0 %v8969
    %v8971 = vpop.f32.mrb[0].mxu0
    %v8972 = vadd.f32 %v8896, %v8971
    %v8973 = vpop.f32.mrb[0].mxu0
    %8974 = vdwg.mxu0
    %8975 = vmatprep.subr.mxu0 0.0
    %v8976 = vand.u32 %v1429, 4294901760
    %8977 = vmatpush1.xpose.msra.mxu0 %v8976
    %8978 = vmatprep.subr.mxu0 0.0
    %v8979 = vand.u32 %v1432, 4294901760
    %8980 = vmatpush1.xpose.msra.mxu0 %v8979
    %8981 = vmatprep.subr.mxu0 0.0
    %8982 = vmatpush1.xpose.msra.mxu0 0.0
    %8983 = vmatprep.subr.mxu0 0.0
    %8984 = vmatpush1.xpose.msra.mxu0 0.0
    %8985 = vmatprep.subr.mxu0 0.0
    %8986 = vmatpush1.xpose.msra.mxu0 0.0
    %8987 = vmatprep.subr.mxu0 0.0
    %8988 = vmatpush1.xpose.msra.mxu0 0.0
    %8989 = vmatprep.subr.mxu0 0.0
    %8990 = vmatpush1.xpose.msra.mxu0 0.0
    %8991 = vmatprep.subr.mxu0 0.0
    %8992 = vmatpush1.xpose.msra.mxu0 0.0
    %8993 = vmatprep.subr.mxu0 0.0
    %8994 = vmatpush1.xpose.msra.mxu0 0.0
    %8995 = vmatprep.subr.mxu0 0.0
    %8996 = vmatpush1.xpose.msra.mxu0 0.0
    %8997 = vmatprep.subr.mxu0 0.0
    %8998 = vmatpush1.xpose.msra.mxu0 0.0
    %8999 = vmatprep.subr.mxu0 0.0
    %9000 = vmatpush1.xpose.msra.mxu0 0.0
    %9001 = vmatprep.subr.mxu0 0.0
    %9002 = vmatpush1.xpose.msra.mxu0 0.0
    %9003 = vmatprep.subr.mxu0 0.0
    %9004 = vmatpush1.xpose.msra.mxu0 0.0
    %9005 = vmatprep.subr.mxu0 0.0
    %9006 = vmatpush1.xpose.msra.mxu0 0.0
    %9007 = vmatprep.subr.mxu0 0.0
    %9008 = vmatpush1.xpose.msra.mxu0 0.0
    %9009 = vmatprep.subr.mxu0 0.0
    %9010 = vmatpush1.xpose.msra.mxu0 0.0
    %9011 = vmatprep.subr.mxu0 0.0
    %9012 = vmatpush1.xpose.msra.mxu0 0.0
    %9013 = vmatprep.subr.mxu0 0.0
    %9014 = vmatpush1.xpose.msra.mxu0 0.0
    %9015 = vmatprep.subr.mxu0 0.0
    %9016 = vmatpush1.xpose.msra.mxu0 0.0
    %9017 = vmatprep.subr.mxu0 0.0
    %9018 = vmatpush1.xpose.msra.mxu0 0.0
    %9019 = vmatprep.subr.mxu0 0.0
    %9020 = vmatpush1.xpose.msra.mxu0 0.0
    %9021 = vmatprep.subr.mxu0 0.0
    %9022 = vmatpush1.xpose.msra.mxu0 0.0
    %9023 = vmatprep.subr.mxu0 0.0
    %9024 = vmatpush1.xpose.msra.mxu0 0.0
    %9025 = vmatprep.subr.mxu0 0.0
    %9026 = vmatpush1.xpose.msra.mxu0 0.0
    %9027 = vmatprep.subr.mxu0 0.0
    %9028 = vmatpush1.xpose.msra.mxu0 0.0
    %9029 = vmatprep.subr.mxu0 0.0
    %9030 = vmatpush1.xpose.msra.mxu0 0.0
    %9031 = vmatprep.subr.mxu0 0.0
    %9032 = vmatpush1.xpose.msra.mxu0 0.0
    %9033 = vmatprep.subr.mxu0 0.0
    %9034 = vmatpush1.xpose.msra.mxu0 0.0
    %9035 = vmatprep.subr.mxu0 0.0
    %9036 = vmatpush1.xpose.msra.mxu0 0.0
    %9037 = vmatprep.subr.mxu0 0.0
    %9038 = vmatpush1.xpose.msra.mxu0 0.0
    %9039 = vmatprep.subr.mxu0 0.0
    %9040 = vmatpush1.xpose.msra.mxu0 0.0
    %9041 = vmatprep.mubr.f32.mxu0 0.0
    %v9042 = vand.u32 %v8739, 4294901760
    %v9043 = vsub.f32 %v8739, %v9042
    %v9044 = vand.u32 %v9043, 4294901760
    %9045 = vmatmul.mubr.f32.gmra.mrb[0].mxu0 %v9044
    %v9046 = vpop.f32.mrb[0].mxu0
    %v9047 = vadd.f32 %v8972, %v9046
    %v9048 = vpop.f32.mrb[0].mxu0
    %9049 = vdwg.mxu0
    %9050 = vmatprep.subr.mxu0 0.0
    %v9051 = vand.u32 %v1429, 4294901760
    %v9052 = vsub.f32 %v1429, %v9051
    %v9053 = vand.u32 %v9052, 4294901760
    %9054 = vmatpush1.xpose.msra.mxu0 %v9053
    %9055 = vmatprep.subr.mxu0 0.0
    %v9056 = vand.u32 %v1432, 4294901760
    %v9057 = vsub.f32 %v1432, %v9056
    %v9058 = vand.u32 %v9057, 4294901760
    %9059 = vmatpush1.xpose.msra.mxu0 %v9058
    %9060 = vmatprep.subr.mxu0 0.0
    %9061 = vmatpush1.xpose.msra.mxu0 0.0
    %9062 = vmatprep.subr.mxu0 0.0
    %9063 = vmatpush1.xpose.msra.mxu0 0.0
    %9064 = vmatprep.subr.mxu0 0.0
    %9065 = vmatpush1.xpose.msra.mxu0 0.0
    %9066 = vmatprep.subr.mxu0 0.0
    %9067 = vmatpush1.xpose.msra.mxu0 0.0
    %9068 = vmatprep.subr.mxu0 0.0
    %9069 = vmatpush1.xpose.msra.mxu0 0.0
    %9070 = vmatprep.subr.mxu0 0.0
    %9071 = vmatpush1.xpose.msra.mxu0 0.0
    %9072 = vmatprep.subr.mxu0 0.0
    %9073 = vmatpush1.xpose.msra.mxu0 0.0
    %9074 = vmatprep.subr.mxu0 0.0
    %9075 = vmatpush1.xpose.msra.mxu0 0.0
    %9076 = vmatprep.subr.mxu0 0.0
    %9077 = vmatpush1.xpose.msra.mxu0 0.0
    %9078 = vmatprep.subr.mxu0 0.0
    %9079 = vmatpush1.xpose.msra.mxu0 0.0
    %9080 = vmatprep.subr.mxu0 0.0
    %9081 = vmatpush1.xpose.msra.mxu0 0.0
    %9082 = vmatprep.subr.mxu0 0.0
    %9083 = vmatpush1.xpose.msra.mxu0 0.0
    %9084 = vmatprep.subr.mxu0 0.0
    %9085 = vmatpush1.xpose.msra.mxu0 0.0
    %9086 = vmatprep.subr.mxu0 0.0
    %9087 = vmatpush1.xpose.msra.mxu0 0.0
    %9088 = vmatprep.subr.mxu0 0.0
    %9089 = vmatpush1.xpose.msra.mxu0 0.0
    %9090 = vmatprep.subr.mxu0 0.0
    %9091 = vmatpush1.xpose.msra.mxu0 0.0
    %9092 = vmatprep.subr.mxu0 0.0
    %9093 = vmatpush1.xpose.msra.mxu0 0.0
    %9094 = vmatprep.subr.mxu0 0.0
    %9095 = vmatpush1.xpose.msra.mxu0 0.0
    %9096 = vmatprep.subr.mxu0 0.0
    %9097 = vmatpush1.xpose.msra.mxu0 0.0
    %9098 = vmatprep.subr.mxu0 0.0
    %9099 = vmatpush1.xpose.msra.mxu0 0.0
    %9100 = vmatprep.subr.mxu0 0.0
    %9101 = vmatpush1.xpose.msra.mxu0 0.0
    %9102 = vmatprep.subr.mxu0 0.0
    %9103 = vmatpush1.xpose.msra.mxu0 0.0
    %9104 = vmatprep.subr.mxu0 0.0
    %9105 = vmatpush1.xpose.msra.mxu0 0.0
    %9106 = vmatprep.subr.mxu0 0.0
    %9107 = vmatpush1.xpose.msra.mxu0 0.0
    %9108 = vmatprep.subr.mxu0 0.0
    %9109 = vmatpush1.xpose.msra.mxu0 0.0
    %9110 = vmatprep.subr.mxu0 0.0
    %9111 = vmatpush1.xpose.msra.mxu0 0.0
    %9112 = vmatprep.subr.mxu0 0.0
    %9113 = vmatpush1.xpose.msra.mxu0 0.0
    %9114 = vmatprep.subr.mxu0 0.0
    %9115 = vmatpush1.xpose.msra.mxu0 0.0
    %9116 = vmatprep.subr.mxu0 0.0
    %9117 = vmatpush1.xpose.msra.mxu0 0.0
    %9118 = vmatprep.subr.mxu0 0.0
    %9119 = vmatpush1.xpose.msra.mxu0 0.0
    %9120 = vmatprep.mubr.f32.mxu0 0.0
    %v9121 = vand.u32 %v8739, 4294901760
    %9122 = vmatmul.mubr.f32.gmra.mrb[0].mxu0 %v9121
    %v9123 = vpop.f32.mrb[0].mxu0
    %v9124 = vadd.f32 %v9047, %v9123
    %v9125 = vpop.f32.mrb[0].mxu0
    %9126 = vdwg.mxu0
    %9127 = vmatprep.subr.mxu0 0.0
    %v9128 = vand.u32 %v1429, 4294901760
    %9129 = vmatpush1.xpose.msra.mxu0 %v9128
    %9130 = vmatprep.subr.mxu0 0.0
    %v9131 = vand.u32 %v1432, 4294901760
    %9132 = vmatpush1.xpose.msra.mxu0 %v9131
    %9133 = vmatprep.subr.mxu0 0.0
    %9134 = vmatpush1.xpose.msra.mxu0 0.0
    %9135 = vmatprep.subr.mxu0 0.0
    %9136 = vmatpush1.xpose.msra.mxu0 0.0
    %9137 = vmatprep.subr.mxu0 0.0
    %9138 = vmatpush1.xpose.msra.mxu0 0.0
    %9139 = vmatprep.subr.mxu0 0.0
    %9140 = vmatpush1.xpose.msra.mxu0 0.0
    %9141 = vmatprep.subr.mxu0 0.0
    %9142 = vmatpush1.xpose.msra.mxu0 0.0
    %9143 = vmatprep.subr.mxu0 0.0
    %9144 = vmatpush1.xpose.msra.mxu0 0.0
    %9145 = vmatprep.subr.mxu0 0.0
    %9146 = vmatpush1.xpose.msra.mxu0 0.0
    %9147 = vmatprep.subr.mxu0 0.0
    %9148 = vmatpush1.xpose.msra.mxu0 0.0
    %9149 = vmatprep.subr.mxu0 0.0
    %9150 = vmatpush1.xpose.msra.mxu0 0.0
    %9151 = vmatprep.subr.mxu0 0.0
    %9152 = vmatpush1.xpose.msra.mxu0 0.0
    %9153 = vmatprep.subr.mxu0 0.0
    %9154 = vmatpush1.xpose.msra.mxu0 0.0
    %9155 = vmatprep.subr.mxu0 0.0
    %9156 = vmatpush1.xpose.msra.mxu0 0.0
    %9157 = vmatprep.subr.mxu0 0.0
    %9158 = vmatpush1.xpose.msra.mxu0 0.0
    %9159 = vmatprep.subr.mxu0 0.0
    %9160 = vmatpush1.xpose.msra.mxu0 0.0
    %9161 = vmatprep.subr.mxu0 0.0
    %9162 = vmatpush1.xpose.msra.mxu0 0.0
    %9163 = vmatprep.subr.mxu0 0.0
    %9164 = vmatpush1.xpose.msra.mxu0 0.0
    %9165 = vmatprep.subr.mxu0 0.0
    %9166 = vmatpush1.xpose.msra.mxu0 0.0
    %9167 = vmatprep.subr.mxu0 0.0
    %9168 = vmatpush1.xpose.msra.mxu0 0.0
    %9169 = vmatprep.subr.mxu0 0.0
    %9170 = vmatpush1.xpose.msra.mxu0 0.0
    %9171 = vmatprep.subr.mxu0 0.0
    %9172 = vmatpush1.xpose.msra.mxu0 0.0
    %9173 = vmatprep.subr.mxu0 0.0
    %9174 = vmatpush1.xpose.msra.mxu0 0.0
    %9175 = vmatprep.subr.mxu0 0.0
    %9176 = vmatpush1.xpose.msra.mxu0 0.0
    %9177 = vmatprep.subr.mxu0 0.0
    %9178 = vmatpush1.xpose.msra.mxu0 0.0
    %9179 = vmatprep.subr.mxu0 0.0
    %9180 = vmatpush1.xpose.msra.mxu0 0.0
    %9181 = vmatprep.subr.mxu0 0.0
    %9182 = vmatpush1.xpose.msra.mxu0 0.0
    %9183 = vmatprep.subr.mxu0 0.0
    %9184 = vmatpush1.xpose.msra.mxu0 0.0
    %9185 = vmatprep.subr.mxu0 0.0
    %9186 = vmatpush1.xpose.msra.mxu0 0.0
    %9187 = vmatprep.subr.mxu0 0.0
    %9188 = vmatpush1.xpose.msra.mxu0 0.0
    %9189 = vmatprep.subr.mxu0 0.0
    %9190 = vmatpush1.xpose.msra.mxu0 0.0
    %9191 = vmatprep.subr.mxu0 0.0
    %9192 = vmatpush1.xpose.msra.mxu0 0.0
    %9193 = vmatprep.mubr.f32.mxu0 0.0
    %v9194 = vand.u32 %v8739, 4294901760
    %9195 = vmatmul.mubr.f32.gmra.mrb[0].mxu0 %v9194
    %v9196 = vpop.f32.mrb[0].mxu0
    %v9197 = vadd.f32 %v9124, %v9196
    %v9198 = vpop.f32.mrb[0].mxu0
    %9199 = vdwg.mxu0
    %v9200 = vsel %vm1893, %v9197, -inf
    %v9201 = vrot.slane %v9200, 4
    %v9202 = vmax.f32 %v9200, %v9201
    %v9203 = vrot.slane %v9202, 2
    %v9204 = vmax.f32 %v9202, %v9203
    %v9205 = vrot.slane %v9204, 1
    %v9206 = vmax.f32 %v9204, %v9205
    %v9207 = vsub.f32 %v9197, %v9206
    %v9208 = vmul.f32 %v9207, 1.442695
    %v9209 = vpow.pop %v9208
    %v9210 = vsel %vm1893, %v9209, 0.0
    %v9211 = vrot.slane %v9210, 4
    %v9212 = vadd.f32 %v9210, %v9211
    %v9213 = vrot.slane %v9212, 2
    %v9214 = vadd.f32 %v9212, %v9213
    %v9215 = vrot.slane %v9214, 1
    %v9216 = vadd.f32 %v9214, %v9215
    %v9217 = vrcp.pop %v9216
    %v9218 = vmul.f32 %v9209, %v9217
    %v9219 = vsel %vm1893, %v9218, 0.0
    %9220 = vadd.xlane.f32.xlu0 %v9219
    %v9221 = vpop.xlane.xlu0 %9220
    %v9222 = vadd.f32 %v9221, 1e-08
    %v9223 = vrcp.pop %v9222
    %v9224 = vmul.f32 %v9218, %v9223
    %v9226 = vsel %vm1893, %v9224, 0
    %9228 = vmatprep.subr.mxu0 0.0
    %v9229 = vand.u32 %v1920, 4294901760
    %9230 = vmatpush1.msra.mxu0 %v9229
    %9231 = vmatprep.subr.mxu0 0.0
    %v9232 = vand.u32 %v1922, 4294901760
    %9233 = vmatpush1.msra.mxu0 %v9232
    %9234 = vmatprep.subr.mxu0 0.0
    %9235 = vmatpush1.msra.mxu0 0.0
    %9236 = vmatprep.subr.mxu0 0.0
    %9237 = vmatpush1.msra.mxu0 0.0
    %9238 = vmatprep.subr.mxu0 0.0
    %9239 = vmatpush1.msra.mxu0 0.0
    %9240 = vmatprep.subr.mxu0 0.0
    %9241 = vmatpush1.msra.mxu0 0.0
    %9242 = vmatprep.subr.mxu0 0.0
    %9243 = vmatpush1.msra.mxu0 0.0
    %9244 = vmatprep.subr.mxu0 0.0
    %9245 = vmatpush1.msra.mxu0 0.0
    %9246 = vmatprep.subr.mxu0 0.0
    %9247 = vmatpush1.msra.mxu0 0.0
    %9248 = vmatprep.subr.mxu0 0.0
    %9249 = vmatpush1.msra.mxu0 0.0
    %9250 = vmatprep.subr.mxu0 0.0
    %9251 = vmatpush1.msra.mxu0 0.0
    %9252 = vmatprep.subr.mxu0 0.0
    %9253 = vmatpush1.msra.mxu0 0.0
    %9254 = vmatprep.subr.mxu0 0.0
    %9255 = vmatpush1.msra.mxu0 0.0
    %9256 = vmatprep.subr.mxu0 0.0
    %9257 = vmatpush1.msra.mxu0 0.0
    %9258 = vmatprep.subr.mxu0 0.0
    %9259 = vmatpush1.msra.mxu0 0.0
    %9260 = vmatprep.subr.mxu0 0.0
    %9261 = vmatpush1.msra.mxu0 0.0
    %9262 = vmatprep.subr.mxu0 0.0
    %9263 = vmatpush1.msra.mxu0 0.0
    %9264 = vmatprep.subr.mxu0 0.0
    %9265 = vmatpush1.msra.mxu0 0.0
    %9266 = vmatprep.subr.mxu0 0.0
    %9267 = vmatpush1.msra.mxu0 0.0
    %9268 = vmatprep.subr.mxu0 0.0
    %9269 = vmatpush1.msra.mxu0 0.0
    %9270 = vmatprep.subr.mxu0 0.0
    %9271 = vmatpush1.msra.mxu0 0.0
    %9272 = vmatprep.subr.mxu0 0.0
    %9273 = vmatpush1.msra.mxu0 0.0
    %9274 = vmatprep.subr.mxu0 0.0
    %9275 = vmatpush1.msra.mxu0 0.0
    %9276 = vmatprep.subr.mxu0 0.0
    %9277 = vmatpush1.msra.mxu0 0.0
    %9278 = vmatprep.subr.mxu0 0.0
    %9279 = vmatpush1.msra.mxu0 0.0
    %9280 = vmatprep.subr.mxu0 0.0
    %9281 = vmatpush1.msra.mxu0 0.0
    %9282 = vmatprep.subr.mxu0 0.0
    %9283 = vmatpush1.msra.mxu0 0.0
    %9284 = vmatprep.subr.mxu0 0.0
    %9285 = vmatpush1.msra.mxu0 0.0
    %9286 = vmatprep.subr.mxu0 0.0
    %9287 = vmatpush1.msra.mxu0 0.0
    %9288 = vmatprep.subr.mxu0 0.0
    %9289 = vmatpush1.msra.mxu0 0.0
    %9290 = vmatprep.subr.mxu0 0.0
    %9291 = vmatpush1.msra.mxu0 0.0
    %9292 = vmatprep.subr.mxu0 0.0
    %9293 = vmatpush1.msra.mxu0 0.0
    %9294 = vmatprep.mubr.f32.mxu0 0.0
    %v9295 = vand.u32 %v9226, 4294901760
    %v9296 = vsub.f32 %v9226, %v9295
    %v9297 = vand.u32 %v9296, 4294901760
    %v9298 = vsub.f32 %v9296, %v9297
    %v9299 = vand.u32 %v9298, 4294901760
    %9300 = vmatmul.mubr.f32.gmra.mrb[0].mxu0 %v9299
    %v9301 = vpop.f32.mrb[0].mxu0
    %v9302 = vadd.f32 0.0, %v9301
    %v9303 = vpop.f32.mrb[0].mxu0
    %9304 = vdwg.mxu0
    %9305 = vmatprep.subr.mxu0 0.0
    %v9306 = vand.u32 %v1920, 4294901760
    %v9307 = vsub.f32 %v1920, %v9306
    %v9308 = vand.u32 %v9307, 4294901760
    %v9309 = vsub.f32 %v9307, %v9308
    %v9310 = vand.u32 %v9309, 4294901760
    %9311 = vmatpush1.msra.mxu0 %v9310
    %9312 = vmatprep.subr.mxu0 0.0
    %v9313 = vand.u32 %v1922, 4294901760
    %v9314 = vsub.f32 %v1922, %v9313
    %v9315 = vand.u32 %v9314, 4294901760
    %v9316 = vsub.f32 %v9314, %v9315
    %v9317 = vand.u32 %v9316, 4294901760
    %9318 = vmatpush1.msra.mxu0 %v9317
    %9319 = vmatprep.subr.mxu0 0.0
    %9320 = vmatpush1.msra.mxu0 0.0
    %9321 = vmatprep.subr.mxu0 0.0
    %9322 = vmatpush1.msra.mxu0 0.0
    %9323 = vmatprep.subr.mxu0 0.0
    %9324 = vmatpush1.msra.mxu0 0.0
    %9325 = vmatprep.subr.mxu0 0.0
    %9326 = vmatpush1.msra.mxu0 0.0
    %9327 = vmatprep.subr.mxu0 0.0
    %9328 = vmatpush1.msra.mxu0 0.0
    %9329 = vmatprep.subr.mxu0 0.0
    %9330 = vmatpush1.msra.mxu0 0.0
    %9331 = vmatprep.subr.mxu0 0.0
    %9332 = vmatpush1.msra.mxu0 0.0
    %9333 = vmatprep.subr.mxu0 0.0
    %9334 = vmatpush1.msra.mxu0 0.0
    %9335 = vmatprep.subr.mxu0 0.0
    %9336 = vmatpush1.msra.mxu0 0.0
    %9337 = vmatprep.subr.mxu0 0.0
    %9338 = vmatpush1.msra.mxu0 0.0
    %9339 = vmatprep.subr.mxu0 0.0
    %9340 = vmatpush1.msra.mxu0 0.0
    %9341 = vmatprep.subr.mxu0 0.0
    %9342 = vmatpush1.msra.mxu0 0.0
    %9343 = vmatprep.subr.mxu0 0.0
    %9344 = vmatpush1.msra.mxu0 0.0
    %9345 = vmatprep.subr.mxu0 0.0
    %9346 = vmatpush1.msra.mxu0 0.0
    %9347 = vmatprep.subr.mxu0 0.0
    %9348 = vmatpush1.msra.mxu0 0.0
    %9349 = vmatprep.subr.mxu0 0.0
    %9350 = vmatpush1.msra.mxu0 0.0
    %9351 = vmatprep.subr.mxu0 0.0
    %9352 = vmatpush1.msra.mxu0 0.0
    %9353 = vmatprep.subr.mxu0 0.0
    %9354 = vmatpush1.msra.mxu0 0.0
    %9355 = vmatprep.subr.mxu0 0.0
    %9356 = vmatpush1.msra.mxu0 0.0
    %9357 = vmatprep.subr.mxu0 0.0
    %9358 = vmatpush1.msra.mxu0 0.0
    %9359 = vmatprep.subr.mxu0 0.0
    %9360 = vmatpush1.msra.mxu0 0.0
    %9361 = vmatprep.subr.mxu0 0.0
    %9362 = vmatpush1.msra.mxu0 0.0
    %9363 = vmatprep.subr.mxu0 0.0
    %9364 = vmatpush1.msra.mxu0 0.0
    %9365 = vmatprep.subr.mxu0 0.0
    %9366 = vmatpush1.msra.mxu0 0.0
    %9367 = vmatprep.subr.mxu0 0.0
    %9368 = vmatpush1.msra.mxu0 0.0
    %9369 = vmatprep.subr.mxu0 0.0
    %9370 = vmatpush1.msra.mxu0 0.0
    %9371 = vmatprep.subr.mxu0 0.0
    %9372 = vmatpush1.msra.mxu0 0.0
    %9373 = vmatprep.subr.mxu0 0.0
    %9374 = vmatpush1.msra.mxu0 0.0
    %9375 = vmatprep.subr.mxu0 0.0
    %9376 = vmatpush1.msra.mxu0 0.0
    %9377 = vmatprep.subr.mxu0 0.0
    %9378 = vmatpush1.msra.mxu0 0.0
    %9379 = vmatprep.mubr.f32.mxu0 0.0
    %v9380 = vand.u32 %v9226, 4294901760
    %9381 = vmatmul.mubr.f32.gmra.mrb[0].mxu0 %v9380
    %v9382 = vpop.f32.mrb[0].mxu0
    %v9383 = vadd.f32 %v9302, %v9382
    %v9384 = vpop.f32.mrb[0].mxu0
    %9385 = vdwg.mxu0
    %9386 = vmatprep.subr.mxu0 0.0
    %v9387 = vand.u32 %v1920, 4294901760
    %v9388 = vsub.f32 %v1920, %v9387
    %9389 = vmatpush1.msra.mxu0 %v9388
    %9390 = vmatprep.subr.mxu0 0.0
    %v9391 = vand.u32 %v1922, 4294901760
    %v9392 = vsub.f32 %v1922, %v9391
    %9393 = vmatpush1.msra.mxu0 %v9392
    %9394 = vmatprep.subr.mxu0 0.0
    %9395 = vmatpush1.msra.mxu0 0.0
    %9396 = vmatprep.subr.mxu0 0.0
    %9397 = vmatpush1.msra.mxu0 0.0
    %9398 = vmatprep.subr.mxu0 0.0
    %9399 = vmatpush1.msra.mxu0 0.0
    %9400 = vmatprep.subr.mxu0 0.0
    %9401 = vmatpush1.msra.mxu0 0.0
    %9402 = vmatprep.subr.mxu0 0.0
    %9403 = vmatpush1.msra.mxu0 0.0
    %9404 = vmatprep.subr.mxu0 0.0
    %9405 = vmatpush1.msra.mxu0 0.0
    %9406 = vmatprep.subr.mxu0 0.0
    %9407 = vmatpush1.msra.mxu0 0.0
    %9408 = vmatprep.subr.mxu0 0.0
    %9409 = vmatpush1.msra.mxu0 0.0
    %9410 = vmatprep.subr.mxu0 0.0
    %9411 = vmatpush1.msra.mxu0 0.0
    %9412 = vmatprep.subr.mxu0 0.0
    %9413 = vmatpush1.msra.mxu0 0.0
    %9414 = vmatprep.subr.mxu0 0.0
    %9415 = vmatpush1.msra.mxu0 0.0
    %9416 = vmatprep.subr.mxu0 0.0
    %9417 = vmatpush1.msra.mxu0 0.0
    %9418 = vmatprep.subr.mxu0 0.0
    %9419 = vmatpush1.msra.mxu0 0.0
    %9420 = vmatprep.subr.mxu0 0.0
    %9421 = vmatpush1.msra.mxu0 0.0
    %9422 = vmatprep.subr.mxu0 0.0
    %9423 = vmatpush1.msra.mxu0 0.0
    %9424 = vmatprep.subr.mxu0 0.0
    %9425 = vmatpush1.msra.mxu0 0.0
    %9426 = vmatprep.subr.mxu0 0.0
    %9427 = vmatpush1.msra.mxu0 0.0
    %9428 = vmatprep.subr.mxu0 0.0
    %9429 = vmatpush1.msra.mxu0 0.0
    %9430 = vmatprep.subr.mxu0 0.0
    %9431 = vmatpush1.msra.mxu0 0.0
    %9432 = vmatprep.subr.mxu0 0.0
    %9433 = vmatpush1.msra.mxu0 0.0
    %9434 = vmatprep.subr.mxu0 0.0
    %9435 = vmatpush1.msra.mxu0 0.0
    %9436 = vmatprep.subr.mxu0 0.0
    %9437 = vmatpush1.msra.mxu0 0.0
    %9438 = vmatprep.subr.mxu0 0.0
    %9439 = vmatpush1.msra.mxu0 0.0
    %9440 = vmatprep.subr.mxu0 0.0
    %9441 = vmatpush1.msra.mxu0 0.0
    %9442 = vmatprep.subr.mxu0 0.0
    %9443 = vmatpush1.msra.mxu0 0.0
    %9444 = vmatprep.subr.mxu0 0.0
    %9445 = vmatpush1.msra.mxu0 0.0
    %9446 = vmatprep.subr.mxu0 0.0
    %9447 = vmatpush1.msra.mxu0 0.0
    %9448 = vmatprep.subr.mxu0 0.0
    %9449 = vmatpush1.msra.mxu0 0.0
    %9450 = vmatprep.subr.mxu0 0.0
    %9451 = vmatpush1.msra.mxu0 0.0
    %9452 = vmatprep.subr.mxu0 0.0
    %9453 = vmatpush1.msra.mxu0 0.0
    %9454 = vmatprep.mubr.f32.mxu0 0.0
    %v9455 = vand.u32 %v9226, 4294901760
    %v9456 = vsub.f32 %v9226, %v9455
    %9457 = vmatmul.mubr.f32.gmra.mrb[0].mxu0 %v9456
    %v9458 = vpop.f32.mrb[0].mxu0
    %v9459 = vadd.f32 %v9383, %v9458
    %v9460 = vpop.f32.mrb[0].mxu0
    %9461 = vdwg.mxu0
    %9462 = vmatprep.subr.mxu0 0.0
    %v9463 = vand.u32 %v1920, 4294901760
    %9464 = vmatpush1.msra.mxu0 %v9463
    %9465 = vmatprep.subr.mxu0 0.0
    %v9466 = vand.u32 %v1922, 4294901760
    %9467 = vmatpush1.msra.mxu0 %v9466
    %9468 = vmatprep.subr.mxu0 0.0
    %9469 = vmatpush1.msra.mxu0 0.0
    %9470 = vmatprep.subr.mxu0 0.0
    %9471 = vmatpush1.msra.mxu0 0.0
    %9472 = vmatprep.subr.mxu0 0.0
    %9473 = vmatpush1.msra.mxu0 0.0
    %9474 = vmatprep.subr.mxu0 0.0
    %9475 = vmatpush1.msra.mxu0 0.0
    %9476 = vmatprep.subr.mxu0 0.0
    %9477 = vmatpush1.msra.mxu0 0.0
    %9478 = vmatprep.subr.mxu0 0.0
    %9479 = vmatpush1.msra.mxu0 0.0
    %9480 = vmatprep.subr.mxu0 0.0
    %9481 = vmatpush1.msra.mxu0 0.0
    %9482 = vmatprep.subr.mxu0 0.0
    %9483 = vmatpush1.msra.mxu0 0.0
    %9484 = vmatprep.subr.mxu0 0.0
    %9485 = vmatpush1.msra.mxu0 0.0
    %9486 = vmatprep.subr.mxu0 0.0
    %9487 = vmatpush1.msra.mxu0 0.0
    %9488 = vmatprep.subr.mxu0 0.0
    %9489 = vmatpush1.msra.mxu0 0.0
    %9490 = vmatprep.subr.mxu0 0.0
    %9491 = vmatpush1.msra.mxu0 0.0
    %9492 = vmatprep.subr.mxu0 0.0
    %9493 = vmatpush1.msra.mxu0 0.0
    %9494 = vmatprep.subr.mxu0 0.0
    %9495 = vmatpush1.msra.mxu0 0.0
    %9496 = vmatprep.subr.mxu0 0.0
    %9497 = vmatpush1.msra.mxu0 0.0
    %9498 = vmatprep.subr.mxu0 0.0
    %9499 = vmatpush1.msra.mxu0 0.0
    %9500 = vmatprep.subr.mxu0 0.0
    %9501 = vmatpush1.msra.mxu0 0.0
    %9502 = vmatprep.subr.mxu0 0.0
    %9503 = vmatpush1.msra.mxu0 0.0
    %9504 = vmatprep.subr.mxu0 0.0
    %9505 = vmatpush1.msra.mxu0 0.0
    %9506 = vmatprep.subr.mxu0 0.0
    %9507 = vmatpush1.msra.mxu0 0.0
    %9508 = vmatprep.subr.mxu0 0.0
    %9509 = vmatpush1.msra.mxu0 0.0
    %9510 = vmatprep.subr.mxu0 0.0
    %9511 = vmatpush1.msra.mxu0 0.0
    %9512 = vmatprep.subr.mxu0 0.0
    %9513 = vmatpush1.msra.mxu0 0.0
    %9514 = vmatprep.subr.mxu0 0.0
    %9515 = vmatpush1.msra.mxu0 0.0
    %9516 = vmatprep.subr.mxu0 0.0
    %9517 = vmatpush1.msra.mxu0 0.0
    %9518 = vmatprep.subr.mxu0 0.0
    %9519 = vmatpush1.msra.mxu0 0.0
    %9520 = vmatprep.subr.mxu0 0.0
    %9521 = vmatpush1.msra.mxu0 0.0
    %9522 = vmatprep.subr.mxu0 0.0
    %9523 = vmatpush1.msra.mxu0 0.0
    %9524 = vmatprep.subr.mxu0 0.0
    %9525 = vmatpush1.msra.mxu0 0.0
    %9526 = vmatprep.subr.mxu0 0.0
    %9527 = vmatpush1.msra.mxu0 0.0
    %9528 = vmatprep.mubr.f32.mxu0 0.0
    %v9529 = vand.u32 %v9226, 4294901760
    %v9530 = vsub.f32 %v9226, %v9529
    %v9531 = vand.u32 %v9530, 4294901760
    %9532 = vmatmul.mubr.f32.gmra.mrb[0].mxu0 %v9531
    %v9533 = vpop.f32.mrb[0].mxu0
    %v9534 = vadd.f32 %v9459, %v9533
    %v9535 = vpop.f32.mrb[0].mxu0
    %9536 = vdwg.mxu0
    %9537 = vmatprep.subr.mxu0 0.0
    %v9538 = vand.u32 %v1920, 4294901760
    %v9539 = vsub.f32 %v1920, %v9538
    %v9540 = vand.u32 %v9539, 4294901760
    %9541 = vmatpush1.msra.mxu0 %v9540
    %9542 = vmatprep.subr.mxu0 0.0
    %v9543 = vand.u32 %v1922, 4294901760
    %v9544 = vsub.f32 %v1922, %v9543
    %v9545 = vand.u32 %v9544, 4294901760
    %9546 = vmatpush1.msra.mxu0 %v9545
    %9547 = vmatprep.subr.mxu0 0.0
    %9548 = vmatpush1.msra.mxu0 0.0
    %9549 = vmatprep.subr.mxu0 0.0
    %9550 = vmatpush1.msra.mxu0 0.0
    %9551 = vmatprep.subr.mxu0 0.0
    %9552 = vmatpush1.msra.mxu0 0.0
    %9553 = vmatprep.subr.mxu0 0.0
    %9554 = vmatpush1.msra.mxu0 0.0
    %9555 = vmatprep.subr.mxu0 0.0
    %9556 = vmatpush1.msra.mxu0 0.0
    %9557 = vmatprep.subr.mxu0 0.0
    %9558 = vmatpush1.msra.mxu0 0.0
    %9559 = vmatprep.subr.mxu0 0.0
    %9560 = vmatpush1.msra.mxu0 0.0
    %9561 = vmatprep.subr.mxu0 0.0
    %9562 = vmatpush1.msra.mxu0 0.0
    %9563 = vmatprep.subr.mxu0 0.0
    %9564 = vmatpush1.msra.mxu0 0.0
    %9565 = vmatprep.subr.mxu0 0.0
    %9566 = vmatpush1.msra.mxu0 0.0
    %9567 = vmatprep.subr.mxu0 0.0
    %9568 = vmatpush1.msra.mxu0 0.0
    %9569 = vmatprep.subr.mxu0 0.0
    %9570 = vmatpush1.msra.mxu0 0.0
    %9571 = vmatprep.subr.mxu0 0.0
    %9572 = vmatpush1.msra.mxu0 0.0
    %9573 = vmatprep.subr.mxu0 0.0
    %9574 = vmatpush1.msra.mxu0 0.0
    %9575 = vmatprep.subr.mxu0 0.0
    %9576 = vmatpush1.msra.mxu0 0.0
    %9577 = vmatprep.subr.mxu0 0.0
    %9578 = vmatpush1.msra.mxu0 0.0
    %9579 = vmatprep.subr.mxu0 0.0
    %9580 = vmatpush1.msra.mxu0 0.0
    %9581 = vmatprep.subr.mxu0 0.0
    %9582 = vmatpush1.msra.mxu0 0.0
    %9583 = vmatprep.subr.mxu0 0.0
    %9584 = vmatpush1.msra.mxu0 0.0
    %9585 = vmatprep.subr.mxu0 0.0
    %9586 = vmatpush1.msra.mxu0 0.0
    %9587 = vmatprep.subr.mxu0 0.0
    %9588 = vmatpush1.msra.mxu0 0.0
    %9589 = vmatprep.subr.mxu0 0.0
    %9590 = vmatpush1.msra.mxu0 0.0
    %9591 = vmatprep.subr.mxu0 0.0
    %9592 = vmatpush1.msra.mxu0 0.0
    %9593 = vmatprep.subr.mxu0 0.0
    %9594 = vmatpush1.msra.mxu0 0.0
    %9595 = vmatprep.subr.mxu0 0.0
    %9596 = vmatpush1.msra.mxu0 0.0
    %9597 = vmatprep.subr.mxu0 0.0
    %9598 = vmatpush1.msra.mxu0 0.0
    %9599 = vmatprep.subr.mxu0 0.0
    %9600 = vmatpush1.msra.mxu0 0.0
    %9601 = vmatprep.subr.mxu0 0.0
    %9602 = vmatpush1.msra.mxu0 0.0
    %9603 = vmatprep.subr.mxu0 0.0
    %9604 = vmatpush1.msra.mxu0 0.0
    %9605 = vmatprep.subr.mxu0 0.0
    %9606 = vmatpush1.msra.mxu0 0.0
    %9607 = vmatprep.mubr.f32.mxu0 0.0
    %v9608 = vand.u32 %v9226, 4294901760
    %9609 = vmatmul.mubr.f32.gmra.mrb[0].mxu0 %v9608
    %v9610 = vpop.f32.mrb[0].mxu0
    %v9611 = vadd.f32 %v9534, %v9610
    %v9612 = vpop.f32.mrb[0].mxu0
    %9613 = vdwg.mxu0
    %9614 = vmatprep.subr.mxu0 0.0
    %v9615 = vand.u32 %v1920, 4294901760
    %9616 = vmatpush1.msra.mxu0 %v9615
    %9617 = vmatprep.subr.mxu0 0.0
    %v9618 = vand.u32 %v1922, 4294901760
    %9619 = vmatpush1.msra.mxu0 %v9618
    %9620 = vmatprep.subr.mxu0 0.0
    %9621 = vmatpush1.msra.mxu0 0.0
    %9622 = vmatprep.subr.mxu0 0.0
    %9623 = vmatpush1.msra.mxu0 0.0
    %9624 = vmatprep.subr.mxu0 0.0
    %9625 = vmatpush1.msra.mxu0 0.0
    %9626 = vmatprep.subr.mxu0 0.0
    %9627 = vmatpush1.msra.mxu0 0.0
    %9628 = vmatprep.subr.mxu0 0.0
    %9629 = vmatpush1.msra.mxu0 0.0
    %9630 = vmatprep.subr.mxu0 0.0
    %9631 = vmatpush1.msra.mxu0 0.0
    %9632 = vmatprep.subr.mxu0 0.0
    %9633 = vmatpush1.msra.mxu0 0.0
    %9634 = vmatprep.subr.mxu0 0.0
    %9635 = vmatpush1.msra.mxu0 0.0
    %9636 = vmatprep.subr.mxu0 0.0
    %9637 = vmatpush1.msra.mxu0 0.0
    %9638 = vmatprep.subr.mxu0 0.0
    %9639 = vmatpush1.msra.mxu0 0.0
    %9640 = vmatprep.subr.mxu0 0.0
    %9641 = vmatpush1.msra.mxu0 0.0
    %9642 = vmatprep.subr.mxu0 0.0
    %9643 = vmatpush1.msra.mxu0 0.0
    %9644 = vmatprep.subr.mxu0 0.0
    %9645 = vmatpush1.msra.mxu0 0.0
    %9646 = vmatprep.subr.mxu0 0.0
    %9647 = vmatpush1.msra.mxu0 0.0
    %9648 = vmatprep.subr.mxu0 0.0
    %9649 = vmatpush1.msra.mxu0 0.0
    %9650 = vmatprep.subr.mxu0 0.0
    %9651 = vmatpush1.msra.mxu0 0.0
    %9652 = vmatprep.subr.mxu0 0.0
    %9653 = vmatpush1.msra.mxu0 0.0
    %9654 = vmatprep.subr.mxu0 0.0
    %9655 = vmatpush1.msra.mxu0 0.0
    %9656 = vmatprep.subr.mxu0 0.0
    %9657 = vmatpush1.msra.mxu0 0.0
    %9658 = vmatprep.subr.mxu0 0.0
    %9659 = vmatpush1.msra.mxu0 0.0
    %9660 = vmatprep.subr.mxu0 0.0
    %9661 = vmatpush1.msra.mxu0 0.0
    %9662 = vmatprep.subr.mxu0 0.0
    %9663 = vmatpush1.msra.mxu0 0.0
    %9664 = vmatprep.subr.mxu0 0.0
    %9665 = vmatpush1.msra.mxu0 0.0
    %9666 = vmatprep.subr.mxu0 0.0
    %9667 = vmatpush1.msra.mxu0 0.0
    %9668 = vmatprep.subr.mxu0 0.0
    %9669 = vmatpush1.msra.mxu0 0.0
    %9670 = vmatprep.subr.mxu0 0.0
    %9671 = vmatpush1.msra.mxu0 0.0
    %9672 = vmatprep.subr.mxu0 0.0
    %9673 = vmatpush1.msra.mxu0 0.0
    %9674 = vmatprep.subr.mxu0 0.0
    %9675 = vmatpush1.msra.mxu0 0.0
    %9676 = vmatprep.subr.mxu0 0.0
    %9677 = vmatpush1.msra.mxu0 0.0
    %9678 = vmatprep.subr.mxu0 0.0
    %9679 = vmatpush1.msra.mxu0 0.0
    %9680 = vmatprep.mubr.f32.mxu0 0.0
    %v9681 = vand.u32 %v9226, 4294901760
    %9682 = vmatmul.mubr.f32.gmra.mrb[0].mxu0 %v9681
    %v9683 = vpop.f32.mrb[0].mxu0
    %v9684 = vadd.f32 %v9611, %v9683
    %v9685 = vpop.f32.mrb[0].mxu0
    %9686 = vdwg.mxu0
    %v9688 = vsel %vm151, %v8737, 0
    %9690 = vmatprep.subr.mxu0 0.0
    %v9691 = vand.u32 %v2391, 4294901760
    %9692 = vmatpush1.xpose.msra.mxu0 %v9691
    %9693 = vmatprep.subr.mxu0 0.0
    %v9694 = vand.u32 %v2394, 4294901760
    %9695 = vmatpush1.xpose.msra.mxu0 %v9694
    %9696 = vmatprep.subr.mxu0 0.0
    %9697 = vmatpush1.xpose.msra.mxu0 0.0
    %9698 = vmatprep.subr.mxu0 0.0
    %9699 = vmatpush1.xpose.msra.mxu0 0.0
    %9700 = vmatprep.subr.mxu0 0.0
    %9701 = vmatpush1.xpose.msra.mxu0 0.0
    %9702 = vmatprep.subr.mxu0 0.0
    %9703 = vmatpush1.xpose.msra.mxu0 0.0
    %9704 = vmatprep.subr.mxu0 0.0
    %9705 = vmatpush1.xpose.msra.mxu0 0.0
    %9706 = vmatprep.subr.mxu0 0.0
    %9707 = vmatpush1.xpose.msra.mxu0 0.0
    %9708 = vmatprep.subr.mxu0 0.0
    %9709 = vmatpush1.xpose.msra.mxu0 0.0
    %9710 = vmatprep.subr.mxu0 0.0
    %9711 = vmatpush1.xpose.msra.mxu0 0.0
    %9712 = vmatprep.subr.mxu0 0.0
    %9713 = vmatpush1.xpose.msra.mxu0 0.0
    %9714 = vmatprep.subr.mxu0 0.0
    %9715 = vmatpush1.xpose.msra.mxu0 0.0
    %9716 = vmatprep.subr.mxu0 0.0
    %9717 = vmatpush1.xpose.msra.mxu0 0.0
    %9718 = vmatprep.subr.mxu0 0.0
    %9719 = vmatpush1.xpose.msra.mxu0 0.0
    %9720 = vmatprep.subr.mxu0 0.0
    %9721 = vmatpush1.xpose.msra.mxu0 0.0
    %9722 = vmatprep.subr.mxu0 0.0
    %9723 = vmatpush1.xpose.msra.mxu0 0.0
    %9724 = vmatprep.subr.mxu0 0.0
    %9725 = vmatpush1.xpose.msra.mxu0 0.0
    %9726 = vmatprep.subr.mxu0 0.0
    %9727 = vmatpush1.xpose.msra.mxu0 0.0
    %9728 = vmatprep.subr.mxu0 0.0
    %9729 = vmatpush1.xpose.msra.mxu0 0.0
    %9730 = vmatprep.subr.mxu0 0.0
    %9731 = vmatpush1.xpose.msra.mxu0 0.0
    %9732 = vmatprep.subr.mxu0 0.0
    %9733 = vmatpush1.xpose.msra.mxu0 0.0
    %9734 = vmatprep.subr.mxu0 0.0
    %9735 = vmatpush1.xpose.msra.mxu0 0.0
    %9736 = vmatprep.subr.mxu0 0.0
    %9737 = vmatpush1.xpose.msra.mxu0 0.0
    %9738 = vmatprep.subr.mxu0 0.0
    %9739 = vmatpush1.xpose.msra.mxu0 0.0
    %9740 = vmatprep.subr.mxu0 0.0
    %9741 = vmatpush1.xpose.msra.mxu0 0.0
    %9742 = vmatprep.subr.mxu0 0.0
    %9743 = vmatpush1.xpose.msra.mxu0 0.0
    %9744 = vmatprep.subr.mxu0 0.0
    %9745 = vmatpush1.xpose.msra.mxu0 0.0
    %9746 = vmatprep.subr.mxu0 0.0
    %9747 = vmatpush1.xpose.msra.mxu0 0.0
    %9748 = vmatprep.subr.mxu0 0.0
    %9749 = vmatpush1.xpose.msra.mxu0 0.0
    %9750 = vmatprep.subr.mxu0 0.0
    %9751 = vmatpush1.xpose.msra.mxu0 0.0
    %9752 = vmatprep.subr.mxu0 0.0
    %9753 = vmatpush1.xpose.msra.mxu0 0.0
    %9754 = vmatprep.subr.mxu0 0.0
    %9755 = vmatpush1.xpose.msra.mxu0 0.0
    %9756 = vmatprep.mubr.f32.mxu0 0.0
    %v9757 = vand.u32 %v9688, 4294901760
    %v9758 = vsub.f32 %v9688, %v9757
    %v9759 = vand.u32 %v9758, 4294901760
    %v9760 = vsub.f32 %v9758, %v9759
    %v9761 = vand.u32 %v9760, 4294901760
    %9762 = vmatmul.mubr.f32.gmra.mrb[0].mxu0 %v9761
    %v9763 = vpop.f32.mrb[0].mxu0
    %v9764 = vadd.f32 0.0, %v9763
    %v9765 = vpop.f32.mrb[0].mxu0
    %9766 = vdwg.mxu0
    %9767 = vmatprep.subr.mxu0 0.0
    %v9768 = vand.u32 %v2391, 4294901760
    %v9769 = vsub.f32 %v2391, %v9768
    %v9770 = vand.u32 %v9769, 4294901760
    %v9771 = vsub.f32 %v9769, %v9770
    %v9772 = vand.u32 %v9771, 4294901760
    %9773 = vmatpush1.xpose.msra.mxu0 %v9772
    %9774 = vmatprep.subr.mxu0 0.0
    %v9775 = vand.u32 %v2394, 4294901760
    %v9776 = vsub.f32 %v2394, %v9775
    %v9777 = vand.u32 %v9776, 4294901760
    %v9778 = vsub.f32 %v9776, %v9777
    %v9779 = vand.u32 %v9778, 4294901760
    %9780 = vmatpush1.xpose.msra.mxu0 %v9779
    %9781 = vmatprep.subr.mxu0 0.0
    %9782 = vmatpush1.xpose.msra.mxu0 0.0
    %9783 = vmatprep.subr.mxu0 0.0
    %9784 = vmatpush1.xpose.msra.mxu0 0.0
    %9785 = vmatprep.subr.mxu0 0.0
    %9786 = vmatpush1.xpose.msra.mxu0 0.0
    %9787 = vmatprep.subr.mxu0 0.0
    %9788 = vmatpush1.xpose.msra.mxu0 0.0
    %9789 = vmatprep.subr.mxu0 0.0
    %9790 = vmatpush1.xpose.msra.mxu0 0.0
    %9791 = vmatprep.subr.mxu0 0.0
    %9792 = vmatpush1.xpose.msra.mxu0 0.0
    %9793 = vmatprep.subr.mxu0 0.0
    %9794 = vmatpush1.xpose.msra.mxu0 0.0
    %9795 = vmatprep.subr.mxu0 0.0
    %9796 = vmatpush1.xpose.msra.mxu0 0.0
    %9797 = vmatprep.subr.mxu0 0.0
    %9798 = vmatpush1.xpose.msra.mxu0 0.0
    %9799 = vmatprep.subr.mxu0 0.0
    %9800 = vmatpush1.xpose.msra.mxu0 0.0
    %9801 = vmatprep.subr.mxu0 0.0
    %9802 = vmatpush1.xpose.msra.mxu0 0.0
    %9803 = vmatprep.subr.mxu0 0.0
    %9804 = vmatpush1.xpose.msra.mxu0 0.0
    %9805 = vmatprep.subr.mxu0 0.0
    %9806 = vmatpush1.xpose.msra.mxu0 0.0
    %9807 = vmatprep.subr.mxu0 0.0
    %9808 = vmatpush1.xpose.msra.mxu0 0.0
    %9809 = vmatprep.subr.mxu0 0.0
    %9810 = vmatpush1.xpose.msra.mxu0 0.0
    %9811 = vmatprep.subr.mxu0 0.0
    %9812 = vmatpush1.xpose.msra.mxu0 0.0
    %9813 = vmatprep.subr.mxu0 0.0
    %9814 = vmatpush1.xpose.msra.mxu0 0.0
    %9815 = vmatprep.subr.mxu0 0.0
    %9816 = vmatpush1.xpose.msra.mxu0 0.0
    %9817 = vmatprep.subr.mxu0 0.0
    %9818 = vmatpush1.xpose.msra.mxu0 0.0
    %9819 = vmatprep.subr.mxu0 0.0
    %9820 = vmatpush1.xpose.msra.mxu0 0.0
    %9821 = vmatprep.subr.mxu0 0.0
    %9822 = vmatpush1.xpose.msra.mxu0 0.0
    %9823 = vmatprep.subr.mxu0 0.0
    %9824 = vmatpush1.xpose.msra.mxu0 0.0
    %9825 = vmatprep.subr.mxu0 0.0
    %9826 = vmatpush1.xpose.msra.mxu0 0.0
    %9827 = vmatprep.subr.mxu0 0.0
    %9828 = vmatpush1.xpose.msra.mxu0 0.0
    %9829 = vmatprep.subr.mxu0 0.0
    %9830 = vmatpush1.xpose.msra.mxu0 0.0
    %9831 = vmatprep.subr.mxu0 0.0
    %9832 = vmatpush1.xpose.msra.mxu0 0.0
    %9833 = vmatprep.subr.mxu0 0.0
    %9834 = vmatpush1.xpose.msra.mxu0 0.0
    %9835 = vmatprep.subr.mxu0 0.0
    %9836 = vmatpush1.xpose.msra.mxu0 0.0
    %9837 = vmatprep.subr.mxu0 0.0
    %9838 = vmatpush1.xpose.msra.mxu0 0.0
    %9839 = vmatprep.subr.mxu0 0.0
    %9840 = vmatpush1.xpose.msra.mxu0 0.0
    %9841 = vmatprep.mubr.f32.mxu0 0.0
    %v9842 = vand.u32 %v9688, 4294901760
    %9843 = vmatmul.mubr.f32.gmra.mrb[0].mxu0 %v9842
    %v9844 = vpop.f32.mrb[0].mxu0
    %v9845 = vadd.f32 %v9764, %v9844
    %v9846 = vpop.f32.mrb[0].mxu0
    %9847 = vdwg.mxu0
    %9848 = vmatprep.subr.mxu0 0.0
    %v9849 = vand.u32 %v2391, 4294901760
    %v9850 = vsub.f32 %v2391, %v9849
    %9851 = vmatpush1.xpose.msra.mxu0 %v9850
    %9852 = vmatprep.subr.mxu0 0.0
    %v9853 = vand.u32 %v2394, 4294901760
    %v9854 = vsub.f32 %v2394, %v9853
    %9855 = vmatpush1.xpose.msra.mxu0 %v9854
    %9856 = vmatprep.subr.mxu0 0.0
    %9857 = vmatpush1.xpose.msra.mxu0 0.0
    %9858 = vmatprep.subr.mxu0 0.0
    %9859 = vmatpush1.xpose.msra.mxu0 0.0
    %9860 = vmatprep.subr.mxu0 0.0
    %9861 = vmatpush1.xpose.msra.mxu0 0.0
    %9862 = vmatprep.subr.mxu0 0.0
    %9863 = vmatpush1.xpose.msra.mxu0 0.0
    %9864 = vmatprep.subr.mxu0 0.0
    %9865 = vmatpush1.xpose.msra.mxu0 0.0
    %9866 = vmatprep.subr.mxu0 0.0
    %9867 = vmatpush1.xpose.msra.mxu0 0.0
    %9868 = vmatprep.subr.mxu0 0.0
    %9869 = vmatpush1.xpose.msra.mxu0 0.0
    %9870 = vmatprep.subr.mxu0 0.0
    %9871 = vmatpush1.xpose.msra.mxu0 0.0
    %9872 = vmatprep.subr.mxu0 0.0
    %9873 = vmatpush1.xpose.msra.mxu0 0.0
    %9874 = vmatprep.subr.mxu0 0.0
    %9875 = vmatpush1.xpose.msra.mxu0 0.0
    %9876 = vmatprep.subr.mxu0 0.0
    %9877 = vmatpush1.xpose.msra.mxu0 0.0
    %9878 = vmatprep.subr.mxu0 0.0
    %9879 = vmatpush1.xpose.msra.mxu0 0.0
    %9880 = vmatprep.subr.mxu0 0.0
    %9881 = vmatpush1.xpose.msra.mxu0 0.0
    %9882 = vmatprep.subr.mxu0 0.0
    %9883 = vmatpush1.xpose.msra.mxu0 0.0
    %9884 = vmatprep.subr.mxu0 0.0
    %9885 = vmatpush1.xpose.msra.mxu0 0.0
    %9886 = vmatprep.subr.mxu0 0.0
    %9887 = vmatpush1.xpose.msra.mxu0 0.0
    %9888 = vmatprep.subr.mxu0 0.0
    %9889 = vmatpush1.xpose.msra.mxu0 0.0
    %9890 = vmatprep.subr.mxu0 0.0
    %9891 = vmatpush1.xpose.msra.mxu0 0.0
    %9892 = vmatprep.subr.mxu0 0.0
    %9893 = vmatpush1.xpose.msra.mxu0 0.0
    %9894 = vmatprep.subr.mxu0 0.0
    %9895 = vmatpush1.xpose.msra.mxu0 0.0
    %9896 = vmatprep.subr.mxu0 0.0
    %9897 = vmatpush1.xpose.msra.mxu0 0.0
    %9898 = vmatprep.subr.mxu0 0.0
    %9899 = vmatpush1.xpose.msra.mxu0 0.0
    %9900 = vmatprep.subr.mxu0 0.0
    %9901 = vmatpush1.xpose.msra.mxu0 0.0
    %9902 = vmatprep.subr.mxu0 0.0
    %9903 = vmatpush1.xpose.msra.mxu0 0.0
    %9904 = vmatprep.subr.mxu0 0.0
    %9905 = vmatpush1.xpose.msra.mxu0 0.0
    %9906 = vmatprep.subr.mxu0 0.0
    %9907 = vmatpush1.xpose.msra.mxu0 0.0
    %9908 = vmatprep.subr.mxu0 0.0
    %9909 = vmatpush1.xpose.msra.mxu0 0.0
    %9910 = vmatprep.subr.mxu0 0.0
    %9911 = vmatpush1.xpose.msra.mxu0 0.0
    %9912 = vmatprep.subr.mxu0 0.0
    %9913 = vmatpush1.xpose.msra.mxu0 0.0
    %9914 = vmatprep.subr.mxu0 0.0
    %9915 = vmatpush1.xpose.msra.mxu0 0.0
    %9916 = vmatprep.mubr.f32.mxu0 0.0
    %v9917 = vand.u32 %v9688, 4294901760
    %v9918 = vsub.f32 %v9688, %v9917
    %9919 = vmatmul.mubr.f32.gmra.mrb[0].mxu0 %v9918
    %v9920 = vpop.f32.mrb[0].mxu0
    %v9921 = vadd.f32 %v9845, %v9920
    %v9922 = vpop.f32.mrb[0].mxu0
    %9923 = vdwg.mxu0
    %9924 = vmatprep.subr.mxu0 0.0
    %v9925 = vand.u32 %v2391, 4294901760
    %9926 = vmatpush1.xpose.msra.mxu0 %v9925
    %9927 = vmatprep.subr.mxu0 0.0
    %v9928 = vand.u32 %v2394, 4294901760
    %9929 = vmatpush1.xpose.msra.mxu0 %v9928
    %9930 = vmatprep.subr.mxu0 0.0
    %9931 = vmatpush1.xpose.msra.mxu0 0.0
    %9932 = vmatprep.subr.mxu0 0.0
    %9933 = vmatpush1.xpose.msra.mxu0 0.0
    %9934 = vmatprep.subr.mxu0 0.0
    %9935 = vmatpush1.xpose.msra.mxu0 0.0
    %9936 = vmatprep.subr.mxu0 0.0
    %9937 = vmatpush1.xpose.msra.mxu0 0.0
    %9938 = vmatprep.subr.mxu0 0.0
    %9939 = vmatpush1.xpose.msra.mxu0 0.0
    %9940 = vmatprep.subr.mxu0 0.0
    %9941 = vmatpush1.xpose.msra.mxu0 0.0
    %9942 = vmatprep.subr.mxu0 0.0
    %9943 = vmatpush1.xpose.msra.mxu0 0.0
    %9944 = vmatprep.subr.mxu0 0.0
    %9945 = vmatpush1.xpose.msra.mxu0 0.0
    %9946 = vmatprep.subr.mxu0 0.0
    %9947 = vmatpush1.xpose.msra.mxu0 0.0
    %9948 = vmatprep.subr.mxu0 0.0
    %9949 = vmatpush1.xpose.msra.mxu0 0.0
    %9950 = vmatprep.subr.mxu0 0.0
    %9951 = vmatpush1.xpose.msra.mxu0 0.0
    %9952 = vmatprep.subr.mxu0 0.0
    %9953 = vmatpush1.xpose.msra.mxu0 0.0
    %9954 = vmatprep.subr.mxu0 0.0
    %9955 = vmatpush1.xpose.msra.mxu0 0.0
    %9956 = vmatprep.subr.mxu0 0.0
    %9957 = vmatpush1.xpose.msra.mxu0 0.0
    %9958 = vmatprep.subr.mxu0 0.0
    %9959 = vmatpush1.xpose.msra.mxu0 0.0
    %9960 = vmatprep.subr.mxu0 0.0
    %9961 = vmatpush1.xpose.msra.mxu0 0.0
    %9962 = vmatprep.subr.mxu0 0.0
    %9963 = vmatpush1.xpose.msra.mxu0 0.0
    %9964 = vmatprep.subr.mxu0 0.0
    %9965 = vmatpush1.xpose.msra.mxu0 0.0
    %9966 = vmatprep.subr.mxu0 0.0
    %9967 = vmatpush1.xpose.msra.mxu0 0.0
    %9968 = vmatprep.subr.mxu0 0.0
    %9969 = vmatpush1.xpose.msra.mxu0 0.0
    %9970 = vmatprep.subr.mxu0 0.0
    %9971 = vmatpush1.xpose.msra.mxu0 0.0
    %9972 = vmatprep.subr.mxu0 0.0
    %9973 = vmatpush1.xpose.msra.mxu0 0.0
    %9974 = vmatprep.subr.mxu0 0.0
    %9975 = vmatpush1.xpose.msra.mxu0 0.0
    %9976 = vmatprep.subr.mxu0 0.0
    %9977 = vmatpush1.xpose.msra.mxu0 0.0
    %9978 = vmatprep.subr.mxu0 0.0
    %9979 = vmatpush1.xpose.msra.mxu0 0.0
    %9980 = vmatprep.subr.mxu0 0.0
    %9981 = vmatpush1.xpose.msra.mxu0 0.0
    %9982 = vmatprep.subr.mxu0 0.0
    %9983 = vmatpush1.xpose.msra.mxu0 0.0
    %9984 = vmatprep.subr.mxu0 0.0
    %9985 = vmatpush1.xpose.msra.mxu0 0.0
    %9986 = vmatprep.subr.mxu0 0.0
    %9987 = vmatpush1.xpose.msra.mxu0 0.0
    %9988 = vmatprep.subr.mxu0 0.0
    %9989 = vmatpush1.xpose.msra.mxu0 0.0
    %9990 = vmatprep.mubr.f32.mxu0 0.0
    %v9991 = vand.u32 %v9688, 4294901760
    %v9992 = vsub.f32 %v9688, %v9991
    %v9993 = vand.u32 %v9992, 4294901760
    %9994 = vmatmul.mubr.f32.gmra.mrb[0].mxu0 %v9993
    %v9995 = vpop.f32.mrb[0].mxu0
    %v9996 = vadd.f32 %v9921, %v9995
    %v9997 = vpop.f32.mrb[0].mxu0
    %9998 = vdwg.mxu0
    %9999 = vmatprep.subr.mxu0 0.0
    %v10000 = vand.u32 %v2391, 4294901760
    %v10001 = vsub.f32 %v2391, %v10000
    %v10002 = vand.u32 %v10001, 4294901760
    %10003 = vmatpush1.xpose.msra.mxu0 %v10002
    %10004 = vmatprep.subr.mxu0 0.0
    %v10005 = vand.u32 %v2394, 4294901760
    %v10006 = vsub.f32 %v2394, %v10005
    %v10007 = vand.u32 %v10006, 4294901760
    %10008 = vmatpush1.xpose.msra.mxu0 %v10007
    %10009 = vmatprep.subr.mxu0 0.0
    %10010 = vmatpush1.xpose.msra.mxu0 0.0
    %10011 = vmatprep.subr.mxu0 0.0
    %10012 = vmatpush1.xpose.msra.mxu0 0.0
    %10013 = vmatprep.subr.mxu0 0.0
    %10014 = vmatpush1.xpose.msra.mxu0 0.0
    %10015 = vmatprep.subr.mxu0 0.0
    %10016 = vmatpush1.xpose.msra.mxu0 0.0
    %10017 = vmatprep.subr.mxu0 0.0
    %10018 = vmatpush1.xpose.msra.mxu0 0.0
    %10019 = vmatprep.subr.mxu0 0.0
    %10020 = vmatpush1.xpose.msra.mxu0 0.0
    %10021 = vmatprep.subr.mxu0 0.0
    %10022 = vmatpush1.xpose.msra.mxu0 0.0
    %10023 = vmatprep.subr.mxu0 0.0
    %10024 = vmatpush1.xpose.msra.mxu0 0.0
    %10025 = vmatprep.subr.mxu0 0.0
    %10026 = vmatpush1.xpose.msra.mxu0 0.0
    %10027 = vmatprep.subr.mxu0 0.0
    %10028 = vmatpush1.xpose.msra.mxu0 0.0
    %10029 = vmatprep.subr.mxu0 0.0
    %10030 = vmatpush1.xpose.msra.mxu0 0.0
    %10031 = vmatprep.subr.mxu0 0.0
    %10032 = vmatpush1.xpose.msra.mxu0 0.0
    %10033 = vmatprep.subr.mxu0 0.0
    %10034 = vmatpush1.xpose.msra.mxu0 0.0
    %10035 = vmatprep.subr.mxu0 0.0
    %10036 = vmatpush1.xpose.msra.mxu0 0.0
    %10037 = vmatprep.subr.mxu0 0.0
    %10038 = vmatpush1.xpose.msra.mxu0 0.0
    %10039 = vmatprep.subr.mxu0 0.0
    %10040 = vmatpush1.xpose.msra.mxu0 0.0
    %10041 = vmatprep.subr.mxu0 0.0
    %10042 = vmatpush1.xpose.msra.mxu0 0.0
    %10043 = vmatprep.subr.mxu0 0.0
    %10044 = vmatpush1.xpose.msra.mxu0 0.0
    %10045 = vmatprep.subr.mxu0 0.0
    %10046 = vmatpush1.xpose.msra.mxu0 0.0
    %10047 = vmatprep.subr.mxu0 0.0
    %10048 = vmatpush1.xpose.msra.mxu0 0.0
    %10049 = vmatprep.subr.mxu0 0.0
    %10050 = vmatpush1.xpose.msra.mxu0 0.0
    %10051 = vmatprep.subr.mxu0 0.0
    %10052 = vmatpush1.xpose.msra.mxu0 0.0
    %10053 = vmatprep.subr.mxu0 0.0
    %10054 = vmatpush1.xpose.msra.mxu0 0.0
    %10055 = vmatprep.subr.mxu0 0.0
    %10056 = vmatpush1.xpose.msra.mxu0 0.0
    %10057 = vmatprep.subr.mxu0 0.0
    %10058 = vmatpush1.xpose.msra.mxu0 0.0
    %10059 = vmatprep.subr.mxu0 0.0
    %10060 = vmatpush1.xpose.msra.mxu0 0.0
    %10061 = vmatprep.subr.mxu0 0.0
    %10062 = vmatpush1.xpose.msra.mxu0 0.0
    %10063 = vmatprep.subr.mxu0 0.0
    %10064 = vmatpush1.xpose.msra.mxu0 0.0
    %10065 = vmatprep.subr.mxu0 0.0
    %10066 = vmatpush1.xpose.msra.mxu0 0.0
    %10067 = vmatprep.subr.mxu0 0.0
    %10068 = vmatpush1.xpose.msra.mxu0 0.0
    %10069 = vmatprep.mubr.f32.mxu0 0.0
    %v10070 = vand.u32 %v9688, 4294901760
    %10071 = vmatmul.mubr.f32.gmra.mrb[0].mxu0 %v10070
    %v10072 = vpop.f32.mrb[0].mxu0
    %v10073 = vadd.f32 %v9996, %v10072
    %v10074 = vpop.f32.mrb[0].mxu0
    %10075 = vdwg.mxu0
    %10076 = vmatprep.subr.mxu0 0.0
    %v10077 = vand.u32 %v2391, 4294901760
    %10078 = vmatpush1.xpose.msra.mxu0 %v10077
    %10079 = vmatprep.subr.mxu0 0.0
    %v10080 = vand.u32 %v2394, 4294901760
    %10081 = vmatpush1.xpose.msra.mxu0 %v10080
    %10082 = vmatprep.subr.mxu0 0.0
    %10083 = vmatpush1.xpose.msra.mxu0 0.0
    %10084 = vmatprep.subr.mxu0 0.0
    %10085 = vmatpush1.xpose.msra.mxu0 0.0
    %10086 = vmatprep.subr.mxu0 0.0
    %10087 = vmatpush1.xpose.msra.mxu0 0.0
    %10088 = vmatprep.subr.mxu0 0.0
    %10089 = vmatpush1.xpose.msra.mxu0 0.0
    %10090 = vmatprep.subr.mxu0 0.0
    %10091 = vmatpush1.xpose.msra.mxu0 0.0
    %10092 = vmatprep.subr.mxu0 0.0
    %10093 = vmatpush1.xpose.msra.mxu0 0.0
    %10094 = vmatprep.subr.mxu0 0.0
    %10095 = vmatpush1.xpose.msra.mxu0 0.0
    %10096 = vmatprep.subr.mxu0 0.0
    %10097 = vmatpush1.xpose.msra.mxu0 0.0
    %10098 = vmatprep.subr.mxu0 0.0
    %10099 = vmatpush1.xpose.msra.mxu0 0.0
    %10100 = vmatprep.subr.mxu0 0.0
    %10101 = vmatpush1.xpose.msra.mxu0 0.0
    %10102 = vmatprep.subr.mxu0 0.0
    %10103 = vmatpush1.xpose.msra.mxu0 0.0
    %10104 = vmatprep.subr.mxu0 0.0
    %10105 = vmatpush1.xpose.msra.mxu0 0.0
    %10106 = vmatprep.subr.mxu0 0.0
    %10107 = vmatpush1.xpose.msra.mxu0 0.0
    %10108 = vmatprep.subr.mxu0 0.0
    %10109 = vmatpush1.xpose.msra.mxu0 0.0
    %10110 = vmatprep.subr.mxu0 0.0
    %10111 = vmatpush1.xpose.msra.mxu0 0.0
    %10112 = vmatprep.subr.mxu0 0.0
    %10113 = vmatpush1.xpose.msra.mxu0 0.0
    %10114 = vmatprep.subr.mxu0 0.0
    %10115 = vmatpush1.xpose.msra.mxu0 0.0
    %10116 = vmatprep.subr.mxu0 0.0
    %10117 = vmatpush1.xpose.msra.mxu0 0.0
    %10118 = vmatprep.subr.mxu0 0.0
    %10119 = vmatpush1.xpose.msra.mxu0 0.0
    %10120 = vmatprep.subr.mxu0 0.0
    %10121 = vmatpush1.xpose.msra.mxu0 0.0
    %10122 = vmatprep.subr.mxu0 0.0
    %10123 = vmatpush1.xpose.msra.mxu0 0.0
    %10124 = vmatprep.subr.mxu0 0.0
    %10125 = vmatpush1.xpose.msra.mxu0 0.0
    %10126 = vmatprep.subr.mxu0 0.0
    %10127 = vmatpush1.xpose.msra.mxu0 0.0
    %10128 = vmatprep.subr.mxu0 0.0
    %10129 = vmatpush1.xpose.msra.mxu0 0.0
    %10130 = vmatprep.subr.mxu0 0.0
    %10131 = vmatpush1.xpose.msra.mxu0 0.0
    %10132 = vmatprep.subr.mxu0 0.0
    %10133 = vmatpush1.xpose.msra.mxu0 0.0
    %10134 = vmatprep.subr.mxu0 0.0
    %10135 = vmatpush1.xpose.msra.mxu0 0.0
    %10136 = vmatprep.subr.mxu0 0.0
    %10137 = vmatpush1.xpose.msra.mxu0 0.0
    %10138 = vmatprep.subr.mxu0 0.0
    %10139 = vmatpush1.xpose.msra.mxu0 0.0
    %10140 = vmatprep.subr.mxu0 0.0
    %10141 = vmatpush1.xpose.msra.mxu0 0.0
    %10142 = vmatprep.mubr.f32.mxu0 0.0
    %v10143 = vand.u32 %v9688, 4294901760
    %10144 = vmatmul.mubr.f32.gmra.mrb[0].mxu0 %v10143
    %v10145 = vpop.f32.mrb[0].mxu0
    %v10146 = vadd.f32 %v10073, %v10145
    %v10147 = vpop.f32.mrb[0].mxu0
    %10148 = vdwg.mxu0
    %v10149 = vsel %vm1893, %v10146, -inf
    %v10150 = vrot.slane %v10149, 4
    %v10151 = vmax.f32 %v10149, %v10150
    %v10152 = vrot.slane %v10151, 2
    %v10153 = vmax.f32 %v10151, %v10152
    %v10154 = vrot.slane %v10153, 1
    %v10155 = vmax.f32 %v10153, %v10154
    %v10156 = vsub.f32 %v10146, %v10155
    %v10157 = vmul.f32 %v10156, 1.442695
    %v10158 = vpow.pop %v10157
    %v10159 = vsel %vm1893, %v10158, 0.0
    %v10160 = vrot.slane %v10159, 4
    %v10161 = vadd.f32 %v10159, %v10160
    %v10162 = vrot.slane %v10161, 2
    %v10163 = vadd.f32 %v10161, %v10162
    %v10164 = vrot.slane %v10163, 1
    %v10165 = vadd.f32 %v10163, %v10164
    %v10166 = vrcp.pop %v10165
    %v10167 = vmul.f32 %v10158, %v10166
    %v10168 = vsel %vm1893, %v10167, 0.0
    %10169 = vadd.xlane.f32.xlu0 %v10168
    %v10170 = vpop.xlane.xlu0 %10169
    %v10171 = vadd.f32 %v10170, 1e-08
    %v10172 = vrcp.pop %v10171
    %v10173 = vmul.f32 %v10167, %v10172
    %v10175 = vsel %vm1893, %v10173, 0
    %10177 = vmatprep.subr.mxu0 0.0
    %v10178 = vand.u32 %v2881, 4294901760
    %10179 = vmatpush1.msra.mxu0 %v10178
    %10180 = vmatprep.subr.mxu0 0.0
    %v10181 = vand.u32 %v2883, 4294901760
    %10182 = vmatpush1.msra.mxu0 %v10181
    %10183 = vmatprep.subr.mxu0 0.0
    %10184 = vmatpush1.msra.mxu0 0.0
    %10185 = vmatprep.subr.mxu0 0.0
    %10186 = vmatpush1.msra.mxu0 0.0
    %10187 = vmatprep.subr.mxu0 0.0
    %10188 = vmatpush1.msra.mxu0 0.0
    %10189 = vmatprep.subr.mxu0 0.0
    %10190 = vmatpush1.msra.mxu0 0.0
    %10191 = vmatprep.subr.mxu0 0.0
    %10192 = vmatpush1.msra.mxu0 0.0
    %10193 = vmatprep.subr.mxu0 0.0
    %10194 = vmatpush1.msra.mxu0 0.0
    %10195 = vmatprep.subr.mxu0 0.0
    %10196 = vmatpush1.msra.mxu0 0.0
    %10197 = vmatprep.subr.mxu0 0.0
    %10198 = vmatpush1.msra.mxu0 0.0
    %10199 = vmatprep.subr.mxu0 0.0
    %10200 = vmatpush1.msra.mxu0 0.0
    %10201 = vmatprep.subr.mxu0 0.0
    %10202 = vmatpush1.msra.mxu0 0.0
    %10203 = vmatprep.subr.mxu0 0.0
    %10204 = vmatpush1.msra.mxu0 0.0
    %10205 = vmatprep.subr.mxu0 0.0
    %10206 = vmatpush1.msra.mxu0 0.0
    %10207 = vmatprep.subr.mxu0 0.0
    %10208 = vmatpush1.msra.mxu0 0.0
    %10209 = vmatprep.subr.mxu0 0.0
    %10210 = vmatpush1.msra.mxu0 0.0
    %10211 = vmatprep.subr.mxu0 0.0
    %10212 = vmatpush1.msra.mxu0 0.0
    %10213 = vmatprep.subr.mxu0 0.0
    %10214 = vmatpush1.msra.mxu0 0.0
    %10215 = vmatprep.subr.mxu0 0.0
    %10216 = vmatpush1.msra.mxu0 0.0
    %10217 = vmatprep.subr.mxu0 0.0
    %10218 = vmatpush1.msra.mxu0 0.0
    %10219 = vmatprep.subr.mxu0 0.0
    %10220 = vmatpush1.msra.mxu0 0.0
    %10221 = vmatprep.subr.mxu0 0.0
    %10222 = vmatpush1.msra.mxu0 0.0
    %10223 = vmatprep.subr.mxu0 0.0
    %10224 = vmatpush1.msra.mxu0 0.0
    %10225 = vmatprep.subr.mxu0 0.0
    %10226 = vmatpush1.msra.mxu0 0.0
    %10227 = vmatprep.subr.mxu0 0.0
    %10228 = vmatpush1.msra.mxu0 0.0
    %10229 = vmatprep.subr.mxu0 0.0
    %10230 = vmatpush1.msra.mxu0 0.0
    %10231 = vmatprep.subr.mxu0 0.0
    %10232 = vmatpush1.msra.mxu0 0.0
    %10233 = vmatprep.subr.mxu0 0.0
    %10234 = vmatpush1.msra.mxu0 0.0
    %10235 = vmatprep.subr.mxu0 0.0
    %10236 = vmatpush1.msra.mxu0 0.0
    %10237 = vmatprep.subr.mxu0 0.0
    %10238 = vmatpush1.msra.mxu0 0.0
    %10239 = vmatprep.subr.mxu0 0.0
    %10240 = vmatpush1.msra.mxu0 0.0
    %10241 = vmatprep.subr.mxu0 0.0
    %10242 = vmatpush1.msra.mxu0 0.0
    %10243 = vmatprep.mubr.f32.mxu0 0.0
    %v10244 = vand.u32 %v10175, 4294901760
    %v10245 = vsub.f32 %v10175, %v10244
    %v10246 = vand.u32 %v10245, 4294901760
    %v10247 = vsub.f32 %v10245, %v10246
    %v10248 = vand.u32 %v10247, 4294901760
    %10249 = vmatmul.mubr.f32.gmra.mrb[0].mxu0 %v10248
    %v10250 = vpop.f32.mrb[0].mxu0
    %v10251 = vadd.f32 0.0, %v10250
    %v10252 = vpop.f32.mrb[0].mxu0
    %10253 = vdwg.mxu0
    %10254 = vmatprep.subr.mxu0 0.0
    %v10255 = vand.u32 %v2881, 4294901760
    %v10256 = vsub.f32 %v2881, %v10255
    %v10257 = vand.u32 %v10256, 4294901760
    %v10258 = vsub.f32 %v10256, %v10257
    %v10259 = vand.u32 %v10258, 4294901760
    %10260 = vmatpush1.msra.mxu0 %v10259
    %10261 = vmatprep.subr.mxu0 0.0
    %v10262 = vand.u32 %v2883, 4294901760
    %v10263 = vsub.f32 %v2883, %v10262
    %v10264 = vand.u32 %v10263, 4294901760
    %v10265 = vsub.f32 %v10263, %v10264
    %v10266 = vand.u32 %v10265, 4294901760
    %10267 = vmatpush1.msra.mxu0 %v10266
    %10268 = vmatprep.subr.mxu0 0.0
    %10269 = vmatpush1.msra.mxu0 0.0
    %10270 = vmatprep.subr.mxu0 0.0
    %10271 = vmatpush1.msra.mxu0 0.0
    %10272 = vmatprep.subr.mxu0 0.0
    %10273 = vmatpush1.msra.mxu0 0.0
    %10274 = vmatprep.subr.mxu0 0.0
    %10275 = vmatpush1.msra.mxu0 0.0
    %10276 = vmatprep.subr.mxu0 0.0
    %10277 = vmatpush1.msra.mxu0 0.0
    %10278 = vmatprep.subr.mxu0 0.0
    %10279 = vmatpush1.msra.mxu0 0.0
    %10280 = vmatprep.subr.mxu0 0.0
    %10281 = vmatpush1.msra.mxu0 0.0
    %10282 = vmatprep.subr.mxu0 0.0
    %10283 = vmatpush1.msra.mxu0 0.0
    %10284 = vmatprep.subr.mxu0 0.0
    %10285 = vmatpush1.msra.mxu0 0.0
    %10286 = vmatprep.subr.mxu0 0.0
    %10287 = vmatpush1.msra.mxu0 0.0
    %10288 = vmatprep.subr.mxu0 0.0
    %10289 = vmatpush1.msra.mxu0 0.0
    %10290 = vmatprep.subr.mxu0 0.0
    %10291 = vmatpush1.msra.mxu0 0.0
    %10292 = vmatprep.subr.mxu0 0.0
    %10293 = vmatpush1.msra.mxu0 0.0
    %10294 = vmatprep.subr.mxu0 0.0
    %10295 = vmatpush1.msra.mxu0 0.0
    %10296 = vmatprep.subr.mxu0 0.0
    %10297 = vmatpush1.msra.mxu0 0.0
    %10298 = vmatprep.subr.mxu0 0.0
    %10299 = vmatpush1.msra.mxu0 0.0
    %10300 = vmatprep.subr.mxu0 0.0
    %10301 = vmatpush1.msra.mxu0 0.0
    %10302 = vmatprep.subr.mxu0 0.0
    %10303 = vmatpush1.msra.mxu0 0.0
    %10304 = vmatprep.subr.mxu0 0.0
    %10305 = vmatpush1.msra.mxu0 0.0
    %10306 = vmatprep.subr.mxu0 0.0
    %10307 = vmatpush1.msra.mxu0 0.0
    %10308 = vmatprep.subr.mxu0 0.0
    %10309 = vmatpush1.msra.mxu0 0.0
    %10310 = vmatprep.subr.mxu0 0.0
    %10311 = vmatpush1.msra.mxu0 0.0
    %10312 = vmatprep.subr.mxu0 0.0
    %10313 = vmatpush1.msra.mxu0 0.0
    %10314 = vmatprep.subr.mxu0 0.0
    %10315 = vmatpush1.msra.mxu0 0.0
    %10316 = vmatprep.subr.mxu0 0.0
    %10317 = vmatpush1.msra.mxu0 0.0
    %10318 = vmatprep.subr.mxu0 0.0
    %10319 = vmatpush1.msra.mxu0 0.0
    %10320 = vmatprep.subr.mxu0 0.0
    %10321 = vmatpush1.msra.mxu0 0.0
    %10322 = vmatprep.subr.mxu0 0.0
    %10323 = vmatpush1.msra.mxu0 0.0
    %10324 = vmatprep.subr.mxu0 0.0
    %10325 = vmatpush1.msra.mxu0 0.0
    %10326 = vmatprep.subr.mxu0 0.0
    %10327 = vmatpush1.msra.mxu0 0.0
    %10328 = vmatprep.mubr.f32.mxu0 0.0
    %v10329 = vand.u32 %v10175, 4294901760
    %10330 = vmatmul.mubr.f32.gmra.mrb[0].mxu0 %v10329
    %v10331 = vpop.f32.mrb[0].mxu0
    %v10332 = vadd.f32 %v10251, %v10331
    %v10333 = vpop.f32.mrb[0].mxu0
    %10334 = vdwg.mxu0
    %10335 = vmatprep.subr.mxu0 0.0
    %v10336 = vand.u32 %v2881, 4294901760
    %v10337 = vsub.f32 %v2881, %v10336
    %10338 = vmatpush1.msra.mxu0 %v10337
    %10339 = vmatprep.subr.mxu0 0.0
    %v10340 = vand.u32 %v2883, 4294901760
    %v10341 = vsub.f32 %v2883, %v10340
    %10342 = vmatpush1.msra.mxu0 %v10341
    %10343 = vmatprep.subr.mxu0 0.0
    %10344 = vmatpush1.msra.mxu0 0.0
    %10345 = vmatprep.subr.mxu0 0.0
    %10346 = vmatpush1.msra.mxu0 0.0
    %10347 = vmatprep.subr.mxu0 0.0
    %10348 = vmatpush1.msra.mxu0 0.0
    %10349 = vmatprep.subr.mxu0 0.0
    %10350 = vmatpush1.msra.mxu0 0.0
    %10351 = vmatprep.subr.mxu0 0.0
    %10352 = vmatpush1.msra.mxu0 0.0
    %10353 = vmatprep.subr.mxu0 0.0
    %10354 = vmatpush1.msra.mxu0 0.0
    %10355 = vmatprep.subr.mxu0 0.0
    %10356 = vmatpush1.msra.mxu0 0.0
    %10357 = vmatprep.subr.mxu0 0.0
    %10358 = vmatpush1.msra.mxu0 0.0
    %10359 = vmatprep.subr.mxu0 0.0
    %10360 = vmatpush1.msra.mxu0 0.0
    %10361 = vmatprep.subr.mxu0 0.0
    %10362 = vmatpush1.msra.mxu0 0.0
    %10363 = vmatprep.subr.mxu0 0.0
    %10364 = vmatpush1.msra.mxu0 0.0
    %10365 = vmatprep.subr.mxu0 0.0
    %10366 = vmatpush1.msra.mxu0 0.0
    %10367 = vmatprep.subr.mxu0 0.0
    %10368 = vmatpush1.msra.mxu0 0.0
    %10369 = vmatprep.subr.mxu0 0.0
    %10370 = vmatpush1.msra.mxu0 0.0
    %10371 = vmatprep.subr.mxu0 0.0
    %10372 = vmatpush1.msra.mxu0 0.0
    %10373 = vmatprep.subr.mxu0 0.0
    %10374 = vmatpush1.msra.mxu0 0.0
    %10375 = vmatprep.subr.mxu0 0.0
    %10376 = vmatpush1.msra.mxu0 0.0
    %10377 = vmatprep.subr.mxu0 0.0
    %10378 = vmatpush1.msra.mxu0 0.0
    %10379 = vmatprep.subr.mxu0 0.0
    %10380 = vmatpush1.msra.mxu0 0.0
    %10381 = vmatprep.subr.mxu0 0.0
    %10382 = vmatpush1.msra.mxu0 0.0
    %10383 = vmatprep.subr.mxu0 0.0
    %10384 = vmatpush1.msra.mxu0 0.0
    %10385 = vmatprep.subr.mxu0 0.0
    %10386 = vmatpush1.msra.mxu0 0.0
    %10387 = vmatprep.subr.mxu0 0.0
    %10388 = vmatpush1.msra.mxu0 0.0
    %10389 = vmatprep.subr.mxu0 0.0
    %10390 = vmatpush1.msra.mxu0 0.0
    %10391 = vmatprep.subr.mxu0 0.0
    %10392 = vmatpush1.msra.mxu0 0.0
    %10393 = vmatprep.subr.mxu0 0.0
    %10394 = vmatpush1.msra.mxu0 0.0
    %10395 = vmatprep.subr.mxu0 0.0
    %10396 = vmatpush1.msra.mxu0 0.0
    %10397 = vmatprep.subr.mxu0 0.0
    %10398 = vmatpush1.msra.mxu0 0.0
    %10399 = vmatprep.subr.mxu0 0.0
    %10400 = vmatpush1.msra.mxu0 0.0
    %10401 = vmatprep.subr.mxu0 0.0
    %10402 = vmatpush1.msra.mxu0 0.0
    %10403 = vmatprep.mubr.f32.mxu0 0.0
    %v10404 = vand.u32 %v10175, 4294901760
    %v10405 = vsub.f32 %v10175, %v10404
    %10406 = vmatmul.mubr.f32.gmra.mrb[0].mxu0 %v10405
    %v10407 = vpop.f32.mrb[0].mxu0
    %v10408 = vadd.f32 %v10332, %v10407
    %v10409 = vpop.f32.mrb[0].mxu0
    %10410 = vdwg.mxu0
    %10411 = vmatprep.subr.mxu0 0.0
    %v10412 = vand.u32 %v2881, 4294901760
    %10413 = vmatpush1.msra.mxu0 %v10412
    %10414 = vmatprep.subr.mxu0 0.0
    %v10415 = vand.u32 %v2883, 4294901760
    %10416 = vmatpush1.msra.mxu0 %v10415
    %10417 = vmatprep.subr.mxu0 0.0
    %10418 = vmatpush1.msra.mxu0 0.0
    %10419 = vmatprep.subr.mxu0 0.0
    %10420 = vmatpush1.msra.mxu0 0.0
    %10421 = vmatprep.subr.mxu0 0.0
    %10422 = vmatpush1.msra.mxu0 0.0
    %10423 = vmatprep.subr.mxu0 0.0
    %10424 = vmatpush1.msra.mxu0 0.0
    %10425 = vmatprep.subr.mxu0 0.0
    %10426 = vmatpush1.msra.mxu0 0.0
    %10427 = vmatprep.subr.mxu0 0.0
    %10428 = vmatpush1.msra.mxu0 0.0
    %10429 = vmatprep.subr.mxu0 0.0
    %10430 = vmatpush1.msra.mxu0 0.0
    %10431 = vmatprep.subr.mxu0 0.0
    %10432 = vmatpush1.msra.mxu0 0.0
    %10433 = vmatprep.subr.mxu0 0.0
    %10434 = vmatpush1.msra.mxu0 0.0
    %10435 = vmatprep.subr.mxu0 0.0
    %10436 = vmatpush1.msra.mxu0 0.0
    %10437 = vmatprep.subr.mxu0 0.0
    %10438 = vmatpush1.msra.mxu0 0.0
    %10439 = vmatprep.subr.mxu0 0.0
    %10440 = vmatpush1.msra.mxu0 0.0
    %10441 = vmatprep.subr.mxu0 0.0
    %10442 = vmatpush1.msra.mxu0 0.0
    %10443 = vmatprep.subr.mxu0 0.0
    %10444 = vmatpush1.msra.mxu0 0.0
    %10445 = vmatprep.subr.mxu0 0.0
    %10446 = vmatpush1.msra.mxu0 0.0
    %10447 = vmatprep.subr.mxu0 0.0
    %10448 = vmatpush1.msra.mxu0 0.0
    %10449 = vmatprep.subr.mxu0 0.0
    %10450 = vmatpush1.msra.mxu0 0.0
    %10451 = vmatprep.subr.mxu0 0.0
    %10452 = vmatpush1.msra.mxu0 0.0
    %10453 = vmatprep.subr.mxu0 0.0
    %10454 = vmatpush1.msra.mxu0 0.0
    %10455 = vmatprep.subr.mxu0 0.0
    %10456 = vmatpush1.msra.mxu0 0.0
    %10457 = vmatprep.subr.mxu0 0.0
    %10458 = vmatpush1.msra.mxu0 0.0
    %10459 = vmatprep.subr.mxu0 0.0
    %10460 = vmatpush1.msra.mxu0 0.0
    %10461 = vmatprep.subr.mxu0 0.0
    %10462 = vmatpush1.msra.mxu0 0.0
    %10463 = vmatprep.subr.mxu0 0.0
    %10464 = vmatpush1.msra.mxu0 0.0
    %10465 = vmatprep.subr.mxu0 0.0
    %10466 = vmatpush1.msra.mxu0 0.0
    %10467 = vmatprep.subr.mxu0 0.0
    %10468 = vmatpush1.msra.mxu0 0.0
    %10469 = vmatprep.subr.mxu0 0.0
    %10470 = vmatpush1.msra.mxu0 0.0
    %10471 = vmatprep.subr.mxu0 0.0
    %10472 = vmatpush1.msra.mxu0 0.0
    %10473 = vmatprep.subr.mxu0 0.0
    %10474 = vmatpush1.msra.mxu0 0.0
    %10475 = vmatprep.subr.mxu0 0.0
    %10476 = vmatpush1.msra.mxu0 0.0
    %10477 = vmatprep.mubr.f32.mxu0 0.0
    %v10478 = vand.u32 %v10175, 4294901760
    %v10479 = vsub.f32 %v10175, %v10478
    %v10480 = vand.u32 %v10479, 4294901760
    %10481 = vmatmul.mubr.f32.gmra.mrb[0].mxu0 %v10480
    %v10482 = vpop.f32.mrb[0].mxu0
    %v10483 = vadd.f32 %v10408, %v10482
    %v10484 = vpop.f32.mrb[0].mxu0
    %10485 = vdwg.mxu0
    %10486 = vmatprep.subr.mxu0 0.0
    %v10487 = vand.u32 %v2881, 4294901760
    %v10488 = vsub.f32 %v2881, %v10487
    %v10489 = vand.u32 %v10488, 4294901760
    %10490 = vmatpush1.msra.mxu0 %v10489
    %10491 = vmatprep.subr.mxu0 0.0
    %v10492 = vand.u32 %v2883, 4294901760
    %v10493 = vsub.f32 %v2883, %v10492
    %v10494 = vand.u32 %v10493, 4294901760
    %10495 = vmatpush1.msra.mxu0 %v10494
    %10496 = vmatprep.subr.mxu0 0.0
    %10497 = vmatpush1.msra.mxu0 0.0
    %10498 = vmatprep.subr.mxu0 0.0
    %10499 = vmatpush1.msra.mxu0 0.0
    %10500 = vmatprep.subr.mxu0 0.0
    %10501 = vmatpush1.msra.mxu0 0.0
    %10502 = vmatprep.subr.mxu0 0.0
    %10503 = vmatpush1.msra.mxu0 0.0
    %10504 = vmatprep.subr.mxu0 0.0
    %10505 = vmatpush1.msra.mxu0 0.0
    %10506 = vmatprep.subr.mxu0 0.0
    %10507 = vmatpush1.msra.mxu0 0.0
    %10508 = vmatprep.subr.mxu0 0.0
    %10509 = vmatpush1.msra.mxu0 0.0
    %10510 = vmatprep.subr.mxu0 0.0
    %10511 = vmatpush1.msra.mxu0 0.0
    %10512 = vmatprep.subr.mxu0 0.0
    %10513 = vmatpush1.msra.mxu0 0.0
    %10514 = vmatprep.subr.mxu0 0.0
    %10515 = vmatpush1.msra.mxu0 0.0
    %10516 = vmatprep.subr.mxu0 0.0
    %10517 = vmatpush1.msra.mxu0 0.0
    %10518 = vmatprep.subr.mxu0 0.0
    %10519 = vmatpush1.msra.mxu0 0.0
    %10520 = vmatprep.subr.mxu0 0.0
    %10521 = vmatpush1.msra.mxu0 0.0
    %10522 = vmatprep.subr.mxu0 0.0
    %10523 = vmatpush1.msra.mxu0 0.0
    %10524 = vmatprep.subr.mxu0 0.0
    %10525 = vmatpush1.msra.mxu0 0.0
    %10526 = vmatprep.subr.mxu0 0.0
    %10527 = vmatpush1.msra.mxu0 0.0
    %10528 = vmatprep.subr.mxu0 0.0
    %10529 = vmatpush1.msra.mxu0 0.0
    %10530 = vmatprep.subr.mxu0 0.0
    %10531 = vmatpush1.msra.mxu0 0.0
    %10532 = vmatprep.subr.mxu0 0.0
    %10533 = vmatpush1.msra.mxu0 0.0
    %10534 = vmatprep.subr.mxu0 0.0
    %10535 = vmatpush1.msra.mxu0 0.0
    %10536 = vmatprep.subr.mxu0 0.0
    %10537 = vmatpush1.msra.mxu0 0.0
    %10538 = vmatprep.subr.mxu0 0.0
    %10539 = vmatpush1.msra.mxu0 0.0
    %10540 = vmatprep.subr.mxu0 0.0
    %10541 = vmatpush1.msra.mxu0 0.0
    %10542 = vmatprep.subr.mxu0 0.0
    %10543 = vmatpush1.msra.mxu0 0.0
    %10544 = vmatprep.subr.mxu0 0.0
    %10545 = vmatpush1.msra.mxu0 0.0
    %10546 = vmatprep.subr.mxu0 0.0
    %10547 = vmatpush1.msra.mxu0 0.0
    %10548 = vmatprep.subr.mxu0 0.0
    %10549 = vmatpush1.msra.mxu0 0.0
    %10550 = vmatprep.subr.mxu0 0.0
    %10551 = vmatpush1.msra.mxu0 0.0
    %10552 = vmatprep.subr.mxu0 0.0
    %10553 = vmatpush1.msra.mxu0 0.0
    %10554 = vmatprep.subr.mxu0 0.0
    %10555 = vmatpush1.msra.mxu0 0.0
    %10556 = vmatprep.mubr.f32.mxu0 0.0
    %v10557 = vand.u32 %v10175, 4294901760
    %10558 = vmatmul.mubr.f32.gmra.mrb[0].mxu0 %v10557
    %v10559 = vpop.f32.mrb[0].mxu0
    %v10560 = vadd.f32 %v10483, %v10559
    %v10561 = vpop.f32.mrb[0].mxu0
    %10562 = vdwg.mxu0
    %10563 = vmatprep.subr.mxu0 0.0
    %v10564 = vand.u32 %v2881, 4294901760
    %10565 = vmatpush1.msra.mxu0 %v10564
    %10566 = vmatprep.subr.mxu0 0.0
    %v10567 = vand.u32 %v2883, 4294901760
    %10568 = vmatpush1.msra.mxu0 %v10567
    %10569 = vmatprep.subr.mxu0 0.0
    %10570 = vmatpush1.msra.mxu0 0.0
    %10571 = vmatprep.subr.mxu0 0.0
    %10572 = vmatpush1.msra.mxu0 0.0
    %10573 = vmatprep.subr.mxu0 0.0
    %10574 = vmatpush1.msra.mxu0 0.0
    %10575 = vmatprep.subr.mxu0 0.0
    %10576 = vmatpush1.msra.mxu0 0.0
    %10577 = vmatprep.subr.mxu0 0.0
    %10578 = vmatpush1.msra.mxu0 0.0
    %10579 = vmatprep.subr.mxu0 0.0
    %10580 = vmatpush1.msra.mxu0 0.0
    %10581 = vmatprep.subr.mxu0 0.0
    %10582 = vmatpush1.msra.mxu0 0.0
    %10583 = vmatprep.subr.mxu0 0.0
    %10584 = vmatpush1.msra.mxu0 0.0
    %10585 = vmatprep.subr.mxu0 0.0
    %10586 = vmatpush1.msra.mxu0 0.0
    %10587 = vmatprep.subr.mxu0 0.0
    %10588 = vmatpush1.msra.mxu0 0.0
    %10589 = vmatprep.subr.mxu0 0.0
    %10590 = vmatpush1.msra.mxu0 0.0
    %10591 = vmatprep.subr.mxu0 0.0
    %10592 = vmatpush1.msra.mxu0 0.0
    %10593 = vmatprep.subr.mxu0 0.0
    %10594 = vmatpush1.msra.mxu0 0.0
    %10595 = vmatprep.subr.mxu0 0.0
    %10596 = vmatpush1.msra.mxu0 0.0
    %10597 = vmatprep.subr.mxu0 0.0
    %10598 = vmatpush1.msra.mxu0 0.0
    %10599 = vmatprep.subr.mxu0 0.0
    %10600 = vmatpush1.msra.mxu0 0.0
    %10601 = vmatprep.subr.mxu0 0.0
    %10602 = vmatpush1.msra.mxu0 0.0
    %10603 = vmatprep.subr.mxu0 0.0
    %10604 = vmatpush1.msra.mxu0 0.0
    %10605 = vmatprep.subr.mxu0 0.0
    %10606 = vmatpush1.msra.mxu0 0.0
    %10607 = vmatprep.subr.mxu0 0.0
    %10608 = vmatpush1.msra.mxu0 0.0
    %10609 = vmatprep.subr.mxu0 0.0
    %10610 = vmatpush1.msra.mxu0 0.0
    %10611 = vmatprep.subr.mxu0 0.0
    %10612 = vmatpush1.msra.mxu0 0.0
    %10613 = vmatprep.subr.mxu0 0.0
    %10614 = vmatpush1.msra.mxu0 0.0
    %10615 = vmatprep.subr.mxu0 0.0
    %10616 = vmatpush1.msra.mxu0 0.0
    %10617 = vmatprep.subr.mxu0 0.0
    %10618 = vmatpush1.msra.mxu0 0.0
    %10619 = vmatprep.subr.mxu0 0.0
    %10620 = vmatpush1.msra.mxu0 0.0
    %10621 = vmatprep.subr.mxu0 0.0
    %10622 = vmatpush1.msra.mxu0 0.0
    %10623 = vmatprep.subr.mxu0 0.0
    %10624 = vmatpush1.msra.mxu0 0.0
    %10625 = vmatprep.subr.mxu0 0.0
    %10626 = vmatpush1.msra.mxu0 0.0
    %10627 = vmatprep.subr.mxu0 0.0
    %10628 = vmatpush1.msra.mxu0 0.0
    %10629 = vmatprep.mubr.f32.mxu0 0.0
    %v10630 = vand.u32 %v10175, 4294901760
    %10631 = vmatmul.mubr.f32.gmra.mrb[0].mxu0 %v10630
    %v10632 = vpop.f32.mrb[0].mxu0
    %v10633 = vadd.f32 %v10560, %v10632
    %v10634 = vpop.f32.mrb[0].mxu0
    %10635 = vdwg.mxu0
    %v10637 = vsel %vm151, %v9684, 0
    %v10640 = vsel %vm151, %v10633, 0
    %10642 = vmatprep.subr.mxu0 0.0
    %v10643 = vand.u32 %v143, 4294901760
    %10644 = vmatpush1.msra.mxu0 %v10643
    %10645 = vmatprep.subr.mxu0 0.0
    %v10646 = vand.u32 %v144, 4294901760
    %10647 = vmatpush1.msra.mxu0 %v10646
    %10648 = vmatprep.subr.mxu0 0.0
    %v10649 = vand.u32 %v145, 4294901760
    %10650 = vmatpush1.msra.mxu0 %v10649
    %10651 = vmatprep.subr.mxu0 0.0
    %v10652 = vand.u32 %v146, 4294901760
    %10653 = vmatpush1.msra.mxu0 %v10652
    %10654 = vmatprep.subr.mxu0 0.0
    %10655 = vmatpush1.msra.mxu0 0.0
    %10656 = vmatprep.subr.mxu0 0.0
    %10657 = vmatpush1.msra.mxu0 0.0
    %10658 = vmatprep.subr.mxu0 0.0
    %10659 = vmatpush1.msra.mxu0 0.0
    %10660 = vmatprep.subr.mxu0 0.0
    %10661 = vmatpush1.msra.mxu0 0.0
    %10662 = vmatprep.subr.mxu0 0.0
    %10663 = vmatpush1.msra.mxu0 0.0
    %10664 = vmatprep.subr.mxu0 0.0
    %10665 = vmatpush1.msra.mxu0 0.0
    %10666 = vmatprep.subr.mxu0 0.0
    %10667 = vmatpush1.msra.mxu0 0.0
    %10668 = vmatprep.subr.mxu0 0.0
    %10669 = vmatpush1.msra.mxu0 0.0
    %10670 = vmatprep.subr.mxu0 0.0
    %10671 = vmatpush1.msra.mxu0 0.0
    %10672 = vmatprep.subr.mxu0 0.0
    %10673 = vmatpush1.msra.mxu0 0.0
    %10674 = vmatprep.subr.mxu0 0.0
    %10675 = vmatpush1.msra.mxu0 0.0
    %10676 = vmatprep.subr.mxu0 0.0
    %10677 = vmatpush1.msra.mxu0 0.0
    %10678 = vmatprep.subr.mxu0 0.0
    %10679 = vmatpush1.msra.mxu0 0.0
    %10680 = vmatprep.subr.mxu0 0.0
    %10681 = vmatpush1.msra.mxu0 0.0
    %10682 = vmatprep.subr.mxu0 0.0
    %10683 = vmatpush1.msra.mxu0 0.0
    %10684 = vmatprep.subr.mxu0 0.0
    %10685 = vmatpush1.msra.mxu0 0.0
    %10686 = vmatprep.subr.mxu0 0.0
    %10687 = vmatpush1.msra.mxu0 0.0
    %10688 = vmatprep.subr.mxu0 0.0
    %10689 = vmatpush1.msra.mxu0 0.0
    %10690 = vmatprep.subr.mxu0 0.0
    %10691 = vmatpush1.msra.mxu0 0.0
    %10692 = vmatprep.subr.mxu0 0.0
    %10693 = vmatpush1.msra.mxu0 0.0
    %10694 = vmatprep.subr.mxu0 0.0
    %10695 = vmatpush1.msra.mxu0 0.0
    %10696 = vmatprep.subr.mxu0 0.0
    %10697 = vmatpush1.msra.mxu0 0.0
    %10698 = vmatprep.subr.mxu0 0.0
    %10699 = vmatpush1.msra.mxu0 0.0
    %10700 = vmatprep.subr.mxu0 0.0
    %10701 = vmatpush1.msra.mxu0 0.0
    %10702 = vmatprep.subr.mxu0 0.0
    %10703 = vmatpush1.msra.mxu0 0.0
    %10704 = vmatprep.subr.mxu0 0.0
    %10705 = vmatpush1.msra.mxu0 0.0
    %10706 = vmatprep.subr.mxu0 0.0
    %10707 = vmatpush1.msra.mxu0 0.0
    %10708 = vmatprep.subr.mxu0 0.0
    %10709 = vmatpush1.msra.mxu0 0.0
    %10710 = vmatprep.mubr.f32.mxu0 0.0
    %v10711 = vand.u32 %v10637, 4294901760
    %v10712 = vsub.f32 %v10637, %v10711
    %v10713 = vand.u32 %v10712, 4294901760
    %v10714 = vsub.f32 %v10712, %v10713
    %v10715 = vand.u32 %v10714, 4294901760
    %10716 = vmatmul.mubr.f32.gmra.mrb[0].mxu0 %v10715
    %v10717 = vpop.f32.mrb[0].mxu0
    %v10718 = vadd.f32 0.0, %v10717
    %v10719 = vpop.f32.mrb[0].mxu0
    %10720 = vmatprep.mubr.f32.mxu0 0.0
    %v10721 = vand.u32 %v10640, 4294901760
    %v10722 = vsub.f32 %v10640, %v10721
    %v10723 = vand.u32 %v10722, 4294901760
    %v10724 = vsub.f32 %v10722, %v10723
    %v10725 = vand.u32 %v10724, 4294901760
    %10726 = vmatmul.mubr.f32.gmra.mrb[0].mxu0 %v10725
    %v10727 = vpop.f32.mrb[0].mxu0
    %v10728 = vadd.f32 0.0, %v10727
    %v10729 = vpop.f32.mrb[0].mxu0
    %10730 = vdwg.mxu0
    %10731 = vmatprep.subr.mxu0 0.0
    %v10732 = vand.u32 %v143, 4294901760
    %v10733 = vsub.f32 %v143, %v10732
    %v10734 = vand.u32 %v10733, 4294901760
    %v10735 = vsub.f32 %v10733, %v10734
    %v10736 = vand.u32 %v10735, 4294901760
    %10737 = vmatpush1.msra.mxu0 %v10736
    %10738 = vmatprep.subr.mxu0 0.0
    %v10739 = vand.u32 %v144, 4294901760
    %v10740 = vsub.f32 %v144, %v10739
    %v10741 = vand.u32 %v10740, 4294901760
    %v10742 = vsub.f32 %v10740, %v10741
    %v10743 = vand.u32 %v10742, 4294901760
    %10744 = vmatpush1.msra.mxu0 %v10743
    %10745 = vmatprep.subr.mxu0 0.0
    %v10746 = vand.u32 %v145, 4294901760
    %v10747 = vsub.f32 %v145, %v10746
    %v10748 = vand.u32 %v10747, 4294901760
    %v10749 = vsub.f32 %v10747, %v10748
    %v10750 = vand.u32 %v10749, 4294901760
    %10751 = vmatpush1.msra.mxu0 %v10750
    %10752 = vmatprep.subr.mxu0 0.0
    %v10753 = vand.u32 %v146, 4294901760
    %v10754 = vsub.f32 %v146, %v10753
    %v10755 = vand.u32 %v10754, 4294901760
    %v10756 = vsub.f32 %v10754, %v10755
    %v10757 = vand.u32 %v10756, 4294901760
    %10758 = vmatpush1.msra.mxu0 %v10757
    %10759 = vmatprep.subr.mxu0 0.0
    %10760 = vmatpush1.msra.mxu0 0.0
    %10761 = vmatprep.subr.mxu0 0.0
    %10762 = vmatpush1.msra.mxu0 0.0
    %10763 = vmatprep.subr.mxu0 0.0
    %10764 = vmatpush1.msra.mxu0 0.0
    %10765 = vmatprep.subr.mxu0 0.0
    %10766 = vmatpush1.msra.mxu0 0.0
    %10767 = vmatprep.subr.mxu0 0.0
    %10768 = vmatpush1.msra.mxu0 0.0
    %10769 = vmatprep.subr.mxu0 0.0
    %10770 = vmatpush1.msra.mxu0 0.0
    %10771 = vmatprep.subr.mxu0 0.0
    %10772 = vmatpush1.msra.mxu0 0.0
    %10773 = vmatprep.subr.mxu0 0.0
    %10774 = vmatpush1.msra.mxu0 0.0
    %10775 = vmatprep.subr.mxu0 0.0
    %10776 = vmatpush1.msra.mxu0 0.0
    %10777 = vmatprep.subr.mxu0 0.0
    %10778 = vmatpush1.msra.mxu0 0.0
    %10779 = vmatprep.subr.mxu0 0.0
    %10780 = vmatpush1.msra.mxu0 0.0
    %10781 = vmatprep.subr.mxu0 0.0
    %10782 = vmatpush1.msra.mxu0 0.0
    %10783 = vmatprep.subr.mxu0 0.0
    %10784 = vmatpush1.msra.mxu0 0.0
    %10785 = vmatprep.subr.mxu0 0.0
    %10786 = vmatpush1.msra.mxu0 0.0
    %10787 = vmatprep.subr.mxu0 0.0
    %10788 = vmatpush1.msra.mxu0 0.0
    %10789 = vmatprep.subr.mxu0 0.0
    %10790 = vmatpush1.msra.mxu0 0.0
    %10791 = vmatprep.subr.mxu0 0.0
    %10792 = vmatpush1.msra.mxu0 0.0
    %10793 = vmatprep.subr.mxu0 0.0
    %10794 = vmatpush1.msra.mxu0 0.0
    %10795 = vmatprep.subr.mxu0 0.0
    %10796 = vmatpush1.msra.mxu0 0.0
    %10797 = vmatprep.subr.mxu0 0.0
    %10798 = vmatpush1.msra.mxu0 0.0
    %10799 = vmatprep.subr.mxu0 0.0
    %10800 = vmatpush1.msra.mxu0 0.0
    %10801 = vmatprep.subr.mxu0 0.0
    %10802 = vmatpush1.msra.mxu0 0.0
    %10803 = vmatprep.subr.mxu0 0.0
    %10804 = vmatpush1.msra.mxu0 0.0
    %10805 = vmatprep.subr.mxu0 0.0
    %10806 = vmatpush1.msra.mxu0 0.0
    %10807 = vmatprep.subr.mxu0 0.0
    %10808 = vmatpush1.msra.mxu0 0.0
    %10809 = vmatprep.subr.mxu0 0.0
    %10810 = vmatpush1.msra.mxu0 0.0
    %10811 = vmatprep.subr.mxu0 0.0
    %10812 = vmatpush1.msra.mxu0 0.0
    %10813 = vmatprep.subr.mxu0 0.0
    %10814 = vmatpush1.msra.mxu0 0.0
    %10815 = vmatprep.mubr.f32.mxu0 0.0
    %v10816 = vand.u32 %v10637, 4294901760
    %10817 = vmatmul.mubr.f32.gmra.mrb[0].mxu0 %v10816
    %v10818 = vpop.f32.mrb[0].mxu0
    %v10819 = vadd.f32 %v10718, %v10818
    %v10820 = vpop.f32.mrb[0].mxu0
    %10821 = vmatprep.mubr.f32.mxu0 0.0
    %v10822 = vand.u32 %v10640, 4294901760
    %10823 = vmatmul.mubr.f32.gmra.mrb[0].mxu0 %v10822
    %v10824 = vpop.f32.mrb[0].mxu0
    %v10825 = vadd.f32 %v10728, %v10824
    %v10826 = vpop.f32.mrb[0].mxu0
    %10827 = vdwg.mxu0
    %10828 = vmatprep.subr.mxu0 0.0
    %v10829 = vand.u32 %v143, 4294901760
    %v10830 = vsub.f32 %v143, %v10829
    %10831 = vmatpush1.msra.mxu0 %v10830
    %10832 = vmatprep.subr.mxu0 0.0
    %v10833 = vand.u32 %v144, 4294901760
    %v10834 = vsub.f32 %v144, %v10833
    %10835 = vmatpush1.msra.mxu0 %v10834
    %10836 = vmatprep.subr.mxu0 0.0
    %v10837 = vand.u32 %v145, 4294901760
    %v10838 = vsub.f32 %v145, %v10837
    %10839 = vmatpush1.msra.mxu0 %v10838
    %10840 = vmatprep.subr.mxu0 0.0
    %v10841 = vand.u32 %v146, 4294901760
    %v10842 = vsub.f32 %v146, %v10841
    %10843 = vmatpush1.msra.mxu0 %v10842
    %10844 = vmatprep.subr.mxu0 0.0
    %10845 = vmatpush1.msra.mxu0 0.0
    %10846 = vmatprep.subr.mxu0 0.0
    %10847 = vmatpush1.msra.mxu0 0.0
    %10848 = vmatprep.subr.mxu0 0.0
    %10849 = vmatpush1.msra.mxu0 0.0
    %10850 = vmatprep.subr.mxu0 0.0
    %10851 = vmatpush1.msra.mxu0 0.0
    %10852 = vmatprep.subr.mxu0 0.0
    %10853 = vmatpush1.msra.mxu0 0.0
    %10854 = vmatprep.subr.mxu0 0.0
    %10855 = vmatpush1.msra.mxu0 0.0
    %10856 = vmatprep.subr.mxu0 0.0
    %10857 = vmatpush1.msra.mxu0 0.0
    %10858 = vmatprep.subr.mxu0 0.0
    %10859 = vmatpush1.msra.mxu0 0.0
    %10860 = vmatprep.subr.mxu0 0.0
    %10861 = vmatpush1.msra.mxu0 0.0
    %10862 = vmatprep.subr.mxu0 0.0
    %10863 = vmatpush1.msra.mxu0 0.0
    %10864 = vmatprep.subr.mxu0 0.0
    %10865 = vmatpush1.msra.mxu0 0.0
    %10866 = vmatprep.subr.mxu0 0.0
    %10867 = vmatpush1.msra.mxu0 0.0
    %10868 = vmatprep.subr.mxu0 0.0
    %10869 = vmatpush1.msra.mxu0 0.0
    %10870 = vmatprep.subr.mxu0 0.0
    %10871 = vmatpush1.msra.mxu0 0.0
    %10872 = vmatprep.subr.mxu0 0.0
    %10873 = vmatpush1.msra.mxu0 0.0
    %10874 = vmatprep.subr.mxu0 0.0
    %10875 = vmatpush1.msra.mxu0 0.0
    %10876 = vmatprep.subr.mxu0 0.0
    %10877 = vmatpush1.msra.mxu0 0.0
    %10878 = vmatprep.subr.mxu0 0.0
    %10879 = vmatpush1.msra.mxu0 0.0
    %10880 = vmatprep.subr.mxu0 0.0
    %10881 = vmatpush1.msra.mxu0 0.0
    %10882 = vmatprep.subr.mxu0 0.0
    %10883 = vmatpush1.msra.mxu0 0.0
    %10884 = vmatprep.subr.mxu0 0.0
    %10885 = vmatpush1.msra.mxu0 0.0
    %10886 = vmatprep.subr.mxu0 0.0
    %10887 = vmatpush1.msra.mxu0 0.0
    %10888 = vmatprep.subr.mxu0 0.0
    %10889 = vmatpush1.msra.mxu0 0.0
    %10890 = vmatprep.subr.mxu0 0.0
    %10891 = vmatpush1.msra.mxu0 0.0
    %10892 = vmatprep.subr.mxu0 0.0
    %10893 = vmatpush1.msra.mxu0 0.0
    %10894 = vmatprep.subr.mxu0 0.0
    %10895 = vmatpush1.msra.mxu0 0.0
    %10896 = vmatprep.subr.mxu0 0.0
    %10897 = vmatpush1.msra.mxu0 0.0
    %10898 = vmatprep.subr.mxu0 0.0
    %10899 = vmatpush1.msra.mxu0 0.0
    %10900 = vmatprep.mubr.f32.mxu0 0.0
    %v10901 = vand.u32 %v10637, 4294901760
    %v10902 = vsub.f32 %v10637, %v10901
    %10903 = vmatmul.mubr.f32.gmra.mrb[0].mxu0 %v10902
    %v10904 = vpop.f32.mrb[0].mxu0
    %v10905 = vadd.f32 %v10819, %v10904
    %v10906 = vpop.f32.mrb[0].mxu0
    %10907 = vmatprep.mubr.f32.mxu0 0.0
    %v10908 = vand.u32 %v10640, 4294901760
    %v10909 = vsub.f32 %v10640, %v10908
    %10910 = vmatmul.mubr.f32.gmra.mrb[0].mxu0 %v10909
    %v10911 = vpop.f32.mrb[0].mxu0
    %v10912 = vadd.f32 %v10825, %v10911
    %v10913 = vpop.f32.mrb[0].mxu0
    %10914 = vdwg.mxu0
    %10915 = vmatprep.subr.mxu0 0.0
    %v10916 = vand.u32 %v143, 4294901760
    %10917 = vmatpush1.msra.mxu0 %v10916
    %10918 = vmatprep.subr.mxu0 0.0
    %v10919 = vand.u32 %v144, 4294901760
    %10920 = vmatpush1.msra.mxu0 %v10919
    %10921 = vmatprep.subr.mxu0 0.0
    %v10922 = vand.u32 %v145, 4294901760
    %10923 = vmatpush1.msra.mxu0 %v10922
    %10924 = vmatprep.subr.mxu0 0.0
    %v10925 = vand.u32 %v146, 4294901760
    %10926 = vmatpush1.msra.mxu0 %v10925
    %10927 = vmatprep.subr.mxu0 0.0
    %10928 = vmatpush1.msra.mxu0 0.0
    %10929 = vmatprep.subr.mxu0 0.0
    %10930 = vmatpush1.msra.mxu0 0.0
    %10931 = vmatprep.subr.mxu0 0.0
    %10932 = vmatpush1.msra.mxu0 0.0
    %10933 = vmatprep.subr.mxu0 0.0
    %10934 = vmatpush1.msra.mxu0 0.0
    %10935 = vmatprep.subr.mxu0 0.0
    %10936 = vmatpush1.msra.mxu0 0.0
    %10937 = vmatprep.subr.mxu0 0.0
    %10938 = vmatpush1.msra.mxu0 0.0
    %10939 = vmatprep.subr.mxu0 0.0
    %10940 = vmatpush1.msra.mxu0 0.0
    %10941 = vmatprep.subr.mxu0 0.0
    %10942 = vmatpush1.msra.mxu0 0.0
    %10943 = vmatprep.subr.mxu0 0.0
    %10944 = vmatpush1.msra.mxu0 0.0
    %10945 = vmatprep.subr.mxu0 0.0
    %10946 = vmatpush1.msra.mxu0 0.0
    %10947 = vmatprep.subr.mxu0 0.0
    %10948 = vmatpush1.msra.mxu0 0.0
    %10949 = vmatprep.subr.mxu0 0.0
    %10950 = vmatpush1.msra.mxu0 0.0
    %10951 = vmatprep.subr.mxu0 0.0
    %10952 = vmatpush1.msra.mxu0 0.0
    %10953 = vmatprep.subr.mxu0 0.0
    %10954 = vmatpush1.msra.mxu0 0.0
    %10955 = vmatprep.subr.mxu0 0.0
    %10956 = vmatpush1.msra.mxu0 0.0
    %10957 = vmatprep.subr.mxu0 0.0
    %10958 = vmatpush1.msra.mxu0 0.0
    %10959 = vmatprep.subr.mxu0 0.0
    %10960 = vmatpush1.msra.mxu0 0.0
    %10961 = vmatprep.subr.mxu0 0.0
    %10962 = vmatpush1.msra.mxu0 0.0
    %10963 = vmatprep.subr.mxu0 0.0
    %10964 = vmatpush1.msra.mxu0 0.0
    %10965 = vmatprep.subr.mxu0 0.0
    %10966 = vmatpush1.msra.mxu0 0.0
    %10967 = vmatprep.subr.mxu0 0.0
    %10968 = vmatpush1.msra.mxu0 0.0
    %10969 = vmatprep.subr.mxu0 0.0
    %10970 = vmatpush1.msra.mxu0 0.0
    %10971 = vmatprep.subr.mxu0 0.0
    %10972 = vmatpush1.msra.mxu0 0.0
    %10973 = vmatprep.subr.mxu0 0.0
    %10974 = vmatpush1.msra.mxu0 0.0
    %10975 = vmatprep.subr.mxu0 0.0
    %10976 = vmatpush1.msra.mxu0 0.0
    %10977 = vmatprep.subr.mxu0 0.0
    %10978 = vmatpush1.msra.mxu0 0.0
    %10979 = vmatprep.subr.mxu0 0.0
    %10980 = vmatpush1.msra.mxu0 0.0
    %10981 = vmatprep.subr.mxu0 0.0
    %10982 = vmatpush1.msra.mxu0 0.0
    %10983 = vmatprep.mubr.f32.mxu0 0.0
    %v10984 = vand.u32 %v10637, 4294901760
    %v10985 = vsub.f32 %v10637, %v10984
    %v10986 = vand.u32 %v10985, 4294901760
    %10987 = vmatmul.mubr.f32.gmra.mrb[0].mxu0 %v10986
    %v10988 = vpop.f32.mrb[0].mxu0
    %v10989 = vadd.f32 %v10905, %v10988
    %v10990 = vpop.f32.mrb[0].mxu0
    %10991 = vmatprep.mubr.f32.mxu0 0.0
    %v10992 = vand.u32 %v10640, 4294901760
    %v10993 = vsub.f32 %v10640, %v10992
    %v10994 = vand.u32 %v10993, 4294901760
    %10995 = vmatmul.mubr.f32.gmra.mrb[0].mxu0 %v10994
    %v10996 = vpop.f32.mrb[0].mxu0
    %v10997 = vadd.f32 %v10912, %v10996
    %v10998 = vpop.f32.mrb[0].mxu0
    %10999 = vdwg.mxu0
    %11000 = vmatprep.subr.mxu0 0.0
    %v11001 = vand.u32 %v143, 4294901760
    %v11002 = vsub.f32 %v143, %v11001
    %v11003 = vand.u32 %v11002, 4294901760
    %11004 = vmatpush1.msra.mxu0 %v11003
    %11005 = vmatprep.subr.mxu0 0.0
    %v11006 = vand.u32 %v144, 4294901760
    %v11007 = vsub.f32 %v144, %v11006
    %v11008 = vand.u32 %v11007, 4294901760
    %11009 = vmatpush1.msra.mxu0 %v11008
    %11010 = vmatprep.subr.mxu0 0.0
    %v11011 = vand.u32 %v145, 4294901760
    %v11012 = vsub.f32 %v145, %v11011
    %v11013 = vand.u32 %v11012, 4294901760
    %11014 = vmatpush1.msra.mxu0 %v11013
    %11015 = vmatprep.subr.mxu0 0.0
    %v11016 = vand.u32 %v146, 4294901760
    %v11017 = vsub.f32 %v146, %v11016
    %v11018 = vand.u32 %v11017, 4294901760
    %11019 = vmatpush1.msra.mxu0 %v11018
    %11020 = vmatprep.subr.mxu0 0.0
    %11021 = vmatpush1.msra.mxu0 0.0
    %11022 = vmatprep.subr.mxu0 0.0
    %11023 = vmatpush1.msra.mxu0 0.0
    %11024 = vmatprep.subr.mxu0 0.0
    %11025 = vmatpush1.msra.mxu0 0.0
    %11026 = vmatprep.subr.mxu0 0.0
    %11027 = vmatpush1.msra.mxu0 0.0
    %11028 = vmatprep.subr.mxu0 0.0
    %11029 = vmatpush1.msra.mxu0 0.0
    %11030 = vmatprep.subr.mxu0 0.0
    %11031 = vmatpush1.msra.mxu0 0.0
    %11032 = vmatprep.subr.mxu0 0.0
    %11033 = vmatpush1.msra.mxu0 0.0
    %11034 = vmatprep.subr.mxu0 0.0
    %11035 = vmatpush1.msra.mxu0 0.0
    %11036 = vmatprep.subr.mxu0 0.0
    %11037 = vmatpush1.msra.mxu0 0.0
    %11038 = vmatprep.subr.mxu0 0.0
    %11039 = vmatpush1.msra.mxu0 0.0
    %11040 = vmatprep.subr.mxu0 0.0
    %11041 = vmatpush1.msra.mxu0 0.0
    %11042 = vmatprep.subr.mxu0 0.0
    %11043 = vmatpush1.msra.mxu0 0.0
    %11044 = vmatprep.subr.mxu0 0.0
    %11045 = vmatpush1.msra.mxu0 0.0
    %11046 = vmatprep.subr.mxu0 0.0
    %11047 = vmatpush1.msra.mxu0 0.0
    %11048 = vmatprep.subr.mxu0 0.0
    %11049 = vmatpush1.msra.mxu0 0.0
    %11050 = vmatprep.subr.mxu0 0.0
    %11051 = vmatpush1.msra.mxu0 0.0
    %11052 = vmatprep.subr.mxu0 0.0
    %11053 = vmatpush1.msra.mxu0 0.0
    %11054 = vmatprep.subr.mxu0 0.0
    %11055 = vmatpush1.msra.mxu0 0.0
    %11056 = vmatprep.subr.mxu0 0.0
    %11057 = vmatpush1.msra.mxu0 0.0
    %11058 = vmatprep.subr.mxu0 0.0
    %11059 = vmatpush1.msra.mxu0 0.0
    %11060 = vmatprep.subr.mxu0 0.0
    %11061 = vmatpush1.msra.mxu0 0.0
    %11062 = vmatprep.subr.mxu0 0.0
    %11063 = vmatpush1.msra.mxu0 0.0
    %11064 = vmatprep.subr.mxu0 0.0
    %11065 = vmatpush1.msra.mxu0 0.0
    %11066 = vmatprep.subr.mxu0 0.0
    %11067 = vmatpush1.msra.mxu0 0.0
    %11068 = vmatprep.subr.mxu0 0.0
    %11069 = vmatpush1.msra.mxu0 0.0
    %11070 = vmatprep.subr.mxu0 0.0
    %11071 = vmatpush1.msra.mxu0 0.0
    %11072 = vmatprep.subr.mxu0 0.0
    %11073 = vmatpush1.msra.mxu0 0.0
    %11074 = vmatprep.subr.mxu0 0.0
    %11075 = vmatpush1.msra.mxu0 0.0
    %11076 = vmatprep.mubr.f32.mxu0 0.0
    %v11077 = vand.u32 %v10637, 4294901760
    %11078 = vmatmul.mubr.f32.gmra.mrb[0].mxu0 %v11077
    %v11079 = vpop.f32.mrb[0].mxu0
    %v11080 = vadd.f32 %v10989, %v11079
    %v11081 = vpop.f32.mrb[0].mxu0
    %11082 = vmatprep.mubr.f32.mxu0 0.0
    %v11083 = vand.u32 %v10640, 4294901760
    %11084 = vmatmul.mubr.f32.gmra.mrb[0].mxu0 %v11083
    %v11085 = vpop.f32.mrb[0].mxu0
    %v11086 = vadd.f32 %v10997, %v11085
    %v11087 = vpop.f32.mrb[0].mxu0
    %11088 = vdwg.mxu0
    %11089 = vmatprep.subr.mxu0 0.0
    %v11090 = vand.u32 %v143, 4294901760
    %11091 = vmatpush1.msra.mxu0 %v11090
    %11092 = vmatprep.subr.mxu0 0.0
    %v11093 = vand.u32 %v144, 4294901760
    %11094 = vmatpush1.msra.mxu0 %v11093
    %11095 = vmatprep.subr.mxu0 0.0
    %v11096 = vand.u32 %v145, 4294901760
    %11097 = vmatpush1.msra.mxu0 %v11096
    %11098 = vmatprep.subr.mxu0 0.0
    %v11099 = vand.u32 %v146, 4294901760
    %11100 = vmatpush1.msra.mxu0 %v11099
    %11101 = vmatprep.subr.mxu0 0.0
    %11102 = vmatpush1.msra.mxu0 0.0
    %11103 = vmatprep.subr.mxu0 0.0
    %11104 = vmatpush1.msra.mxu0 0.0
    %11105 = vmatprep.subr.mxu0 0.0
    %11106 = vmatpush1.msra.mxu0 0.0
    %11107 = vmatprep.subr.mxu0 0.0
    %11108 = vmatpush1.msra.mxu0 0.0
    %11109 = vmatprep.subr.mxu0 0.0
    %11110 = vmatpush1.msra.mxu0 0.0
    %11111 = vmatprep.subr.mxu0 0.0
    %11112 = vmatpush1.msra.mxu0 0.0
    %11113 = vmatprep.subr.mxu0 0.0
    %11114 = vmatpush1.msra.mxu0 0.0
    %11115 = vmatprep.subr.mxu0 0.0
    %11116 = vmatpush1.msra.mxu0 0.0
    %11117 = vmatprep.subr.mxu0 0.0
    %11118 = vmatpush1.msra.mxu0 0.0
    %11119 = vmatprep.subr.mxu0 0.0
    %11120 = vmatpush1.msra.mxu0 0.0
    %11121 = vmatprep.subr.mxu0 0.0
    %11122 = vmatpush1.msra.mxu0 0.0
    %11123 = vmatprep.subr.mxu0 0.0
    %11124 = vmatpush1.msra.mxu0 0.0
    %11125 = vmatprep.subr.mxu0 0.0
    %11126 = vmatpush1.msra.mxu0 0.0
    %11127 = vmatprep.subr.mxu0 0.0
    %11128 = vmatpush1.msra.mxu0 0.0
    %11129 = vmatprep.subr.mxu0 0.0
    %11130 = vmatpush1.msra.mxu0 0.0
    %11131 = vmatprep.subr.mxu0 0.0
    %11132 = vmatpush1.msra.mxu0 0.0
    %11133 = vmatprep.subr.mxu0 0.0
    %11134 = vmatpush1.msra.mxu0 0.0
    %11135 = vmatprep.subr.mxu0 0.0
    %11136 = vmatpush1.msra.mxu0 0.0
    %11137 = vmatprep.subr.mxu0 0.0
    %11138 = vmatpush1.msra.mxu0 0.0
    %11139 = vmatprep.subr.mxu0 0.0
    %11140 = vmatpush1.msra.mxu0 0.0
    %11141 = vmatprep.subr.mxu0 0.0
    %11142 = vmatpush1.msra.mxu0 0.0
    %11143 = vmatprep.subr.mxu0 0.0
    %11144 = vmatpush1.msra.mxu0 0.0
    %11145 = vmatprep.subr.mxu0 0.0
    %11146 = vmatpush1.msra.mxu0 0.0
    %11147 = vmatprep.subr.mxu0 0.0
    %11148 = vmatpush1.msra.mxu0 0.0
    %11149 = vmatprep.subr.mxu0 0.0
    %11150 = vmatpush1.msra.mxu0 0.0
    %11151 = vmatprep.subr.mxu0 0.0
    %11152 = vmatpush1.msra.mxu0 0.0
    %11153 = vmatprep.subr.mxu0 0.0
    %11154 = vmatpush1.msra.mxu0 0.0
    %11155 = vmatprep.subr.mxu0 0.0
    %11156 = vmatpush1.msra.mxu0 0.0
    %11157 = vmatprep.mubr.f32.mxu0 0.0
    %v11158 = vand.u32 %v10637, 4294901760
    %11159 = vmatmul.mubr.f32.gmra.mrb[0].mxu0 %v11158
    %v11160 = vpop.f32.mrb[0].mxu0
    %v11161 = vadd.f32 %v11080, %v11160
    %v11162 = vpop.f32.mrb[0].mxu0
    %11163 = vmatprep.mubr.f32.mxu0 0.0
    %v11164 = vand.u32 %v10640, 4294901760
    %11165 = vmatmul.mubr.f32.gmra.mrb[0].mxu0 %v11164
    %v11166 = vpop.f32.mrb[0].mxu0
    %v11167 = vadd.f32 %v11086, %v11166
    %v11168 = vpop.f32.mrb[0].mxu0
    %11169 = vdwg.mxu0
    %v11170 = vsel %vm151, %v8155, 0
    %v11172 = vsel %vm151, %v8157, 0
    %11174 = vmatprep.subr.mxu0 0.0
    %v11175 = vand.u32 %v147, 4294901760
    %11176 = vmatpush1.msra.mxu0 %v11175
    %11177 = vmatprep.subr.mxu0 0.0
    %v11178 = vand.u32 %v148, 4294901760
    %11179 = vmatpush1.msra.mxu0 %v11178
    %11180 = vmatprep.subr.mxu0 0.0
    %v11181 = vand.u32 %v149, 4294901760
    %11182 = vmatpush1.msra.mxu0 %v11181
    %11183 = vmatprep.subr.mxu0 0.0
    %v11184 = vand.u32 %v150, 4294901760
    %11185 = vmatpush1.msra.mxu0 %v11184
    %11186 = vmatprep.subr.mxu0 0.0
    %11187 = vmatpush1.msra.mxu0 0.0
    %11188 = vmatprep.subr.mxu0 0.0
    %11189 = vmatpush1.msra.mxu0 0.0
    %11190 = vmatprep.subr.mxu0 0.0
    %11191 = vmatpush1.msra.mxu0 0.0
    %11192 = vmatprep.subr.mxu0 0.0
    %11193 = vmatpush1.msra.mxu0 0.0
    %11194 = vmatprep.subr.mxu0 0.0
    %11195 = vmatpush1.msra.mxu0 0.0
    %11196 = vmatprep.subr.mxu0 0.0
    %11197 = vmatpush1.msra.mxu0 0.0
    %11198 = vmatprep.subr.mxu0 0.0
    %11199 = vmatpush1.msra.mxu0 0.0
    %11200 = vmatprep.subr.mxu0 0.0
    %11201 = vmatpush1.msra.mxu0 0.0
    %11202 = vmatprep.subr.mxu0 0.0
    %11203 = vmatpush1.msra.mxu0 0.0
    %11204 = vmatprep.subr.mxu0 0.0
    %11205 = vmatpush1.msra.mxu0 0.0
    %11206 = vmatprep.subr.mxu0 0.0
    %11207 = vmatpush1.msra.mxu0 0.0
    %11208 = vmatprep.subr.mxu0 0.0
    %11209 = vmatpush1.msra.mxu0 0.0
    %11210 = vmatprep.subr.mxu0 0.0
    %11211 = vmatpush1.msra.mxu0 0.0
    %11212 = vmatprep.subr.mxu0 0.0
    %11213 = vmatpush1.msra.mxu0 0.0
    %11214 = vmatprep.subr.mxu0 0.0
    %11215 = vmatpush1.msra.mxu0 0.0
    %11216 = vmatprep.subr.mxu0 0.0
    %11217 = vmatpush1.msra.mxu0 0.0
    %11218 = vmatprep.subr.mxu0 0.0
    %11219 = vmatpush1.msra.mxu0 0.0
    %11220 = vmatprep.subr.mxu0 0.0
    %11221 = vmatpush1.msra.mxu0 0.0
    %11222 = vmatprep.subr.mxu0 0.0
    %11223 = vmatpush1.msra.mxu0 0.0
    %11224 = vmatprep.subr.mxu0 0.0
    %11225 = vmatpush1.msra.mxu0 0.0
    %11226 = vmatprep.subr.mxu0 0.0
    %11227 = vmatpush1.msra.mxu0 0.0
    %11228 = vmatprep.subr.mxu0 0.0
    %11229 = vmatpush1.msra.mxu0 0.0
    %11230 = vmatprep.subr.mxu0 0.0
    %11231 = vmatpush1.msra.mxu0 0.0
    %11232 = vmatprep.subr.mxu0 0.0
    %11233 = vmatpush1.msra.mxu0 0.0
    %11234 = vmatprep.subr.mxu0 0.0
    %11235 = vmatpush1.msra.mxu0 0.0
    %11236 = vmatprep.subr.mxu0 0.0
    %11237 = vmatpush1.msra.mxu0 0.0
    %11238 = vmatprep.subr.mxu0 0.0
    %11239 = vmatpush1.msra.mxu0 0.0
    %11240 = vmatprep.subr.mxu0 0.0
    %11241 = vmatpush1.msra.mxu0 0.0
    %11242 = vmatprep.mubr.f32.mxu0 0.0
    %v11243 = vand.u32 %v11170, 4294901760
    %v11244 = vsub.f32 %v11170, %v11243
    %v11245 = vand.u32 %v11244, 4294901760
    %v11246 = vsub.f32 %v11244, %v11245
    %v11247 = vand.u32 %v11246, 4294901760
    %11248 = vmatmul.mubr.f32.gmra.mrb[0].mxu0 %v11247
    %v11249 = vpop.f32.mrb[0].mxu0
    %v11250 = vadd.f32 0.0, %v11249
    %v11251 = vpop.f32.mrb[0].mxu0
    %11252 = vmatprep.mubr.f32.mxu0 0.0
    %v11253 = vand.u32 %v11172, 4294901760
    %v11254 = vsub.f32 %v11172, %v11253
    %v11255 = vand.u32 %v11254, 4294901760
    %v11256 = vsub.f32 %v11254, %v11255
    %v11257 = vand.u32 %v11256, 4294901760
    %11258 = vmatmul.mubr.f32.gmra.mrb[0].mxu0 %v11257
    %v11259 = vpop.f32.mrb[0].mxu0
    %v11260 = vadd.f32 0.0, %v11259
    %v11261 = vpop.f32.mrb[0].mxu0
    %11262 = vdwg.mxu0
    %11263 = vmatprep.subr.mxu0 0.0
    %v11264 = vand.u32 %v147, 4294901760
    %v11265 = vsub.f32 %v147, %v11264
    %v11266 = vand.u32 %v11265, 4294901760
    %v11267 = vsub.f32 %v11265, %v11266
    %v11268 = vand.u32 %v11267, 4294901760
    %11269 = vmatpush1.msra.mxu0 %v11268
    %11270 = vmatprep.subr.mxu0 0.0
    %v11271 = vand.u32 %v148, 4294901760
    %v11272 = vsub.f32 %v148, %v11271
    %v11273 = vand.u32 %v11272, 4294901760
    %v11274 = vsub.f32 %v11272, %v11273
    %v11275 = vand.u32 %v11274, 4294901760
    %11276 = vmatpush1.msra.mxu0 %v11275
    %11277 = vmatprep.subr.mxu0 0.0
    %v11278 = vand.u32 %v149, 4294901760
    %v11279 = vsub.f32 %v149, %v11278
    %v11280 = vand.u32 %v11279, 4294901760
    %v11281 = vsub.f32 %v11279, %v11280
    %v11282 = vand.u32 %v11281, 4294901760
    %11283 = vmatpush1.msra.mxu0 %v11282
    %11284 = vmatprep.subr.mxu0 0.0
    %v11285 = vand.u32 %v150, 4294901760
    %v11286 = vsub.f32 %v150, %v11285
    %v11287 = vand.u32 %v11286, 4294901760
    %v11288 = vsub.f32 %v11286, %v11287
    %v11289 = vand.u32 %v11288, 4294901760
    %11290 = vmatpush1.msra.mxu0 %v11289
    %11291 = vmatprep.subr.mxu0 0.0
    %11292 = vmatpush1.msra.mxu0 0.0
    %11293 = vmatprep.subr.mxu0 0.0
    %11294 = vmatpush1.msra.mxu0 0.0
    %11295 = vmatprep.subr.mxu0 0.0
    %11296 = vmatpush1.msra.mxu0 0.0
    %11297 = vmatprep.subr.mxu0 0.0
    %11298 = vmatpush1.msra.mxu0 0.0
    %11299 = vmatprep.subr.mxu0 0.0
    %11300 = vmatpush1.msra.mxu0 0.0
    %11301 = vmatprep.subr.mxu0 0.0
    %11302 = vmatpush1.msra.mxu0 0.0
    %11303 = vmatprep.subr.mxu0 0.0
    %11304 = vmatpush1.msra.mxu0 0.0
    %11305 = vmatprep.subr.mxu0 0.0
    %11306 = vmatpush1.msra.mxu0 0.0
    %11307 = vmatprep.subr.mxu0 0.0
    %11308 = vmatpush1.msra.mxu0 0.0
    %11309 = vmatprep.subr.mxu0 0.0
    %11310 = vmatpush1.msra.mxu0 0.0
    %11311 = vmatprep.subr.mxu0 0.0
    %11312 = vmatpush1.msra.mxu0 0.0
    %11313 = vmatprep.subr.mxu0 0.0
    %11314 = vmatpush1.msra.mxu0 0.0
    %11315 = vmatprep.subr.mxu0 0.0
    %11316 = vmatpush1.msra.mxu0 0.0
    %11317 = vmatprep.subr.mxu0 0.0
    %11318 = vmatpush1.msra.mxu0 0.0
    %11319 = vmatprep.subr.mxu0 0.0
    %11320 = vmatpush1.msra.mxu0 0.0
    %11321 = vmatprep.subr.mxu0 0.0
    %11322 = vmatpush1.msra.mxu0 0.0
    %11323 = vmatprep.subr.mxu0 0.0
    %11324 = vmatpush1.msra.mxu0 0.0
    %11325 = vmatprep.subr.mxu0 0.0
    %11326 = vmatpush1.msra.mxu0 0.0
    %11327 = vmatprep.subr.mxu0 0.0
    %11328 = vmatpush1.msra.mxu0 0.0
    %11329 = vmatprep.subr.mxu0 0.0
    %11330 = vmatpush1.msra.mxu0 0.0
    %11331 = vmatprep.subr.mxu0 0.0
    %11332 = vmatpush1.msra.mxu0 0.0
    %11333 = vmatprep.subr.mxu0 0.0
    %11334 = vmatpush1.msra.mxu0 0.0
    %11335 = vmatprep.subr.mxu0 0.0
    %11336 = vmatpush1.msra.mxu0 0.0
    %11337 = vmatprep.subr.mxu0 0.0
    %11338 = vmatpush1.msra.mxu0 0.0
    %11339 = vmatprep.subr.mxu0 0.0
    %11340 = vmatpush1.msra.mxu0 0.0
    %11341 = vmatprep.subr.mxu0 0.0
    %11342 = vmatpush1.msra.mxu0 0.0
    %11343 = vmatprep.subr.mxu0 0.0
    %11344 = vmatpush1.msra.mxu0 0.0
    %11345 = vmatprep.subr.mxu0 0.0
    %11346 = vmatpush1.msra.mxu0 0.0
    %11347 = vmatprep.mubr.f32.mxu0 0.0
    %v11348 = vand.u32 %v11170, 4294901760
    %11349 = vmatmul.mubr.f32.gmra.mrb[0].mxu0 %v11348
    %v11350 = vpop.f32.mrb[0].mxu0
    %v11351 = vadd.f32 %v11250, %v11350
    %v11352 = vpop.f32.mrb[0].mxu0
    %11353 = vmatprep.mubr.f32.mxu0 0.0
    %v11354 = vand.u32 %v11172, 4294901760
    %11355 = vmatmul.mubr.f32.gmra.mrb[0].mxu0 %v11354
    %v11356 = vpop.f32.mrb[0].mxu0
    %v11357 = vadd.f32 %v11260, %v11356
    %v11358 = vpop.f32.mrb[0].mxu0
    %11359 = vdwg.mxu0
    %11360 = vmatprep.subr.mxu0 0.0
    %v11361 = vand.u32 %v147, 4294901760
    %v11362 = vsub.f32 %v147, %v11361
    %11363 = vmatpush1.msra.mxu0 %v11362
    %11364 = vmatprep.subr.mxu0 0.0
    %v11365 = vand.u32 %v148, 4294901760
    %v11366 = vsub.f32 %v148, %v11365
    %11367 = vmatpush1.msra.mxu0 %v11366
    %11368 = vmatprep.subr.mxu0 0.0
    %v11369 = vand.u32 %v149, 4294901760
    %v11370 = vsub.f32 %v149, %v11369
    %11371 = vmatpush1.msra.mxu0 %v11370
    %11372 = vmatprep.subr.mxu0 0.0
    %v11373 = vand.u32 %v150, 4294901760
    %v11374 = vsub.f32 %v150, %v11373
    %11375 = vmatpush1.msra.mxu0 %v11374
    %11376 = vmatprep.subr.mxu0 0.0
    %11377 = vmatpush1.msra.mxu0 0.0
    %11378 = vmatprep.subr.mxu0 0.0
    %11379 = vmatpush1.msra.mxu0 0.0
    %11380 = vmatprep.subr.mxu0 0.0
    %11381 = vmatpush1.msra.mxu0 0.0
    %11382 = vmatprep.subr.mxu0 0.0
    %11383 = vmatpush1.msra.mxu0 0.0
    %11384 = vmatprep.subr.mxu0 0.0
    %11385 = vmatpush1.msra.mxu0 0.0
    %11386 = vmatprep.subr.mxu0 0.0
    %11387 = vmatpush1.msra.mxu0 0.0
    %11388 = vmatprep.subr.mxu0 0.0
    %11389 = vmatpush1.msra.mxu0 0.0
    %11390 = vmatprep.subr.mxu0 0.0
    %11391 = vmatpush1.msra.mxu0 0.0
    %11392 = vmatprep.subr.mxu0 0.0
    %11393 = vmatpush1.msra.mxu0 0.0
    %11394 = vmatprep.subr.mxu0 0.0
    %11395 = vmatpush1.msra.mxu0 0.0
    %11396 = vmatprep.subr.mxu0 0.0
    %11397 = vmatpush1.msra.mxu0 0.0
    %11398 = vmatprep.subr.mxu0 0.0
    %11399 = vmatpush1.msra.mxu0 0.0
    %11400 = vmatprep.subr.mxu0 0.0
    %11401 = vmatpush1.msra.mxu0 0.0
    %11402 = vmatprep.subr.mxu0 0.0
    %11403 = vmatpush1.msra.mxu0 0.0
    %11404 = vmatprep.subr.mxu0 0.0
    %11405 = vmatpush1.msra.mxu0 0.0
    %11406 = vmatprep.subr.mxu0 0.0
    %11407 = vmatpush1.msra.mxu0 0.0
    %11408 = vmatprep.subr.mxu0 0.0
    %11409 = vmatpush1.msra.mxu0 0.0
    %11410 = vmatprep.subr.mxu0 0.0
    %11411 = vmatpush1.msra.mxu0 0.0
    %11412 = vmatprep.subr.mxu0 0.0
    %11413 = vmatpush1.msra.mxu0 0.0
    %11414 = vmatprep.subr.mxu0 0.0
    %11415 = vmatpush1.msra.mxu0 0.0
    %11416 = vmatprep.subr.mxu0 0.0
    %11417 = vmatpush1.msra.mxu0 0.0
    %11418 = vmatprep.subr.mxu0 0.0
    %11419 = vmatpush1.msra.mxu0 0.0
    %11420 = vmatprep.subr.mxu0 0.0
    %11421 = vmatpush1.msra.mxu0 0.0
    %11422 = vmatprep.subr.mxu0 0.0
    %11423 = vmatpush1.msra.mxu0 0.0
    %11424 = vmatprep.subr.mxu0 0.0
    %11425 = vmatpush1.msra.mxu0 0.0
    %11426 = vmatprep.subr.mxu0 0.0
    %11427 = vmatpush1.msra.mxu0 0.0
    %11428 = vmatprep.subr.mxu0 0.0
    %11429 = vmatpush1.msra.mxu0 0.0
    %11430 = vmatprep.subr.mxu0 0.0
    %11431 = vmatpush1.msra.mxu0 0.0
    %11432 = vmatprep.mubr.f32.mxu0 0.0
    %v11433 = vand.u32 %v11170, 4294901760
    %v11434 = vsub.f32 %v11170, %v11433
    %11435 = vmatmul.mubr.f32.gmra.mrb[0].mxu0 %v11434
    %v11436 = vpop.f32.mrb[0].mxu0
    %v11437 = vadd.f32 %v11351, %v11436
    %v11438 = vpop.f32.mrb[0].mxu0
    %11439 = vmatprep.mubr.f32.mxu0 0.0
    %v11440 = vand.u32 %v11172, 4294901760
    %v11441 = vsub.f32 %v11172, %v11440
    %11442 = vmatmul.mubr.f32.gmra.mrb[0].mxu0 %v11441
    %v11443 = vpop.f32.mrb[0].mxu0
    %v11444 = vadd.f32 %v11357, %v11443
    %v11445 = vpop.f32.mrb[0].mxu0
    %11446 = vdwg.mxu0
    %11447 = vmatprep.subr.mxu0 0.0
    %v11448 = vand.u32 %v147, 4294901760
    %11449 = vmatpush1.msra.mxu0 %v11448
    %11450 = vmatprep.subr.mxu0 0.0
    %v11451 = vand.u32 %v148, 4294901760
    %11452 = vmatpush1.msra.mxu0 %v11451
    %11453 = vmatprep.subr.mxu0 0.0
    %v11454 = vand.u32 %v149, 4294901760
    %11455 = vmatpush1.msra.mxu0 %v11454
    %11456 = vmatprep.subr.mxu0 0.0
    %v11457 = vand.u32 %v150, 4294901760
    %11458 = vmatpush1.msra.mxu0 %v11457
    %11459 = vmatprep.subr.mxu0 0.0
    %11460 = vmatpush1.msra.mxu0 0.0
    %11461 = vmatprep.subr.mxu0 0.0
    %11462 = vmatpush1.msra.mxu0 0.0
    %11463 = vmatprep.subr.mxu0 0.0
    %11464 = vmatpush1.msra.mxu0 0.0
    %11465 = vmatprep.subr.mxu0 0.0
    %11466 = vmatpush1.msra.mxu0 0.0
    %11467 = vmatprep.subr.mxu0 0.0
    %11468 = vmatpush1.msra.mxu0 0.0
    %11469 = vmatprep.subr.mxu0 0.0
    %11470 = vmatpush1.msra.mxu0 0.0
    %11471 = vmatprep.subr.mxu0 0.0
    %11472 = vmatpush1.msra.mxu0 0.0
    %11473 = vmatprep.subr.mxu0 0.0
    %11474 = vmatpush1.msra.mxu0 0.0
    %11475 = vmatprep.subr.mxu0 0.0
    %11476 = vmatpush1.msra.mxu0 0.0
    %11477 = vmatprep.subr.mxu0 0.0
    %11478 = vmatpush1.msra.mxu0 0.0
    %11479 = vmatprep.subr.mxu0 0.0
    %11480 = vmatpush1.msra.mxu0 0.0
    %11481 = vmatprep.subr.mxu0 0.0
    %11482 = vmatpush1.msra.mxu0 0.0
    %11483 = vmatprep.subr.mxu0 0.0
    %11484 = vmatpush1.msra.mxu0 0.0
    %11485 = vmatprep.subr.mxu0 0.0
    %11486 = vmatpush1.msra.mxu0 0.0
    %11487 = vmatprep.subr.mxu0 0.0
    %11488 = vmatpush1.msra.mxu0 0.0
    %11489 = vmatprep.subr.mxu0 0.0
    %11490 = vmatpush1.msra.mxu0 0.0
    %11491 = vmatprep.subr.mxu0 0.0
    %11492 = vmatpush1.msra.mxu0 0.0
    %11493 = vmatprep.subr.mxu0 0.0
    %11494 = vmatpush1.msra.mxu0 0.0
    %11495 = vmatprep.subr.mxu0 0.0
    %11496 = vmatpush1.msra.mxu0 0.0
    %11497 = vmatprep.subr.mxu0 0.0
    %11498 = vmatpush1.msra.mxu0 0.0
    %11499 = vmatprep.subr.mxu0 0.0
    %11500 = vmatpush1.msra.mxu0 0.0
    %11501 = vmatprep.subr.mxu0 0.0
    %11502 = vmatpush1.msra.mxu0 0.0
    %11503 = vmatprep.subr.mxu0 0.0
    %11504 = vmatpush1.msra.mxu0 0.0
    %11505 = vmatprep.subr.mxu0 0.0
    %11506 = vmatpush1.msra.mxu0 0.0
    %11507 = vmatprep.subr.mxu0 0.0
    %11508 = vmatpush1.msra.mxu0 0.0
    %11509 = vmatprep.subr.mxu0 0.0
    %11510 = vmatpush1.msra.mxu0 0.0
    %11511 = vmatprep.subr.mxu0 0.0
    %11512 = vmatpush1.msra.mxu0 0.0
    %11513 = vmatprep.subr.mxu0 0.0
    %11514 = vmatpush1.msra.mxu0 0.0
    %11515 = vmatprep.mubr.f32.mxu0 0.0
    %v11516 = vand.u32 %v11170, 4294901760
    %v11517 = vsub.f32 %v11170, %v11516
    %v11518 = vand.u32 %v11517, 4294901760
    %11519 = vmatmul.mubr.f32.gmra.mrb[0].mxu0 %v11518
    %v11520 = vpop.f32.mrb[0].mxu0
    %v11521 = vadd.f32 %v11437, %v11520
    %v11522 = vpop.f32.mrb[0].mxu0
    %11523 = vmatprep.mubr.f32.mxu0 0.0
    %v11524 = vand.u32 %v11172, 4294901760
    %v11525 = vsub.f32 %v11172, %v11524
    %v11526 = vand.u32 %v11525, 4294901760
    %11527 = vmatmul.mubr.f32.gmra.mrb[0].mxu0 %v11526
    %v11528 = vpop.f32.mrb[0].mxu0
    %v11529 = vadd.f32 %v11444, %v11528
    %v11530 = vpop.f32.mrb[0].mxu0
    %11531 = vdwg.mxu0
    %11532 = vmatprep.subr.mxu0 0.0
    %v11533 = vand.u32 %v147, 4294901760
    %v11534 = vsub.f32 %v147, %v11533
    %v11535 = vand.u32 %v11534, 4294901760
    %11536 = vmatpush1.msra.mxu0 %v11535
    %11537 = vmatprep.subr.mxu0 0.0
    %v11538 = vand.u32 %v148, 4294901760
    %v11539 = vsub.f32 %v148, %v11538
    %v11540 = vand.u32 %v11539, 4294901760
    %11541 = vmatpush1.msra.mxu0 %v11540
    %11542 = vmatprep.subr.mxu0 0.0
    %v11543 = vand.u32 %v149, 4294901760
    %v11544 = vsub.f32 %v149, %v11543
    %v11545 = vand.u32 %v11544, 4294901760
    %11546 = vmatpush1.msra.mxu0 %v11545
    %11547 = vmatprep.subr.mxu0 0.0
    %v11548 = vand.u32 %v150, 4294901760
    %v11549 = vsub.f32 %v150, %v11548
    %v11550 = vand.u32 %v11549, 4294901760
    %11551 = vmatpush1.msra.mxu0 %v11550
    %11552 = vmatprep.subr.mxu0 0.0
    %11553 = vmatpush1.msra.mxu0 0.0
    %11554 = vmatprep.subr.mxu0 0.0
    %11555 = vmatpush1.msra.mxu0 0.0
    %11556 = vmatprep.subr.mxu0 0.0
    %11557 = vmatpush1.msra.mxu0 0.0
    %11558 = vmatprep.subr.mxu0 0.0
    %11559 = vmatpush1.msra.mxu0 0.0
    %11560 = vmatprep.subr.mxu0 0.0
    %11561 = vmatpush1.msra.mxu0 0.0
    %11562 = vmatprep.subr.mxu0 0.0
    %11563 = vmatpush1.msra.mxu0 0.0
    %11564 = vmatprep.subr.mxu0 0.0
    %11565 = vmatpush1.msra.mxu0 0.0
    %11566 = vmatprep.subr.mxu0 0.0
    %11567 = vmatpush1.msra.mxu0 0.0
    %11568 = vmatprep.subr.mxu0 0.0
    %11569 = vmatpush1.msra.mxu0 0.0
    %11570 = vmatprep.subr.mxu0 0.0
    %11571 = vmatpush1.msra.mxu0 0.0
    %11572 = vmatprep.subr.mxu0 0.0
    %11573 = vmatpush1.msra.mxu0 0.0
    %11574 = vmatprep.subr.mxu0 0.0
    %11575 = vmatpush1.msra.mxu0 0.0
    %11576 = vmatprep.subr.mxu0 0.0
    %11577 = vmatpush1.msra.mxu0 0.0
    %11578 = vmatprep.subr.mxu0 0.0
    %11579 = vmatpush1.msra.mxu0 0.0
    %11580 = vmatprep.subr.mxu0 0.0
    %11581 = vmatpush1.msra.mxu0 0.0
    %11582 = vmatprep.subr.mxu0 0.0
    %11583 = vmatpush1.msra.mxu0 0.0
    %11584 = vmatprep.subr.mxu0 0.0
    %11585 = vmatpush1.msra.mxu0 0.0
    %11586 = vmatprep.subr.mxu0 0.0
    %11587 = vmatpush1.msra.mxu0 0.0
    %11588 = vmatprep.subr.mxu0 0.0
    %11589 = vmatpush1.msra.mxu0 0.0
    %11590 = vmatprep.subr.mxu0 0.0
    %11591 = vmatpush1.msra.mxu0 0.0
    %11592 = vmatprep.subr.mxu0 0.0
    %11593 = vmatpush1.msra.mxu0 0.0
    %11594 = vmatprep.subr.mxu0 0.0
    %11595 = vmatpush1.msra.mxu0 0.0
    %11596 = vmatprep.subr.mxu0 0.0
    %11597 = vmatpush1.msra.mxu0 0.0
    %11598 = vmatprep.subr.mxu0 0.0
    %11599 = vmatpush1.msra.mxu0 0.0
    %11600 = vmatprep.subr.mxu0 0.0
    %11601 = vmatpush1.msra.mxu0 0.0
    %11602 = vmatprep.subr.mxu0 0.0
    %11603 = vmatpush1.msra.mxu0 0.0
    %11604 = vmatprep.subr.mxu0 0.0
    %11605 = vmatpush1.msra.mxu0 0.0
    %11606 = vmatprep.subr.mxu0 0.0
    %11607 = vmatpush1.msra.mxu0 0.0
    %11608 = vmatprep.mubr.f32.mxu0 0.0
    %v11609 = vand.u32 %v11170, 4294901760
    %11610 = vmatmul.mubr.f32.gmra.mrb[0].mxu0 %v11609
    %v11611 = vpop.f32.mrb[0].mxu0
    %v11612 = vadd.f32 %v11521, %v11611
    %v11613 = vpop.f32.mrb[0].mxu0
    %11614 = vmatprep.mubr.f32.mxu0 0.0
    %v11615 = vand.u32 %v11172, 4294901760
    %11616 = vmatmul.mubr.f32.gmra.mrb[0].mxu0 %v11615
    %v11617 = vpop.f32.mrb[0].mxu0
    %v11618 = vadd.f32 %v11529, %v11617
    %v11619 = vpop.f32.mrb[0].mxu0
    %11620 = vdwg.mxu0
    %11621 = vmatprep.subr.mxu0 0.0
    %v11622 = vand.u32 %v147, 4294901760
    %11623 = vmatpush1.msra.mxu0 %v11622
    %11624 = vmatprep.subr.mxu0 0.0
    %v11625 = vand.u32 %v148, 4294901760
    %11626 = vmatpush1.msra.mxu0 %v11625
    %11627 = vmatprep.subr.mxu0 0.0
    %v11628 = vand.u32 %v149, 4294901760
    %11629 = vmatpush1.msra.mxu0 %v11628
    %11630 = vmatprep.subr.mxu0 0.0
    %v11631 = vand.u32 %v150, 4294901760
    %11632 = vmatpush1.msra.mxu0 %v11631
    %11633 = vmatprep.subr.mxu0 0.0
    %11634 = vmatpush1.msra.mxu0 0.0
    %11635 = vmatprep.subr.mxu0 0.0
    %11636 = vmatpush1.msra.mxu0 0.0
    %11637 = vmatprep.subr.mxu0 0.0
    %11638 = vmatpush1.msra.mxu0 0.0
    %11639 = vmatprep.subr.mxu0 0.0
    %11640 = vmatpush1.msra.mxu0 0.0
    %11641 = vmatprep.subr.mxu0 0.0
    %11642 = vmatpush1.msra.mxu0 0.0
    %11643 = vmatprep.subr.mxu0 0.0
    %11644 = vmatpush1.msra.mxu0 0.0
    %11645 = vmatprep.subr.mxu0 0.0
    %11646 = vmatpush1.msra.mxu0 0.0
    %11647 = vmatprep.subr.mxu0 0.0
    %11648 = vmatpush1.msra.mxu0 0.0
    %11649 = vmatprep.subr.mxu0 0.0
    %11650 = vmatpush1.msra.mxu0 0.0
    %11651 = vmatprep.subr.mxu0 0.0
    %11652 = vmatpush1.msra.mxu0 0.0
    %11653 = vmatprep.subr.mxu0 0.0
    %11654 = vmatpush1.msra.mxu0 0.0
    %11655 = vmatprep.subr.mxu0 0.0
    %11656 = vmatpush1.msra.mxu0 0.0
    %11657 = vmatprep.subr.mxu0 0.0
    %11658 = vmatpush1.msra.mxu0 0.0
    %11659 = vmatprep.subr.mxu0 0.0
    %11660 = vmatpush1.msra.mxu0 0.0
    %11661 = vmatprep.subr.mxu0 0.0
    %11662 = vmatpush1.msra.mxu0 0.0
    %11663 = vmatprep.subr.mxu0 0.0
    %11664 = vmatpush1.msra.mxu0 0.0
    %11665 = vmatprep.subr.mxu0 0.0
    %11666 = vmatpush1.msra.mxu0 0.0
    %11667 = vmatprep.subr.mxu0 0.0
    %11668 = vmatpush1.msra.mxu0 0.0
    %11669 = vmatprep.subr.mxu0 0.0
    %11670 = vmatpush1.msra.mxu0 0.0
    %11671 = vmatprep.subr.mxu0 0.0
    %11672 = vmatpush1.msra.mxu0 0.0
    %11673 = vmatprep.subr.mxu0 0.0
    %11674 = vmatpush1.msra.mxu0 0.0
    %11675 = vmatprep.subr.mxu0 0.0
    %11676 = vmatpush1.msra.mxu0 0.0
    %11677 = vmatprep.subr.mxu0 0.0
    %11678 = vmatpush1.msra.mxu0 0.0
    %11679 = vmatprep.subr.mxu0 0.0
    %11680 = vmatpush1.msra.mxu0 0.0
    %11681 = vmatprep.subr.mxu0 0.0
    %11682 = vmatpush1.msra.mxu0 0.0
    %11683 = vmatprep.subr.mxu0 0.0
    %11684 = vmatpush1.msra.mxu0 0.0
    %11685 = vmatprep.subr.mxu0 0.0
    %11686 = vmatpush1.msra.mxu0 0.0
    %11687 = vmatprep.subr.mxu0 0.0
    %11688 = vmatpush1.msra.mxu0 0.0
    %11689 = vmatprep.mubr.f32.mxu0 0.0
    %v11690 = vand.u32 %v11170, 4294901760
    %11691 = vmatmul.mubr.f32.gmra.mrb[0].mxu0 %v11690
    %v11692 = vpop.f32.mrb[0].mxu0
    %v11693 = vadd.f32 %v11612, %v11692
    %v11694 = vpop.f32.mrb[0].mxu0
    %11695 = vmatprep.mubr.f32.mxu0 0.0
    %v11696 = vand.u32 %v11172, 4294901760
    %11697 = vmatmul.mubr.f32.gmra.mrb[0].mxu0 %v11696
    %v11698 = vpop.f32.mrb[0].mxu0
    %v11699 = vadd.f32 %v11618, %v11698
    %v11700 = vpop.f32.mrb[0].mxu0
    %11701 = vdwg.mxu0
    %v11702 = vadd.f32 %v11161, %v11693
    %v11703 = vadd.f32 %v11167, %v11699
    %v11704 = vadd.f32 %v11702, %v4421
    %v11705 = vadd.f32 %v11703, %v4421
    %v11706 = vxor.u32 %v11704, 2147483648
    %v11707 = vxor.u32 %v11705, 2147483648
    %v11708 = vmul.f32 %v11706, 1.442695
    %v11709 = vpow.pop %v11708
    %v11710 = vmul.f32 %v11707, 1.442695
    %v11711 = vpow.pop %v11710
    %v11712 = vadd.f32 %v11709, 1.0
    %v11713 = vadd.f32 %v11711, 1.0
    %v11714 = vrcp.pop %v11712
    %v11715 = vmul.f32 1.0, %v11714
    %v11716 = vrcp.pop %v11713
    %v11717 = vmul.f32 1.0, %v11716
    %v11718 = vadd.f32 %v11702, %v4442
    %v11719 = vadd.f32 %v11703, %v4442
    %v11720 = vxor.u32 %v11718, 2147483648
    %v11721 = vxor.u32 %v11719, 2147483648
    %v11722 = vmul.f32 %v11720, 1.442695
    %v11723 = vpow.pop %v11722
    %v11724 = vmul.f32 %v11721, 1.442695
    %v11725 = vpow.pop %v11724
    %v11726 = vadd.f32 %v11723, 1.0
    %v11727 = vadd.f32 %v11725, 1.0
    %v11728 = vrcp.pop %v11726
    %v11729 = vmul.f32 1.0, %v11728
    %v11730 = vrcp.pop %v11727
    %v11731 = vmul.f32 1.0, %v11730
    %v11732 = vadd.f32 %v11161, %v4464
    %v11733 = vadd.f32 %v11167, %v4464
    %v11734 = vadd.f32 %v11693, %v4474
    %v11735 = vadd.f32 %v11699, %v4474
    %11738 = vrot.lane.b32.xlu0 %v11734, 64
    %v11739 = vpop.permute.xlu0 %11738
    %11740 = vrot.lane.b32.xlu0 %v11735, 64
    %v11741 = vpop.permute.xlu0 %11740
    %v11744 = vmul.f32 %v11715, %v11739
    %v11745 = vmul.f32 %v11717, %v11741
    %11748 = vrot.lane.b32.xlu0 %v11744, 64
    %v11749 = vpop.permute.xlu0 %11748
    %11750 = vrot.lane.b32.xlu0 %v11745, 64
    %v11751 = vpop.permute.xlu0 %11750
    %v11754 = vadd.f32 %v11732, %v11749
    %v11755 = vadd.f32 %v11733, %v11751
    %v11756 = vtanh.pop %v11754
    %v11757 = vtanh.pop %v11755
    %v11758 = vsub.f32 1.0, %v11729
    %v11759 = vsub.f32 1.0, %v11731
    %11762 = vrot.lane.b32.xlu0 %v11756, 96
    %v11763 = vpop.permute.xlu0 %11762
    %11764 = vrot.lane.b32.xlu0 %v11757, 96
    %v11765 = vpop.permute.xlu0 %11764
    %v11768 = vmul.f32 %v11758, %v11763
    %v11769 = vmul.f32 %v11759, %v11765
    %v11770 = vmul.f32 %v11729, %v8150
    %v11771 = vmul.f32 %v11731, %v8151
    %v11772 = vadd.f32 %v11768, %v11770
    %v11773 = vadd.f32 %v11769, %v11771
    %11775 = vrot.lane.b32.xlu0 %v11772, 96
    %v11776 = vpop.permute.xlu0 %11775
    %11778 = vst.msk [vmem:[#allocation14] sm:$0xff] %vm151, %v11776
    %11779 = vst.msk [vmem:[#allocation15] sm:$0xff] %vm1893, %v9218
    %11781 = vrot.lane.b32.xlu0 %v11773, 96
    %v11782 = vpop.permute.xlu0 %11781
    %s11784 = scalar_lea.vmem [#allocation14], 8
    %11785 = vst.msk [vmem:[%s11784] sm:$0xff] %vm151, %v11782
    %s11786 = scalar_lea.vmem [#allocation15], 8
    %11787 = vst.msk [vmem:[%s11786] sm:$0xff] %vm1893, %v10167
    // Predicated region
    $region58: #{tpu_custom_call.1} parent=1 // pred_check
      _
    $region59: #{tpu_custom_call.1} parent=1 // pred_check_branch
      %11789 = sbr.rel (0) target = $region61
    $region60: #{tpu_custom_call.1} parent=1 // pred_region
      %s11791 = ssub.s32 256, 256
      %11792 = vsyncadd [#allocation4], %s11791
      %s11793 = sshll.u32 [#allocation14], 4
      %s11794 = int_to_ptr.vmem [resolvable:$true] %s11793
      %11799 = dma.vmem_to_hbm [thread:$0]  %s11794, 256, %s7, [#allocation4], 128, 128, 8
    $region61: #{tpu_custom_call.1} parent=1 // pred_fallthru
      _
    // Predicated region
    $region62: #{tpu_custom_call.1} parent=1 // pred_check
      _
    $region63: #{tpu_custom_call.1} parent=1 // pred_check_branch
      %11801 = sbr.rel (0) target = $region65
    $region64: #{tpu_custom_call.1} parent=1 // pred_region
      %s11803 = ssub.s32 256, 256
      %11804 = vsyncadd [#allocation16], %s11803
      %s11805 = sshll.u32 [#allocation15], 4
      %s11806 = int_to_ptr.vmem [resolvable:$true] %s11805
      %11811 = dma.vmem_to_hbm [thread:$0]  %s11806, 256, %s8, [#allocation16], 128, 128, 8
    $region65: #{tpu_custom_call.1} parent=1 // pred_fallthru
      _
    // Predicated region
    $region66: #{tpu_custom_call.1} parent=1 // pred_check
      _
    $region67: #{tpu_custom_call.1} parent=1 // pred_check_branch
      %11813 = sbr.rel (0) target = $region69
    $region68: #{tpu_custom_call.1} parent=1 // pred_region
      %11814 = dma.done [#allocation4], 256
    $region69: #{tpu_custom_call.1} parent=1 // pred_fallthru
      _
    // Predicated region
    $region70: #{tpu_custom_call.1} parent=1 // pred_check
      _
    $region71: #{tpu_custom_call.1} parent=1 // pred_check_branch
      %11816 = sbr.rel (0) target = $region73
    $region72: #{tpu_custom_call.1} parent=1 // pred_region
      %11817 = dma.done [#allocation16], 256
    $region73: #{tpu_custom_call.1} parent=1 // pred_fallthru
      _
    %11818 = vsyncpa [#allocation3], 1
    %11819 = vsyncpa [#allocation6], 1
    %11820 = vsyncpa [#allocation9], 1
    %11821 = vsyncpa [#allocation12], 1
    %11822 = vsyncpa [#allocation4], 1
    %11823 = vsyncpa [#allocation16], 1

</llo_original>
